<compile_context>
chip_gen: v5e
topology: v5e:2x2
jax: 0.10.0
libtpu: 0.0.40
codegen_flags: <defaults>
</compile_context>

<pallas_src>
import jax
import jax.numpy as jnp
from jax.experimental import pallas as pl
from jax.experimental.pallas import tpu as pltpu

INPUT_SIZE = 34
HIDDEN = 64
NUM_LAYERS = 3
NUM_CLASSES = 10

BP = 8                 # batch padded to one f32 sublane tile
DPAD = 2 * HIDDEN      # 128: lane-dense width of every layer input / hidden slab
GW = 8 * HIDDEN        # 512: fused (both-direction, permuted) gate width


# ----------------------------- fused RNN kernel ------------------------------
def fused_rnn_kernel(x_ref, wa_ref, wb_ref, whh_ref, bias_ref, ow_ref, ob_ref,
                     o_ref, act_scr, rev_scr, gx_scr):
    """
    x_ref    : (T*BP, 128)  zero-padded input, time-major, rows grouped by step
    wa_ref   : (3, 128, 512)  input-projection matrix applied to act (Z)
    wb_ref   : (3, 128, 512)  input-projection matrix applied to rev (Z reversed)
    whh_ref  : (3, 128, 512)  block-diagonal fused recurrent weights
    bias_ref : (3, 1, 512)    fused (b_ih + b_hh) for both directions
    ow_ref   : (2, 128, 10)   classifier weights, split for [h_f(T-1)|h_b(T-1)]
    ob_ref   : (1, 10)        classifier bias
    o_ref    : (BP, 10)
    act_scr  : (T*BP, 128)    Z[s]      = [h_f(s)     | h_b(T-1-s)]
    rev_scr  : (T*BP, 128)    Z[T-1-s]  (time-reversed copy of act_scr)
    gx_scr   : (T*BP, 512)    hoisted input-projected gates (fused layout)
    """
    DH = DPAD            # 128
    T = x_ref.shape[0] // BP

    # ---- layer-0 input: natural + time-reversed copies (off critical path) --
    act_scr[...] = x_ref[...]
    for s in range(T):
        rev_scr[(T - 1 - s) * BP:(T - s) * BP, :] = x_ref[s * BP:(s + 1) * BP, :]

    h = jnp.zeros((BP, DH), jnp.float32)
    h_first = h

    for l in range(NUM_LAYERS):
        # ---- hoisted input projection (both directions, one 512-wide slab),
        #      completely off the serialized h->h chain ----
        gx_scr[...] = (
            jnp.dot(act_scr[...], wa_ref[l], preferred_element_type=jnp.float32)
            + jnp.dot(rev_scr[...], wb_ref[l], preferred_element_type=jnp.float32)
            + bias_ref[l])

        # ---- fused bidirectional recurrence: T steps (was 2T) ----
        h = jnp.zeros((BP, DH), jnp.float32)      # [h_fwd | h_bwd]
        c = jnp.zeros((BP, DH), jnp.float32)
        for s in range(T):
            r = s * BP
            # W_hh read per step -> short RHS live range, no spill on the chain
            gates = gx_scr[r:r + BP, :] + jnp.dot(
                h, whh_ref[l], preferred_element_type=jnp.float32)   # (8, 512)
            # fused gate layout: [i|i, f|f, o|o] sigmoid, [g|g] tanh
            sig = jax.nn.sigmoid(gates[:, 0:3 * DH])                 # (8, 384)
            g_g = jnp.tanh(gates[:, 3 * DH:4 * DH])                  # (8, 128)
            c = sig[:, DH:2 * DH] * c + sig[:, 0:DH] * g_g
            h = sig[:, 2 * DH:3 * DH] * jnp.tanh(c)
            # full 128-lane stores (no masked partial-lane RMW)
            act_scr[r:r + BP, :] = h                                 # Z[s]
            rev_scr[(T - 1 - s) * BP:(T - s) * BP, :] = h            # Z[T-1-s]
            if l == NUM_LAYERS - 1 and s == 0:
                h_first = h                                          # Z[0]

    # ---- final Linear on r_out[:, -1, :] = [h_f(T-1) | h_b(T-1)] ----
    #   h_f(T-1) lives in lanes 0:64 of the final-step h  (ow_ref[0] masks rest)
    #   h_b(T-1) lives in lanes 64:128 of the step-0  h   (ow_ref[1] masks rest)
    o_ref[...] = (
        jnp.dot(h, ow_ref[0], preferred_element_type=jnp.float32)
        + jnp.dot(h_first, ow_ref[1], preferred_element_type=jnp.float32)
        + ob_ref[...])


def rnn_forward(x, fused_params):
    """x: (B, T, 34) batch-first (PyTorch convention) -> (B, 10)."""
    B, T, D = x.shape
    assert B <= BP and D <= DPAD

    # time-major, batch padded to 8 sublanes, features zero-padded to 128 lanes
    xt = jnp.transpose(x, (1, 0, 2)).astype(jnp.float32)        # (T, B, 34)
    xp = jnp.zeros((T, BP, DPAD), jnp.float32).at[:, :B, :D].set(xt)
    xp = xp.reshape(T * BP, DPAD)                               # (T*BP, 128)

    out = pl.pallas_call(
        fused_rnn_kernel,
        out_shape=jax.ShapeDtypeStruct((BP, NUM_CLASSES), jnp.float32),
        scratch_shapes=[
            pltpu.VMEM((T * BP, DPAD), jnp.float32),            # act (Z)
            pltpu.VMEM((T * BP, DPAD), jnp.float32),            # rev (Z reversed)
            pltpu.VMEM((T * BP, GW), jnp.float32),              # fused gx
        ],
    )(xp, fused_params["wa"], fused_params["wb"], fused_params["whh"],
      fused_params["bias"], fused_params["ow"], fused_params["ob"])

    return out[:B]


# ------------------------------- Parameters ----------------------------------
def init_params(key):
    """Synthetic params matching PyTorch LSTM/Linear shapes, stored transposed
    (x @ W layout) and stacked over (layer, direction); layer-0 W_ih rows past
    input_size=34 are zero so feature padding does not change results."""
    scale = (1.0 / HIDDEN) ** 0.5
    wih = jnp.zeros((NUM_LAYERS, 2, DPAD, 4 * HIDDEN), jnp.float32)
    whh = jnp.zeros((NUM_LAYERS, 2, HIDDEN, 4 * HIDDEN), jnp.float32)
    bias = jnp.zeros((NUM_LAYERS, 2, 1, 4 * HIDDEN), jnp.float32)
    for l in range(NUM_LAYERS):
        in_size = INPUT_SIZE if l == 0 else 2 * HIDDEN
        for d in range(2):
            key, k1, k2, k3, k4 = jax.random.split(key, 5)
            w_ih = jax.random.uniform(k1, (in_size, 4 * HIDDEN),
                                      jnp.float32, -scale, scale)
            w_hh = jax.random.uniform(k2, (HIDDEN, 4 * HIDDEN),
                                      jnp.float32, -scale, scale)
            b_ih = jax.random.uniform(k3, (1, 4 * HIDDEN),
                                      jnp.float32, -scale, scale)
            b_hh = jax.random.uniform(k4, (1, 4 * HIDDEN),
                                      jnp.float32, -scale, scale)
            wih = wih.at[l, d, :in_size, :].set(w_ih)
            whh = whh.at[l, d].set(w_hh)
            bias = bias.at[l, d].set(b_ih + b_hh)
    key, k1, k2 = jax.random.split(key, 3)
    out_scale = (1.0 / (2 * HIDDEN)) ** 0.5
    ow = jax.random.uniform(k1, (2 * HIDDEN, NUM_CLASSES),
                            jnp.float32, -out_scale, out_scale)
    ob = jax.random.uniform(k2, (1, NUM_CLASSES),
                            jnp.float32, -out_scale, out_scale)
    return dict(wih=wih, whh=whh, b=bias, ow=ow, ob=ob)


def _scatter_gates(w, d):
    """Map a per-direction (rows, 256) matrix with PyTorch gate order [i|f|g|o]
    into the fused 512-wide layout [i_f|i_b | f_f|f_b | o_f|o_b | g_f|g_b]
    (d=0 forward, d=1 backward half of each 128-lane gate pair)."""
    H = HIDDEN
    src = [w[:, 0:H], w[:, H:2 * H], w[:, 3 * H:4 * H], w[:, 2 * H:3 * H]]
    out = jnp.zeros((w.shape[0], GW), w.dtype)
    for k in range(4):
        out = out.at[:, k * 2 * H + d * H: k * 2 * H + (d + 1) * H].set(src[k])
    return out


def prepare_params(raw):
    """Build the fused / permuted weights consumed by the kernel.

    act holds Z[s] = [h_f(s) | h_b(T-1-s)], rev holds Z[T-1-s], so the layer
    input projection is  gx[s] = Z[s] @ A + Z[T-1-s] @ B + bias, with A/B
    assembled here so that forward-gate columns see the time-s input and
    backward-gate columns see the time-(T-1-s) input."""
    H = HIDDEN
    wa, wb, whh_f, bias = [], [], [], []
    for l in range(NUM_LAYERS):
        wf, wbk = raw["wih"][l, 0], raw["wih"][l, 1]         # (128, 256)
        if l == 0:
            A = _scatter_gates(wf, 0)                         # x(s)     -> fwd gates
            B = _scatter_gates(wbk, 1)                        # x(T-1-s) -> bwd gates
        else:
            A = jnp.concatenate([_scatter_gates(wf[0:H], 0),        # h_f(s)      -> fwd
                                 _scatter_gates(wbk[H:2 * H], 1)],  # h_b(T-1-s)  -> bwd
                                axis=0)
            B = jnp.concatenate([_scatter_gates(wbk[0:H], 1),       # h_f(T-1-s)  -> bwd
                                 _scatter_gates(wf[H:2 * H], 0)],   # h_b(s)      -> fwd
                                axis=0)
        wa.append(A)
        wb.append(B)
        whh_f.append(jnp.concatenate([_scatter_gates(raw["whh"][l, 0], 0),
                                      _scatter_gates(raw["whh"][l, 1], 1)],
                                     axis=0))                 # block-diag (128, 512)
        bias.append(_scatter_gates(raw["b"][l, 0], 0)
                    + _scatter_gates(raw["b"][l, 1], 1))      # (1, 512)
    ow = jnp.zeros((2, DPAD, NUM_CLASSES), jnp.float32)
    ow = ow.at[0, 0:H].set(raw["ow"][0:H])                    # acts on h_f(T-1)
    ow = ow.at[1, H:2 * H].set(raw["ow"][H:2 * H])            # acts on h_b(T-1)
    return dict(wa=jnp.stack(wa), wb=jnp.stack(wb), whh=jnp.stack(whh_f),
                bias=jnp.stack(bias), ow=ow, ob=raw["ob"])


# ------------------------- Pure-JAX reference (check) ------------------------
def _ref_lstm_layer(seq, w_ih, w_hh, b):
    H = HIDDEN
    hi = jax.lax.Precision.HIGHEST

    def cell(carry, x_t):
        h, c = carry
        g = (jnp.dot(x_t, w_ih, precision=hi)
             + jnp.dot(h, w_hh, precision=hi) + b)
        i_g = jax.nn.sigmoid(g[:, 0 * H:1 * H])
        f_g = jax.nn.sigmoid(g[:, 1 * H:2 * H])
        g_g = jnp.tanh(g[:, 2 * H:3 * H])
        o_g = jax.nn.sigmoid(g[:, 3 * H:4 * H])
        c_new = f_g * c + i_g * g_g
        h_new = o_g * jnp.tanh(c_new)
        return (h_new, c_new), h_new

    B = seq.shape[1]
    init = (jnp.zeros((B, H), jnp.float32), jnp.zeros((B, H), jnp.float32))
    _, hs = jax.lax.scan(cell, init, seq)
    return hs


def rnn_reference(x, params):
    seq = jnp.transpose(x, (1, 0, 2)).astype(jnp.float32)       # (T, B, 34)
    for l in range(NUM_LAYERS):
        din = INPUT_SIZE if l == 0 else 2 * HIDDEN
        out_f = _ref_lstm_layer(seq, params["wih"][l, 0, :din, :],
                                params["whh"][l, 0], params["b"][l, 0])
        out_b = _ref_lstm_layer(seq[::-1], params["wih"][l, 1, :din, :],
                                params["whh"][l, 1], params["b"][l, 1])[::-1]
        seq = jnp.concatenate([out_f, out_b], axis=-1)
    return (jnp.dot(seq[-1], params["ow"], precision=jax.lax.Precision.HIGHEST)
            + params["ob"])


if __name__ == "__main__":
    key = jax.random.PRNGKey(0)
    k_param, k_x = jax.random.split(key)

    B, T = 2, 8
    x = jax.random.normal(k_x, (B, T, INPUT_SIZE), dtype=jnp.float32)
    raw_params = init_params(k_param)
    fused_params = prepare_params(raw_params)

    fwd = jax.jit(rnn_forward)
    out = jax.block_until_ready(fwd(x, fused_params))

    assert out.shape == (B, NUM_CLASSES)
    assert out.dtype == jnp.float32

    ref = jax.block_until_ready(rnn_reference(x, raw_params))
    assert jnp.allclose(out, ref, rtol=1e-3, atol=1e-3), (
        f"max abs err {float(jnp.max(jnp.abs(out - ref))):.3e}")

    print("KERNEL_OK")
</pallas_src>

<mosaic_0001>
module attributes {stable_mosaic.version = 11 : i64} {
  func.func @fused_rnn_kernel(%arg0: memref<64x128xf32, #tpu.memory_space<vmem>>, %arg1: memref<3x128x512xf32, #tpu.memory_space<vmem>>, %arg2: memref<3x128x512xf32, #tpu.memory_space<vmem>>, %arg3: memref<3x128x512xf32, #tpu.memory_space<vmem>>, %arg4: memref<3x1x512xf32, #tpu.memory_space<vmem>>, %arg5: memref<2x128x10xf32, #tpu.memory_space<vmem>>, %arg6: memref<1x10xf32, #tpu.memory_space<vmem>>, %arg7: memref<8x10xf32, #tpu.memory_space<vmem>>, %arg8: memref<64x128xf32, #tpu.memory_space<vmem>>, %arg9: memref<64x128xf32, #tpu.memory_space<vmem>>, %arg10: memref<64x512xf32, #tpu.memory_space<vmem>>) attributes {dimension_semantics = [], scalar_prefetch = 0 : i64, scratch_operands = 3 : i64, tpu.core_type = #tpu.core_type<tc>} {
    %c0 = arith.constant 0 : index
    %c0_0 = arith.constant 0 : index
    %0 = vector.load %arg0[%c0, %c0_0] : memref<64x128xf32, #tpu.memory_space<vmem>>, vector<64x128xf32>
    %c0_1 = arith.constant 0 : index
    %c0_2 = arith.constant 0 : index
    %1 = vector.load %arg8[%c0_1, %c0_2] : memref<64x128xf32, #tpu.memory_space<vmem>>, vector<64x128xf32>
    tpu.vector_store %arg8[%c0_1, %c0_2], %0 {strides = array<i32>} : memref<64x128xf32, #tpu.memory_space<vmem>>, vector<64x128xf32>,
    %c0_3 = arith.constant 0 : index
    %c0_4 = arith.constant 0 : index
    %2 = vector.load %arg0[%c0_3, %c0_4] : memref<64x128xf32, #tpu.memory_space<vmem>>, vector<8x128xf32>
    %c56 = arith.constant 56 : index
    %c0_5 = arith.constant 0 : index
    %3 = vector.load %arg9[%c56, %c0_5] : memref<64x128xf32, #tpu.memory_space<vmem>>, vector<8x128xf32>
    tpu.vector_store %arg9[%c56, %c0_5], %2 {strides = array<i32>} : memref<64x128xf32, #tpu.memory_space<vmem>>, vector<8x128xf32>,
    %c8 = arith.constant 8 : index
    %c0_6 = arith.constant 0 : index
    %4 = vector.load %arg0[%c8, %c0_6] : memref<64x128xf32, #tpu.memory_space<vmem>>, vector<8x128xf32>
    %c48 = arith.constant 48 : index
    %c0_7 = arith.constant 0 : index
    %5 = vector.load %arg9[%c48, %c0_7] : memref<64x128xf32, #tpu.memory_space<vmem>>, vector<8x128xf32>
    tpu.vector_store %arg9[%c48, %c0_7], %4 {strides = array<i32>} : memref<64x128xf32, #tpu.memory_space<vmem>>, vector<8x128xf32>,
    %c16 = arith.constant 16 : index
    %c0_8 = arith.constant 0 : index
    %6 = vector.load %arg0[%c16, %c0_8] : memref<64x128xf32, #tpu.memory_space<vmem>>, vector<8x128xf32>
    %c40 = arith.constant 40 : index
    %c0_9 = arith.constant 0 : index
    %7 = vector.load %arg9[%c40, %c0_9] : memref<64x128xf32, #tpu.memory_space<vmem>>, vector<8x128xf32>
    tpu.vector_store %arg9[%c40, %c0_9], %6 {strides = array<i32>} : memref<64x128xf32, #tpu.memory_space<vmem>>, vector<8x128xf32>,
    %c24 = arith.constant 24 : index
    %c0_10 = arith.constant 0 : index
    %8 = vector.load %arg0[%c24, %c0_10] : memref<64x128xf32, #tpu.memory_space<vmem>>, vector<8x128xf32>
    %c32 = arith.constant 32 : index
    %c0_11 = arith.constant 0 : index
    %9 = vector.load %arg9[%c32, %c0_11] : memref<64x128xf32, #tpu.memory_space<vmem>>, vector<8x128xf32>
    tpu.vector_store %arg9[%c32, %c0_11], %8 {strides = array<i32>} : memref<64x128xf32, #tpu.memory_space<vmem>>, vector<8x128xf32>,
    %c32_12 = arith.constant 32 : index
    %c0_13 = arith.constant 0 : index
    %10 = vector.load %arg0[%c32_12, %c0_13] : memref<64x128xf32, #tpu.memory_space<vmem>>, vector<8x128xf32>
    %c24_14 = arith.constant 24 : index
    %c0_15 = arith.constant 0 : index
    %11 = vector.load %arg9[%c24_14, %c0_15] : memref<64x128xf32, #tpu.memory_space<vmem>>, vector<8x128xf32>
    tpu.vector_store %arg9[%c24_14, %c0_15], %10 {strides = array<i32>} : memref<64x128xf32, #tpu.memory_space<vmem>>, vector<8x128xf32>,
    %c40_16 = arith.constant 40 : index
    %c0_17 = arith.constant 0 : index
    %12 = vector.load %arg0[%c40_16, %c0_17] : memref<64x128xf32, #tpu.memory_space<vmem>>, vector<8x128xf32>
    %c16_18 = arith.constant 16 : index
    %c0_19 = arith.constant 0 : index
    %13 = vector.load %arg9[%c16_18, %c0_19] : memref<64x128xf32, #tpu.memory_space<vmem>>, vector<8x128xf32>
    tpu.vector_store %arg9[%c16_18, %c0_19], %12 {strides = array<i32>} : memref<64x128xf32, #tpu.memory_space<vmem>>, vector<8x128xf32>,
    %c48_20 = arith.constant 48 : index
    %c0_21 = arith.constant 0 : index
    %14 = vector.load %arg0[%c48_20, %c0_21] : memref<64x128xf32, #tpu.memory_space<vmem>>, vector<8x128xf32>
    %c8_22 = arith.constant 8 : index
    %c0_23 = arith.constant 0 : index
    %15 = vector.load %arg9[%c8_22, %c0_23] : memref<64x128xf32, #tpu.memory_space<vmem>>, vector<8x128xf32>
    tpu.vector_store %arg9[%c8_22, %c0_23], %14 {strides = array<i32>} : memref<64x128xf32, #tpu.memory_space<vmem>>, vector<8x128xf32>,
    %c56_24 = arith.constant 56 : index
    %c0_25 = arith.constant 0 : index
    %16 = vector.load %arg0[%c56_24, %c0_25] : memref<64x128xf32, #tpu.memory_space<vmem>>, vector<8x128xf32>
    %c0_26 = arith.constant 0 : index
    %c0_27 = arith.constant 0 : index
    %17 = vector.load %arg9[%c0_26, %c0_27] : memref<64x128xf32, #tpu.memory_space<vmem>>, vector<8x128xf32>
    tpu.vector_store %arg9[%c0_26, %c0_27], %16 {strides = array<i32>} : memref<64x128xf32, #tpu.memory_space<vmem>>, vector<8x128xf32>,
    %c0_28 = arith.constant 0 : index
    %c0_29 = arith.constant 0 : index
    %18 = vector.load %arg8[%c0_28, %c0_29] : memref<64x128xf32, #tpu.memory_space<vmem>>, vector<64x128xf32>
    %c0_30 = arith.constant 0 : index
    %c0_31 = arith.constant 0 : index
    %c0_32 = arith.constant 0 : index
    %19 = vector.load %arg1[%c0_30, %c0_31, %c0_32] : memref<3x128x512xf32, #tpu.memory_space<vmem>>, vector<1x128x512xf32>
    %20 = vector.shape_cast %19 : vector<1x128x512xf32> to vector<128x512xf32>
    %cst = arith.constant dense<0.000000e+00> : vector<64x512xf32>
    %21 = tpu.matmul %18, %20, %cst {dimension_numbers = #tpu.dot_dimension_numbers<[1], [0], [0], [1], [0, 0, 1, 1], [], []>} : vector<64x128xf32>, vector<128x512xf32>, vector<64x512xf32> -> vector<64x512xf32>
    %c0_33 = arith.constant 0 : index
    %c0_34 = arith.constant 0 : index
    %22 = vector.load %arg9[%c0_33, %c0_34] : memref<64x128xf32, #tpu.memory_space<vmem>>, vector<64x128xf32>
    %c0_35 = arith.constant 0 : index
    %c0_36 = arith.constant 0 : index
    %c0_37 = arith.constant 0 : index
    %23 = vector.load %arg2[%c0_35, %c0_36, %c0_37] : memref<3x128x512xf32, #tpu.memory_space<vmem>>, vector<1x128x512xf32>
    %24 = vector.shape_cast %23 : vector<1x128x512xf32> to vector<128x512xf32>
    %cst_38 = arith.constant dense<0.000000e+00> : vector<64x512xf32>
    %25 = tpu.matmul %22, %24, %cst_38 {dimension_numbers = #tpu.dot_dimension_numbers<[1], [0], [0], [1], [0, 0, 1, 1], [], []>} : vector<64x128xf32>, vector<128x512xf32>, vector<64x512xf32> -> vector<64x512xf32>
    %26 = arith.addf %21, %25 : vector<64x512xf32>
    %c0_39 = arith.constant 0 : index
    %c0_40 = arith.constant 0 : index
    %c0_41 = arith.constant 0 : index
    %27 = vector.load %arg4[%c0_39, %c0_40, %c0_41] : memref<3x1x512xf32, #tpu.memory_space<vmem>>, vector<1x1x512xf32>
    %28 = vector.shape_cast %27 : vector<1x1x512xf32> to vector<1x512xf32>
    %29 = vector.broadcast %28 : vector<1x512xf32> to vector<64x512xf32>
    %30 = arith.addf %26, %29 : vector<64x512xf32>
    %c0_42 = arith.constant 0 : index
    %c0_43 = arith.constant 0 : index
    %31 = vector.load %arg10[%c0_42, %c0_43] : memref<64x512xf32, #tpu.memory_space<vmem>>, vector<64x512xf32>
    tpu.vector_store %arg10[%c0_42, %c0_43], %30 {strides = array<i32>} : memref<64x512xf32, #tpu.memory_space<vmem>>, vector<64x512xf32>,
    %cst_44 = arith.constant 0.000000e+00 : f32
    %32 = vector.broadcast %cst_44 : f32 to vector<8x128xf32>
    %cst_45 = arith.constant 0.000000e+00 : f32
    %33 = vector.broadcast %cst_45 : f32 to vector<8x128xf32>
    %c0_46 = arith.constant 0 : index
    %c0_47 = arith.constant 0 : index
    %34 = vector.load %arg10[%c0_46, %c0_47] : memref<64x512xf32, #tpu.memory_space<vmem>>, vector<8x512xf32>
    %c0_48 = arith.constant 0 : index
    %c0_49 = arith.constant 0 : index
    %c0_50 = arith.constant 0 : index
    %35 = vector.load %arg3[%c0_48, %c0_49, %c0_50] : memref<3x128x512xf32, #tpu.memory_space<vmem>>, vector<1x128x512xf32>
    %36 = vector.shape_cast %35 : vector<1x128x512xf32> to vector<128x512xf32>
    %cst_51 = arith.constant dense<0.000000e+00> : vector<8x512xf32>
    %37 = tpu.matmul %32, %36, %cst_51 {dimension_numbers = #tpu.dot_dimension_numbers<[1], [0], [0], [1], [0, 0, 1, 1], [], []>} : vector<8x128xf32>, vector<128x512xf32>, vector<8x512xf32> -> vector<8x512xf32>
    %38 = arith.addf %34, %37 : vector<8x512xf32>
    %39 = vector.extract_strided_slice %38 {offsets = [0, 0], sizes = [8, 384], strides = [1, 1]} : vector<8x512xf32> to vector<8x384xf32>
    %40 = arith.negf %39 : vector<8x384xf32>
    %41 = math.exp %40 : vector<8x384xf32>
    %cst_52 = arith.constant 1.000000e+00 : f32
    %42 = vector.broadcast %cst_52 : f32 to vector<8x384xf32>
    %43 = arith.addf %42, %41 : vector<8x384xf32>
    %44 = arith.divf %42, %43 : vector<8x384xf32>
    %45 = vector.extract_strided_slice %38 {offsets = [0, 384], sizes = [8, 128], strides = [1, 1]} : vector<8x512xf32> to vector<8x128xf32>
    %46 = math.tanh %45 : vector<8x128xf32>
    %47 = vector.extract_strided_slice %44 {offsets = [0, 128], sizes = [8, 128], strides = [1, 1]} : vector<8x384xf32> to vector<8x128xf32>
    %48 = arith.mulf %47, %33 : vector<8x128xf32>
    %49 = vector.extract_strided_slice %44 {offsets = [0, 0], sizes = [8, 128], strides = [1, 1]} : vector<8x384xf32> to vector<8x128xf32>
    %50 = arith.mulf %49, %46 : vector<8x128xf32>
    %51 = arith.addf %48, %50 : vector<8x128xf32>
    %52 = vector.extract_strided_slice %44 {offsets = [0, 256], sizes = [8, 128], strides = [1, 1]} : vector<8x384xf32> to vector<8x128xf32>
    %53 = math.tanh %51 : vector<8x128xf32>
    %54 = arith.mulf %52, %53 : vector<8x128xf32>
    %c0_53 = arith.constant 0 : index
    %c0_54 = arith.constant 0 : index
    %55 = vector.load %arg8[%c0_53, %c0_54] : memref<64x128xf32, #tpu.memory_space<vmem>>, vector<8x128xf32>
    tpu.vector_store %arg8[%c0_53, %c0_54], %54 {strides = array<i32>} : memref<64x128xf32, #tpu.memory_space<vmem>>, vector<8x128xf32>,
    %c56_55 = arith.constant 56 : index
    %c0_56 = arith.constant 0 : index
    %56 = vector.load %arg9[%c56_55, %c0_56] : memref<64x128xf32, #tpu.memory_space<vmem>>, vector<8x128xf32>
    tpu.vector_store %arg9[%c56_55, %c0_56], %54 {strides = array<i32>} : memref<64x128xf32, #tpu.memory_space<vmem>>, vector<8x128xf32>,
    %c8_57 = arith.constant 8 : index
    %c0_58 = arith.constant 0 : index
    %57 = vector.load %arg10[%c8_57, %c0_58] : memref<64x512xf32, #tpu.memory_space<vmem>>, vector<8x512xf32>
    %c0_59 = arith.constant 0 : index
    %c0_60 = arith.constant 0 : index
    %c0_61 = arith.constant 0 : index
    %58 = vector.load %arg3[%c0_59, %c0_60, %c0_61] : memref<3x128x512xf32, #tpu.memory_space<vmem>>, vector<1x128x512xf32>
    %59 = vector.shape_cast %58 : vector<1x128x512xf32> to vector<128x512xf32>
    %cst_62 = arith.constant dense<0.000000e+00> : vector<8x512xf32>
    %60 = tpu.matmul %54, %59, %cst_62 {dimension_numbers = #tpu.dot_dimension_numbers<[1], [0], [0], [1], [0, 0, 1, 1], [], []>} : vector<8x128xf32>, vector<128x512xf32>, vector<8x512xf32> -> vector<8x512xf32>
    %61 = arith.addf %57, %60 : vector<8x512xf32>
    %62 = vector.extract_strided_slice %61 {offsets = [0, 0], sizes = [8, 384], strides = [1, 1]} : vector<8x512xf32> to vector<8x384xf32>
    %63 = arith.negf %62 : vector<8x384xf32>
    %64 = math.exp %63 : vector<8x384xf32>
    %cst_63 = arith.constant 1.000000e+00 : f32
    %65 = vector.broadcast %cst_63 : f32 to vector<8x384xf32>
    %66 = arith.addf %65, %64 : vector<8x384xf32>
    %67 = arith.divf %65, %66 : vector<8x384xf32>
    %68 = vector.extract_strided_slice %61 {offsets = [0, 384], sizes = [8, 128], strides = [1, 1]} : vector<8x512xf32> to vector<8x128xf32>
    %69 = math.tanh %68 : vector<8x128xf32>
    %70 = vector.extract_strided_slice %67 {offsets = [0, 128], sizes = [8, 128], strides = [1, 1]} : vector<8x384xf32> to vector<8x128xf32>
    %71 = arith.mulf %70, %51 : vector<8x128xf32>
    %72 = vector.extract_strided_slice %67 {offsets = [0, 0], sizes = [8, 128], strides = [1, 1]} : vector<8x384xf32> to vector<8x128xf32>
    %73 = arith.mulf %72, %69 : vector<8x128xf32>
    %74 = arith.addf %71, %73 : vector<8x128xf32>
    %75 = vector.extract_strided_slice %67 {offsets = [0, 256], sizes = [8, 128], strides = [1, 1]} : vector<8x384xf32> to vector<8x128xf32>
    %76 = math.tanh %74 : vector<8x128xf32>
    %77 = arith.mulf %75, %76 : vector<8x128xf32>
    %c8_64 = arith.constant 8 : index
    %c0_65 = arith.constant 0 : index
    %78 = vector.load %arg8[%c8_64, %c0_65] : memref<64x128xf32, #tpu.memory_space<vmem>>, vector<8x128xf32>
    tpu.vector_store %arg8[%c8_64, %c0_65], %77 {strides = array<i32>} : memref<64x128xf32, #tpu.memory_space<vmem>>, vector<8x128xf32>,
    %c48_66 = arith.constant 48 : index
    %c0_67 = arith.constant 0 : index
    %79 = vector.load %arg9[%c48_66, %c0_67] : memref<64x128xf32, #tpu.memory_space<vmem>>, vector<8x128xf32>
    tpu.vector_store %arg9[%c48_66, %c0_67], %77 {strides = array<i32>} : memref<64x128xf32, #tpu.memory_space<vmem>>, vector<8x128xf32>,
    %c16_68 = arith.constant 16 : index
    %c0_69 = arith.constant 0 : index
    %80 = vector.load %arg10[%c16_68, %c0_69] : memref<64x512xf32, #tpu.memory_space<vmem>>, vector<8x512xf32>
    %c0_70 = arith.constant 0 : index
    %c0_71 = arith.constant 0 : index
    %c0_72 = arith.constant 0 : index
    %81 = vector.load %arg3[%c0_70, %c0_71, %c0_72] : memref<3x128x512xf32, #tpu.memory_space<vmem>>, vector<1x128x512xf32>
    %82 = vector.shape_cast %81 : vector<1x128x512xf32> to vector<128x512xf32>
    %cst_73 = arith.constant dense<0.000000e+00> : vector<8x512xf32>
    %83 = tpu.matmul %77, %82, %cst_73 {dimension_numbers = #tpu.dot_dimension_numbers<[1], [0], [0], [1], [0, 0, 1, 1], [], []>} : vector<8x128xf32>, vector<128x512xf32>, vector<8x512xf32> -> vector<8x512xf32>
    %84 = arith.addf %80, %83 : vector<8x512xf32>
    %85 = vector.extract_strided_slice %84 {offsets = [0, 0], sizes = [8, 384], strides = [1, 1]} : vector<8x512xf32> to vector<8x384xf32>
    %86 = arith.negf %85 : vector<8x384xf32>
    %87 = math.exp %86 : vector<8x384xf32>
    %cst_74 = arith.constant 1.000000e+00 : f32
    %88 = vector.broadcast %cst_74 : f32 to vector<8x384xf32>
    %89 = arith.addf %88, %87 : vector<8x384xf32>
    %90 = arith.divf %88, %89 : vector<8x384xf32>
    %91 = vector.extract_strided_slice %84 {offsets = [0, 384], sizes = [8, 128], strides = [1, 1]} : vector<8x512xf32> to vector<8x128xf32>
    %92 = math.tanh %91 : vector<8x128xf32>
    %93 = vector.extract_strided_slice %90 {offsets = [0, 128], sizes = [8, 128], strides = [1, 1]} : vector<8x384xf32> to vector<8x128xf32>
    %94 = arith.mulf %93, %74 : vector<8x128xf32>
    %95 = vector.extract_strided_slice %90 {offsets = [0, 0], sizes = [8, 128], strides = [1, 1]} : vector<8x384xf32> to vector<8x128xf32>
    %96 = arith.mulf %95, %92 : vector<8x128xf32>
    %97 = arith.addf %94, %96 : vector<8x128xf32>
    %98 = vector.extract_strided_slice %90 {offsets = [0, 256], sizes = [8, 128], strides = [1, 1]} : vector<8x384xf32> to vector<8x128xf32>
    %99 = math.tanh %97 : vector<8x128xf32>
    %100 = arith.mulf %98, %99 : vector<8x128xf32>
    %c16_75 = arith.constant 16 : index
    %c0_76 = arith.constant 0 : index
    %101 = vector.load %arg8[%c16_75, %c0_76] : memref<64x128xf32, #tpu.memory_space<vmem>>, vector<8x128xf32>
    tpu.vector_store %arg8[%c16_75, %c0_76], %100 {strides = array<i32>} : memref<64x128xf32, #tpu.memory_space<vmem>>, vector<8x128xf32>,
    %c40_77 = arith.constant 40 : index
    %c0_78 = arith.constant 0 : index
    %102 = vector.load %arg9[%c40_77, %c0_78] : memref<64x128xf32, #tpu.memory_space<vmem>>, vector<8x128xf32>
    tpu.vector_store %arg9[%c40_77, %c0_78], %100 {strides = array<i32>} : memref<64x128xf32, #tpu.memory_space<vmem>>, vector<8x128xf32>,
    %c24_79 = arith.constant 24 : index
    %c0_80 = arith.constant 0 : index
    %103 = vector.load %arg10[%c24_79, %c0_80] : memref<64x512xf32, #tpu.memory_space<vmem>>, vector<8x512xf32>
    %c0_81 = arith.constant 0 : index
    %c0_82 = arith.constant 0 : index
    %c0_83 = arith.constant 0 : index
    %104 = vector.load %arg3[%c0_81, %c0_82, %c0_83] : memref<3x128x512xf32, #tpu.memory_space<vmem>>, vector<1x128x512xf32>
    %105 = vector.shape_cast %104 : vector<1x128x512xf32> to vector<128x512xf32>
    %cst_84 = arith.constant dense<0.000000e+00> : vector<8x512xf32>
    %106 = tpu.matmul %100, %105, %cst_84 {dimension_numbers = #tpu.dot_dimension_numbers<[1], [0], [0], [1], [0, 0, 1, 1], [], []>} : vector<8x128xf32>, vector<128x512xf32>, vector<8x512xf32> -> vector<8x512xf32>
    %107 = arith.addf %103, %106 : vector<8x512xf32>
    %108 = vector.extract_strided_slice %107 {offsets = [0, 0], sizes = [8, 384], strides = [1, 1]} : vector<8x512xf32> to vector<8x384xf32>
    %109 = arith.negf %108 : vector<8x384xf32>
    %110 = math.exp %109 : vector<8x384xf32>
    %cst_85 = arith.constant 1.000000e+00 : f32
    %111 = vector.broadcast %cst_85 : f32 to vector<8x384xf32>
    %112 = arith.addf %111, %110 : vector<8x384xf32>
    %113 = arith.divf %111, %112 : vector<8x384xf32>
    %114 = vector.extract_strided_slice %107 {offsets = [0, 384], sizes = [8, 128], strides = [1, 1]} : vector<8x512xf32> to vector<8x128xf32>
    %115 = math.tanh %114 : vector<8x128xf32>
    %116 = vector.extract_strided_slice %113 {offsets = [0, 128], sizes = [8, 128], strides = [1, 1]} : vector<8x384xf32> to vector<8x128xf32>
    %117 = arith.mulf %116, %97 : vector<8x128xf32>
    %118 = vector.extract_strided_slice %113 {offsets = [0, 0], sizes = [8, 128], strides = [1, 1]} : vector<8x384xf32> to vector<8x128xf32>
    %119 = arith.mulf %118, %115 : vector<8x128xf32>
    %120 = arith.addf %117, %119 : vector<8x128xf32>
    %121 = vector.extract_strided_slice %113 {offsets = [0, 256], sizes = [8, 128], strides = [1, 1]} : vector<8x384xf32> to vector<8x128xf32>
    %122 = math.tanh %120 : vector<8x128xf32>
    %123 = arith.mulf %121, %122 : vector<8x128xf32>
    %c24_86 = arith.constant 24 : index
    %c0_87 = arith.constant 0 : index
    %124 = vector.load %arg8[%c24_86, %c0_87] : memref<64x128xf32, #tpu.memory_space<vmem>>, vector<8x128xf32>
    tpu.vector_store %arg8[%c24_86, %c0_87], %123 {strides = array<i32>} : memref<64x128xf32, #tpu.memory_space<vmem>>, vector<8x128xf32>,
    %c32_88 = arith.constant 32 : index
    %c0_89 = arith.constant 0 : index
    %125 = vector.load %arg9[%c32_88, %c0_89] : memref<64x128xf32, #tpu.memory_space<vmem>>, vector<8x128xf32>
    tpu.vector_store %arg9[%c32_88, %c0_89], %123 {strides = array<i32>} : memref<64x128xf32, #tpu.memory_space<vmem>>, vector<8x128xf32>,
    %c32_90 = arith.constant 32 : index
    %c0_91 = arith.constant 0 : index
    %126 = vector.load %arg10[%c32_90, %c0_91] : memref<64x512xf32, #tpu.memory_space<vmem>>, vector<8x512xf32>
    %c0_92 = arith.constant 0 : index
    %c0_93 = arith.constant 0 : index
    %c0_94 = arith.constant 0 : index
    %127 = vector.load %arg3[%c0_92, %c0_93, %c0_94] : memref<3x128x512xf32, #tpu.memory_space<vmem>>, vector<1x128x512xf32>
    %128 = vector.shape_cast %127 : vector<1x128x512xf32> to vector<128x512xf32>
    %cst_95 = arith.constant dense<0.000000e+00> : vector<8x512xf32>
    %129 = tpu.matmul %123, %128, %cst_95 {dimension_numbers = #tpu.dot_dimension_numbers<[1], [0], [0], [1], [0, 0, 1, 1], [], []>} : vector<8x128xf32>, vector<128x512xf32>, vector<8x512xf32> -> vector<8x512xf32>
    %130 = arith.addf %126, %129 : vector<8x512xf32>
    %131 = vector.extract_strided_slice %130 {offsets = [0, 0], sizes = [8, 384], strides = [1, 1]} : vector<8x512xf32> to vector<8x384xf32>
    %132 = arith.negf %131 : vector<8x384xf32>
    %133 = math.exp %132 : vector<8x384xf32>
    %cst_96 = arith.constant 1.000000e+00 : f32
    %134 = vector.broadcast %cst_96 : f32 to vector<8x384xf32>
    %135 = arith.addf %134, %133 : vector<8x384xf32>
    %136 = arith.divf %134, %135 : vector<8x384xf32>
    %137 = vector.extract_strided_slice %130 {offsets = [0, 384], sizes = [8, 128], strides = [1, 1]} : vector<8x512xf32> to vector<8x128xf32>
    %138 = math.tanh %137 : vector<8x128xf32>
    %139 = vector.extract_strided_slice %136 {offsets = [0, 128], sizes = [8, 128], strides = [1, 1]} : vector<8x384xf32> to vector<8x128xf32>
    %140 = arith.mulf %139, %120 : vector<8x128xf32>
    %141 = vector.extract_strided_slice %136 {offsets = [0, 0], sizes = [8, 128], strides = [1, 1]} : vector<8x384xf32> to vector<8x128xf32>
    %142 = arith.mulf %141, %138 : vector<8x128xf32>
    %143 = arith.addf %140, %142 : vector<8x128xf32>
    %144 = vector.extract_strided_slice %136 {offsets = [0, 256], sizes = [8, 128], strides = [1, 1]} : vector<8x384xf32> to vector<8x128xf32>
    %145 = math.tanh %143 : vector<8x128xf32>
    %146 = arith.mulf %144, %145 : vector<8x128xf32>
    %c32_97 = arith.constant 32 : index
    %c0_98 = arith.constant 0 : index
    %147 = vector.load %arg8[%c32_97, %c0_98] : memref<64x128xf32, #tpu.memory_space<vmem>>, vector<8x128xf32>
    tpu.vector_store %arg8[%c32_97, %c0_98], %146 {strides = array<i32>} : memref<64x128xf32, #tpu.memory_space<vmem>>, vector<8x128xf32>,
    %c24_99 = arith.constant 24 : index
    %c0_100 = arith.constant 0 : index
    %148 = vector.load %arg9[%c24_99, %c0_100] : memref<64x128xf32, #tpu.memory_space<vmem>>, vector<8x128xf32>
    tpu.vector_store %arg9[%c24_99, %c0_100], %146 {strides = array<i32>} : memref<64x128xf32, #tpu.memory_space<vmem>>, vector<8x128xf32>,
    %c40_101 = arith.constant 40 : index
    %c0_102 = arith.constant 0 : index
    %149 = vector.load %arg10[%c40_101, %c0_102] : memref<64x512xf32, #tpu.memory_space<vmem>>, vector<8x512xf32>
    %c0_103 = arith.constant 0 : index
    %c0_104 = arith.constant 0 : index
    %c0_105 = arith.constant 0 : index
    %150 = vector.load %arg3[%c0_103, %c0_104, %c0_105] : memref<3x128x512xf32, #tpu.memory_space<vmem>>, vector<1x128x512xf32>
    %151 = vector.shape_cast %150 : vector<1x128x512xf32> to vector<128x512xf32>
    %cst_106 = arith.constant dense<0.000000e+00> : vector<8x512xf32>
    %152 = tpu.matmul %146, %151, %cst_106 {dimension_numbers = #tpu.dot_dimension_numbers<[1], [0], [0], [1], [0, 0, 1, 1], [], []>} : vector<8x128xf32>, vector<128x512xf32>, vector<8x512xf32> -> vector<8x512xf32>
    %153 = arith.addf %149, %152 : vector<8x512xf32>
    %154 = vector.extract_strided_slice %153 {offsets = [0, 0], sizes = [8, 384], strides = [1, 1]} : vector<8x512xf32> to vector<8x384xf32>
    %155 = arith.negf %154 : vector<8x384xf32>
    %156 = math.exp %155 : vector<8x384xf32>
    %cst_107 = arith.constant 1.000000e+00 : f32
    %157 = vector.broadcast %cst_107 : f32 to vector<8x384xf32>
    %158 = arith.addf %157, %156 : vector<8x384xf32>
    %159 = arith.divf %157, %158 : vector<8x384xf32>
    %160 = vector.extract_strided_slice %153 {offsets = [0, 384], sizes = [8, 128], strides = [1, 1]} : vector<8x512xf32> to vector<8x128xf32>
    %161 = math.tanh %160 : vector<8x128xf32>
    %162 = vector.extract_strided_slice %159 {offsets = [0, 128], sizes = [8, 128], strides = [1, 1]} : vector<8x384xf32> to vector<8x128xf32>
    %163 = arith.mulf %162, %143 : vector<8x128xf32>
    %164 = vector.extract_strided_slice %159 {offsets = [0, 0], sizes = [8, 128], strides = [1, 1]} : vector<8x384xf32> to vector<8x128xf32>
    %165 = arith.mulf %164, %161 : vector<8x128xf32>
    %166 = arith.addf %163, %165 : vector<8x128xf32>
    %167 = vector.extract_strided_slice %159 {offsets = [0, 256], sizes = [8, 128], strides = [1, 1]} : vector<8x384xf32> to vector<8x128xf32>
    %168 = math.tanh %166 : vector<8x128xf32>
    %169 = arith.mulf %167, %168 : vector<8x128xf32>
    %c40_108 = arith.constant 40 : index
    %c0_109 = arith.constant 0 : index
    %170 = vector.load %arg8[%c40_108, %c0_109] : memref<64x128xf32, #tpu.memory_space<vmem>>, vector<8x128xf32>
    tpu.vector_store %arg8[%c40_108, %c0_109], %169 {strides = array<i32>} : memref<64x128xf32, #tpu.memory_space<vmem>>, vector<8x128xf32>,
    %c16_110 = arith.constant 16 : index
    %c0_111 = arith.constant 0 : index
    %171 = vector.load %arg9[%c16_110, %c0_111] : memref<64x128xf32, #tpu.memory_space<vmem>>, vector<8x128xf32>
    tpu.vector_store %arg9[%c16_110, %c0_111], %169 {strides = array<i32>} : memref<64x128xf32, #tpu.memory_space<vmem>>, vector<8x128xf32>,
    %c48_112 = arith.constant 48 : index
    %c0_113 = arith.constant 0 : index
    %172 = vector.load %arg10[%c48_112, %c0_113] : memref<64x512xf32, #tpu.memory_space<vmem>>, vector<8x512xf32>
    %c0_114 = arith.constant 0 : index
    %c0_115 = arith.constant 0 : index
    %c0_116 = arith.constant 0 : index
    %173 = vector.load %arg3[%c0_114, %c0_115, %c0_116] : memref<3x128x512xf32, #tpu.memory_space<vmem>>, vector<1x128x512xf32>
    %174 = vector.shape_cast %173 : vector<1x128x512xf32> to vector<128x512xf32>
    %cst_117 = arith.constant dense<0.000000e+00> : vector<8x512xf32>
    %175 = tpu.matmul %169, %174, %cst_117 {dimension_numbers = #tpu.dot_dimension_numbers<[1], [0], [0], [1], [0, 0, 1, 1], [], []>} : vector<8x128xf32>, vector<128x512xf32>, vector<8x512xf32> -> vector<8x512xf32>
    %176 = arith.addf %172, %175 : vector<8x512xf32>
    %177 = vector.extract_strided_slice %176 {offsets = [0, 0], sizes = [8, 384], strides = [1, 1]} : vector<8x512xf32> to vector<8x384xf32>
    %178 = arith.negf %177 : vector<8x384xf32>
    %179 = math.exp %178 : vector<8x384xf32>
    %cst_118 = arith.constant 1.000000e+00 : f32
    %180 = vector.broadcast %cst_118 : f32 to vector<8x384xf32>
    %181 = arith.addf %180, %179 : vector<8x384xf32>
    %182 = arith.divf %180, %181 : vector<8x384xf32>
    %183 = vector.extract_strided_slice %176 {offsets = [0, 384], sizes = [8, 128], strides = [1, 1]} : vector<8x512xf32> to vector<8x128xf32>
    %184 = math.tanh %183 : vector<8x128xf32>
    %185 = vector.extract_strided_slice %182 {offsets = [0, 128], sizes = [8, 128], strides = [1, 1]} : vector<8x384xf32> to vector<8x128xf32>
    %186 = arith.mulf %185, %166 : vector<8x128xf32>
    %187 = vector.extract_strided_slice %182 {offsets = [0, 0], sizes = [8, 128], strides = [1, 1]} : vector<8x384xf32> to vector<8x128xf32>
    %188 = arith.mulf %187, %184 : vector<8x128xf32>
    %189 = arith.addf %186, %188 : vector<8x128xf32>
    %190 = vector.extract_strided_slice %182 {offsets = [0, 256], sizes = [8, 128], strides = [1, 1]} : vector<8x384xf32> to vector<8x128xf32>
    %191 = math.tanh %189 : vector<8x128xf32>
    %192 = arith.mulf %190, %191 : vector<8x128xf32>
    %c48_119 = arith.constant 48 : index
    %c0_120 = arith.constant 0 : index
    %193 = vector.load %arg8[%c48_119, %c0_120] : memref<64x128xf32, #tpu.memory_space<vmem>>, vector<8x128xf32>
    tpu.vector_store %arg8[%c48_119, %c0_120], %192 {strides = array<i32>} : memref<64x128xf32, #tpu.memory_space<vmem>>, vector<8x128xf32>,
    %c8_121 = arith.constant 8 : index
    %c0_122 = arith.constant 0 : index
    %194 = vector.load %arg9[%c8_121, %c0_122] : memref<64x128xf32, #tpu.memory_space<vmem>>, vector<8x128xf32>
    tpu.vector_store %arg9[%c8_121, %c0_122], %192 {strides = array<i32>} : memref<64x128xf32, #tpu.memory_space<vmem>>, vector<8x128xf32>,
    %c56_123 = arith.constant 56 : index
    %c0_124 = arith.constant 0 : index
    %195 = vector.load %arg10[%c56_123, %c0_124] : memref<64x512xf32, #tpu.memory_space<vmem>>, vector<8x512xf32>
    %c0_125 = arith.constant 0 : index
    %c0_126 = arith.constant 0 : index
    %c0_127 = arith.constant 0 : index
    %196 = vector.load %arg3[%c0_125, %c0_126, %c0_127] : memref<3x128x512xf32, #tpu.memory_space<vmem>>, vector<1x128x512xf32>
    %197 = vector.shape_cast %196 : vector<1x128x512xf32> to vector<128x512xf32>
    %cst_128 = arith.constant dense<0.000000e+00> : vector<8x512xf32>
    %198 = tpu.matmul %192, %197, %cst_128 {dimension_numbers = #tpu.dot_dimension_numbers<[1], [0], [0], [1], [0, 0, 1, 1], [], []>} : vector<8x128xf32>, vector<128x512xf32>, vector<8x512xf32> -> vector<8x512xf32>
    %199 = arith.addf %195, %198 : vector<8x512xf32>
    %200 = vector.extract_strided_slice %199 {offsets = [0, 0], sizes = [8, 384], strides = [1, 1]} : vector<8x512xf32> to vector<8x384xf32>
    %201 = arith.negf %200 : vector<8x384xf32>
    %202 = math.exp %201 : vector<8x384xf32>
    %cst_129 = arith.constant 1.000000e+00 : f32
    %203 = vector.broadcast %cst_129 : f32 to vector<8x384xf32>
    %204 = arith.addf %203, %202 : vector<8x384xf32>
    %205 = arith.divf %203, %204 : vector<8x384xf32>
    %206 = vector.extract_strided_slice %199 {offsets = [0, 384], sizes = [8, 128], strides = [1, 1]} : vector<8x512xf32> to vector<8x128xf32>
    %207 = math.tanh %206 : vector<8x128xf32>
    %208 = vector.extract_strided_slice %205 {offsets = [0, 128], sizes = [8, 128], strides = [1, 1]} : vector<8x384xf32> to vector<8x128xf32>
    %209 = arith.mulf %208, %189 : vector<8x128xf32>
    %210 = vector.extract_strided_slice %205 {offsets = [0, 0], sizes = [8, 128], strides = [1, 1]} : vector<8x384xf32> to vector<8x128xf32>
    %211 = arith.mulf %210, %207 : vector<8x128xf32>
    %212 = arith.addf %209, %211 : vector<8x128xf32>
    %213 = vector.extract_strided_slice %205 {offsets = [0, 256], sizes = [8, 128], strides = [1, 1]} : vector<8x384xf32> to vector<8x128xf32>
    %214 = math.tanh %212 : vector<8x128xf32>
    %215 = arith.mulf %213, %214 : vector<8x128xf32>
    %c56_130 = arith.constant 56 : index
    %c0_131 = arith.constant 0 : index
    %216 = vector.load %arg8[%c56_130, %c0_131] : memref<64x128xf32, #tpu.memory_space<vmem>>, vector<8x128xf32>
    tpu.vector_store %arg8[%c56_130, %c0_131], %215 {strides = array<i32>} : memref<64x128xf32, #tpu.memory_space<vmem>>, vector<8x128xf32>,
    %c0_132 = arith.constant 0 : index
    %c0_133 = arith.constant 0 : index
    %217 = vector.load %arg9[%c0_132, %c0_133] : memref<64x128xf32, #tpu.memory_space<vmem>>, vector<8x128xf32>
    tpu.vector_store %arg9[%c0_132, %c0_133], %215 {strides = array<i32>} : memref<64x128xf32, #tpu.memory_space<vmem>>, vector<8x128xf32>,
    %c0_134 = arith.constant 0 : index
    %c0_135 = arith.constant 0 : index
    %218 = vector.load %arg8[%c0_134, %c0_135] : memref<64x128xf32, #tpu.memory_space<vmem>>, vector<64x128xf32>
    %c1 = arith.constant 1 : index
    %c0_136 = arith.constant 0 : index
    %c0_137 = arith.constant 0 : index
    %219 = vector.load %arg1[%c1, %c0_136, %c0_137] : memref<3x128x512xf32, #tpu.memory_space<vmem>>, vector<1x128x512xf32>
    %220 = vector.shape_cast %219 : vector<1x128x512xf32> to vector<128x512xf32>
    %cst_138 = arith.constant dense<0.000000e+00> : vector<64x512xf32>
    %221 = tpu.matmul %218, %220, %cst_138 {dimension_numbers = #tpu.dot_dimension_numbers<[1], [0], [0], [1], [0, 0, 1, 1], [], []>} : vector<64x128xf32>, vector<128x512xf32>, vector<64x512xf32> -> vector<64x512xf32>
    %c0_139 = arith.constant 0 : index
    %c0_140 = arith.constant 0 : index
    %222 = vector.load %arg9[%c0_139, %c0_140] : memref<64x128xf32, #tpu.memory_space<vmem>>, vector<64x128xf32>
    %c1_141 = arith.constant 1 : index
    %c0_142 = arith.constant 0 : index
    %c0_143 = arith.constant 0 : index
    %223 = vector.load %arg2[%c1_141, %c0_142, %c0_143] : memref<3x128x512xf32, #tpu.memory_space<vmem>>, vector<1x128x512xf32>
    %224 = vector.shape_cast %223 : vector<1x128x512xf32> to vector<128x512xf32>
    %cst_144 = arith.constant dense<0.000000e+00> : vector<64x512xf32>
    %225 = tpu.matmul %222, %224, %cst_144 {dimension_numbers = #tpu.dot_dimension_numbers<[1], [0], [0], [1], [0, 0, 1, 1], [], []>} : vector<64x128xf32>, vector<128x512xf32>, vector<64x512xf32> -> vector<64x512xf32>
    %226 = arith.addf %221, %225 : vector<64x512xf32>
    %c1_145 = arith.constant 1 : index
    %c0_146 = arith.constant 0 : index
    %c0_147 = arith.constant 0 : index
    %227 = vector.load %arg4[%c1_145, %c0_146, %c0_147] : memref<3x1x512xf32, #tpu.memory_space<vmem>>, vector<1x1x512xf32>
    %228 = vector.shape_cast %227 : vector<1x1x512xf32> to vector<1x512xf32>
    %229 = vector.broadcast %228 : vector<1x512xf32> to vector<64x512xf32>
    %230 = arith.addf %226, %229 : vector<64x512xf32>
    %c0_148 = arith.constant 0 : index
    %c0_149 = arith.constant 0 : index
    %231 = vector.load %arg10[%c0_148, %c0_149] : memref<64x512xf32, #tpu.memory_space<vmem>>, vector<64x512xf32>
    tpu.vector_store %arg10[%c0_148, %c0_149], %230 {strides = array<i32>} : memref<64x512xf32, #tpu.memory_space<vmem>>, vector<64x512xf32>,
    %cst_150 = arith.constant 0.000000e+00 : f32
    %232 = vector.broadcast %cst_150 : f32 to vector<8x128xf32>
    %cst_151 = arith.constant 0.000000e+00 : f32
    %233 = vector.broadcast %cst_151 : f32 to vector<8x128xf32>
    %c0_152 = arith.constant 0 : index
    %c0_153 = arith.constant 0 : index
    %234 = vector.load %arg10[%c0_152, %c0_153] : memref<64x512xf32, #tpu.memory_space<vmem>>, vector<8x512xf32>
    %c1_154 = arith.constant 1 : index
    %c0_155 = arith.constant 0 : index
    %c0_156 = arith.constant 0 : index
    %235 = vector.load %arg3[%c1_154, %c0_155, %c0_156] : memref<3x128x512xf32, #tpu.memory_space<vmem>>, vector<1x128x512xf32>
    %236 = vector.shape_cast %235 : vector<1x128x512xf32> to vector<128x512xf32>
    %cst_157 = arith.constant dense<0.000000e+00> : vector<8x512xf32>
    %237 = tpu.matmul %232, %236, %cst_157 {dimension_numbers = #tpu.dot_dimension_numbers<[1], [0], [0], [1], [0, 0, 1, 1], [], []>} : vector<8x128xf32>, vector<128x512xf32>, vector<8x512xf32> -> vector<8x512xf32>
    %238 = arith.addf %234, %237 : vector<8x512xf32>
    %239 = vector.extract_strided_slice %238 {offsets = [0, 0], sizes = [8, 384], strides = [1, 1]} : vector<8x512xf32> to vector<8x384xf32>
    %240 = arith.negf %239 : vector<8x384xf32>
    %241 = math.exp %240 : vector<8x384xf32>
    %cst_158 = arith.constant 1.000000e+00 : f32
    %242 = vector.broadcast %cst_158 : f32 to vector<8x384xf32>
    %243 = arith.addf %242, %241 : vector<8x384xf32>
    %244 = arith.divf %242, %243 : vector<8x384xf32>
    %245 = vector.extract_strided_slice %238 {offsets = [0, 384], sizes = [8, 128], strides = [1, 1]} : vector<8x512xf32> to vector<8x128xf32>
    %246 = math.tanh %245 : vector<8x128xf32>
    %247 = vector.extract_strided_slice %244 {offsets = [0, 128], sizes = [8, 128], strides = [1, 1]} : vector<8x384xf32> to vector<8x128xf32>
    %248 = arith.mulf %247, %233 : vector<8x128xf32>
    %249 = vector.extract_strided_slice %244 {offsets = [0, 0], sizes = [8, 128], strides = [1, 1]} : vector<8x384xf32> to vector<8x128xf32>
    %250 = arith.mulf %249, %246 : vector<8x128xf32>
    %251 = arith.addf %248, %250 : vector<8x128xf32>
    %252 = vector.extract_strided_slice %244 {offsets = [0, 256], sizes = [8, 128], strides = [1, 1]} : vector<8x384xf32> to vector<8x128xf32>
    %253 = math.tanh %251 : vector<8x128xf32>
    %254 = arith.mulf %252, %253 : vector<8x128xf32>
    %c0_159 = arith.constant 0 : index
    %c0_160 = arith.constant 0 : index
    %255 = vector.load %arg8[%c0_159, %c0_160] : memref<64x128xf32, #tpu.memory_space<vmem>>, vector<8x128xf32>
    tpu.vector_store %arg8[%c0_159, %c0_160], %254 {strides = array<i32>} : memref<64x128xf32, #tpu.memory_space<vmem>>, vector<8x128xf32>,
    %c56_161 = arith.constant 56 : index
    %c0_162 = arith.constant 0 : index
    %256 = vector.load %arg9[%c56_161, %c0_162] : memref<64x128xf32, #tpu.memory_space<vmem>>, vector<8x128xf32>
    tpu.vector_store %arg9[%c56_161, %c0_162], %254 {strides = array<i32>} : memref<64x128xf32, #tpu.memory_space<vmem>>, vector<8x128xf32>,
    %c8_163 = arith.constant 8 : index
    %c0_164 = arith.constant 0 : index
    %257 = vector.load %arg10[%c8_163, %c0_164] : memref<64x512xf32, #tpu.memory_space<vmem>>, vector<8x512xf32>
    %c1_165 = arith.constant 1 : index
    %c0_166 = arith.constant 0 : index
    %c0_167 = arith.constant 0 : index
    %258 = vector.load %arg3[%c1_165, %c0_166, %c0_167] : memref<3x128x512xf32, #tpu.memory_space<vmem>>, vector<1x128x512xf32>
    %259 = vector.shape_cast %258 : vector<1x128x512xf32> to vector<128x512xf32>
    %cst_168 = arith.constant dense<0.000000e+00> : vector<8x512xf32>
    %260 = tpu.matmul %254, %259, %cst_168 {dimension_numbers = #tpu.dot_dimension_numbers<[1], [0], [0], [1], [0, 0, 1, 1], [], []>} : vector<8x128xf32>, vector<128x512xf32>, vector<8x512xf32> -> vector<8x512xf32>
    %261 = arith.addf %257, %260 : vector<8x512xf32>
    %262 = vector.extract_strided_slice %261 {offsets = [0, 0], sizes = [8, 384], strides = [1, 1]} : vector<8x512xf32> to vector<8x384xf32>
    %263 = arith.negf %262 : vector<8x384xf32>
    %264 = math.exp %263 : vector<8x384xf32>
    %cst_169 = arith.constant 1.000000e+00 : f32
    %265 = vector.broadcast %cst_169 : f32 to vector<8x384xf32>
    %266 = arith.addf %265, %264 : vector<8x384xf32>
    %267 = arith.divf %265, %266 : vector<8x384xf32>
    %268 = vector.extract_strided_slice %261 {offsets = [0, 384], sizes = [8, 128], strides = [1, 1]} : vector<8x512xf32> to vector<8x128xf32>
    %269 = math.tanh %268 : vector<8x128xf32>
    %270 = vector.extract_strided_slice %267 {offsets = [0, 128], sizes = [8, 128], strides = [1, 1]} : vector<8x384xf32> to vector<8x128xf32>
    %271 = arith.mulf %270, %251 : vector<8x128xf32>
    %272 = vector.extract_strided_slice %267 {offsets = [0, 0], sizes = [8, 128], strides = [1, 1]} : vector<8x384xf32> to vector<8x128xf32>
    %273 = arith.mulf %272, %269 : vector<8x128xf32>
    %274 = arith.addf %271, %273 : vector<8x128xf32>
    %275 = vector.extract_strided_slice %267 {offsets = [0, 256], sizes = [8, 128], strides = [1, 1]} : vector<8x384xf32> to vector<8x128xf32>
    %276 = math.tanh %274 : vector<8x128xf32>
    %277 = arith.mulf %275, %276 : vector<8x128xf32>
    %c8_170 = arith.constant 8 : index
    %c0_171 = arith.constant 0 : index
    %278 = vector.load %arg8[%c8_170, %c0_171] : memref<64x128xf32, #tpu.memory_space<vmem>>, vector<8x128xf32>
    tpu.vector_store %arg8[%c8_170, %c0_171], %277 {strides = array<i32>} : memref<64x128xf32, #tpu.memory_space<vmem>>, vector<8x128xf32>,
    %c48_172 = arith.constant 48 : index
    %c0_173 = arith.constant 0 : index
    %279 = vector.load %arg9[%c48_172, %c0_173] : memref<64x128xf32, #tpu.memory_space<vmem>>, vector<8x128xf32>
    tpu.vector_store %arg9[%c48_172, %c0_173], %277 {strides = array<i32>} : memref<64x128xf32, #tpu.memory_space<vmem>>, vector<8x128xf32>,
    %c16_174 = arith.constant 16 : index
    %c0_175 = arith.constant 0 : index
    %280 = vector.load %arg10[%c16_174, %c0_175] : memref<64x512xf32, #tpu.memory_space<vmem>>, vector<8x512xf32>
    %c1_176 = arith.constant 1 : index
    %c0_177 = arith.constant 0 : index
    %c0_178 = arith.constant 0 : index
    %281 = vector.load %arg3[%c1_176, %c0_177, %c0_178] : memref<3x128x512xf32, #tpu.memory_space<vmem>>, vector<1x128x512xf32>
    %282 = vector.shape_cast %281 : vector<1x128x512xf32> to vector<128x512xf32>
    %cst_179 = arith.constant dense<0.000000e+00> : vector<8x512xf32>
    %283 = tpu.matmul %277, %282, %cst_179 {dimension_numbers = #tpu.dot_dimension_numbers<[1], [0], [0], [1], [0, 0, 1, 1], [], []>} : vector<8x128xf32>, vector<128x512xf32>, vector<8x512xf32> -> vector<8x512xf32>
    %284 = arith.addf %280, %283 : vector<8x512xf32>
    %285 = vector.extract_strided_slice %284 {offsets = [0, 0], sizes = [8, 384], strides = [1, 1]} : vector<8x512xf32> to vector<8x384xf32>
    %286 = arith.negf %285 : vector<8x384xf32>
    %287 = math.exp %286 : vector<8x384xf32>
    %cst_180 = arith.constant 1.000000e+00 : f32
    %288 = vector.broadcast %cst_180 : f32 to vector<8x384xf32>
    %289 = arith.addf %288, %287 : vector<8x384xf32>
    %290 = arith.divf %288, %289 : vector<8x384xf32>
    %291 = vector.extract_strided_slice %284 {offsets = [0, 384], sizes = [8, 128], strides = [1, 1]} : vector<8x512xf32> to vector<8x128xf32>
    %292 = math.tanh %291 : vector<8x128xf32>
    %293 = vector.extract_strided_slice %290 {offsets = [0, 128], sizes = [8, 128], strides = [1, 1]} : vector<8x384xf32> to vector<8x128xf32>
    %294 = arith.mulf %293, %274 : vector<8x128xf32>
    %295 = vector.extract_strided_slice %290 {offsets = [0, 0], sizes = [8, 128], strides = [1, 1]} : vector<8x384xf32> to vector<8x128xf32>
    %296 = arith.mulf %295, %292 : vector<8x128xf32>
    %297 = arith.addf %294, %296 : vector<8x128xf32>
    %298 = vector.extract_strided_slice %290 {offsets = [0, 256], sizes = [8, 128], strides = [1, 1]} : vector<8x384xf32> to vector<8x128xf32>
    %299 = math.tanh %297 : vector<8x128xf32>
    %300 = arith.mulf %298, %299 : vector<8x128xf32>
    %c16_181 = arith.constant 16 : index
    %c0_182 = arith.constant 0 : index
    %301 = vector.load %arg8[%c16_181, %c0_182] : memref<64x128xf32, #tpu.memory_space<vmem>>, vector<8x128xf32>
    tpu.vector_store %arg8[%c16_181, %c0_182], %300 {strides = array<i32>} : memref<64x128xf32, #tpu.memory_space<vmem>>, vector<8x128xf32>,
    %c40_183 = arith.constant 40 : index
    %c0_184 = arith.constant 0 : index
    %302 = vector.load %arg9[%c40_183, %c0_184] : memref<64x128xf32, #tpu.memory_space<vmem>>, vector<8x128xf32>
    tpu.vector_store %arg9[%c40_183, %c0_184], %300 {strides = array<i32>} : memref<64x128xf32, #tpu.memory_space<vmem>>, vector<8x128xf32>,
    %c24_185 = arith.constant 24 : index
    %c0_186 = arith.constant 0 : index
    %303 = vector.load %arg10[%c24_185, %c0_186] : memref<64x512xf32, #tpu.memory_space<vmem>>, vector<8x512xf32>
    %c1_187 = arith.constant 1 : index
    %c0_188 = arith.constant 0 : index
    %c0_189 = arith.constant 0 : index
    %304 = vector.load %arg3[%c1_187, %c0_188, %c0_189] : memref<3x128x512xf32, #tpu.memory_space<vmem>>, vector<1x128x512xf32>
    %305 = vector.shape_cast %304 : vector<1x128x512xf32> to vector<128x512xf32>
    %cst_190 = arith.constant dense<0.000000e+00> : vector<8x512xf32>
    %306 = tpu.matmul %300, %305, %cst_190 {dimension_numbers = #tpu.dot_dimension_numbers<[1], [0], [0], [1], [0, 0, 1, 1], [], []>} : vector<8x128xf32>, vector<128x512xf32>, vector<8x512xf32> -> vector<8x512xf32>
    %307 = arith.addf %303, %306 : vector<8x512xf32>
    %308 = vector.extract_strided_slice %307 {offsets = [0, 0], sizes = [8, 384], strides = [1, 1]} : vector<8x512xf32> to vector<8x384xf32>
    %309 = arith.negf %308 : vector<8x384xf32>
    %310 = math.exp %309 : vector<8x384xf32>
    %cst_191 = arith.constant 1.000000e+00 : f32
    %311 = vector.broadcast %cst_191 : f32 to vector<8x384xf32>
    %312 = arith.addf %311, %310 : vector<8x384xf32>
    %313 = arith.divf %311, %312 : vector<8x384xf32>
    %314 = vector.extract_strided_slice %307 {offsets = [0, 384], sizes = [8, 128], strides = [1, 1]} : vector<8x512xf32> to vector<8x128xf32>
    %315 = math.tanh %314 : vector<8x128xf32>
    %316 = vector.extract_strided_slice %313 {offsets = [0, 128], sizes = [8, 128], strides = [1, 1]} : vector<8x384xf32> to vector<8x128xf32>
    %317 = arith.mulf %316, %297 : vector<8x128xf32>
    %318 = vector.extract_strided_slice %313 {offsets = [0, 0], sizes = [8, 128], strides = [1, 1]} : vector<8x384xf32> to vector<8x128xf32>
    %319 = arith.mulf %318, %315 : vector<8x128xf32>
    %320 = arith.addf %317, %319 : vector<8x128xf32>
    %321 = vector.extract_strided_slice %313 {offsets = [0, 256], sizes = [8, 128], strides = [1, 1]} : vector<8x384xf32> to vector<8x128xf32>
    %322 = math.tanh %320 : vector<8x128xf32>
    %323 = arith.mulf %321, %322 : vector<8x128xf32>
    %c24_192 = arith.constant 24 : index
    %c0_193 = arith.constant 0 : index
    %324 = vector.load %arg8[%c24_192, %c0_193] : memref<64x128xf32, #tpu.memory_space<vmem>>, vector<8x128xf32>
    tpu.vector_store %arg8[%c24_192, %c0_193], %323 {strides = array<i32>} : memref<64x128xf32, #tpu.memory_space<vmem>>, vector<8x128xf32>,
    %c32_194 = arith.constant 32 : index
    %c0_195 = arith.constant 0 : index
    %325 = vector.load %arg9[%c32_194, %c0_195] : memref<64x128xf32, #tpu.memory_space<vmem>>, vector<8x128xf32>
    tpu.vector_store %arg9[%c32_194, %c0_195], %323 {strides = array<i32>} : memref<64x128xf32, #tpu.memory_space<vmem>>, vector<8x128xf32>,
    %c32_196 = arith.constant 32 : index
    %c0_197 = arith.constant 0 : index
    %326 = vector.load %arg10[%c32_196, %c0_197] : memref<64x512xf32, #tpu.memory_space<vmem>>, vector<8x512xf32>
    %c1_198 = arith.constant 1 : index
    %c0_199 = arith.constant 0 : index
    %c0_200 = arith.constant 0 : index
    %327 = vector.load %arg3[%c1_198, %c0_199, %c0_200] : memref<3x128x512xf32, #tpu.memory_space<vmem>>, vector<1x128x512xf32>
    %328 = vector.shape_cast %327 : vector<1x128x512xf32> to vector<128x512xf32>
    %cst_201 = arith.constant dense<0.000000e+00> : vector<8x512xf32>
    %329 = tpu.matmul %323, %328, %cst_201 {dimension_numbers = #tpu.dot_dimension_numbers<[1], [0], [0], [1], [0, 0, 1, 1], [], []>} : vector<8x128xf32>, vector<128x512xf32>, vector<8x512xf32> -> vector<8x512xf32>
    %330 = arith.addf %326, %329 : vector<8x512xf32>
    %331 = vector.extract_strided_slice %330 {offsets = [0, 0], sizes = [8, 384], strides = [1, 1]} : vector<8x512xf32> to vector<8x384xf32>
    %332 = arith.negf %331 : vector<8x384xf32>
    %333 = math.exp %332 : vector<8x384xf32>
    %cst_202 = arith.constant 1.000000e+00 : f32
    %334 = vector.broadcast %cst_202 : f32 to vector<8x384xf32>
    %335 = arith.addf %334, %333 : vector<8x384xf32>
    %336 = arith.divf %334, %335 : vector<8x384xf32>
    %337 = vector.extract_strided_slice %330 {offsets = [0, 384], sizes = [8, 128], strides = [1, 1]} : vector<8x512xf32> to vector<8x128xf32>
    %338 = math.tanh %337 : vector<8x128xf32>
    %339 = vector.extract_strided_slice %336 {offsets = [0, 128], sizes = [8, 128], strides = [1, 1]} : vector<8x384xf32> to vector<8x128xf32>
    %340 = arith.mulf %339, %320 : vector<8x128xf32>
    %341 = vector.extract_strided_slice %336 {offsets = [0, 0], sizes = [8, 128], strides = [1, 1]} : vector<8x384xf32> to vector<8x128xf32>
    %342 = arith.mulf %341, %338 : vector<8x128xf32>
    %343 = arith.addf %340, %342 : vector<8x128xf32>
    %344 = vector.extract_strided_slice %336 {offsets = [0, 256], sizes = [8, 128], strides = [1, 1]} : vector<8x384xf32> to vector<8x128xf32>
    %345 = math.tanh %343 : vector<8x128xf32>
    %346 = arith.mulf %344, %345 : vector<8x128xf32>
    %c32_203 = arith.constant 32 : index
    %c0_204 = arith.constant 0 : index
    %347 = vector.load %arg8[%c32_203, %c0_204] : memref<64x128xf32, #tpu.memory_space<vmem>>, vector<8x128xf32>
    tpu.vector_store %arg8[%c32_203, %c0_204], %346 {strides = array<i32>} : memref<64x128xf32, #tpu.memory_space<vmem>>, vector<8x128xf32>,
    %c24_205 = arith.constant 24 : index
    %c0_206 = arith.constant 0 : index
    %348 = vector.load %arg9[%c24_205, %c0_206] : memref<64x128xf32, #tpu.memory_space<vmem>>, vector<8x128xf32>
    tpu.vector_store %arg9[%c24_205, %c0_206], %346 {strides = array<i32>} : memref<64x128xf32, #tpu.memory_space<vmem>>, vector<8x128xf32>,
    %c40_207 = arith.constant 40 : index
    %c0_208 = arith.constant 0 : index
    %349 = vector.load %arg10[%c40_207, %c0_208] : memref<64x512xf32, #tpu.memory_space<vmem>>, vector<8x512xf32>
    %c1_209 = arith.constant 1 : index
    %c0_210 = arith.constant 0 : index
    %c0_211 = arith.constant 0 : index
    %350 = vector.load %arg3[%c1_209, %c0_210, %c0_211] : memref<3x128x512xf32, #tpu.memory_space<vmem>>, vector<1x128x512xf32>
    %351 = vector.shape_cast %350 : vector<1x128x512xf32> to vector<128x512xf32>
    %cst_212 = arith.constant dense<0.000000e+00> : vector<8x512xf32>
    %352 = tpu.matmul %346, %351, %cst_212 {dimension_numbers = #tpu.dot_dimension_numbers<[1], [0], [0], [1], [0, 0, 1, 1], [], []>} : vector<8x128xf32>, vector<128x512xf32>, vector<8x512xf32> -> vector<8x512xf32>
    %353 = arith.addf %349, %352 : vector<8x512xf32>
    %354 = vector.extract_strided_slice %353 {offsets = [0, 0], sizes = [8, 384], strides = [1, 1]} : vector<8x512xf32> to vector<8x384xf32>
    %355 = arith.negf %354 : vector<8x384xf32>
    %356 = math.exp %355 : vector<8x384xf32>
    %cst_213 = arith.constant 1.000000e+00 : f32
    %357 = vector.broadcast %cst_213 : f32 to vector<8x384xf32>
    %358 = arith.addf %357, %356 : vector<8x384xf32>
    %359 = arith.divf %357, %358 : vector<8x384xf32>
    %360 = vector.extract_strided_slice %353 {offsets = [0, 384], sizes = [8, 128], strides = [1, 1]} : vector<8x512xf32> to vector<8x128xf32>
    %361 = math.tanh %360 : vector<8x128xf32>
    %362 = vector.extract_strided_slice %359 {offsets = [0, 128], sizes = [8, 128], strides = [1, 1]} : vector<8x384xf32> to vector<8x128xf32>
    %363 = arith.mulf %362, %343 : vector<8x128xf32>
    %364 = vector.extract_strided_slice %359 {offsets = [0, 0], sizes = [8, 128], strides = [1, 1]} : vector<8x384xf32> to vector<8x128xf32>
    %365 = arith.mulf %364, %361 : vector<8x128xf32>
    %366 = arith.addf %363, %365 : vector<8x128xf32>
    %367 = vector.extract_strided_slice %359 {offsets = [0, 256], sizes = [8, 128], strides = [1, 1]} : vector<8x384xf32> to vector<8x128xf32>
    %368 = math.tanh %366 : vector<8x128xf32>
    %369 = arith.mulf %367, %368 : vector<8x128xf32>
    %c40_214 = arith.constant 40 : index
    %c0_215 = arith.constant 0 : index
    %370 = vector.load %arg8[%c40_214, %c0_215] : memref<64x128xf32, #tpu.memory_space<vmem>>, vector<8x128xf32>
    tpu.vector_store %arg8[%c40_214, %c0_215], %369 {strides = array<i32>} : memref<64x128xf32, #tpu.memory_space<vmem>>, vector<8x128xf32>,
    %c16_216 = arith.constant 16 : index
    %c0_217 = arith.constant 0 : index
    %371 = vector.load %arg9[%c16_216, %c0_217] : memref<64x128xf32, #tpu.memory_space<vmem>>, vector<8x128xf32>
    tpu.vector_store %arg9[%c16_216, %c0_217], %369 {strides = array<i32>} : memref<64x128xf32, #tpu.memory_space<vmem>>, vector<8x128xf32>,
    %c48_218 = arith.constant 48 : index
    %c0_219 = arith.constant 0 : index
    %372 = vector.load %arg10[%c48_218, %c0_219] : memref<64x512xf32, #tpu.memory_space<vmem>>, vector<8x512xf32>
    %c1_220 = arith.constant 1 : index
    %c0_221 = arith.constant 0 : index
    %c0_222 = arith.constant 0 : index
    %373 = vector.load %arg3[%c1_220, %c0_221, %c0_222] : memref<3x128x512xf32, #tpu.memory_space<vmem>>, vector<1x128x512xf32>
    %374 = vector.shape_cast %373 : vector<1x128x512xf32> to vector<128x512xf32>
    %cst_223 = arith.constant dense<0.000000e+00> : vector<8x512xf32>
    %375 = tpu.matmul %369, %374, %cst_223 {dimension_numbers = #tpu.dot_dimension_numbers<[1], [0], [0], [1], [0, 0, 1, 1], [], []>} : vector<8x128xf32>, vector<128x512xf32>, vector<8x512xf32> -> vector<8x512xf32>
    %376 = arith.addf %372, %375 : vector<8x512xf32>
    %377 = vector.extract_strided_slice %376 {offsets = [0, 0], sizes = [8, 384], strides = [1, 1]} : vector<8x512xf32> to vector<8x384xf32>
    %378 = arith.negf %377 : vector<8x384xf32>
    %379 = math.exp %378 : vector<8x384xf32>
    %cst_224 = arith.constant 1.000000e+00 : f32
    %380 = vector.broadcast %cst_224 : f32 to vector<8x384xf32>
    %381 = arith.addf %380, %379 : vector<8x384xf32>
    %382 = arith.divf %380, %381 : vector<8x384xf32>
    %383 = vector.extract_strided_slice %376 {offsets = [0, 384], sizes = [8, 128], strides = [1, 1]} : vector<8x512xf32> to vector<8x128xf32>
    %384 = math.tanh %383 : vector<8x128xf32>
    %385 = vector.extract_strided_slice %382 {offsets = [0, 128], sizes = [8, 128], strides = [1, 1]} : vector<8x384xf32> to vector<8x128xf32>
    %386 = arith.mulf %385, %366 : vector<8x128xf32>
    %387 = vector.extract_strided_slice %382 {offsets = [0, 0], sizes = [8, 128], strides = [1, 1]} : vector<8x384xf32> to vector<8x128xf32>
    %388 = arith.mulf %387, %384 : vector<8x128xf32>
    %389 = arith.addf %386, %388 : vector<8x128xf32>
    %390 = vector.extract_strided_slice %382 {offsets = [0, 256], sizes = [8, 128], strides = [1, 1]} : vector<8x384xf32> to vector<8x128xf32>
    %391 = math.tanh %389 : vector<8x128xf32>
    %392 = arith.mulf %390, %391 : vector<8x128xf32>
    %c48_225 = arith.constant 48 : index
    %c0_226 = arith.constant 0 : index
    %393 = vector.load %arg8[%c48_225, %c0_226] : memref<64x128xf32, #tpu.memory_space<vmem>>, vector<8x128xf32>
    tpu.vector_store %arg8[%c48_225, %c0_226], %392 {strides = array<i32>} : memref<64x128xf32, #tpu.memory_space<vmem>>, vector<8x128xf32>,
    %c8_227 = arith.constant 8 : index
    %c0_228 = arith.constant 0 : index
    %394 = vector.load %arg9[%c8_227, %c0_228] : memref<64x128xf32, #tpu.memory_space<vmem>>, vector<8x128xf32>
    tpu.vector_store %arg9[%c8_227, %c0_228], %392 {strides = array<i32>} : memref<64x128xf32, #tpu.memory_space<vmem>>, vector<8x128xf32>,
    %c56_229 = arith.constant 56 : index
    %c0_230 = arith.constant 0 : index
    %395 = vector.load %arg10[%c56_229, %c0_230] : memref<64x512xf32, #tpu.memory_space<vmem>>, vector<8x512xf32>
    %c1_231 = arith.constant 1 : index
    %c0_232 = arith.constant 0 : index
    %c0_233 = arith.constant 0 : index
    %396 = vector.load %arg3[%c1_231, %c0_232, %c0_233] : memref<3x128x512xf32, #tpu.memory_space<vmem>>, vector<1x128x512xf32>
    %397 = vector.shape_cast %396 : vector<1x128x512xf32> to vector<128x512xf32>
    %cst_234 = arith.constant dense<0.000000e+00> : vector<8x512xf32>
    %398 = tpu.matmul %392, %397, %cst_234 {dimension_numbers = #tpu.dot_dimension_numbers<[1], [0], [0], [1], [0, 0, 1, 1], [], []>} : vector<8x128xf32>, vector<128x512xf32>, vector<8x512xf32> -> vector<8x512xf32>
    %399 = arith.addf %395, %398 : vector<8x512xf32>
    %400 = vector.extract_strided_slice %399 {offsets = [0, 0], sizes = [8, 384], strides = [1, 1]} : vector<8x512xf32> to vector<8x384xf32>
    %401 = arith.negf %400 : vector<8x384xf32>
    %402 = math.exp %401 : vector<8x384xf32>
    %cst_235 = arith.constant 1.000000e+00 : f32
    %403 = vector.broadcast %cst_235 : f32 to vector<8x384xf32>
    %404 = arith.addf %403, %402 : vector<8x384xf32>
    %405 = arith.divf %403, %404 : vector<8x384xf32>
    %406 = vector.extract_strided_slice %399 {offsets = [0, 384], sizes = [8, 128], strides = [1, 1]} : vector<8x512xf32> to vector<8x128xf32>
    %407 = math.tanh %406 : vector<8x128xf32>
    %408 = vector.extract_strided_slice %405 {offsets = [0, 128], sizes = [8, 128], strides = [1, 1]} : vector<8x384xf32> to vector<8x128xf32>
    %409 = arith.mulf %408, %389 : vector<8x128xf32>
    %410 = vector.extract_strided_slice %405 {offsets = [0, 0], sizes = [8, 128], strides = [1, 1]} : vector<8x384xf32> to vector<8x128xf32>
    %411 = arith.mulf %410, %407 : vector<8x128xf32>
    %412 = arith.addf %409, %411 : vector<8x128xf32>
    %413 = vector.extract_strided_slice %405 {offsets = [0, 256], sizes = [8, 128], strides = [1, 1]} : vector<8x384xf32> to vector<8x128xf32>
    %414 = math.tanh %412 : vector<8x128xf32>
    %415 = arith.mulf %413, %414 : vector<8x128xf32>
    %c56_236 = arith.constant 56 : index
    %c0_237 = arith.constant 0 : index
    %416 = vector.load %arg8[%c56_236, %c0_237] : memref<64x128xf32, #tpu.memory_space<vmem>>, vector<8x128xf32>
    tpu.vector_store %arg8[%c56_236, %c0_237], %415 {strides = array<i32>} : memref<64x128xf32, #tpu.memory_space<vmem>>, vector<8x128xf32>,
    %c0_238 = arith.constant 0 : index
    %c0_239 = arith.constant 0 : index
    %417 = vector.load %arg9[%c0_238, %c0_239] : memref<64x128xf32, #tpu.memory_space<vmem>>, vector<8x128xf32>
    tpu.vector_store %arg9[%c0_238, %c0_239], %415 {strides = array<i32>} : memref<64x128xf32, #tpu.memory_space<vmem>>, vector<8x128xf32>,
    %c0_240 = arith.constant 0 : index
    %c0_241 = arith.constant 0 : index
    %418 = vector.load %arg8[%c0_240, %c0_241] : memref<64x128xf32, #tpu.memory_space<vmem>>, vector<64x128xf32>
    %c2 = arith.constant 2 : index
    %c0_242 = arith.constant 0 : index
    %c0_243 = arith.constant 0 : index
    %419 = vector.load %arg1[%c2, %c0_242, %c0_243] : memref<3x128x512xf32, #tpu.memory_space<vmem>>, vector<1x128x512xf32>
    %420 = vector.shape_cast %419 : vector<1x128x512xf32> to vector<128x512xf32>
    %cst_244 = arith.constant dense<0.000000e+00> : vector<64x512xf32>
    %421 = tpu.matmul %418, %420, %cst_244 {dimension_numbers = #tpu.dot_dimension_numbers<[1], [0], [0], [1], [0, 0, 1, 1], [], []>} : vector<64x128xf32>, vector<128x512xf32>, vector<64x512xf32> -> vector<64x512xf32>
    %c0_245 = arith.constant 0 : index
    %c0_246 = arith.constant 0 : index
    %422 = vector.load %arg9[%c0_245, %c0_246] : memref<64x128xf32, #tpu.memory_space<vmem>>, vector<64x128xf32>
    %c2_247 = arith.constant 2 : index
    %c0_248 = arith.constant 0 : index
    %c0_249 = arith.constant 0 : index
    %423 = vector.load %arg2[%c2_247, %c0_248, %c0_249] : memref<3x128x512xf32, #tpu.memory_space<vmem>>, vector<1x128x512xf32>
    %424 = vector.shape_cast %423 : vector<1x128x512xf32> to vector<128x512xf32>
    %cst_250 = arith.constant dense<0.000000e+00> : vector<64x512xf32>
    %425 = tpu.matmul %422, %424, %cst_250 {dimension_numbers = #tpu.dot_dimension_numbers<[1], [0], [0], [1], [0, 0, 1, 1], [], []>} : vector<64x128xf32>, vector<128x512xf32>, vector<64x512xf32> -> vector<64x512xf32>
    %426 = arith.addf %421, %425 : vector<64x512xf32>
    %c2_251 = arith.constant 2 : index
    %c0_252 = arith.constant 0 : index
    %c0_253 = arith.constant 0 : index
    %427 = vector.load %arg4[%c2_251, %c0_252, %c0_253] : memref<3x1x512xf32, #tpu.memory_space<vmem>>, vector<1x1x512xf32>
    %428 = vector.shape_cast %427 : vector<1x1x512xf32> to vector<1x512xf32>
    %429 = vector.broadcast %428 : vector<1x512xf32> to vector<64x512xf32>
    %430 = arith.addf %426, %429 : vector<64x512xf32>
    %c0_254 = arith.constant 0 : index
    %c0_255 = arith.constant 0 : index
    %431 = vector.load %arg10[%c0_254, %c0_255] : memref<64x512xf32, #tpu.memory_space<vmem>>, vector<64x512xf32>
    tpu.vector_store %arg10[%c0_254, %c0_255], %430 {strides = array<i32>} : memref<64x512xf32, #tpu.memory_space<vmem>>, vector<64x512xf32>,
    %cst_256 = arith.constant 0.000000e+00 : f32
    %432 = vector.broadcast %cst_256 : f32 to vector<8x128xf32>
    %cst_257 = arith.constant 0.000000e+00 : f32
    %433 = vector.broadcast %cst_257 : f32 to vector<8x128xf32>
    %c0_258 = arith.constant 0 : index
    %c0_259 = arith.constant 0 : index
    %434 = vector.load %arg10[%c0_258, %c0_259] : memref<64x512xf32, #tpu.memory_space<vmem>>, vector<8x512xf32>
    %c2_260 = arith.constant 2 : index
    %c0_261 = arith.constant 0 : index
    %c0_262 = arith.constant 0 : index
    %435 = vector.load %arg3[%c2_260, %c0_261, %c0_262] : memref<3x128x512xf32, #tpu.memory_space<vmem>>, vector<1x128x512xf32>
    %436 = vector.shape_cast %435 : vector<1x128x512xf32> to vector<128x512xf32>
    %cst_263 = arith.constant dense<0.000000e+00> : vector<8x512xf32>
    %437 = tpu.matmul %432, %436, %cst_263 {dimension_numbers = #tpu.dot_dimension_numbers<[1], [0], [0], [1], [0, 0, 1, 1], [], []>} : vector<8x128xf32>, vector<128x512xf32>, vector<8x512xf32> -> vector<8x512xf32>
    %438 = arith.addf %434, %437 : vector<8x512xf32>
    %439 = vector.extract_strided_slice %438 {offsets = [0, 0], sizes = [8, 384], strides = [1, 1]} : vector<8x512xf32> to vector<8x384xf32>
    %440 = arith.negf %439 : vector<8x384xf32>
    %441 = math.exp %440 : vector<8x384xf32>
    %cst_264 = arith.constant 1.000000e+00 : f32
    %442 = vector.broadcast %cst_264 : f32 to vector<8x384xf32>
    %443 = arith.addf %442, %441 : vector<8x384xf32>
    %444 = arith.divf %442, %443 : vector<8x384xf32>
    %445 = vector.extract_strided_slice %438 {offsets = [0, 384], sizes = [8, 128], strides = [1, 1]} : vector<8x512xf32> to vector<8x128xf32>
    %446 = math.tanh %445 : vector<8x128xf32>
    %447 = vector.extract_strided_slice %444 {offsets = [0, 128], sizes = [8, 128], strides = [1, 1]} : vector<8x384xf32> to vector<8x128xf32>
    %448 = arith.mulf %447, %433 : vector<8x128xf32>
    %449 = vector.extract_strided_slice %444 {offsets = [0, 0], sizes = [8, 128], strides = [1, 1]} : vector<8x384xf32> to vector<8x128xf32>
    %450 = arith.mulf %449, %446 : vector<8x128xf32>
    %451 = arith.addf %448, %450 : vector<8x128xf32>
    %452 = vector.extract_strided_slice %444 {offsets = [0, 256], sizes = [8, 128], strides = [1, 1]} : vector<8x384xf32> to vector<8x128xf32>
    %453 = math.tanh %451 : vector<8x128xf32>
    %454 = arith.mulf %452, %453 : vector<8x128xf32>
    %c0_265 = arith.constant 0 : index
    %c0_266 = arith.constant 0 : index
    %455 = vector.load %arg8[%c0_265, %c0_266] : memref<64x128xf32, #tpu.memory_space<vmem>>, vector<8x128xf32>
    tpu.vector_store %arg8[%c0_265, %c0_266], %454 {strides = array<i32>} : memref<64x128xf32, #tpu.memory_space<vmem>>, vector<8x128xf32>,
    %c56_267 = arith.constant 56 : index
    %c0_268 = arith.constant 0 : index
    %456 = vector.load %arg9[%c56_267, %c0_268] : memref<64x128xf32, #tpu.memory_space<vmem>>, vector<8x128xf32>
    tpu.vector_store %arg9[%c56_267, %c0_268], %454 {strides = array<i32>} : memref<64x128xf32, #tpu.memory_space<vmem>>, vector<8x128xf32>,
    %c8_269 = arith.constant 8 : index
    %c0_270 = arith.constant 0 : index
    %457 = vector.load %arg10[%c8_269, %c0_270] : memref<64x512xf32, #tpu.memory_space<vmem>>, vector<8x512xf32>
    %c2_271 = arith.constant 2 : index
    %c0_272 = arith.constant 0 : index
    %c0_273 = arith.constant 0 : index
    %458 = vector.load %arg3[%c2_271, %c0_272, %c0_273] : memref<3x128x512xf32, #tpu.memory_space<vmem>>, vector<1x128x512xf32>
    %459 = vector.shape_cast %458 : vector<1x128x512xf32> to vector<128x512xf32>
    %cst_274 = arith.constant dense<0.000000e+00> : vector<8x512xf32>
    %460 = tpu.matmul %454, %459, %cst_274 {dimension_numbers = #tpu.dot_dimension_numbers<[1], [0], [0], [1], [0, 0, 1, 1], [], []>} : vector<8x128xf32>, vector<128x512xf32>, vector<8x512xf32> -> vector<8x512xf32>
    %461 = arith.addf %457, %460 : vector<8x512xf32>
    %462 = vector.extract_strided_slice %461 {offsets = [0, 0], sizes = [8, 384], strides = [1, 1]} : vector<8x512xf32> to vector<8x384xf32>
    %463 = arith.negf %462 : vector<8x384xf32>
    %464 = math.exp %463 : vector<8x384xf32>
    %cst_275 = arith.constant 1.000000e+00 : f32
    %465 = vector.broadcast %cst_275 : f32 to vector<8x384xf32>
    %466 = arith.addf %465, %464 : vector<8x384xf32>
    %467 = arith.divf %465, %466 : vector<8x384xf32>
    %468 = vector.extract_strided_slice %461 {offsets = [0, 384], sizes = [8, 128], strides = [1, 1]} : vector<8x512xf32> to vector<8x128xf32>
    %469 = math.tanh %468 : vector<8x128xf32>
    %470 = vector.extract_strided_slice %467 {offsets = [0, 128], sizes = [8, 128], strides = [1, 1]} : vector<8x384xf32> to vector<8x128xf32>
    %471 = arith.mulf %470, %451 : vector<8x128xf32>
    %472 = vector.extract_strided_slice %467 {offsets = [0, 0], sizes = [8, 128], strides = [1, 1]} : vector<8x384xf32> to vector<8x128xf32>
    %473 = arith.mulf %472, %469 : vector<8x128xf32>
    %474 = arith.addf %471, %473 : vector<8x128xf32>
    %475 = vector.extract_strided_slice %467 {offsets = [0, 256], sizes = [8, 128], strides = [1, 1]} : vector<8x384xf32> to vector<8x128xf32>
    %476 = math.tanh %474 : vector<8x128xf32>
    %477 = arith.mulf %475, %476 : vector<8x128xf32>
    %c8_276 = arith.constant 8 : index
    %c0_277 = arith.constant 0 : index
    %478 = vector.load %arg8[%c8_276, %c0_277] : memref<64x128xf32, #tpu.memory_space<vmem>>, vector<8x128xf32>
    tpu.vector_store %arg8[%c8_276, %c0_277], %477 {strides = array<i32>} : memref<64x128xf32, #tpu.memory_space<vmem>>, vector<8x128xf32>,
    %c48_278 = arith.constant 48 : index
    %c0_279 = arith.constant 0 : index
    %479 = vector.load %arg9[%c48_278, %c0_279] : memref<64x128xf32, #tpu.memory_space<vmem>>, vector<8x128xf32>
    tpu.vector_store %arg9[%c48_278, %c0_279], %477 {strides = array<i32>} : memref<64x128xf32, #tpu.memory_space<vmem>>, vector<8x128xf32>,
    %c16_280 = arith.constant 16 : index
    %c0_281 = arith.constant 0 : index
    %480 = vector.load %arg10[%c16_280, %c0_281] : memref<64x512xf32, #tpu.memory_space<vmem>>, vector<8x512xf32>
    %c2_282 = arith.constant 2 : index
    %c0_283 = arith.constant 0 : index
    %c0_284 = arith.constant 0 : index
    %481 = vector.load %arg3[%c2_282, %c0_283, %c0_284] : memref<3x128x512xf32, #tpu.memory_space<vmem>>, vector<1x128x512xf32>
    %482 = vector.shape_cast %481 : vector<1x128x512xf32> to vector<128x512xf32>
    %cst_285 = arith.constant dense<0.000000e+00> : vector<8x512xf32>
    %483 = tpu.matmul %477, %482, %cst_285 {dimension_numbers = #tpu.dot_dimension_numbers<[1], [0], [0], [1], [0, 0, 1, 1], [], []>} : vector<8x128xf32>, vector<128x512xf32>, vector<8x512xf32> -> vector<8x512xf32>
    %484 = arith.addf %480, %483 : vector<8x512xf32>
    %485 = vector.extract_strided_slice %484 {offsets = [0, 0], sizes = [8, 384], strides = [1, 1]} : vector<8x512xf32> to vector<8x384xf32>
    %486 = arith.negf %485 : vector<8x384xf32>
    %487 = math.exp %486 : vector<8x384xf32>
    %cst_286 = arith.constant 1.000000e+00 : f32
    %488 = vector.broadcast %cst_286 : f32 to vector<8x384xf32>
    %489 = arith.addf %488, %487 : vector<8x384xf32>
    %490 = arith.divf %488, %489 : vector<8x384xf32>
    %491 = vector.extract_strided_slice %484 {offsets = [0, 384], sizes = [8, 128], strides = [1, 1]} : vector<8x512xf32> to vector<8x128xf32>
    %492 = math.tanh %491 : vector<8x128xf32>
    %493 = vector.extract_strided_slice %490 {offsets = [0, 128], sizes = [8, 128], strides = [1, 1]} : vector<8x384xf32> to vector<8x128xf32>
    %494 = arith.mulf %493, %474 : vector<8x128xf32>
    %495 = vector.extract_strided_slice %490 {offsets = [0, 0], sizes = [8, 128], strides = [1, 1]} : vector<8x384xf32> to vector<8x128xf32>
    %496 = arith.mulf %495, %492 : vector<8x128xf32>
    %497 = arith.addf %494, %496 : vector<8x128xf32>
    %498 = vector.extract_strided_slice %490 {offsets = [0, 256], sizes = [8, 128], strides = [1, 1]} : vector<8x384xf32> to vector<8x128xf32>
    %499 = math.tanh %497 : vector<8x128xf32>
    %500 = arith.mulf %498, %499 : vector<8x128xf32>
    %c16_287 = arith.constant 16 : index
    %c0_288 = arith.constant 0 : index
    %501 = vector.load %arg8[%c16_287, %c0_288] : memref<64x128xf32, #tpu.memory_space<vmem>>, vector<8x128xf32>
    tpu.vector_store %arg8[%c16_287, %c0_288], %500 {strides = array<i32>} : memref<64x128xf32, #tpu.memory_space<vmem>>, vector<8x128xf32>,
    %c40_289 = arith.constant 40 : index
    %c0_290 = arith.constant 0 : index
    %502 = vector.load %arg9[%c40_289, %c0_290] : memref<64x128xf32, #tpu.memory_space<vmem>>, vector<8x128xf32>
    tpu.vector_store %arg9[%c40_289, %c0_290], %500 {strides = array<i32>} : memref<64x128xf32, #tpu.memory_space<vmem>>, vector<8x128xf32>,
    %c24_291 = arith.constant 24 : index
    %c0_292 = arith.constant 0 : index
    %503 = vector.load %arg10[%c24_291, %c0_292] : memref<64x512xf32, #tpu.memory_space<vmem>>, vector<8x512xf32>
    %c2_293 = arith.constant 2 : index
    %c0_294 = arith.constant 0 : index
    %c0_295 = arith.constant 0 : index
    %504 = vector.load %arg3[%c2_293, %c0_294, %c0_295] : memref<3x128x512xf32, #tpu.memory_space<vmem>>, vector<1x128x512xf32>
    %505 = vector.shape_cast %504 : vector<1x128x512xf32> to vector<128x512xf32>
    %cst_296 = arith.constant dense<0.000000e+00> : vector<8x512xf32>
    %506 = tpu.matmul %500, %505, %cst_296 {dimension_numbers = #tpu.dot_dimension_numbers<[1], [0], [0], [1], [0, 0, 1, 1], [], []>} : vector<8x128xf32>, vector<128x512xf32>, vector<8x512xf32> -> vector<8x512xf32>
    %507 = arith.addf %503, %506 : vector<8x512xf32>
    %508 = vector.extract_strided_slice %507 {offsets = [0, 0], sizes = [8, 384], strides = [1, 1]} : vector<8x512xf32> to vector<8x384xf32>
    %509 = arith.negf %508 : vector<8x384xf32>
    %510 = math.exp %509 : vector<8x384xf32>
    %cst_297 = arith.constant 1.000000e+00 : f32
    %511 = vector.broadcast %cst_297 : f32 to vector<8x384xf32>
    %512 = arith.addf %511, %510 : vector<8x384xf32>
    %513 = arith.divf %511, %512 : vector<8x384xf32>
    %514 = vector.extract_strided_slice %507 {offsets = [0, 384], sizes = [8, 128], strides = [1, 1]} : vector<8x512xf32> to vector<8x128xf32>
    %515 = math.tanh %514 : vector<8x128xf32>
    %516 = vector.extract_strided_slice %513 {offsets = [0, 128], sizes = [8, 128], strides = [1, 1]} : vector<8x384xf32> to vector<8x128xf32>
    %517 = arith.mulf %516, %497 : vector<8x128xf32>
    %518 = vector.extract_strided_slice %513 {offsets = [0, 0], sizes = [8, 128], strides = [1, 1]} : vector<8x384xf32> to vector<8x128xf32>
    %519 = arith.mulf %518, %515 : vector<8x128xf32>
    %520 = arith.addf %517, %519 : vector<8x128xf32>
    %521 = vector.extract_strided_slice %513 {offsets = [0, 256], sizes = [8, 128], strides = [1, 1]} : vector<8x384xf32> to vector<8x128xf32>
    %522 = math.tanh %520 : vector<8x128xf32>
    %523 = arith.mulf %521, %522 : vector<8x128xf32>
    %c24_298 = arith.constant 24 : index
    %c0_299 = arith.constant 0 : index
    %524 = vector.load %arg8[%c24_298, %c0_299] : memref<64x128xf32, #tpu.memory_space<vmem>>, vector<8x128xf32>
    tpu.vector_store %arg8[%c24_298, %c0_299], %523 {strides = array<i32>} : memref<64x128xf32, #tpu.memory_space<vmem>>, vector<8x128xf32>,
    %c32_300 = arith.constant 32 : index
    %c0_301 = arith.constant 0 : index
    %525 = vector.load %arg9[%c32_300, %c0_301] : memref<64x128xf32, #tpu.memory_space<vmem>>, vector<8x128xf32>
    tpu.vector_store %arg9[%c32_300, %c0_301], %523 {strides = array<i32>} : memref<64x128xf32, #tpu.memory_space<vmem>>, vector<8x128xf32>,
    %c32_302 = arith.constant 32 : index
    %c0_303 = arith.constant 0 : index
    %526 = vector.load %arg10[%c32_302, %c0_303] : memref<64x512xf32, #tpu.memory_space<vmem>>, vector<8x512xf32>
    %c2_304 = arith.constant 2 : index
    %c0_305 = arith.constant 0 : index
    %c0_306 = arith.constant 0 : index
    %527 = vector.load %arg3[%c2_304, %c0_305, %c0_306] : memref<3x128x512xf32, #tpu.memory_space<vmem>>, vector<1x128x512xf32>
    %528 = vector.shape_cast %527 : vector<1x128x512xf32> to vector<128x512xf32>
    %cst_307 = arith.constant dense<0.000000e+00> : vector<8x512xf32>
    %529 = tpu.matmul %523, %528, %cst_307 {dimension_numbers = #tpu.dot_dimension_numbers<[1], [0], [0], [1], [0, 0, 1, 1], [], []>} : vector<8x128xf32>, vector<128x512xf32>, vector<8x512xf32> -> vector<8x512xf32>
    %530 = arith.addf %526, %529 : vector<8x512xf32>
    %531 = vector.extract_strided_slice %530 {offsets = [0, 0], sizes = [8, 384], strides = [1, 1]} : vector<8x512xf32> to vector<8x384xf32>
    %532 = arith.negf %531 : vector<8x384xf32>
    %533 = math.exp %532 : vector<8x384xf32>
    %cst_308 = arith.constant 1.000000e+00 : f32
    %534 = vector.broadcast %cst_308 : f32 to vector<8x384xf32>
    %535 = arith.addf %534, %533 : vector<8x384xf32>
    %536 = arith.divf %534, %535 : vector<8x384xf32>
    %537 = vector.extract_strided_slice %530 {offsets = [0, 384], sizes = [8, 128], strides = [1, 1]} : vector<8x512xf32> to vector<8x128xf32>
    %538 = math.tanh %537 : vector<8x128xf32>
    %539 = vector.extract_strided_slice %536 {offsets = [0, 128], sizes = [8, 128], strides = [1, 1]} : vector<8x384xf32> to vector<8x128xf32>
    %540 = arith.mulf %539, %520 : vector<8x128xf32>
    %541 = vector.extract_strided_slice %536 {offsets = [0, 0], sizes = [8, 128], strides = [1, 1]} : vector<8x384xf32> to vector<8x128xf32>
    %542 = arith.mulf %541, %538 : vector<8x128xf32>
    %543 = arith.addf %540, %542 : vector<8x128xf32>
    %544 = vector.extract_strided_slice %536 {offsets = [0, 256], sizes = [8, 128], strides = [1, 1]} : vector<8x384xf32> to vector<8x128xf32>
    %545 = math.tanh %543 : vector<8x128xf32>
    %546 = arith.mulf %544, %545 : vector<8x128xf32>
    %c32_309 = arith.constant 32 : index
    %c0_310 = arith.constant 0 : index
    %547 = vector.load %arg8[%c32_309, %c0_310] : memref<64x128xf32, #tpu.memory_space<vmem>>, vector<8x128xf32>
    tpu.vector_store %arg8[%c32_309, %c0_310], %546 {strides = array<i32>} : memref<64x128xf32, #tpu.memory_space<vmem>>, vector<8x128xf32>,
    %c24_311 = arith.constant 24 : index
    %c0_312 = arith.constant 0 : index
    %548 = vector.load %arg9[%c24_311, %c0_312] : memref<64x128xf32, #tpu.memory_space<vmem>>, vector<8x128xf32>
    tpu.vector_store %arg9[%c24_311, %c0_312], %546 {strides = array<i32>} : memref<64x128xf32, #tpu.memory_space<vmem>>, vector<8x128xf32>,
    %c40_313 = arith.constant 40 : index
    %c0_314 = arith.constant 0 : index
    %549 = vector.load %arg10[%c40_313, %c0_314] : memref<64x512xf32, #tpu.memory_space<vmem>>, vector<8x512xf32>
    %c2_315 = arith.constant 2 : index
    %c0_316 = arith.constant 0 : index
    %c0_317 = arith.constant 0 : index
    %550 = vector.load %arg3[%c2_315, %c0_316, %c0_317] : memref<3x128x512xf32, #tpu.memory_space<vmem>>, vector<1x128x512xf32>
    %551 = vector.shape_cast %550 : vector<1x128x512xf32> to vector<128x512xf32>
    %cst_318 = arith.constant dense<0.000000e+00> : vector<8x512xf32>
    %552 = tpu.matmul %546, %551, %cst_318 {dimension_numbers = #tpu.dot_dimension_numbers<[1], [0], [0], [1], [0, 0, 1, 1], [], []>} : vector<8x128xf32>, vector<128x512xf32>, vector<8x512xf32> -> vector<8x512xf32>
    %553 = arith.addf %549, %552 : vector<8x512xf32>
    %554 = vector.extract_strided_slice %553 {offsets = [0, 0], sizes = [8, 384], strides = [1, 1]} : vector<8x512xf32> to vector<8x384xf32>
    %555 = arith.negf %554 : vector<8x384xf32>
    %556 = math.exp %555 : vector<8x384xf32>
    %cst_319 = arith.constant 1.000000e+00 : f32
    %557 = vector.broadcast %cst_319 : f32 to vector<8x384xf32>
    %558 = arith.addf %557, %556 : vector<8x384xf32>
    %559 = arith.divf %557, %558 : vector<8x384xf32>
    %560 = vector.extract_strided_slice %553 {offsets = [0, 384], sizes = [8, 128], strides = [1, 1]} : vector<8x512xf32> to vector<8x128xf32>
    %561 = math.tanh %560 : vector<8x128xf32>
    %562 = vector.extract_strided_slice %559 {offsets = [0, 128], sizes = [8, 128], strides = [1, 1]} : vector<8x384xf32> to vector<8x128xf32>
    %563 = arith.mulf %562, %543 : vector<8x128xf32>
    %564 = vector.extract_strided_slice %559 {offsets = [0, 0], sizes = [8, 128], strides = [1, 1]} : vector<8x384xf32> to vector<8x128xf32>
    %565 = arith.mulf %564, %561 : vector<8x128xf32>
    %566 = arith.addf %563, %565 : vector<8x128xf32>
    %567 = vector.extract_strided_slice %559 {offsets = [0, 256], sizes = [8, 128], strides = [1, 1]} : vector<8x384xf32> to vector<8x128xf32>
    %568 = math.tanh %566 : vector<8x128xf32>
    %569 = arith.mulf %567, %568 : vector<8x128xf32>
    %c40_320 = arith.constant 40 : index
    %c0_321 = arith.constant 0 : index
    %570 = vector.load %arg8[%c40_320, %c0_321] : memref<64x128xf32, #tpu.memory_space<vmem>>, vector<8x128xf32>
    tpu.vector_store %arg8[%c40_320, %c0_321], %569 {strides = array<i32>} : memref<64x128xf32, #tpu.memory_space<vmem>>, vector<8x128xf32>,
    %c16_322 = arith.constant 16 : index
    %c0_323 = arith.constant 0 : index
    %571 = vector.load %arg9[%c16_322, %c0_323] : memref<64x128xf32, #tpu.memory_space<vmem>>, vector<8x128xf32>
    tpu.vector_store %arg9[%c16_322, %c0_323], %569 {strides = array<i32>} : memref<64x128xf32, #tpu.memory_space<vmem>>, vector<8x128xf32>,
    %c48_324 = arith.constant 48 : index
    %c0_325 = arith.constant 0 : index
    %572 = vector.load %arg10[%c48_324, %c0_325] : memref<64x512xf32, #tpu.memory_space<vmem>>, vector<8x512xf32>
    %c2_326 = arith.constant 2 : index
    %c0_327 = arith.constant 0 : index
    %c0_328 = arith.constant 0 : index
    %573 = vector.load %arg3[%c2_326, %c0_327, %c0_328] : memref<3x128x512xf32, #tpu.memory_space<vmem>>, vector<1x128x512xf32>
    %574 = vector.shape_cast %573 : vector<1x128x512xf32> to vector<128x512xf32>
    %cst_329 = arith.constant dense<0.000000e+00> : vector<8x512xf32>
    %575 = tpu.matmul %569, %574, %cst_329 {dimension_numbers = #tpu.dot_dimension_numbers<[1], [0], [0], [1], [0, 0, 1, 1], [], []>} : vector<8x128xf32>, vector<128x512xf32>, vector<8x512xf32> -> vector<8x512xf32>
    %576 = arith.addf %572, %575 : vector<8x512xf32>
    %577 = vector.extract_strided_slice %576 {offsets = [0, 0], sizes = [8, 384], strides = [1, 1]} : vector<8x512xf32> to vector<8x384xf32>
    %578 = arith.negf %577 : vector<8x384xf32>
    %579 = math.exp %578 : vector<8x384xf32>
    %cst_330 = arith.constant 1.000000e+00 : f32
    %580 = vector.broadcast %cst_330 : f32 to vector<8x384xf32>
    %581 = arith.addf %580, %579 : vector<8x384xf32>
    %582 = arith.divf %580, %581 : vector<8x384xf32>
    %583 = vector.extract_strided_slice %576 {offsets = [0, 384], sizes = [8, 128], strides = [1, 1]} : vector<8x512xf32> to vector<8x128xf32>
    %584 = math.tanh %583 : vector<8x128xf32>
    %585 = vector.extract_strided_slice %582 {offsets = [0, 128], sizes = [8, 128], strides = [1, 1]} : vector<8x384xf32> to vector<8x128xf32>
    %586 = arith.mulf %585, %566 : vector<8x128xf32>
    %587 = vector.extract_strided_slice %582 {offsets = [0, 0], sizes = [8, 128], strides = [1, 1]} : vector<8x384xf32> to vector<8x128xf32>
    %588 = arith.mulf %587, %584 : vector<8x128xf32>
    %589 = arith.addf %586, %588 : vector<8x128xf32>
    %590 = vector.extract_strided_slice %582 {offsets = [0, 256], sizes = [8, 128], strides = [1, 1]} : vector<8x384xf32> to vector<8x128xf32>
    %591 = math.tanh %589 : vector<8x128xf32>
    %592 = arith.mulf %590, %591 : vector<8x128xf32>
    %c48_331 = arith.constant 48 : index
    %c0_332 = arith.constant 0 : index
    %593 = vector.load %arg8[%c48_331, %c0_332] : memref<64x128xf32, #tpu.memory_space<vmem>>, vector<8x128xf32>
    tpu.vector_store %arg8[%c48_331, %c0_332], %592 {strides = array<i32>} : memref<64x128xf32, #tpu.memory_space<vmem>>, vector<8x128xf32>,
    %c8_333 = arith.constant 8 : index
    %c0_334 = arith.constant 0 : index
    %594 = vector.load %arg9[%c8_333, %c0_334] : memref<64x128xf32, #tpu.memory_space<vmem>>, vector<8x128xf32>
    tpu.vector_store %arg9[%c8_333, %c0_334], %592 {strides = array<i32>} : memref<64x128xf32, #tpu.memory_space<vmem>>, vector<8x128xf32>,
    %c56_335 = arith.constant 56 : index
    %c0_336 = arith.constant 0 : index
    %595 = vector.load %arg10[%c56_335, %c0_336] : memref<64x512xf32, #tpu.memory_space<vmem>>, vector<8x512xf32>
    %c2_337 = arith.constant 2 : index
    %c0_338 = arith.constant 0 : index
    %c0_339 = arith.constant 0 : index
    %596 = vector.load %arg3[%c2_337, %c0_338, %c0_339] : memref<3x128x512xf32, #tpu.memory_space<vmem>>, vector<1x128x512xf32>
    %597 = vector.shape_cast %596 : vector<1x128x512xf32> to vector<128x512xf32>
    %cst_340 = arith.constant dense<0.000000e+00> : vector<8x512xf32>
    %598 = tpu.matmul %592, %597, %cst_340 {dimension_numbers = #tpu.dot_dimension_numbers<[1], [0], [0], [1], [0, 0, 1, 1], [], []>} : vector<8x128xf32>, vector<128x512xf32>, vector<8x512xf32> -> vector<8x512xf32>
    %599 = arith.addf %595, %598 : vector<8x512xf32>
    %600 = vector.extract_strided_slice %599 {offsets = [0, 0], sizes = [8, 384], strides = [1, 1]} : vector<8x512xf32> to vector<8x384xf32>
    %601 = arith.negf %600 : vector<8x384xf32>
    %602 = math.exp %601 : vector<8x384xf32>
    %cst_341 = arith.constant 1.000000e+00 : f32
    %603 = vector.broadcast %cst_341 : f32 to vector<8x384xf32>
    %604 = arith.addf %603, %602 : vector<8x384xf32>
    %605 = arith.divf %603, %604 : vector<8x384xf32>
    %606 = vector.extract_strided_slice %599 {offsets = [0, 384], sizes = [8, 128], strides = [1, 1]} : vector<8x512xf32> to vector<8x128xf32>
    %607 = math.tanh %606 : vector<8x128xf32>
    %608 = vector.extract_strided_slice %605 {offsets = [0, 128], sizes = [8, 128], strides = [1, 1]} : vector<8x384xf32> to vector<8x128xf32>
    %609 = arith.mulf %608, %589 : vector<8x128xf32>
    %610 = vector.extract_strided_slice %605 {offsets = [0, 0], sizes = [8, 128], strides = [1, 1]} : vector<8x384xf32> to vector<8x128xf32>
    %611 = arith.mulf %610, %607 : vector<8x128xf32>
    %612 = arith.addf %609, %611 : vector<8x128xf32>
    %613 = vector.extract_strided_slice %605 {offsets = [0, 256], sizes = [8, 128], strides = [1, 1]} : vector<8x384xf32> to vector<8x128xf32>
    %614 = math.tanh %612 : vector<8x128xf32>
    %615 = arith.mulf %613, %614 : vector<8x128xf32>
    %c56_342 = arith.constant 56 : index
    %c0_343 = arith.constant 0 : index
    %616 = vector.load %arg8[%c56_342, %c0_343] : memref<64x128xf32, #tpu.memory_space<vmem>>, vector<8x128xf32>
    tpu.vector_store %arg8[%c56_342, %c0_343], %615 {strides = array<i32>} : memref<64x128xf32, #tpu.memory_space<vmem>>, vector<8x128xf32>,
    %c0_344 = arith.constant 0 : index
    %c0_345 = arith.constant 0 : index
    %617 = vector.load %arg9[%c0_344, %c0_345] : memref<64x128xf32, #tpu.memory_space<vmem>>, vector<8x128xf32>
    tpu.vector_store %arg9[%c0_344, %c0_345], %615 {strides = array<i32>} : memref<64x128xf32, #tpu.memory_space<vmem>>, vector<8x128xf32>,
    %c0_346 = arith.constant 0 : index
    %c0_347 = arith.constant 0 : index
    %c0_348 = arith.constant 0 : index
    %618 = vector.load %arg5[%c0_346, %c0_347, %c0_348] : memref<2x128x10xf32, #tpu.memory_space<vmem>>, vector<1x128x10xf32>
    %619 = vector.shape_cast %618 : vector<1x128x10xf32> to vector<128x10xf32>
    %cst_349 = arith.constant dense<0.000000e+00> : vector<8x10xf32>
    %620 = tpu.matmul %615, %619, %cst_349 {dimension_numbers = #tpu.dot_dimension_numbers<[1], [0], [0], [1], [0, 0, 1, 1], [], []>} : vector<8x128xf32>, vector<128x10xf32>, vector<8x10xf32> -> vector<8x10xf32>
    %c1_350 = arith.constant 1 : index
    %c0_351 = arith.constant 0 : index
    %c0_352 = arith.constant 0 : index
    %621 = vector.load %arg5[%c1_350, %c0_351, %c0_352] : memref<2x128x10xf32, #tpu.memory_space<vmem>>, vector<1x128x10xf32>
    %622 = vector.shape_cast %621 : vector<1x128x10xf32> to vector<128x10xf32>
    %cst_353 = arith.constant dense<0.000000e+00> : vector<8x10xf32>
    %623 = tpu.matmul %454, %622, %cst_353 {dimension_numbers = #tpu.dot_dimension_numbers<[1], [0], [0], [1], [0, 0, 1, 1], [], []>} : vector<8x128xf32>, vector<128x10xf32>, vector<8x10xf32> -> vector<8x10xf32>
    %624 = arith.addf %620, %623 : vector<8x10xf32>
    %c0_354 = arith.constant 0 : index
    %c0_355 = arith.constant 0 : index
    %625 = vector.load %arg6[%c0_354, %c0_355] : memref<1x10xf32, #tpu.memory_space<vmem>>, vector<1x10xf32>
    %626 = vector.broadcast %625 : vector<1x10xf32> to vector<8x10xf32>
    %627 = arith.addf %624, %626 : vector<8x10xf32>
    %c0_356 = arith.constant 0 : index
    %c0_357 = arith.constant 0 : index
    %628 = vector.load %arg7[%c0_356, %c0_357] : memref<8x10xf32, #tpu.memory_space<vmem>>, vector<8x10xf32>
    tpu.vector_store %arg7[%c0_356, %c0_357], %627 {strides = array<i32>} : memref<8x10xf32, #tpu.memory_space<vmem>>, vector<8x10xf32>,
    return
  }
}

</mosaic_0001>

<llo_original>
// kernel: rnn_forward.1
$region0: #{rnn_forward.1}
  #allocation0 [shape = 'u32[]', space=smem, size = 0x4, offset = 0x4, fixed_abs, tag = 'smem constant byte address 0x4 - core index']
  #allocation1 [shape = 'u32[72,128]{1,0:T(1,128)}', space=vmem, size = 0x9000, scoped, tag = 'internal scratch']
  #allocation2 [shape = 'f32[64,128]{1,0:T(8,128)}', space=vmem, size = 0x8000, scoped, tag = 'scratch operand']
  #allocation3 [shape = 'f32[64,128]{1,0:T(8,128)}', space=vmem, size = 0x8000, scoped, tag = 'scratch operand']
  #allocation4 [shape = 'f32[64,512]{1,0:T(8,128)}', space=vmem, size = 0x20000, scoped, tag = 'scratch operand']
  %s0 = inlined_call_operand.vmem [shape: f32[64,128], index: 0, kind: input, shape index: {}]
  %s1 = inlined_call_operand.hbm [shape: f32[3,128,512], index: 1, kind: input, shape index: {}]
  %s2 = inlined_call_operand.hbm [shape: f32[3,128,512], index: 2, kind: input, shape index: {}]
  %s3 = inlined_call_operand.hbm [shape: f32[3,128,512], index: 3, kind: input, shape index: {}]
  %s4 = inlined_call_operand.vmem [shape: f32[3,1,512], index: 4, kind: input, shape index: {}]
  %s5 = inlined_call_operand.vmem [shape: f32[2,128,10], index: 5, kind: input, shape index: {}]
  %s6 = inlined_call_operand.vmem [shape: f32[1,10], index: 6, kind: input, shape index: {}]
  %s7 = inlined_call_operand.vmem [shape: f32[8,10], index: 7, kind: output, shape index: {}]
  %s8 = sld [smem:[#allocation0]]
  $region50: #{rnn_forward.1} parent=0
    _
  %s10 = ssub.s32 1, %s8
  %s11 = scalar_select 0, %s10, %s8
  $region1: #{rnn_forward.1} parent=0
    #allocation5 [shape = 'u8[786432]{0}', space=vmem, size = 0xc0000, scoped, tag = 'input window, operand 1, single buffered']
    #allocation6 [shape = 's32[1]{0}', space=sflag, size = 0x4, scoped, tag = 'scoped memory for rnn_forward.1']
    #allocation7 [shape = 'u8[786432]{0}', space=vmem, size = 0xc0000, scoped, tag = 'input window, operand 2, single buffered']
    #allocation8 [shape = 's32[1]{0}', space=sflag, size = 0x4, scoped, tag = 'scoped memory for rnn_forward.1']
    #allocation9 [shape = 'u8[786432]{0}', space=vmem, size = 0xc0000, scoped, tag = 'input window, operand 3, single buffered']
    %12 = vsyncpa [#allocation6], 0
    %13 = vsyncpa [#allocation8], 0
    // Predicated region
    $region2: #{rnn_forward.1} parent=1 // pred_check
      _
    $region3: #{rnn_forward.1} parent=1 // pred_check_branch
      %15 = sbr.rel (0) target = $region5
    $region4: #{rnn_forward.1} parent=1 // pred_region
      _
    $region5: #{rnn_forward.1} parent=1 // pred_fallthru
      _
    // Predicated region
    $region6: #{rnn_forward.1} parent=1 // pred_check
      _
    $region7: #{rnn_forward.1} parent=1 // pred_check_branch
      %17 = sbr.rel (0) target = $region9
    $region8: #{rnn_forward.1} parent=1 // pred_region
      %19 = vsyncadd [#allocation6], 0
      %s20 = sshll.u32 %s1, 4
      %s21 = int_to_ptr.hbm [resolvable:$true] %s20
      %s22 = sshll.u32 [#allocation5], 4
      %s23 = int_to_ptr.vmem [resolvable:$true] %s22
      %28 = dma.hbm_to_vmem [thread:$0]  %s21, 24576, %s23, [#allocation6], 512, 512, 32
    $region9: #{rnn_forward.1} parent=1 // pred_fallthru
      _
    // Predicated region
    $region10: #{rnn_forward.1} parent=1 // pred_check
      _
    $region11: #{rnn_forward.1} parent=1 // pred_check_branch
      %30 = sbr.rel (0) target = $region13
    $region12: #{rnn_forward.1} parent=1 // pred_region
      %32 = vsyncadd [#allocation8], 0
      %s33 = sshll.u32 %s2, 4
      %s34 = int_to_ptr.hbm [resolvable:$true] %s33
      %s35 = sshll.u32 [#allocation7], 4
      %s36 = int_to_ptr.vmem [resolvable:$true] %s35
      %41 = dma.hbm_to_vmem [thread:$0]  %s34, 24576, %s36, [#allocation8], 512, 512, 32
    $region13: #{rnn_forward.1} parent=1 // pred_fallthru
      _
    // Predicated region
    $region14: #{rnn_forward.1} parent=1 // pred_check
      _
    $region15: #{rnn_forward.1} parent=1 // pred_check_branch
      %43 = sbr.rel (0) target = $region17
    $region16: #{rnn_forward.1} parent=1 // pred_region
      %45 = vsyncadd [#allocation8], 0
      %s46 = sshll.u32 %s3, 4
      %s47 = int_to_ptr.hbm [resolvable:$true] %s46
      %s48 = sshll.u32 [#allocation9], 4
      %s49 = int_to_ptr.vmem [resolvable:$true] %s48
      %54 = dma.hbm_to_vmem [thread:$0]  %s47, 24576, %s49, [#allocation8], 512, 512, 32
    $region17: #{rnn_forward.1} parent=1 // pred_fallthru
      _
    // Predicated region
    $region18: #{rnn_forward.1} parent=1 // pred_check
      _
    $region19: #{rnn_forward.1} parent=1 // pred_check_branch
      %56 = sbr.rel (0) target = $region21
    $region20: #{rnn_forward.1} parent=1 // pred_region
      _
    $region21: #{rnn_forward.1} parent=1 // pred_fallthru
      _
    // Predicated region
    $region22: #{rnn_forward.1} parent=1 // pred_check
      _
    $region23: #{rnn_forward.1} parent=1 // pred_check_branch
      %58 = sbr.rel (0) target = $region25
    $region24: #{rnn_forward.1} parent=1 // pred_region
      _
    $region25: #{rnn_forward.1} parent=1 // pred_fallthru
      _
    // Predicated region
    $region26: #{rnn_forward.1} parent=1 // pred_check
      _
    $region27: #{rnn_forward.1} parent=1 // pred_check_branch
      %60 = sbr.rel (0) target = $region29
    $region28: #{rnn_forward.1} parent=1 // pred_region
      _
    $region29: #{rnn_forward.1} parent=1 // pred_fallthru
      _
    // Predicated region
    $region30: #{rnn_forward.1} parent=1 // pred_check
      _
    $region31: #{rnn_forward.1} parent=1 // pred_check_branch
      %62 = sbr.rel (0) target = $region33
    $region32: #{rnn_forward.1} parent=1 // pred_region
      %64 = dma.done [#allocation6], 24576
    $region33: #{rnn_forward.1} parent=1 // pred_fallthru
      _
    // Predicated region
    $region34: #{rnn_forward.1} parent=1 // pred_check
      _
    $region35: #{rnn_forward.1} parent=1 // pred_check_branch
      %66 = sbr.rel (0) target = $region37
    $region36: #{rnn_forward.1} parent=1 // pred_region
      %68 = dma.done [#allocation8], 24576
    $region37: #{rnn_forward.1} parent=1 // pred_fallthru
      _
    // Predicated region
    $region38: #{rnn_forward.1} parent=1 // pred_check
      _
    $region39: #{rnn_forward.1} parent=1 // pred_check_branch
      %70 = sbr.rel (0) target = $region41
    $region40: #{rnn_forward.1} parent=1 // pred_region
      %72 = dma.done [#allocation8], 24576
    $region41: #{rnn_forward.1} parent=1 // pred_fallthru
      _
    %v73 = vld [vmem:[%s0] sm:$0xff]
    %v74 = vld [vmem:[%s0 + $0x8] sm:$0xff]
    %v75 = vld [vmem:[%s0 + $0x10] sm:$0xff]
    %v76 = vld [vmem:[%s0 + $0x18] sm:$0xff]
    %v77 = vld [vmem:[%s0 + $0x20] sm:$0xff]
    %v78 = vld [vmem:[%s0 + $0x28] sm:$0xff]
    %v79 = vld [vmem:[%s0 + $0x30] sm:$0xff]
    %v80 = vld [vmem:[%s0 + $0x38] sm:$0xff]
    %81 = vst [vmem:[#allocation2] sm:$0xff] %v73
    %82 = vst [vmem:[#allocation2 + $0x8] sm:$0xff] %v74
    %83 = vst [vmem:[#allocation2 + $0x10] sm:$0xff] %v75
    %84 = vst [vmem:[#allocation2 + $0x18] sm:$0xff] %v76
    %85 = vst [vmem:[#allocation2 + $0x20] sm:$0xff] %v77
    %86 = vst [vmem:[#allocation2 + $0x28] sm:$0xff] %v78
    %87 = vst [vmem:[#allocation2 + $0x30] sm:$0xff] %v79
    %88 = vst [vmem:[#allocation2 + $0x38] sm:$0xff] %v80
    %v89 = vld [vmem:[%s0] sm:$0xff]
    %90 = vst [vmem:[#allocation3 + $0x38] sm:$0xff] %v89
    %v91 = vld [vmem:[%s0 + $0x8] sm:$0xff]
    %92 = vst [vmem:[#allocation3 + $0x30] sm:$0xff] %v91
    %v93 = vld [vmem:[%s0 + $0x10] sm:$0xff]
    %94 = vst [vmem:[#allocation3 + $0x28] sm:$0xff] %v93
    %v95 = vld [vmem:[%s0 + $0x18] sm:$0xff]
    %96 = vst [vmem:[#allocation3 + $0x20] sm:$0xff] %v95
    %v97 = vld [vmem:[%s0 + $0x20] sm:$0xff]
    %98 = vst [vmem:[#allocation3 + $0x18] sm:$0xff] %v97
    %v99 = vld [vmem:[%s0 + $0x28] sm:$0xff]
    %100 = vst [vmem:[#allocation3 + $0x10] sm:$0xff] %v99
    %v101 = vld [vmem:[%s0 + $0x30] sm:$0xff]
    %102 = vst [vmem:[#allocation3 + $0x8] sm:$0xff] %v101
    %v103 = vld [vmem:[%s0 + $0x38] sm:$0xff]
    %104 = vst [vmem:[#allocation3] sm:$0xff] %v103
    %v105 = vld [vmem:[#allocation2] sm:$0xff]
    %v106 = vld [vmem:[#allocation2 + $0x8] sm:$0xff]
    %v107 = vld [vmem:[#allocation2 + $0x10] sm:$0xff]
    %v108 = vld [vmem:[#allocation2 + $0x18] sm:$0xff]
    %v109 = vld [vmem:[#allocation2 + $0x20] sm:$0xff]
    %v110 = vld [vmem:[#allocation2 + $0x28] sm:$0xff]
    %v111 = vld [vmem:[#allocation2 + $0x30] sm:$0xff]
    %v112 = vld [vmem:[#allocation2 + $0x38] sm:$0xff]
    %v113 = vld [vmem:[#allocation5] sm:$0xff]
    %v114 = vld [vmem:[#allocation5 + $0x8] sm:$0xff]
    %v115 = vld [vmem:[#allocation5 + $0x10] sm:$0xff]
    %v116 = vld [vmem:[#allocation5 + $0x18] sm:$0xff]
    %v117 = vld [vmem:[#allocation5 + $0x20] sm:$0xff]
    %v118 = vld [vmem:[#allocation5 + $0x28] sm:$0xff]
    %v119 = vld [vmem:[#allocation5 + $0x30] sm:$0xff]
    %v120 = vld [vmem:[#allocation5 + $0x38] sm:$0xff]
    %v121 = vld [vmem:[#allocation5 + $0x40] sm:$0xff]
    %v122 = vld [vmem:[#allocation5 + $0x48] sm:$0xff]
    %v123 = vld [vmem:[#allocation5 + $0x50] sm:$0xff]
    %v124 = vld [vmem:[#allocation5 + $0x58] sm:$0xff]
    %v125 = vld [vmem:[#allocation5 + $0x60] sm:$0xff]
    %v126 = vld [vmem:[#allocation5 + $0x68] sm:$0xff]
    %v127 = vld [vmem:[#allocation5 + $0x70] sm:$0xff]
    %v128 = vld [vmem:[#allocation5 + $0x78] sm:$0xff]
    %v129 = vld [vmem:[#allocation5 + $0x80] sm:$0xff]
    %v130 = vld [vmem:[#allocation5 + $0x88] sm:$0xff]
    %v131 = vld [vmem:[#allocation5 + $0x90] sm:$0xff]
    %v132 = vld [vmem:[#allocation5 + $0x98] sm:$0xff]
    %v133 = vld [vmem:[#allocation5 + $0xa0] sm:$0xff]
    %v134 = vld [vmem:[#allocation5 + $0xa8] sm:$0xff]
    %v135 = vld [vmem:[#allocation5 + $0xb0] sm:$0xff]
    %v136 = vld [vmem:[#allocation5 + $0xb8] sm:$0xff]
    %v137 = vld [vmem:[#allocation5 + $0xc0] sm:$0xff]
    %v138 = vld [vmem:[#allocation5 + $0xc8] sm:$0xff]
    %v139 = vld [vmem:[#allocation5 + $0xd0] sm:$0xff]
    %v140 = vld [vmem:[#allocation5 + $0xd8] sm:$0xff]
    %v141 = vld [vmem:[#allocation5 + $0xe0] sm:$0xff]
    %v142 = vld [vmem:[#allocation5 + $0xe8] sm:$0xff]
    %v143 = vld [vmem:[#allocation5 + $0xf0] sm:$0xff]
    %v144 = vld [vmem:[#allocation5 + $0xf8] sm:$0xff]
    %v145 = vld [vmem:[#allocation5 + $0x100] sm:$0xff]
    %v146 = vld [vmem:[#allocation5 + $0x108] sm:$0xff]
    %v147 = vld [vmem:[#allocation5 + $0x110] sm:$0xff]
    %v148 = vld [vmem:[#allocation5 + $0x118] sm:$0xff]
    %v149 = vld [vmem:[#allocation5 + $0x120] sm:$0xff]
    %v150 = vld [vmem:[#allocation5 + $0x128] sm:$0xff]
    %v151 = vld [vmem:[#allocation5 + $0x130] sm:$0xff]
    %v152 = vld [vmem:[#allocation5 + $0x138] sm:$0xff]
    %v153 = vld [vmem:[#allocation5 + $0x140] sm:$0xff]
    %v154 = vld [vmem:[#allocation5 + $0x148] sm:$0xff]
    %v155 = vld [vmem:[#allocation5 + $0x150] sm:$0xff]
    %v156 = vld [vmem:[#allocation5 + $0x158] sm:$0xff]
    %v157 = vld [vmem:[#allocation5 + $0x160] sm:$0xff]
    %v158 = vld [vmem:[#allocation5 + $0x168] sm:$0xff]
    %v159 = vld [vmem:[#allocation5 + $0x170] sm:$0xff]
    %v160 = vld [vmem:[#allocation5 + $0x178] sm:$0xff]
    %v161 = vld [vmem:[#allocation5 + $0x180] sm:$0xff]
    %v162 = vld [vmem:[#allocation5 + $0x188] sm:$0xff]
    %v163 = vld [vmem:[#allocation5 + $0x190] sm:$0xff]
    %v164 = vld [vmem:[#allocation5 + $0x198] sm:$0xff]
    %v165 = vld [vmem:[#allocation5 + $0x1a0] sm:$0xff]
    %v166 = vld [vmem:[#allocation5 + $0x1a8] sm:$0xff]
    %v167 = vld [vmem:[#allocation5 + $0x1b0] sm:$0xff]
    %v168 = vld [vmem:[#allocation5 + $0x1b8] sm:$0xff]
    %v169 = vld [vmem:[#allocation5 + $0x1c0] sm:$0xff]
    %v170 = vld [vmem:[#allocation5 + $0x1c8] sm:$0xff]
    %v171 = vld [vmem:[#allocation5 + $0x1d0] sm:$0xff]
    %v172 = vld [vmem:[#allocation5 + $0x1d8] sm:$0xff]
    %v173 = vld [vmem:[#allocation5 + $0x1e0] sm:$0xff]
    %v174 = vld [vmem:[#allocation5 + $0x1e8] sm:$0xff]
    %v175 = vld [vmem:[#allocation5 + $0x1f0] sm:$0xff]
    %v176 = vld [vmem:[#allocation5 + $0x1f8] sm:$0xff]
    %v177 = vld [vmem:[#allocation3] sm:$0xff]
    %v178 = vld [vmem:[#allocation3 + $0x8] sm:$0xff]
    %v179 = vld [vmem:[#allocation3 + $0x10] sm:$0xff]
    %v180 = vld [vmem:[#allocation3 + $0x18] sm:$0xff]
    %v181 = vld [vmem:[#allocation3 + $0x20] sm:$0xff]
    %v182 = vld [vmem:[#allocation3 + $0x28] sm:$0xff]
    %v183 = vld [vmem:[#allocation3 + $0x30] sm:$0xff]
    %v184 = vld [vmem:[#allocation3 + $0x38] sm:$0xff]
    %v185 = vld [vmem:[#allocation7] sm:$0xff]
    %v186 = vld [vmem:[#allocation7 + $0x8] sm:$0xff]
    %v187 = vld [vmem:[#allocation7 + $0x10] sm:$0xff]
    %v188 = vld [vmem:[#allocation7 + $0x18] sm:$0xff]
    %v189 = vld [vmem:[#allocation7 + $0x20] sm:$0xff]
    %v190 = vld [vmem:[#allocation7 + $0x28] sm:$0xff]
    %v191 = vld [vmem:[#allocation7 + $0x30] sm:$0xff]
    %v192 = vld [vmem:[#allocation7 + $0x38] sm:$0xff]
    %v193 = vld [vmem:[#allocation7 + $0x40] sm:$0xff]
    %v194 = vld [vmem:[#allocation7 + $0x48] sm:$0xff]
    %v195 = vld [vmem:[#allocation7 + $0x50] sm:$0xff]
    %v196 = vld [vmem:[#allocation7 + $0x58] sm:$0xff]
    %v197 = vld [vmem:[#allocation7 + $0x60] sm:$0xff]
    %v198 = vld [vmem:[#allocation7 + $0x68] sm:$0xff]
    %v199 = vld [vmem:[#allocation7 + $0x70] sm:$0xff]
    %v200 = vld [vmem:[#allocation7 + $0x78] sm:$0xff]
    %v201 = vld [vmem:[#allocation7 + $0x80] sm:$0xff]
    %v202 = vld [vmem:[#allocation7 + $0x88] sm:$0xff]
    %v203 = vld [vmem:[#allocation7 + $0x90] sm:$0xff]
    %v204 = vld [vmem:[#allocation7 + $0x98] sm:$0xff]
    %v205 = vld [vmem:[#allocation7 + $0xa0] sm:$0xff]
    %v206 = vld [vmem:[#allocation7 + $0xa8] sm:$0xff]
    %v207 = vld [vmem:[#allocation7 + $0xb0] sm:$0xff]
    %v208 = vld [vmem:[#allocation7 + $0xb8] sm:$0xff]
    %v209 = vld [vmem:[#allocation7 + $0xc0] sm:$0xff]
    %v210 = vld [vmem:[#allocation7 + $0xc8] sm:$0xff]
    %v211 = vld [vmem:[#allocation7 + $0xd0] sm:$0xff]
    %v212 = vld [vmem:[#allocation7 + $0xd8] sm:$0xff]
    %v213 = vld [vmem:[#allocation7 + $0xe0] sm:$0xff]
    %v214 = vld [vmem:[#allocation7 + $0xe8] sm:$0xff]
    %v215 = vld [vmem:[#allocation7 + $0xf0] sm:$0xff]
    %v216 = vld [vmem:[#allocation7 + $0xf8] sm:$0xff]
    %v217 = vld [vmem:[#allocation7 + $0x100] sm:$0xff]
    %v218 = vld [vmem:[#allocation7 + $0x108] sm:$0xff]
    %v219 = vld [vmem:[#allocation7 + $0x110] sm:$0xff]
    %v220 = vld [vmem:[#allocation7 + $0x118] sm:$0xff]
    %v221 = vld [vmem:[#allocation7 + $0x120] sm:$0xff]
    %v222 = vld [vmem:[#allocation7 + $0x128] sm:$0xff]
    %v223 = vld [vmem:[#allocation7 + $0x130] sm:$0xff]
    %v224 = vld [vmem:[#allocation7 + $0x138] sm:$0xff]
    %v225 = vld [vmem:[#allocation7 + $0x140] sm:$0xff]
    %v226 = vld [vmem:[#allocation7 + $0x148] sm:$0xff]
    %v227 = vld [vmem:[#allocation7 + $0x150] sm:$0xff]
    %v228 = vld [vmem:[#allocation7 + $0x158] sm:$0xff]
    %v229 = vld [vmem:[#allocation7 + $0x160] sm:$0xff]
    %v230 = vld [vmem:[#allocation7 + $0x168] sm:$0xff]
    %v231 = vld [vmem:[#allocation7 + $0x170] sm:$0xff]
    %v232 = vld [vmem:[#allocation7 + $0x178] sm:$0xff]
    %v233 = vld [vmem:[#allocation7 + $0x180] sm:$0xff]
    %v234 = vld [vmem:[#allocation7 + $0x188] sm:$0xff]
    %v235 = vld [vmem:[#allocation7 + $0x190] sm:$0xff]
    %v236 = vld [vmem:[#allocation7 + $0x198] sm:$0xff]
    %v237 = vld [vmem:[#allocation7 + $0x1a0] sm:$0xff]
    %v238 = vld [vmem:[#allocation7 + $0x1a8] sm:$0xff]
    %v239 = vld [vmem:[#allocation7 + $0x1b0] sm:$0xff]
    %v240 = vld [vmem:[#allocation7 + $0x1b8] sm:$0xff]
    %v241 = vld [vmem:[#allocation7 + $0x1c0] sm:$0xff]
    %v242 = vld [vmem:[#allocation7 + $0x1c8] sm:$0xff]
    %v243 = vld [vmem:[#allocation7 + $0x1d0] sm:$0xff]
    %v244 = vld [vmem:[#allocation7 + $0x1d8] sm:$0xff]
    %v245 = vld [vmem:[#allocation7 + $0x1e0] sm:$0xff]
    %v246 = vld [vmem:[#allocation7 + $0x1e8] sm:$0xff]
    %v247 = vld [vmem:[#allocation7 + $0x1f0] sm:$0xff]
    %v248 = vld [vmem:[#allocation7 + $0x1f8] sm:$0xff]
    %249 = vmatpush.msra.mxu0 %v245
    %250 = vmatpush.msra.mxu0 %v241
    %251 = vmatpush.msra.mxu0 %v237
    %252 = vmatpush.msra.mxu0 %v233
    %253 = vmatpush.msra.mxu0 %v229
    %254 = vmatpush.msra.mxu0 %v225
    %255 = vmatpush.msra.mxu0 %v221
    %256 = vmatpush.msra.mxu0 %v217
    %257 = vmatpush.msra.mxu0 %v213
    %258 = vmatpush.msra.mxu0 %v209
    %259 = vmatpush.msra.mxu0 %v205
    %260 = vmatpush.msra.mxu0 %v201
    %261 = vmatpush.msra.mxu0 %v197
    %262 = vmatpush.msra.mxu0 %v193
    %263 = vmatpush.msra.mxu0 %v189
    %264 = vmatpush.msra.mxu0 %v185
    %265 = vmatmul.f32.gmra.mxu0 %v177
    %v266 = vpop.f32.mrf.mxu0
    %v267 = vadd.f32 0.0, %v266
    %268 = vmatmul.f32.gmra.mxu0 %v178
    %v269 = vpop.f32.mrf.mxu0
    %v270 = vadd.f32 0.0, %v269
    %271 = vmatmul.f32.gmra.mxu0 %v179
    %v272 = vpop.f32.mrf.mxu0
    %v273 = vadd.f32 0.0, %v272
    %274 = vmatmul.f32.gmra.mxu0 %v180
    %v275 = vpop.f32.mrf.mxu0
    %v276 = vadd.f32 0.0, %v275
    %277 = vmatmul.f32.gmra.mxu0 %v181
    %v278 = vpop.f32.mrf.mxu0
    %v279 = vadd.f32 0.0, %v278
    %280 = vmatmul.f32.gmra.mxu0 %v182
    %v281 = vpop.f32.mrf.mxu0
    %v282 = vadd.f32 0.0, %v281
    %283 = vmatmul.f32.gmra.mxu0 %v183
    %v284 = vpop.f32.mrf.mxu0
    %v285 = vadd.f32 0.0, %v284
    %286 = vmatmul.f32.gmra.mxu0 %v184
    %v287 = vpop.f32.mrf.mxu0
    %v288 = vadd.f32 0.0, %v287
    %289 = vdwg.mxu0
    %290 = vmatpush.msra.mxu0 %v246
    %291 = vmatpush.msra.mxu0 %v242
    %292 = vmatpush.msra.mxu0 %v238
    %293 = vmatpush.msra.mxu0 %v234
    %294 = vmatpush.msra.mxu0 %v230
    %295 = vmatpush.msra.mxu0 %v226
    %296 = vmatpush.msra.mxu0 %v222
    %297 = vmatpush.msra.mxu0 %v218
    %298 = vmatpush.msra.mxu0 %v214
    %299 = vmatpush.msra.mxu0 %v210
    %300 = vmatpush.msra.mxu0 %v206
    %301 = vmatpush.msra.mxu0 %v202
    %302 = vmatpush.msra.mxu0 %v198
    %303 = vmatpush.msra.mxu0 %v194
    %304 = vmatpush.msra.mxu0 %v190
    %305 = vmatpush.msra.mxu0 %v186
    %306 = vmatmul.f32.gmra.mxu0 %v177
    %v307 = vpop.f32.mrf.mxu0
    %v308 = vadd.f32 0.0, %v307
    %309 = vmatmul.f32.gmra.mxu0 %v178
    %v310 = vpop.f32.mrf.mxu0
    %v311 = vadd.f32 0.0, %v310
    %312 = vmatmul.f32.gmra.mxu0 %v179
    %v313 = vpop.f32.mrf.mxu0
    %v314 = vadd.f32 0.0, %v313
    %315 = vmatmul.f32.gmra.mxu0 %v180
    %v316 = vpop.f32.mrf.mxu0
    %v317 = vadd.f32 0.0, %v316
    %318 = vmatmul.f32.gmra.mxu0 %v181
    %v319 = vpop.f32.mrf.mxu0
    %v320 = vadd.f32 0.0, %v319
    %321 = vmatmul.f32.gmra.mxu0 %v182
    %v322 = vpop.f32.mrf.mxu0
    %v323 = vadd.f32 0.0, %v322
    %324 = vmatmul.f32.gmra.mxu0 %v183
    %v325 = vpop.f32.mrf.mxu0
    %v326 = vadd.f32 0.0, %v325
    %327 = vmatmul.f32.gmra.mxu0 %v184
    %v328 = vpop.f32.mrf.mxu0
    %v329 = vadd.f32 0.0, %v328
    %330 = vdwg.mxu0
    %331 = vmatpush.msra.mxu0 %v247
    %332 = vmatpush.msra.mxu0 %v243
    %333 = vmatpush.msra.mxu0 %v239
    %334 = vmatpush.msra.mxu0 %v235
    %335 = vmatpush.msra.mxu0 %v231
    %336 = vmatpush.msra.mxu0 %v227
    %337 = vmatpush.msra.mxu0 %v223
    %338 = vmatpush.msra.mxu0 %v219
    %339 = vmatpush.msra.mxu0 %v215
    %340 = vmatpush.msra.mxu0 %v211
    %341 = vmatpush.msra.mxu0 %v207
    %342 = vmatpush.msra.mxu0 %v203
    %343 = vmatpush.msra.mxu0 %v199
    %344 = vmatpush.msra.mxu0 %v195
    %345 = vmatpush.msra.mxu0 %v191
    %346 = vmatpush.msra.mxu0 %v187
    %347 = vmatmul.f32.gmra.mxu0 %v177
    %v348 = vpop.f32.mrf.mxu0
    %v349 = vadd.f32 0.0, %v348
    %350 = vmatmul.f32.gmra.mxu0 %v178
    %v351 = vpop.f32.mrf.mxu0
    %v352 = vadd.f32 0.0, %v351
    %353 = vmatmul.f32.gmra.mxu0 %v179
    %v354 = vpop.f32.mrf.mxu0
    %v355 = vadd.f32 0.0, %v354
    %356 = vmatmul.f32.gmra.mxu0 %v180
    %v357 = vpop.f32.mrf.mxu0
    %v358 = vadd.f32 0.0, %v357
    %359 = vmatmul.f32.gmra.mxu0 %v181
    %v360 = vpop.f32.mrf.mxu0
    %v361 = vadd.f32 0.0, %v360
    %362 = vmatmul.f32.gmra.mxu0 %v182
    %v363 = vpop.f32.mrf.mxu0
    %v364 = vadd.f32 0.0, %v363
    %365 = vmatmul.f32.gmra.mxu0 %v183
    %v366 = vpop.f32.mrf.mxu0
    %v367 = vadd.f32 0.0, %v366
    %368 = vmatmul.f32.gmra.mxu0 %v184
    %v369 = vpop.f32.mrf.mxu0
    %v370 = vadd.f32 0.0, %v369
    %371 = vdwg.mxu0
    %372 = vmatpush.msra.mxu0 %v248
    %373 = vmatpush.msra.mxu0 %v244
    %374 = vmatpush.msra.mxu0 %v240
    %375 = vmatpush.msra.mxu0 %v236
    %376 = vmatpush.msra.mxu0 %v232
    %377 = vmatpush.msra.mxu0 %v228
    %378 = vmatpush.msra.mxu0 %v224
    %379 = vmatpush.msra.mxu0 %v220
    %380 = vmatpush.msra.mxu0 %v216
    %381 = vmatpush.msra.mxu0 %v212
    %382 = vmatpush.msra.mxu0 %v208
    %383 = vmatpush.msra.mxu0 %v204
    %384 = vmatpush.msra.mxu0 %v200
    %385 = vmatpush.msra.mxu0 %v196
    %386 = vmatpush.msra.mxu0 %v192
    %387 = vmatpush.msra.mxu0 %v188
    %388 = vmatmul.f32.gmra.mxu0 %v177
    %v389 = vpop.f32.mrf.mxu0
    %v390 = vadd.f32 0.0, %v389
    %391 = vmatmul.f32.gmra.mxu0 %v178
    %v392 = vpop.f32.mrf.mxu0
    %v393 = vadd.f32 0.0, %v392
    %394 = vmatmul.f32.gmra.mxu0 %v179
    %v395 = vpop.f32.mrf.mxu0
    %v396 = vadd.f32 0.0, %v395
    %397 = vmatmul.f32.gmra.mxu0 %v180
    %v398 = vpop.f32.mrf.mxu0
    %v399 = vadd.f32 0.0, %v398
    %400 = vmatmul.f32.gmra.mxu0 %v181
    %v401 = vpop.f32.mrf.mxu0
    %v402 = vadd.f32 0.0, %v401
    %403 = vmatmul.f32.gmra.mxu0 %v182
    %v404 = vpop.f32.mrf.mxu0
    %v405 = vadd.f32 0.0, %v404
    %406 = vmatmul.f32.gmra.mxu0 %v183
    %v407 = vpop.f32.mrf.mxu0
    %v408 = vadd.f32 0.0, %v407
    %409 = vmatmul.f32.gmra.mxu0 %v184
    %v410 = vpop.f32.mrf.mxu0
    %v411 = vadd.f32 0.0, %v410
    %412 = vdwg.mxu0
    %413 = vmatpush.msra.mxu0 %v173
    %414 = vmatpush.msra.mxu0 %v169
    %415 = vmatpush.msra.mxu0 %v165
    %416 = vmatpush.msra.mxu0 %v161
    %417 = vmatpush.msra.mxu0 %v157
    %418 = vmatpush.msra.mxu0 %v153
    %419 = vmatpush.msra.mxu0 %v149
    %420 = vmatpush.msra.mxu0 %v145
    %421 = vmatpush.msra.mxu0 %v141
    %422 = vmatpush.msra.mxu0 %v137
    %423 = vmatpush.msra.mxu0 %v133
    %424 = vmatpush.msra.mxu0 %v129
    %425 = vmatpush.msra.mxu0 %v125
    %426 = vmatpush.msra.mxu0 %v121
    %427 = vmatpush.msra.mxu0 %v117
    %428 = vmatpush.msra.mxu0 %v113
    %429 = vmatmul.f32.gmra.mxu0 %v105
    %v430 = vpop.f32.mrf.mxu0
    %v431 = vadd.f32 %v267, %v430
    %432 = vmatmul.f32.gmra.mxu0 %v106
    %v433 = vpop.f32.mrf.mxu0
    %v434 = vadd.f32 %v270, %v433
    %435 = vmatmul.f32.gmra.mxu0 %v107
    %v436 = vpop.f32.mrf.mxu0
    %v437 = vadd.f32 %v273, %v436
    %438 = vmatmul.f32.gmra.mxu0 %v108
    %v439 = vpop.f32.mrf.mxu0
    %v440 = vadd.f32 %v276, %v439
    %441 = vmatmul.f32.gmra.mxu0 %v109
    %v442 = vpop.f32.mrf.mxu0
    %v443 = vadd.f32 %v279, %v442
    %444 = vmatmul.f32.gmra.mxu0 %v110
    %v445 = vpop.f32.mrf.mxu0
    %v446 = vadd.f32 %v282, %v445
    %447 = vmatmul.f32.gmra.mxu0 %v111
    %v448 = vpop.f32.mrf.mxu0
    %v449 = vadd.f32 %v285, %v448
    %450 = vmatmul.f32.gmra.mxu0 %v112
    %v451 = vpop.f32.mrf.mxu0
    %v452 = vadd.f32 %v288, %v451
    %453 = vdwg.mxu0
    %454 = vmatpush.msra.mxu0 %v174
    %455 = vmatpush.msra.mxu0 %v170
    %456 = vmatpush.msra.mxu0 %v166
    %457 = vmatpush.msra.mxu0 %v162
    %458 = vmatpush.msra.mxu0 %v158
    %459 = vmatpush.msra.mxu0 %v154
    %460 = vmatpush.msra.mxu0 %v150
    %461 = vmatpush.msra.mxu0 %v146
    %462 = vmatpush.msra.mxu0 %v142
    %463 = vmatpush.msra.mxu0 %v138
    %464 = vmatpush.msra.mxu0 %v134
    %465 = vmatpush.msra.mxu0 %v130
    %466 = vmatpush.msra.mxu0 %v126
    %467 = vmatpush.msra.mxu0 %v122
    %468 = vmatpush.msra.mxu0 %v118
    %469 = vmatpush.msra.mxu0 %v114
    %470 = vmatmul.f32.gmra.mxu0 %v105
    %v471 = vpop.f32.mrf.mxu0
    %v472 = vadd.f32 %v308, %v471
    %473 = vmatmul.f32.gmra.mxu0 %v106
    %v474 = vpop.f32.mrf.mxu0
    %v475 = vadd.f32 %v311, %v474
    %476 = vmatmul.f32.gmra.mxu0 %v107
    %v477 = vpop.f32.mrf.mxu0
    %v478 = vadd.f32 %v314, %v477
    %479 = vmatmul.f32.gmra.mxu0 %v108
    %v480 = vpop.f32.mrf.mxu0
    %v481 = vadd.f32 %v317, %v480
    %482 = vmatmul.f32.gmra.mxu0 %v109
    %v483 = vpop.f32.mrf.mxu0
    %v484 = vadd.f32 %v320, %v483
    %485 = vmatmul.f32.gmra.mxu0 %v110
    %v486 = vpop.f32.mrf.mxu0
    %v487 = vadd.f32 %v323, %v486
    %488 = vmatmul.f32.gmra.mxu0 %v111
    %v489 = vpop.f32.mrf.mxu0
    %v490 = vadd.f32 %v326, %v489
    %491 = vmatmul.f32.gmra.mxu0 %v112
    %v492 = vpop.f32.mrf.mxu0
    %v493 = vadd.f32 %v329, %v492
    %494 = vdwg.mxu0
    %495 = vmatpush.msra.mxu0 %v175
    %496 = vmatpush.msra.mxu0 %v171
    %497 = vmatpush.msra.mxu0 %v167
    %498 = vmatpush.msra.mxu0 %v163
    %499 = vmatpush.msra.mxu0 %v159
    %500 = vmatpush.msra.mxu0 %v155
    %501 = vmatpush.msra.mxu0 %v151
    %502 = vmatpush.msra.mxu0 %v147
    %503 = vmatpush.msra.mxu0 %v143
    %504 = vmatpush.msra.mxu0 %v139
    %505 = vmatpush.msra.mxu0 %v135
    %506 = vmatpush.msra.mxu0 %v131
    %507 = vmatpush.msra.mxu0 %v127
    %508 = vmatpush.msra.mxu0 %v123
    %509 = vmatpush.msra.mxu0 %v119
    %510 = vmatpush.msra.mxu0 %v115
    %511 = vmatmul.f32.gmra.mxu0 %v105
    %v512 = vpop.f32.mrf.mxu0
    %v513 = vadd.f32 %v349, %v512
    %514 = vmatmul.f32.gmra.mxu0 %v106
    %v515 = vpop.f32.mrf.mxu0
    %v516 = vadd.f32 %v352, %v515
    %517 = vmatmul.f32.gmra.mxu0 %v107
    %v518 = vpop.f32.mrf.mxu0
    %v519 = vadd.f32 %v355, %v518
    %520 = vmatmul.f32.gmra.mxu0 %v108
    %v521 = vpop.f32.mrf.mxu0
    %v522 = vadd.f32 %v358, %v521
    %523 = vmatmul.f32.gmra.mxu0 %v109
    %v524 = vpop.f32.mrf.mxu0
    %v525 = vadd.f32 %v361, %v524
    %526 = vmatmul.f32.gmra.mxu0 %v110
    %v527 = vpop.f32.mrf.mxu0
    %v528 = vadd.f32 %v364, %v527
    %529 = vmatmul.f32.gmra.mxu0 %v111
    %v530 = vpop.f32.mrf.mxu0
    %v531 = vadd.f32 %v367, %v530
    %532 = vmatmul.f32.gmra.mxu0 %v112
    %v533 = vpop.f32.mrf.mxu0
    %v534 = vadd.f32 %v370, %v533
    %535 = vdwg.mxu0
    %536 = vmatpush.msra.mxu0 %v176
    %537 = vmatpush.msra.mxu0 %v172
    %538 = vmatpush.msra.mxu0 %v168
    %539 = vmatpush.msra.mxu0 %v164
    %540 = vmatpush.msra.mxu0 %v160
    %541 = vmatpush.msra.mxu0 %v156
    %542 = vmatpush.msra.mxu0 %v152
    %543 = vmatpush.msra.mxu0 %v148
    %544 = vmatpush.msra.mxu0 %v144
    %545 = vmatpush.msra.mxu0 %v140
    %546 = vmatpush.msra.mxu0 %v136
    %547 = vmatpush.msra.mxu0 %v132
    %548 = vmatpush.msra.mxu0 %v128
    %549 = vmatpush.msra.mxu0 %v124
    %550 = vmatpush.msra.mxu0 %v120
    %551 = vmatpush.msra.mxu0 %v116
    %552 = vmatmul.f32.gmra.mxu0 %v105
    %v553 = vpop.f32.mrf.mxu0
    %v554 = vadd.f32 %v390, %v553
    %555 = vmatmul.f32.gmra.mxu0 %v106
    %v556 = vpop.f32.mrf.mxu0
    %v557 = vadd.f32 %v393, %v556
    %558 = vmatmul.f32.gmra.mxu0 %v107
    %v559 = vpop.f32.mrf.mxu0
    %v560 = vadd.f32 %v396, %v559
    %561 = vmatmul.f32.gmra.mxu0 %v108
    %v562 = vpop.f32.mrf.mxu0
    %v563 = vadd.f32 %v399, %v562
    %564 = vmatmul.f32.gmra.mxu0 %v109
    %v565 = vpop.f32.mrf.mxu0
    %v566 = vadd.f32 %v402, %v565
    %567 = vmatmul.f32.gmra.mxu0 %v110
    %v568 = vpop.f32.mrf.mxu0
    %v569 = vadd.f32 %v405, %v568
    %570 = vmatmul.f32.gmra.mxu0 %v111
    %v571 = vpop.f32.mrf.mxu0
    %v572 = vadd.f32 %v408, %v571
    %573 = vmatmul.f32.gmra.mxu0 %v112
    %v574 = vpop.f32.mrf.mxu0
    %v575 = vadd.f32 %v411, %v574
    %576 = vdwg.mxu0
    %v577 = vld [vmem:[%s4] sm:$0xf]
    %v579 = vperm.slane %v577, 0
    %v580 = vperm.slane %v577, 1
    %v581 = vperm.slane %v577, 2
    %v582 = vperm.slane %v577, 3
    %v587 = vadd.f32 %v431, %v579
    %v588 = vadd.f32 %v472, %v580
    %v589 = vadd.f32 %v513, %v581
    %v590 = vadd.f32 %v554, %v582
    %v591 = vadd.f32 %v434, %v579
    %v592 = vadd.f32 %v475, %v580
    %v593 = vadd.f32 %v516, %v581
    %v594 = vadd.f32 %v557, %v582
    %v595 = vadd.f32 %v437, %v579
    %v596 = vadd.f32 %v478, %v580
    %v597 = vadd.f32 %v519, %v581
    %v598 = vadd.f32 %v560, %v582
    %v599 = vadd.f32 %v440, %v579
    %v600 = vadd.f32 %v481, %v580
    %v601 = vadd.f32 %v522, %v581
    %v602 = vadd.f32 %v563, %v582
    %v603 = vadd.f32 %v443, %v579
    %v604 = vadd.f32 %v484, %v580
    %v605 = vadd.f32 %v525, %v581
    %v606 = vadd.f32 %v566, %v582
    %v607 = vadd.f32 %v446, %v579
    %v608 = vadd.f32 %v487, %v580
    %v609 = vadd.f32 %v528, %v581
    %v610 = vadd.f32 %v569, %v582
    %v611 = vadd.f32 %v449, %v579
    %v612 = vadd.f32 %v490, %v580
    %v613 = vadd.f32 %v531, %v581
    %v614 = vadd.f32 %v572, %v582
    %v615 = vadd.f32 %v452, %v579
    %v616 = vadd.f32 %v493, %v580
    %v617 = vadd.f32 %v534, %v581
    %v618 = vadd.f32 %v575, %v582
    %619 = vst [vmem:[#allocation4] sm:$0xff] %v587
    %620 = vst [vmem:[#allocation4 + $0x8] sm:$0xff] %v588
    %621 = vst [vmem:[#allocation4 + $0x10] sm:$0xff] %v589
    %622 = vst [vmem:[#allocation4 + $0x18] sm:$0xff] %v590
    %623 = vst [vmem:[#allocation4 + $0x20] sm:$0xff] %v591
    %624 = vst [vmem:[#allocation4 + $0x28] sm:$0xff] %v592
    %625 = vst [vmem:[#allocation4 + $0x30] sm:$0xff] %v593
    %626 = vst [vmem:[#allocation4 + $0x38] sm:$0xff] %v594
    %627 = vst [vmem:[#allocation4 + $0x40] sm:$0xff] %v595
    %628 = vst [vmem:[#allocation4 + $0x48] sm:$0xff] %v596
    %629 = vst [vmem:[#allocation4 + $0x50] sm:$0xff] %v597
    %630 = vst [vmem:[#allocation4 + $0x58] sm:$0xff] %v598
    %631 = vst [vmem:[#allocation4 + $0x60] sm:$0xff] %v599
    %632 = vst [vmem:[#allocation4 + $0x68] sm:$0xff] %v600
    %633 = vst [vmem:[#allocation4 + $0x70] sm:$0xff] %v601
    %634 = vst [vmem:[#allocation4 + $0x78] sm:$0xff] %v602
    %635 = vst [vmem:[#allocation4 + $0x80] sm:$0xff] %v603
    %636 = vst [vmem:[#allocation4 + $0x88] sm:$0xff] %v604
    %637 = vst [vmem:[#allocation4 + $0x90] sm:$0xff] %v605
    %638 = vst [vmem:[#allocation4 + $0x98] sm:$0xff] %v606
    %639 = vst [vmem:[#allocation4 + $0xa0] sm:$0xff] %v607
    %640 = vst [vmem:[#allocation4 + $0xa8] sm:$0xff] %v608
    %641 = vst [vmem:[#allocation4 + $0xb0] sm:$0xff] %v609
    %642 = vst [vmem:[#allocation4 + $0xb8] sm:$0xff] %v610
    %643 = vst [vmem:[#allocation4 + $0xc0] sm:$0xff] %v611
    %644 = vst [vmem:[#allocation4 + $0xc8] sm:$0xff] %v612
    %645 = vst [vmem:[#allocation4 + $0xd0] sm:$0xff] %v613
    %646 = vst [vmem:[#allocation4 + $0xd8] sm:$0xff] %v614
    %647 = vst [vmem:[#allocation4 + $0xe0] sm:$0xff] %v615
    %648 = vst [vmem:[#allocation4 + $0xe8] sm:$0xff] %v616
    %649 = vst [vmem:[#allocation4 + $0xf0] sm:$0xff] %v617
    %650 = vst [vmem:[#allocation4 + $0xf8] sm:$0xff] %v618
    %v651 = vld [vmem:[#allocation4] sm:$0xff]
    %v652 = vld [vmem:[#allocation4 + $0x8] sm:$0xff]
    %v653 = vld [vmem:[#allocation4 + $0x10] sm:$0xff]
    %v654 = vld [vmem:[#allocation4 + $0x18] sm:$0xff]
    %v655 = vld [vmem:[#allocation9] sm:$0xff]
    %v656 = vld [vmem:[#allocation9 + $0x8] sm:$0xff]
    %v657 = vld [vmem:[#allocation9 + $0x10] sm:$0xff]
    %v658 = vld [vmem:[#allocation9 + $0x18] sm:$0xff]
    %v659 = vld [vmem:[#allocation9 + $0x20] sm:$0xff]
    %v660 = vld [vmem:[#allocation9 + $0x28] sm:$0xff]
    %v661 = vld [vmem:[#allocation9 + $0x30] sm:$0xff]
    %v662 = vld [vmem:[#allocation9 + $0x38] sm:$0xff]
    %v663 = vld [vmem:[#allocation9 + $0x40] sm:$0xff]
    %v664 = vld [vmem:[#allocation9 + $0x48] sm:$0xff]
    %v665 = vld [vmem:[#allocation9 + $0x50] sm:$0xff]
    %v666 = vld [vmem:[#allocation9 + $0x58] sm:$0xff]
    %v667 = vld [vmem:[#allocation9 + $0x60] sm:$0xff]
    %v668 = vld [vmem:[#allocation9 + $0x68] sm:$0xff]
    %v669 = vld [vmem:[#allocation9 + $0x70] sm:$0xff]
    %v670 = vld [vmem:[#allocation9 + $0x78] sm:$0xff]
    %v671 = vld [vmem:[#allocation9 + $0x80] sm:$0xff]
    %v672 = vld [vmem:[#allocation9 + $0x88] sm:$0xff]
    %v673 = vld [vmem:[#allocation9 + $0x90] sm:$0xff]
    %v674 = vld [vmem:[#allocation9 + $0x98] sm:$0xff]
    %v675 = vld [vmem:[#allocation9 + $0xa0] sm:$0xff]
    %v676 = vld [vmem:[#allocation9 + $0xa8] sm:$0xff]
    %v677 = vld [vmem:[#allocation9 + $0xb0] sm:$0xff]
    %v678 = vld [vmem:[#allocation9 + $0xb8] sm:$0xff]
    %v679 = vld [vmem:[#allocation9 + $0xc0] sm:$0xff]
    %v680 = vld [vmem:[#allocation9 + $0xc8] sm:$0xff]
    %v681 = vld [vmem:[#allocation9 + $0xd0] sm:$0xff]
    %v682 = vld [vmem:[#allocation9 + $0xd8] sm:$0xff]
    %v683 = vld [vmem:[#allocation9 + $0xe0] sm:$0xff]
    %v684 = vld [vmem:[#allocation9 + $0xe8] sm:$0xff]
    %v685 = vld [vmem:[#allocation9 + $0xf0] sm:$0xff]
    %v686 = vld [vmem:[#allocation9 + $0xf8] sm:$0xff]
    %v687 = vld [vmem:[#allocation9 + $0x100] sm:$0xff]
    %v688 = vld [vmem:[#allocation9 + $0x108] sm:$0xff]
    %v689 = vld [vmem:[#allocation9 + $0x110] sm:$0xff]
    %v690 = vld [vmem:[#allocation9 + $0x118] sm:$0xff]
    %v691 = vld [vmem:[#allocation9 + $0x120] sm:$0xff]
    %v692 = vld [vmem:[#allocation9 + $0x128] sm:$0xff]
    %v693 = vld [vmem:[#allocation9 + $0x130] sm:$0xff]
    %v694 = vld [vmem:[#allocation9 + $0x138] sm:$0xff]
    %v695 = vld [vmem:[#allocation9 + $0x140] sm:$0xff]
    %v696 = vld [vmem:[#allocation9 + $0x148] sm:$0xff]
    %v697 = vld [vmem:[#allocation9 + $0x150] sm:$0xff]
    %v698 = vld [vmem:[#allocation9 + $0x158] sm:$0xff]
    %v699 = vld [vmem:[#allocation9 + $0x160] sm:$0xff]
    %v700 = vld [vmem:[#allocation9 + $0x168] sm:$0xff]
    %v701 = vld [vmem:[#allocation9 + $0x170] sm:$0xff]
    %v702 = vld [vmem:[#allocation9 + $0x178] sm:$0xff]
    %v703 = vld [vmem:[#allocation9 + $0x180] sm:$0xff]
    %v704 = vld [vmem:[#allocation9 + $0x188] sm:$0xff]
    %v705 = vld [vmem:[#allocation9 + $0x190] sm:$0xff]
    %v706 = vld [vmem:[#allocation9 + $0x198] sm:$0xff]
    %v707 = vld [vmem:[#allocation9 + $0x1a0] sm:$0xff]
    %v708 = vld [vmem:[#allocation9 + $0x1a8] sm:$0xff]
    %v709 = vld [vmem:[#allocation9 + $0x1b0] sm:$0xff]
    %v710 = vld [vmem:[#allocation9 + $0x1b8] sm:$0xff]
    %v711 = vld [vmem:[#allocation9 + $0x1c0] sm:$0xff]
    %v712 = vld [vmem:[#allocation9 + $0x1c8] sm:$0xff]
    %v713 = vld [vmem:[#allocation9 + $0x1d0] sm:$0xff]
    %v714 = vld [vmem:[#allocation9 + $0x1d8] sm:$0xff]
    %v715 = vld [vmem:[#allocation9 + $0x1e0] sm:$0xff]
    %v716 = vld [vmem:[#allocation9 + $0x1e8] sm:$0xff]
    %v717 = vld [vmem:[#allocation9 + $0x1f0] sm:$0xff]
    %v718 = vld [vmem:[#allocation9 + $0x1f8] sm:$0xff]
    %719 = vmatpush.msra.mxu0 %v715
    %720 = vmatpush.msra.mxu0 %v711
    %721 = vmatpush.msra.mxu0 %v707
    %722 = vmatpush.msra.mxu0 %v703
    %723 = vmatpush.msra.mxu0 %v699
    %724 = vmatpush.msra.mxu0 %v695
    %725 = vmatpush.msra.mxu0 %v691
    %726 = vmatpush.msra.mxu0 %v687
    %727 = vmatpush.msra.mxu0 %v683
    %728 = vmatpush.msra.mxu0 %v679
    %729 = vmatpush.msra.mxu0 %v675
    %730 = vmatpush.msra.mxu0 %v671
    %731 = vmatpush.msra.mxu0 %v667
    %732 = vmatpush.msra.mxu0 %v663
    %733 = vmatpush.msra.mxu0 %v659
    %734 = vmatpush.msra.mxu0 %v655
    %735 = vmatmul.f32.gmra.mxu0 0.0
    %v736 = vpop.f32.mrf.mxu0
    %v737 = vadd.f32 0.0, %v736
    %738 = vdwg.mxu0
    %739 = vmatpush.msra.mxu0 %v716
    %740 = vmatpush.msra.mxu0 %v712
    %741 = vmatpush.msra.mxu0 %v708
    %742 = vmatpush.msra.mxu0 %v704
    %743 = vmatpush.msra.mxu0 %v700
    %744 = vmatpush.msra.mxu0 %v696
    %745 = vmatpush.msra.mxu0 %v692
    %746 = vmatpush.msra.mxu0 %v688
    %747 = vmatpush.msra.mxu0 %v684
    %748 = vmatpush.msra.mxu0 %v680
    %749 = vmatpush.msra.mxu0 %v676
    %750 = vmatpush.msra.mxu0 %v672
    %751 = vmatpush.msra.mxu0 %v668
    %752 = vmatpush.msra.mxu0 %v664
    %753 = vmatpush.msra.mxu0 %v660
    %754 = vmatpush.msra.mxu0 %v656
    %755 = vmatmul.f32.gmra.mxu0 0.0
    %v756 = vpop.f32.mrf.mxu0
    %v757 = vadd.f32 0.0, %v756
    %758 = vdwg.mxu0
    %759 = vmatpush.msra.mxu0 %v717
    %760 = vmatpush.msra.mxu0 %v713
    %761 = vmatpush.msra.mxu0 %v709
    %762 = vmatpush.msra.mxu0 %v705
    %763 = vmatpush.msra.mxu0 %v701
    %764 = vmatpush.msra.mxu0 %v697
    %765 = vmatpush.msra.mxu0 %v693
    %766 = vmatpush.msra.mxu0 %v689
    %767 = vmatpush.msra.mxu0 %v685
    %768 = vmatpush.msra.mxu0 %v681
    %769 = vmatpush.msra.mxu0 %v677
    %770 = vmatpush.msra.mxu0 %v673
    %771 = vmatpush.msra.mxu0 %v669
    %772 = vmatpush.msra.mxu0 %v665
    %773 = vmatpush.msra.mxu0 %v661
    %774 = vmatpush.msra.mxu0 %v657
    %775 = vmatmul.f32.gmra.mxu0 0.0
    %v776 = vpop.f32.mrf.mxu0
    %v777 = vadd.f32 0.0, %v776
    %778 = vdwg.mxu0
    %779 = vmatpush.msra.mxu0 %v718
    %780 = vmatpush.msra.mxu0 %v714
    %781 = vmatpush.msra.mxu0 %v710
    %782 = vmatpush.msra.mxu0 %v706
    %783 = vmatpush.msra.mxu0 %v702
    %784 = vmatpush.msra.mxu0 %v698
    %785 = vmatpush.msra.mxu0 %v694
    %786 = vmatpush.msra.mxu0 %v690
    %787 = vmatpush.msra.mxu0 %v686
    %788 = vmatpush.msra.mxu0 %v682
    %789 = vmatpush.msra.mxu0 %v678
    %790 = vmatpush.msra.mxu0 %v674
    %791 = vmatpush.msra.mxu0 %v670
    %792 = vmatpush.msra.mxu0 %v666
    %793 = vmatpush.msra.mxu0 %v662
    %794 = vmatpush.msra.mxu0 %v658
    %795 = vmatmul.f32.gmra.mxu0 0.0
    %v796 = vpop.f32.mrf.mxu0
    %v797 = vadd.f32 0.0, %v796
    %798 = vdwg.mxu0
    %v799 = vadd.f32 %v651, %v737
    %v800 = vadd.f32 %v652, %v757
    %v801 = vadd.f32 %v653, %v777
    %v802 = vadd.f32 %v654, %v797
    %v803 = vxor.u32 %v799, 2147483648
    %v804 = vxor.u32 %v800, 2147483648
    %v805 = vxor.u32 %v801, 2147483648
    %v806 = vmul.f32 %v803, 1.442695
    %v807 = vpow.pop %v806
    %v808 = vmul.f32 %v804, 1.442695
    %v809 = vpow.pop %v808
    %v810 = vmul.f32 %v805, 1.442695
    %v811 = vpow.pop %v810
    %v812 = vadd.f32 %v807, 1.0
    %v813 = vadd.f32 %v809, 1.0
    %v814 = vadd.f32 %v811, 1.0
    %v815 = vrcp.pop %v812
    %v816 = vmul.f32 %v812, %v815
    %v817 = vsub.f32 1.0, %v816
    %v818 = vmul.f32 %v815, %v817
    %v819 = vadd.f32 %v815, %v818
    %vm820 = vweird.f32 %v812
    %vm821 = vweird.f32 %v815
    %vm822 = vmor %vm820, %vm821
    %v823 = vsel %vm822, %v815, %v819
    %v824 = vand.u32 2147483647, %v812
    %vm825 = vcmp.eq.f32.partialorder %v824, 8.507059e+37
    %v826 = vand.u32 %v812, 2147483648
    %v827 = vor.u32 1.1754944e-38, %v826
    %v828 = vsel %vm825, %v827, %v823
    %v829 = vmul.f32 1.0, %v828
    %v830 = vrcp.pop %v813
    %v831 = vmul.f32 %v813, %v830
    %v832 = vsub.f32 1.0, %v831
    %v833 = vmul.f32 %v830, %v832
    %v834 = vadd.f32 %v830, %v833
    %vm835 = vweird.f32 %v813
    %vm836 = vweird.f32 %v830
    %vm837 = vmor %vm835, %vm836
    %v838 = vsel %vm837, %v830, %v834
    %v839 = vand.u32 2147483647, %v813
    %vm840 = vcmp.eq.f32.partialorder %v839, 8.507059e+37
    %v841 = vand.u32 %v813, 2147483648
    %v842 = vor.u32 1.1754944e-38, %v841
    %v843 = vsel %vm840, %v842, %v838
    %v844 = vmul.f32 1.0, %v843
    %v845 = vrcp.pop %v814
    %v846 = vmul.f32 %v814, %v845
    %v847 = vsub.f32 1.0, %v846
    %v848 = vmul.f32 %v845, %v847
    %v849 = vadd.f32 %v845, %v848
    %vm850 = vweird.f32 %v814
    %vm851 = vweird.f32 %v845
    %vm852 = vmor %vm850, %vm851
    %v853 = vsel %vm852, %v845, %v849
    %v854 = vand.u32 2147483647, %v814
    %vm855 = vcmp.eq.f32.partialorder %v854, 8.507059e+37
    %v856 = vand.u32 %v814, 2147483648
    %v857 = vor.u32 1.1754944e-38, %v856
    %v858 = vsel %vm855, %v857, %v853
    %v859 = vmul.f32 1.0, %v858
    %v860 = vtanh.pop %v802
    %v861 = vmul.f32 %v844, 0.0
    %v862 = vmul.f32 %v829, %v860
    %v863 = vadd.f32 %v861, %v862
    %v864 = vtanh.pop %v863
    %v865 = vmul.f32 %v859, %v864
    %866 = vst [vmem:[#allocation2] sm:$0xff] %v865
    %867 = vst [vmem:[#allocation3 + $0x38] sm:$0xff] %v865
    %v868 = vld [vmem:[#allocation4 + $0x20] sm:$0xff]
    %v869 = vld [vmem:[#allocation4 + $0x28] sm:$0xff]
    %v870 = vld [vmem:[#allocation4 + $0x30] sm:$0xff]
    %v871 = vld [vmem:[#allocation4 + $0x38] sm:$0xff]
    %v872 = vld [vmem:[#allocation9] sm:$0xff]
    %v873 = vld [vmem:[#allocation9 + $0x8] sm:$0xff]
    %v874 = vld [vmem:[#allocation9 + $0x10] sm:$0xff]
    %v875 = vld [vmem:[#allocation9 + $0x18] sm:$0xff]
    %v876 = vld [vmem:[#allocation9 + $0x20] sm:$0xff]
    %v877 = vld [vmem:[#allocation9 + $0x28] sm:$0xff]
    %v878 = vld [vmem:[#allocation9 + $0x30] sm:$0xff]
    %v879 = vld [vmem:[#allocation9 + $0x38] sm:$0xff]
    %v880 = vld [vmem:[#allocation9 + $0x40] sm:$0xff]
    %v881 = vld [vmem:[#allocation9 + $0x48] sm:$0xff]
    %v882 = vld [vmem:[#allocation9 + $0x50] sm:$0xff]
    %v883 = vld [vmem:[#allocation9 + $0x58] sm:$0xff]
    %v884 = vld [vmem:[#allocation9 + $0x60] sm:$0xff]
    %v885 = vld [vmem:[#allocation9 + $0x68] sm:$0xff]
    %v886 = vld [vmem:[#allocation9 + $0x70] sm:$0xff]
    %v887 = vld [vmem:[#allocation9 + $0x78] sm:$0xff]
    %v888 = vld [vmem:[#allocation9 + $0x80] sm:$0xff]
    %v889 = vld [vmem:[#allocation9 + $0x88] sm:$0xff]
    %v890 = vld [vmem:[#allocation9 + $0x90] sm:$0xff]
    %v891 = vld [vmem:[#allocation9 + $0x98] sm:$0xff]
    %v892 = vld [vmem:[#allocation9 + $0xa0] sm:$0xff]
    %v893 = vld [vmem:[#allocation9 + $0xa8] sm:$0xff]
    %v894 = vld [vmem:[#allocation9 + $0xb0] sm:$0xff]
    %v895 = vld [vmem:[#allocation9 + $0xb8] sm:$0xff]
    %v896 = vld [vmem:[#allocation9 + $0xc0] sm:$0xff]
    %v897 = vld [vmem:[#allocation9 + $0xc8] sm:$0xff]
    %v898 = vld [vmem:[#allocation9 + $0xd0] sm:$0xff]
    %v899 = vld [vmem:[#allocation9 + $0xd8] sm:$0xff]
    %v900 = vld [vmem:[#allocation9 + $0xe0] sm:$0xff]
    %v901 = vld [vmem:[#allocation9 + $0xe8] sm:$0xff]
    %v902 = vld [vmem:[#allocation9 + $0xf0] sm:$0xff]
    %v903 = vld [vmem:[#allocation9 + $0xf8] sm:$0xff]
    %v904 = vld [vmem:[#allocation9 + $0x100] sm:$0xff]
    %v905 = vld [vmem:[#allocation9 + $0x108] sm:$0xff]
    %v906 = vld [vmem:[#allocation9 + $0x110] sm:$0xff]
    %v907 = vld [vmem:[#allocation9 + $0x118] sm:$0xff]
    %v908 = vld [vmem:[#allocation9 + $0x120] sm:$0xff]
    %v909 = vld [vmem:[#allocation9 + $0x128] sm:$0xff]
    %v910 = vld [vmem:[#allocation9 + $0x130] sm:$0xff]
    %v911 = vld [vmem:[#allocation9 + $0x138] sm:$0xff]
    %v912 = vld [vmem:[#allocation9 + $0x140] sm:$0xff]
    %v913 = vld [vmem:[#allocation9 + $0x148] sm:$0xff]
    %v914 = vld [vmem:[#allocation9 + $0x150] sm:$0xff]
    %v915 = vld [vmem:[#allocation9 + $0x158] sm:$0xff]
    %v916 = vld [vmem:[#allocation9 + $0x160] sm:$0xff]
    %v917 = vld [vmem:[#allocation9 + $0x168] sm:$0xff]
    %v918 = vld [vmem:[#allocation9 + $0x170] sm:$0xff]
    %v919 = vld [vmem:[#allocation9 + $0x178] sm:$0xff]
    %v920 = vld [vmem:[#allocation9 + $0x180] sm:$0xff]
    %v921 = vld [vmem:[#allocation9 + $0x188] sm:$0xff]
    %v922 = vld [vmem:[#allocation9 + $0x190] sm:$0xff]
    %v923 = vld [vmem:[#allocation9 + $0x198] sm:$0xff]
    %v924 = vld [vmem:[#allocation9 + $0x1a0] sm:$0xff]
    %v925 = vld [vmem:[#allocation9 + $0x1a8] sm:$0xff]
    %v926 = vld [vmem:[#allocation9 + $0x1b0] sm:$0xff]
    %v927 = vld [vmem:[#allocation9 + $0x1b8] sm:$0xff]
    %v928 = vld [vmem:[#allocation9 + $0x1c0] sm:$0xff]
    %v929 = vld [vmem:[#allocation9 + $0x1c8] sm:$0xff]
    %v930 = vld [vmem:[#allocation9 + $0x1d0] sm:$0xff]
    %v931 = vld [vmem:[#allocation9 + $0x1d8] sm:$0xff]
    %v932 = vld [vmem:[#allocation9 + $0x1e0] sm:$0xff]
    %v933 = vld [vmem:[#allocation9 + $0x1e8] sm:$0xff]
    %v934 = vld [vmem:[#allocation9 + $0x1f0] sm:$0xff]
    %v935 = vld [vmem:[#allocation9 + $0x1f8] sm:$0xff]
    %936 = vmatpush.msra.mxu0 %v932
    %937 = vmatpush.msra.mxu0 %v928
    %938 = vmatpush.msra.mxu0 %v924
    %939 = vmatpush.msra.mxu0 %v920
    %940 = vmatpush.msra.mxu0 %v916
    %941 = vmatpush.msra.mxu0 %v912
    %942 = vmatpush.msra.mxu0 %v908
    %943 = vmatpush.msra.mxu0 %v904
    %944 = vmatpush.msra.mxu0 %v900
    %945 = vmatpush.msra.mxu0 %v896
    %946 = vmatpush.msra.mxu0 %v892
    %947 = vmatpush.msra.mxu0 %v888
    %948 = vmatpush.msra.mxu0 %v884
    %949 = vmatpush.msra.mxu0 %v880
    %950 = vmatpush.msra.mxu0 %v876
    %951 = vmatpush.msra.mxu0 %v872
    %952 = vmatmul.f32.gmra.mxu0 %v865
    %v953 = vpop.f32.mrf.mxu0
    %v954 = vadd.f32 0.0, %v953
    %955 = vdwg.mxu0
    %956 = vmatpush.msra.mxu0 %v933
    %957 = vmatpush.msra.mxu0 %v929
    %958 = vmatpush.msra.mxu0 %v925
    %959 = vmatpush.msra.mxu0 %v921
    %960 = vmatpush.msra.mxu0 %v917
    %961 = vmatpush.msra.mxu0 %v913
    %962 = vmatpush.msra.mxu0 %v909
    %963 = vmatpush.msra.mxu0 %v905
    %964 = vmatpush.msra.mxu0 %v901
    %965 = vmatpush.msra.mxu0 %v897
    %966 = vmatpush.msra.mxu0 %v893
    %967 = vmatpush.msra.mxu0 %v889
    %968 = vmatpush.msra.mxu0 %v885
    %969 = vmatpush.msra.mxu0 %v881
    %970 = vmatpush.msra.mxu0 %v877
    %971 = vmatpush.msra.mxu0 %v873
    %972 = vmatmul.f32.gmra.mxu0 %v865
    %v973 = vpop.f32.mrf.mxu0
    %v974 = vadd.f32 0.0, %v973
    %975 = vdwg.mxu0
    %976 = vmatpush.msra.mxu0 %v934
    %977 = vmatpush.msra.mxu0 %v930
    %978 = vmatpush.msra.mxu0 %v926
    %979 = vmatpush.msra.mxu0 %v922
    %980 = vmatpush.msra.mxu0 %v918
    %981 = vmatpush.msra.mxu0 %v914
    %982 = vmatpush.msra.mxu0 %v910
    %983 = vmatpush.msra.mxu0 %v906
    %984 = vmatpush.msra.mxu0 %v902
    %985 = vmatpush.msra.mxu0 %v898
    %986 = vmatpush.msra.mxu0 %v894
    %987 = vmatpush.msra.mxu0 %v890
    %988 = vmatpush.msra.mxu0 %v886
    %989 = vmatpush.msra.mxu0 %v882
    %990 = vmatpush.msra.mxu0 %v878
    %991 = vmatpush.msra.mxu0 %v874
    %992 = vmatmul.f32.gmra.mxu0 %v865
    %v993 = vpop.f32.mrf.mxu0
    %v994 = vadd.f32 0.0, %v993
    %995 = vdwg.mxu0
    %996 = vmatpush.msra.mxu0 %v935
    %997 = vmatpush.msra.mxu0 %v931
    %998 = vmatpush.msra.mxu0 %v927
    %999 = vmatpush.msra.mxu0 %v923
    %1000 = vmatpush.msra.mxu0 %v919
    %1001 = vmatpush.msra.mxu0 %v915
    %1002 = vmatpush.msra.mxu0 %v911
    %1003 = vmatpush.msra.mxu0 %v907
    %1004 = vmatpush.msra.mxu0 %v903
    %1005 = vmatpush.msra.mxu0 %v899
    %1006 = vmatpush.msra.mxu0 %v895
    %1007 = vmatpush.msra.mxu0 %v891
    %1008 = vmatpush.msra.mxu0 %v887
    %1009 = vmatpush.msra.mxu0 %v883
    %1010 = vmatpush.msra.mxu0 %v879
    %1011 = vmatpush.msra.mxu0 %v875
    %1012 = vmatmul.f32.gmra.mxu0 %v865
    %v1013 = vpop.f32.mrf.mxu0
    %v1014 = vadd.f32 0.0, %v1013
    %1015 = vdwg.mxu0
    %v1016 = vadd.f32 %v868, %v954
    %v1017 = vadd.f32 %v869, %v974
    %v1018 = vadd.f32 %v870, %v994
    %v1019 = vadd.f32 %v871, %v1014
    %v1020 = vxor.u32 %v1016, 2147483648
    %v1021 = vxor.u32 %v1017, 2147483648
    %v1022 = vxor.u32 %v1018, 2147483648
    %v1023 = vmul.f32 %v1020, 1.442695
    %v1024 = vpow.pop %v1023
    %v1025 = vmul.f32 %v1021, 1.442695
    %v1026 = vpow.pop %v1025
    %v1027 = vmul.f32 %v1022, 1.442695
    %v1028 = vpow.pop %v1027
    %v1029 = vadd.f32 %v1024, 1.0
    %v1030 = vadd.f32 %v1026, 1.0
    %v1031 = vadd.f32 %v1028, 1.0
    %v1032 = vrcp.pop %v1029
    %v1033 = vmul.f32 %v1029, %v1032
    %v1034 = vsub.f32 1.0, %v1033
    %v1035 = vmul.f32 %v1032, %v1034
    %v1036 = vadd.f32 %v1032, %v1035
    %vm1037 = vweird.f32 %v1029
    %vm1038 = vweird.f32 %v1032
    %vm1039 = vmor %vm1037, %vm1038
    %v1040 = vsel %vm1039, %v1032, %v1036
    %v1041 = vand.u32 2147483647, %v1029
    %vm1042 = vcmp.eq.f32.partialorder %v1041, 8.507059e+37
    %v1043 = vand.u32 %v1029, 2147483648
    %v1044 = vor.u32 1.1754944e-38, %v1043
    %v1045 = vsel %vm1042, %v1044, %v1040
    %v1046 = vmul.f32 1.0, %v1045
    %v1047 = vrcp.pop %v1030
    %v1048 = vmul.f32 %v1030, %v1047
    %v1049 = vsub.f32 1.0, %v1048
    %v1050 = vmul.f32 %v1047, %v1049
    %v1051 = vadd.f32 %v1047, %v1050
    %vm1052 = vweird.f32 %v1030
    %vm1053 = vweird.f32 %v1047
    %vm1054 = vmor %vm1052, %vm1053
    %v1055 = vsel %vm1054, %v1047, %v1051
    %v1056 = vand.u32 2147483647, %v1030
    %vm1057 = vcmp.eq.f32.partialorder %v1056, 8.507059e+37
    %v1058 = vand.u32 %v1030, 2147483648
    %v1059 = vor.u32 1.1754944e-38, %v1058
    %v1060 = vsel %vm1057, %v1059, %v1055
    %v1061 = vmul.f32 1.0, %v1060
    %v1062 = vrcp.pop %v1031
    %v1063 = vmul.f32 %v1031, %v1062
    %v1064 = vsub.f32 1.0, %v1063
    %v1065 = vmul.f32 %v1062, %v1064
    %v1066 = vadd.f32 %v1062, %v1065
    %vm1067 = vweird.f32 %v1031
    %vm1068 = vweird.f32 %v1062
    %vm1069 = vmor %vm1067, %vm1068
    %v1070 = vsel %vm1069, %v1062, %v1066
    %v1071 = vand.u32 2147483647, %v1031
    %vm1072 = vcmp.eq.f32.partialorder %v1071, 8.507059e+37
    %v1073 = vand.u32 %v1031, 2147483648
    %v1074 = vor.u32 1.1754944e-38, %v1073
    %v1075 = vsel %vm1072, %v1074, %v1070
    %v1076 = vmul.f32 1.0, %v1075
    %v1077 = vtanh.pop %v1019
    %v1078 = vmul.f32 %v1061, %v863
    %v1079 = vmul.f32 %v1046, %v1077
    %v1080 = vadd.f32 %v1078, %v1079
    %v1081 = vtanh.pop %v1080
    %v1082 = vmul.f32 %v1076, %v1081
    %1083 = vst [vmem:[#allocation2 + $0x8] sm:$0xff] %v1082
    %1084 = vst [vmem:[#allocation3 + $0x30] sm:$0xff] %v1082
    %v1085 = vld [vmem:[#allocation4 + $0x40] sm:$0xff]
    %v1086 = vld [vmem:[#allocation4 + $0x48] sm:$0xff]
    %v1087 = vld [vmem:[#allocation4 + $0x50] sm:$0xff]
    %v1088 = vld [vmem:[#allocation4 + $0x58] sm:$0xff]
    %v1089 = vld [vmem:[#allocation9] sm:$0xff]
    %v1090 = vld [vmem:[#allocation9 + $0x8] sm:$0xff]
    %v1091 = vld [vmem:[#allocation9 + $0x10] sm:$0xff]
    %v1092 = vld [vmem:[#allocation9 + $0x18] sm:$0xff]
    %v1093 = vld [vmem:[#allocation9 + $0x20] sm:$0xff]
    %v1094 = vld [vmem:[#allocation9 + $0x28] sm:$0xff]
    %v1095 = vld [vmem:[#allocation9 + $0x30] sm:$0xff]
    %v1096 = vld [vmem:[#allocation9 + $0x38] sm:$0xff]
    %v1097 = vld [vmem:[#allocation9 + $0x40] sm:$0xff]
    %v1098 = vld [vmem:[#allocation9 + $0x48] sm:$0xff]
    %v1099 = vld [vmem:[#allocation9 + $0x50] sm:$0xff]
    %v1100 = vld [vmem:[#allocation9 + $0x58] sm:$0xff]
    %v1101 = vld [vmem:[#allocation9 + $0x60] sm:$0xff]
    %v1102 = vld [vmem:[#allocation9 + $0x68] sm:$0xff]
    %v1103 = vld [vmem:[#allocation9 + $0x70] sm:$0xff]
    %v1104 = vld [vmem:[#allocation9 + $0x78] sm:$0xff]
    %v1105 = vld [vmem:[#allocation9 + $0x80] sm:$0xff]
    %v1106 = vld [vmem:[#allocation9 + $0x88] sm:$0xff]
    %v1107 = vld [vmem:[#allocation9 + $0x90] sm:$0xff]
    %v1108 = vld [vmem:[#allocation9 + $0x98] sm:$0xff]
    %v1109 = vld [vmem:[#allocation9 + $0xa0] sm:$0xff]
    %v1110 = vld [vmem:[#allocation9 + $0xa8] sm:$0xff]
    %v1111 = vld [vmem:[#allocation9 + $0xb0] sm:$0xff]
    %v1112 = vld [vmem:[#allocation9 + $0xb8] sm:$0xff]
    %v1113 = vld [vmem:[#allocation9 + $0xc0] sm:$0xff]
    %v1114 = vld [vmem:[#allocation9 + $0xc8] sm:$0xff]
    %v1115 = vld [vmem:[#allocation9 + $0xd0] sm:$0xff]
    %v1116 = vld [vmem:[#allocation9 + $0xd8] sm:$0xff]
    %v1117 = vld [vmem:[#allocation9 + $0xe0] sm:$0xff]
    %v1118 = vld [vmem:[#allocation9 + $0xe8] sm:$0xff]
    %v1119 = vld [vmem:[#allocation9 + $0xf0] sm:$0xff]
    %v1120 = vld [vmem:[#allocation9 + $0xf8] sm:$0xff]
    %v1121 = vld [vmem:[#allocation9 + $0x100] sm:$0xff]
    %v1122 = vld [vmem:[#allocation9 + $0x108] sm:$0xff]
    %v1123 = vld [vmem:[#allocation9 + $0x110] sm:$0xff]
    %v1124 = vld [vmem:[#allocation9 + $0x118] sm:$0xff]
    %v1125 = vld [vmem:[#allocation9 + $0x120] sm:$0xff]
    %v1126 = vld [vmem:[#allocation9 + $0x128] sm:$0xff]
    %v1127 = vld [vmem:[#allocation9 + $0x130] sm:$0xff]
    %v1128 = vld [vmem:[#allocation9 + $0x138] sm:$0xff]
    %v1129 = vld [vmem:[#allocation9 + $0x140] sm:$0xff]
    %v1130 = vld [vmem:[#allocation9 + $0x148] sm:$0xff]
    %v1131 = vld [vmem:[#allocation9 + $0x150] sm:$0xff]
    %v1132 = vld [vmem:[#allocation9 + $0x158] sm:$0xff]
    %v1133 = vld [vmem:[#allocation9 + $0x160] sm:$0xff]
    %v1134 = vld [vmem:[#allocation9 + $0x168] sm:$0xff]
    %v1135 = vld [vmem:[#allocation9 + $0x170] sm:$0xff]
    %v1136 = vld [vmem:[#allocation9 + $0x178] sm:$0xff]
    %v1137 = vld [vmem:[#allocation9 + $0x180] sm:$0xff]
    %v1138 = vld [vmem:[#allocation9 + $0x188] sm:$0xff]
    %v1139 = vld [vmem:[#allocation9 + $0x190] sm:$0xff]
    %v1140 = vld [vmem:[#allocation9 + $0x198] sm:$0xff]
    %v1141 = vld [vmem:[#allocation9 + $0x1a0] sm:$0xff]
    %v1142 = vld [vmem:[#allocation9 + $0x1a8] sm:$0xff]
    %v1143 = vld [vmem:[#allocation9 + $0x1b0] sm:$0xff]
    %v1144 = vld [vmem:[#allocation9 + $0x1b8] sm:$0xff]
    %v1145 = vld [vmem:[#allocation9 + $0x1c0] sm:$0xff]
    %v1146 = vld [vmem:[#allocation9 + $0x1c8] sm:$0xff]
    %v1147 = vld [vmem:[#allocation9 + $0x1d0] sm:$0xff]
    %v1148 = vld [vmem:[#allocation9 + $0x1d8] sm:$0xff]
    %v1149 = vld [vmem:[#allocation9 + $0x1e0] sm:$0xff]
    %v1150 = vld [vmem:[#allocation9 + $0x1e8] sm:$0xff]
    %v1151 = vld [vmem:[#allocation9 + $0x1f0] sm:$0xff]
    %v1152 = vld [vmem:[#allocation9 + $0x1f8] sm:$0xff]
    %1153 = vmatpush.msra.mxu0 %v1149
    %1154 = vmatpush.msra.mxu0 %v1145
    %1155 = vmatpush.msra.mxu0 %v1141
    %1156 = vmatpush.msra.mxu0 %v1137
    %1157 = vmatpush.msra.mxu0 %v1133
    %1158 = vmatpush.msra.mxu0 %v1129
    %1159 = vmatpush.msra.mxu0 %v1125
    %1160 = vmatpush.msra.mxu0 %v1121
    %1161 = vmatpush.msra.mxu0 %v1117
    %1162 = vmatpush.msra.mxu0 %v1113
    %1163 = vmatpush.msra.mxu0 %v1109
    %1164 = vmatpush.msra.mxu0 %v1105
    %1165 = vmatpush.msra.mxu0 %v1101
    %1166 = vmatpush.msra.mxu0 %v1097
    %1167 = vmatpush.msra.mxu0 %v1093
    %1168 = vmatpush.msra.mxu0 %v1089
    %1169 = vmatmul.f32.gmra.mxu0 %v1082
    %v1170 = vpop.f32.mrf.mxu0
    %v1171 = vadd.f32 0.0, %v1170
    %1172 = vdwg.mxu0
    %1173 = vmatpush.msra.mxu0 %v1150
    %1174 = vmatpush.msra.mxu0 %v1146
    %1175 = vmatpush.msra.mxu0 %v1142
    %1176 = vmatpush.msra.mxu0 %v1138
    %1177 = vmatpush.msra.mxu0 %v1134
    %1178 = vmatpush.msra.mxu0 %v1130
    %1179 = vmatpush.msra.mxu0 %v1126
    %1180 = vmatpush.msra.mxu0 %v1122
    %1181 = vmatpush.msra.mxu0 %v1118
    %1182 = vmatpush.msra.mxu0 %v1114
    %1183 = vmatpush.msra.mxu0 %v1110
    %1184 = vmatpush.msra.mxu0 %v1106
    %1185 = vmatpush.msra.mxu0 %v1102
    %1186 = vmatpush.msra.mxu0 %v1098
    %1187 = vmatpush.msra.mxu0 %v1094
    %1188 = vmatpush.msra.mxu0 %v1090
    %1189 = vmatmul.f32.gmra.mxu0 %v1082
    %v1190 = vpop.f32.mrf.mxu0
    %v1191 = vadd.f32 0.0, %v1190
    %1192 = vdwg.mxu0
    %1193 = vmatpush.msra.mxu0 %v1151
    %1194 = vmatpush.msra.mxu0 %v1147
    %1195 = vmatpush.msra.mxu0 %v1143
    %1196 = vmatpush.msra.mxu0 %v1139
    %1197 = vmatpush.msra.mxu0 %v1135
    %1198 = vmatpush.msra.mxu0 %v1131
    %1199 = vmatpush.msra.mxu0 %v1127
    %1200 = vmatpush.msra.mxu0 %v1123
    %1201 = vmatpush.msra.mxu0 %v1119
    %1202 = vmatpush.msra.mxu0 %v1115
    %1203 = vmatpush.msra.mxu0 %v1111
    %1204 = vmatpush.msra.mxu0 %v1107
    %1205 = vmatpush.msra.mxu0 %v1103
    %1206 = vmatpush.msra.mxu0 %v1099
    %1207 = vmatpush.msra.mxu0 %v1095
    %1208 = vmatpush.msra.mxu0 %v1091
    %1209 = vmatmul.f32.gmra.mxu0 %v1082
    %v1210 = vpop.f32.mrf.mxu0
    %v1211 = vadd.f32 0.0, %v1210
    %1212 = vdwg.mxu0
    %1213 = vmatpush.msra.mxu0 %v1152
    %1214 = vmatpush.msra.mxu0 %v1148
    %1215 = vmatpush.msra.mxu0 %v1144
    %1216 = vmatpush.msra.mxu0 %v1140
    %1217 = vmatpush.msra.mxu0 %v1136
    %1218 = vmatpush.msra.mxu0 %v1132
    %1219 = vmatpush.msra.mxu0 %v1128
    %1220 = vmatpush.msra.mxu0 %v1124
    %1221 = vmatpush.msra.mxu0 %v1120
    %1222 = vmatpush.msra.mxu0 %v1116
    %1223 = vmatpush.msra.mxu0 %v1112
    %1224 = vmatpush.msra.mxu0 %v1108
    %1225 = vmatpush.msra.mxu0 %v1104
    %1226 = vmatpush.msra.mxu0 %v1100
    %1227 = vmatpush.msra.mxu0 %v1096
    %1228 = vmatpush.msra.mxu0 %v1092
    %1229 = vmatmul.f32.gmra.mxu0 %v1082
    %v1230 = vpop.f32.mrf.mxu0
    %v1231 = vadd.f32 0.0, %v1230
    %1232 = vdwg.mxu0
    %v1233 = vadd.f32 %v1085, %v1171
    %v1234 = vadd.f32 %v1086, %v1191
    %v1235 = vadd.f32 %v1087, %v1211
    %v1236 = vadd.f32 %v1088, %v1231
    %v1237 = vxor.u32 %v1233, 2147483648
    %v1238 = vxor.u32 %v1234, 2147483648
    %v1239 = vxor.u32 %v1235, 2147483648
    %v1240 = vmul.f32 %v1237, 1.442695
    %v1241 = vpow.pop %v1240
    %v1242 = vmul.f32 %v1238, 1.442695
    %v1243 = vpow.pop %v1242
    %v1244 = vmul.f32 %v1239, 1.442695
    %v1245 = vpow.pop %v1244
    %v1246 = vadd.f32 %v1241, 1.0
    %v1247 = vadd.f32 %v1243, 1.0
    %v1248 = vadd.f32 %v1245, 1.0
    %v1249 = vrcp.pop %v1246
    %v1250 = vmul.f32 %v1246, %v1249
    %v1251 = vsub.f32 1.0, %v1250
    %v1252 = vmul.f32 %v1249, %v1251
    %v1253 = vadd.f32 %v1249, %v1252
    %vm1254 = vweird.f32 %v1246
    %vm1255 = vweird.f32 %v1249
    %vm1256 = vmor %vm1254, %vm1255
    %v1257 = vsel %vm1256, %v1249, %v1253
    %v1258 = vand.u32 2147483647, %v1246
    %vm1259 = vcmp.eq.f32.partialorder %v1258, 8.507059e+37
    %v1260 = vand.u32 %v1246, 2147483648
    %v1261 = vor.u32 1.1754944e-38, %v1260
    %v1262 = vsel %vm1259, %v1261, %v1257
    %v1263 = vmul.f32 1.0, %v1262
    %v1264 = vrcp.pop %v1247
    %v1265 = vmul.f32 %v1247, %v1264
    %v1266 = vsub.f32 1.0, %v1265
    %v1267 = vmul.f32 %v1264, %v1266
    %v1268 = vadd.f32 %v1264, %v1267
    %vm1269 = vweird.f32 %v1247
    %vm1270 = vweird.f32 %v1264
    %vm1271 = vmor %vm1269, %vm1270
    %v1272 = vsel %vm1271, %v1264, %v1268
    %v1273 = vand.u32 2147483647, %v1247
    %vm1274 = vcmp.eq.f32.partialorder %v1273, 8.507059e+37
    %v1275 = vand.u32 %v1247, 2147483648
    %v1276 = vor.u32 1.1754944e-38, %v1275
    %v1277 = vsel %vm1274, %v1276, %v1272
    %v1278 = vmul.f32 1.0, %v1277
    %v1279 = vrcp.pop %v1248
    %v1280 = vmul.f32 %v1248, %v1279
    %v1281 = vsub.f32 1.0, %v1280
    %v1282 = vmul.f32 %v1279, %v1281
    %v1283 = vadd.f32 %v1279, %v1282
    %vm1284 = vweird.f32 %v1248
    %vm1285 = vweird.f32 %v1279
    %vm1286 = vmor %vm1284, %vm1285
    %v1287 = vsel %vm1286, %v1279, %v1283
    %v1288 = vand.u32 2147483647, %v1248
    %vm1289 = vcmp.eq.f32.partialorder %v1288, 8.507059e+37
    %v1290 = vand.u32 %v1248, 2147483648
    %v1291 = vor.u32 1.1754944e-38, %v1290
    %v1292 = vsel %vm1289, %v1291, %v1287
    %v1293 = vmul.f32 1.0, %v1292
    %v1294 = vtanh.pop %v1236
    %v1295 = vmul.f32 %v1278, %v1080
    %v1296 = vmul.f32 %v1263, %v1294
    %v1297 = vadd.f32 %v1295, %v1296
    %v1298 = vtanh.pop %v1297
    %v1299 = vmul.f32 %v1293, %v1298
    %1300 = vst [vmem:[#allocation2 + $0x10] sm:$0xff] %v1299
    %1301 = vst [vmem:[#allocation3 + $0x28] sm:$0xff] %v1299
    %v1302 = vld [vmem:[#allocation4 + $0x60] sm:$0xff]
    %v1303 = vld [vmem:[#allocation4 + $0x68] sm:$0xff]
    %v1304 = vld [vmem:[#allocation4 + $0x70] sm:$0xff]
    %v1305 = vld [vmem:[#allocation4 + $0x78] sm:$0xff]
    %v1306 = vld [vmem:[#allocation9] sm:$0xff]
    %v1307 = vld [vmem:[#allocation9 + $0x8] sm:$0xff]
    %v1308 = vld [vmem:[#allocation9 + $0x10] sm:$0xff]
    %v1309 = vld [vmem:[#allocation9 + $0x18] sm:$0xff]
    %v1310 = vld [vmem:[#allocation9 + $0x20] sm:$0xff]
    %v1311 = vld [vmem:[#allocation9 + $0x28] sm:$0xff]
    %v1312 = vld [vmem:[#allocation9 + $0x30] sm:$0xff]
    %v1313 = vld [vmem:[#allocation9 + $0x38] sm:$0xff]
    %v1314 = vld [vmem:[#allocation9 + $0x40] sm:$0xff]
    %v1315 = vld [vmem:[#allocation9 + $0x48] sm:$0xff]
    %v1316 = vld [vmem:[#allocation9 + $0x50] sm:$0xff]
    %v1317 = vld [vmem:[#allocation9 + $0x58] sm:$0xff]
    %v1318 = vld [vmem:[#allocation9 + $0x60] sm:$0xff]
    %v1319 = vld [vmem:[#allocation9 + $0x68] sm:$0xff]
    %v1320 = vld [vmem:[#allocation9 + $0x70] sm:$0xff]
    %v1321 = vld [vmem:[#allocation9 + $0x78] sm:$0xff]
    %v1322 = vld [vmem:[#allocation9 + $0x80] sm:$0xff]
    %v1323 = vld [vmem:[#allocation9 + $0x88] sm:$0xff]
    %v1324 = vld [vmem:[#allocation9 + $0x90] sm:$0xff]
    %v1325 = vld [vmem:[#allocation9 + $0x98] sm:$0xff]
    %v1326 = vld [vmem:[#allocation9 + $0xa0] sm:$0xff]
    %v1327 = vld [vmem:[#allocation9 + $0xa8] sm:$0xff]
    %v1328 = vld [vmem:[#allocation9 + $0xb0] sm:$0xff]
    %v1329 = vld [vmem:[#allocation9 + $0xb8] sm:$0xff]
    %v1330 = vld [vmem:[#allocation9 + $0xc0] sm:$0xff]
    %v1331 = vld [vmem:[#allocation9 + $0xc8] sm:$0xff]
    %v1332 = vld [vmem:[#allocation9 + $0xd0] sm:$0xff]
    %v1333 = vld [vmem:[#allocation9 + $0xd8] sm:$0xff]
    %v1334 = vld [vmem:[#allocation9 + $0xe0] sm:$0xff]
    %v1335 = vld [vmem:[#allocation9 + $0xe8] sm:$0xff]
    %v1336 = vld [vmem:[#allocation9 + $0xf0] sm:$0xff]
    %v1337 = vld [vmem:[#allocation9 + $0xf8] sm:$0xff]
    %v1338 = vld [vmem:[#allocation9 + $0x100] sm:$0xff]
    %v1339 = vld [vmem:[#allocation9 + $0x108] sm:$0xff]
    %v1340 = vld [vmem:[#allocation9 + $0x110] sm:$0xff]
    %v1341 = vld [vmem:[#allocation9 + $0x118] sm:$0xff]
    %v1342 = vld [vmem:[#allocation9 + $0x120] sm:$0xff]
    %v1343 = vld [vmem:[#allocation9 + $0x128] sm:$0xff]
    %v1344 = vld [vmem:[#allocation9 + $0x130] sm:$0xff]
    %v1345 = vld [vmem:[#allocation9 + $0x138] sm:$0xff]
    %v1346 = vld [vmem:[#allocation9 + $0x140] sm:$0xff]
    %v1347 = vld [vmem:[#allocation9 + $0x148] sm:$0xff]
    %v1348 = vld [vmem:[#allocation9 + $0x150] sm:$0xff]
    %v1349 = vld [vmem:[#allocation9 + $0x158] sm:$0xff]
    %v1350 = vld [vmem:[#allocation9 + $0x160] sm:$0xff]
    %v1351 = vld [vmem:[#allocation9 + $0x168] sm:$0xff]
    %v1352 = vld [vmem:[#allocation9 + $0x170] sm:$0xff]
    %v1353 = vld [vmem:[#allocation9 + $0x178] sm:$0xff]
    %v1354 = vld [vmem:[#allocation9 + $0x180] sm:$0xff]
    %v1355 = vld [vmem:[#allocation9 + $0x188] sm:$0xff]
    %v1356 = vld [vmem:[#allocation9 + $0x190] sm:$0xff]
    %v1357 = vld [vmem:[#allocation9 + $0x198] sm:$0xff]
    %v1358 = vld [vmem:[#allocation9 + $0x1a0] sm:$0xff]
    %v1359 = vld [vmem:[#allocation9 + $0x1a8] sm:$0xff]
    %v1360 = vld [vmem:[#allocation9 + $0x1b0] sm:$0xff]
    %v1361 = vld [vmem:[#allocation9 + $0x1b8] sm:$0xff]
    %v1362 = vld [vmem:[#allocation9 + $0x1c0] sm:$0xff]
    %v1363 = vld [vmem:[#allocation9 + $0x1c8] sm:$0xff]
    %v1364 = vld [vmem:[#allocation9 + $0x1d0] sm:$0xff]
    %v1365 = vld [vmem:[#allocation9 + $0x1d8] sm:$0xff]
    %v1366 = vld [vmem:[#allocation9 + $0x1e0] sm:$0xff]
    %v1367 = vld [vmem:[#allocation9 + $0x1e8] sm:$0xff]
    %v1368 = vld [vmem:[#allocation9 + $0x1f0] sm:$0xff]
    %v1369 = vld [vmem:[#allocation9 + $0x1f8] sm:$0xff]
    %1370 = vmatpush.msra.mxu0 %v1366
    %1371 = vmatpush.msra.mxu0 %v1362
    %1372 = vmatpush.msra.mxu0 %v1358
    %1373 = vmatpush.msra.mxu0 %v1354
    %1374 = vmatpush.msra.mxu0 %v1350
    %1375 = vmatpush.msra.mxu0 %v1346
    %1376 = vmatpush.msra.mxu0 %v1342
    %1377 = vmatpush.msra.mxu0 %v1338
    %1378 = vmatpush.msra.mxu0 %v1334
    %1379 = vmatpush.msra.mxu0 %v1330
    %1380 = vmatpush.msra.mxu0 %v1326
    %1381 = vmatpush.msra.mxu0 %v1322
    %1382 = vmatpush.msra.mxu0 %v1318
    %1383 = vmatpush.msra.mxu0 %v1314
    %1384 = vmatpush.msra.mxu0 %v1310
    %1385 = vmatpush.msra.mxu0 %v1306
    %1386 = vmatmul.f32.gmra.mxu0 %v1299
    %v1387 = vpop.f32.mrf.mxu0
    %v1388 = vadd.f32 0.0, %v1387
    %1389 = vdwg.mxu0
    %1390 = vmatpush.msra.mxu0 %v1367
    %1391 = vmatpush.msra.mxu0 %v1363
    %1392 = vmatpush.msra.mxu0 %v1359
    %1393 = vmatpush.msra.mxu0 %v1355
    %1394 = vmatpush.msra.mxu0 %v1351
    %1395 = vmatpush.msra.mxu0 %v1347
    %1396 = vmatpush.msra.mxu0 %v1343
    %1397 = vmatpush.msra.mxu0 %v1339
    %1398 = vmatpush.msra.mxu0 %v1335
    %1399 = vmatpush.msra.mxu0 %v1331
    %1400 = vmatpush.msra.mxu0 %v1327
    %1401 = vmatpush.msra.mxu0 %v1323
    %1402 = vmatpush.msra.mxu0 %v1319
    %1403 = vmatpush.msra.mxu0 %v1315
    %1404 = vmatpush.msra.mxu0 %v1311
    %1405 = vmatpush.msra.mxu0 %v1307
    %1406 = vmatmul.f32.gmra.mxu0 %v1299
    %v1407 = vpop.f32.mrf.mxu0
    %v1408 = vadd.f32 0.0, %v1407
    %1409 = vdwg.mxu0
    %1410 = vmatpush.msra.mxu0 %v1368
    %1411 = vmatpush.msra.mxu0 %v1364
    %1412 = vmatpush.msra.mxu0 %v1360
    %1413 = vmatpush.msra.mxu0 %v1356
    %1414 = vmatpush.msra.mxu0 %v1352
    %1415 = vmatpush.msra.mxu0 %v1348
    %1416 = vmatpush.msra.mxu0 %v1344
    %1417 = vmatpush.msra.mxu0 %v1340
    %1418 = vmatpush.msra.mxu0 %v1336
    %1419 = vmatpush.msra.mxu0 %v1332
    %1420 = vmatpush.msra.mxu0 %v1328
    %1421 = vmatpush.msra.mxu0 %v1324
    %1422 = vmatpush.msra.mxu0 %v1320
    %1423 = vmatpush.msra.mxu0 %v1316
    %1424 = vmatpush.msra.mxu0 %v1312
    %1425 = vmatpush.msra.mxu0 %v1308
    %1426 = vmatmul.f32.gmra.mxu0 %v1299
    %v1427 = vpop.f32.mrf.mxu0
    %v1428 = vadd.f32 0.0, %v1427
    %1429 = vdwg.mxu0
    %1430 = vmatpush.msra.mxu0 %v1369
    %1431 = vmatpush.msra.mxu0 %v1365
    %1432 = vmatpush.msra.mxu0 %v1361
    %1433 = vmatpush.msra.mxu0 %v1357
    %1434 = vmatpush.msra.mxu0 %v1353
    %1435 = vmatpush.msra.mxu0 %v1349
    %1436 = vmatpush.msra.mxu0 %v1345
    %1437 = vmatpush.msra.mxu0 %v1341
    %1438 = vmatpush.msra.mxu0 %v1337
    %1439 = vmatpush.msra.mxu0 %v1333
    %1440 = vmatpush.msra.mxu0 %v1329
    %1441 = vmatpush.msra.mxu0 %v1325
    %1442 = vmatpush.msra.mxu0 %v1321
    %1443 = vmatpush.msra.mxu0 %v1317
    %1444 = vmatpush.msra.mxu0 %v1313
    %1445 = vmatpush.msra.mxu0 %v1309
    %1446 = vmatmul.f32.gmra.mxu0 %v1299
    %v1447 = vpop.f32.mrf.mxu0
    %v1448 = vadd.f32 0.0, %v1447
    %1449 = vdwg.mxu0
    %v1450 = vadd.f32 %v1302, %v1388
    %v1451 = vadd.f32 %v1303, %v1408
    %v1452 = vadd.f32 %v1304, %v1428
    %v1453 = vadd.f32 %v1305, %v1448
    %v1454 = vxor.u32 %v1450, 2147483648
    %v1455 = vxor.u32 %v1451, 2147483648
    %v1456 = vxor.u32 %v1452, 2147483648
    %v1457 = vmul.f32 %v1454, 1.442695
    %v1458 = vpow.pop %v1457
    %v1459 = vmul.f32 %v1455, 1.442695
    %v1460 = vpow.pop %v1459
    %v1461 = vmul.f32 %v1456, 1.442695
    %v1462 = vpow.pop %v1461
    %v1463 = vadd.f32 %v1458, 1.0
    %v1464 = vadd.f32 %v1460, 1.0
    %v1465 = vadd.f32 %v1462, 1.0
    %v1466 = vrcp.pop %v1463
    %v1467 = vmul.f32 %v1463, %v1466
    %v1468 = vsub.f32 1.0, %v1467
    %v1469 = vmul.f32 %v1466, %v1468
    %v1470 = vadd.f32 %v1466, %v1469
    %vm1471 = vweird.f32 %v1463
    %vm1472 = vweird.f32 %v1466
    %vm1473 = vmor %vm1471, %vm1472
    %v1474 = vsel %vm1473, %v1466, %v1470
    %v1475 = vand.u32 2147483647, %v1463
    %vm1476 = vcmp.eq.f32.partialorder %v1475, 8.507059e+37
    %v1477 = vand.u32 %v1463, 2147483648
    %v1478 = vor.u32 1.1754944e-38, %v1477
    %v1479 = vsel %vm1476, %v1478, %v1474
    %v1480 = vmul.f32 1.0, %v1479
    %v1481 = vrcp.pop %v1464
    %v1482 = vmul.f32 %v1464, %v1481
    %v1483 = vsub.f32 1.0, %v1482
    %v1484 = vmul.f32 %v1481, %v1483
    %v1485 = vadd.f32 %v1481, %v1484
    %vm1486 = vweird.f32 %v1464
    %vm1487 = vweird.f32 %v1481
    %vm1488 = vmor %vm1486, %vm1487
    %v1489 = vsel %vm1488, %v1481, %v1485
    %v1490 = vand.u32 2147483647, %v1464
    %vm1491 = vcmp.eq.f32.partialorder %v1490, 8.507059e+37
    %v1492 = vand.u32 %v1464, 2147483648
    %v1493 = vor.u32 1.1754944e-38, %v1492
    %v1494 = vsel %vm1491, %v1493, %v1489
    %v1495 = vmul.f32 1.0, %v1494
    %v1496 = vrcp.pop %v1465
    %v1497 = vmul.f32 %v1465, %v1496
    %v1498 = vsub.f32 1.0, %v1497
    %v1499 = vmul.f32 %v1496, %v1498
    %v1500 = vadd.f32 %v1496, %v1499
    %vm1501 = vweird.f32 %v1465
    %vm1502 = vweird.f32 %v1496
    %vm1503 = vmor %vm1501, %vm1502
    %v1504 = vsel %vm1503, %v1496, %v1500
    %v1505 = vand.u32 2147483647, %v1465
    %vm1506 = vcmp.eq.f32.partialorder %v1505, 8.507059e+37
    %v1507 = vand.u32 %v1465, 2147483648
    %v1508 = vor.u32 1.1754944e-38, %v1507
    %v1509 = vsel %vm1506, %v1508, %v1504
    %v1510 = vmul.f32 1.0, %v1509
    %v1511 = vtanh.pop %v1453
    %v1512 = vmul.f32 %v1495, %v1297
    %v1513 = vmul.f32 %v1480, %v1511
    %v1514 = vadd.f32 %v1512, %v1513
    %v1515 = vtanh.pop %v1514
    %v1516 = vmul.f32 %v1510, %v1515
    %1517 = vst [vmem:[#allocation2 + $0x18] sm:$0xff] %v1516
    %1518 = vst [vmem:[#allocation3 + $0x20] sm:$0xff] %v1516
    %v1519 = vld [vmem:[#allocation4 + $0x80] sm:$0xff]
    %v1520 = vld [vmem:[#allocation4 + $0x88] sm:$0xff]
    %v1521 = vld [vmem:[#allocation4 + $0x90] sm:$0xff]
    %v1522 = vld [vmem:[#allocation4 + $0x98] sm:$0xff]
    %v1523 = vld [vmem:[#allocation9] sm:$0xff]
    %v1524 = vld [vmem:[#allocation9 + $0x8] sm:$0xff]
    %v1525 = vld [vmem:[#allocation9 + $0x10] sm:$0xff]
    %v1526 = vld [vmem:[#allocation9 + $0x18] sm:$0xff]
    %v1527 = vld [vmem:[#allocation9 + $0x20] sm:$0xff]
    %v1528 = vld [vmem:[#allocation9 + $0x28] sm:$0xff]
    %v1529 = vld [vmem:[#allocation9 + $0x30] sm:$0xff]
    %v1530 = vld [vmem:[#allocation9 + $0x38] sm:$0xff]
    %v1531 = vld [vmem:[#allocation9 + $0x40] sm:$0xff]
    %v1532 = vld [vmem:[#allocation9 + $0x48] sm:$0xff]
    %v1533 = vld [vmem:[#allocation9 + $0x50] sm:$0xff]
    %v1534 = vld [vmem:[#allocation9 + $0x58] sm:$0xff]
    %v1535 = vld [vmem:[#allocation9 + $0x60] sm:$0xff]
    %v1536 = vld [vmem:[#allocation9 + $0x68] sm:$0xff]
    %v1537 = vld [vmem:[#allocation9 + $0x70] sm:$0xff]
    %v1538 = vld [vmem:[#allocation9 + $0x78] sm:$0xff]
    %v1539 = vld [vmem:[#allocation9 + $0x80] sm:$0xff]
    %v1540 = vld [vmem:[#allocation9 + $0x88] sm:$0xff]
    %v1541 = vld [vmem:[#allocation9 + $0x90] sm:$0xff]
    %v1542 = vld [vmem:[#allocation9 + $0x98] sm:$0xff]
    %v1543 = vld [vmem:[#allocation9 + $0xa0] sm:$0xff]
    %v1544 = vld [vmem:[#allocation9 + $0xa8] sm:$0xff]
    %v1545 = vld [vmem:[#allocation9 + $0xb0] sm:$0xff]
    %v1546 = vld [vmem:[#allocation9 + $0xb8] sm:$0xff]
    %v1547 = vld [vmem:[#allocation9 + $0xc0] sm:$0xff]
    %v1548 = vld [vmem:[#allocation9 + $0xc8] sm:$0xff]
    %v1549 = vld [vmem:[#allocation9 + $0xd0] sm:$0xff]
    %v1550 = vld [vmem:[#allocation9 + $0xd8] sm:$0xff]
    %v1551 = vld [vmem:[#allocation9 + $0xe0] sm:$0xff]
    %v1552 = vld [vmem:[#allocation9 + $0xe8] sm:$0xff]
    %v1553 = vld [vmem:[#allocation9 + $0xf0] sm:$0xff]
    %v1554 = vld [vmem:[#allocation9 + $0xf8] sm:$0xff]
    %v1555 = vld [vmem:[#allocation9 + $0x100] sm:$0xff]
    %v1556 = vld [vmem:[#allocation9 + $0x108] sm:$0xff]
    %v1557 = vld [vmem:[#allocation9 + $0x110] sm:$0xff]
    %v1558 = vld [vmem:[#allocation9 + $0x118] sm:$0xff]
    %v1559 = vld [vmem:[#allocation9 + $0x120] sm:$0xff]
    %v1560 = vld [vmem:[#allocation9 + $0x128] sm:$0xff]
    %v1561 = vld [vmem:[#allocation9 + $0x130] sm:$0xff]
    %v1562 = vld [vmem:[#allocation9 + $0x138] sm:$0xff]
    %v1563 = vld [vmem:[#allocation9 + $0x140] sm:$0xff]
    %v1564 = vld [vmem:[#allocation9 + $0x148] sm:$0xff]
    %v1565 = vld [vmem:[#allocation9 + $0x150] sm:$0xff]
    %v1566 = vld [vmem:[#allocation9 + $0x158] sm:$0xff]
    %v1567 = vld [vmem:[#allocation9 + $0x160] sm:$0xff]
    %v1568 = vld [vmem:[#allocation9 + $0x168] sm:$0xff]
    %v1569 = vld [vmem:[#allocation9 + $0x170] sm:$0xff]
    %v1570 = vld [vmem:[#allocation9 + $0x178] sm:$0xff]
    %v1571 = vld [vmem:[#allocation9 + $0x180] sm:$0xff]
    %v1572 = vld [vmem:[#allocation9 + $0x188] sm:$0xff]
    %v1573 = vld [vmem:[#allocation9 + $0x190] sm:$0xff]
    %v1574 = vld [vmem:[#allocation9 + $0x198] sm:$0xff]
    %v1575 = vld [vmem:[#allocation9 + $0x1a0] sm:$0xff]
    %v1576 = vld [vmem:[#allocation9 + $0x1a8] sm:$0xff]
    %v1577 = vld [vmem:[#allocation9 + $0x1b0] sm:$0xff]
    %v1578 = vld [vmem:[#allocation9 + $0x1b8] sm:$0xff]
    %v1579 = vld [vmem:[#allocation9 + $0x1c0] sm:$0xff]
    %v1580 = vld [vmem:[#allocation9 + $0x1c8] sm:$0xff]
    %v1581 = vld [vmem:[#allocation9 + $0x1d0] sm:$0xff]
    %v1582 = vld [vmem:[#allocation9 + $0x1d8] sm:$0xff]
    %v1583 = vld [vmem:[#allocation9 + $0x1e0] sm:$0xff]
    %v1584 = vld [vmem:[#allocation9 + $0x1e8] sm:$0xff]
    %v1585 = vld [vmem:[#allocation9 + $0x1f0] sm:$0xff]
    %v1586 = vld [vmem:[#allocation9 + $0x1f8] sm:$0xff]
    %1587 = vmatpush.msra.mxu0 %v1583
    %1588 = vmatpush.msra.mxu0 %v1579
    %1589 = vmatpush.msra.mxu0 %v1575
    %1590 = vmatpush.msra.mxu0 %v1571
    %1591 = vmatpush.msra.mxu0 %v1567
    %1592 = vmatpush.msra.mxu0 %v1563
    %1593 = vmatpush.msra.mxu0 %v1559
    %1594 = vmatpush.msra.mxu0 %v1555
    %1595 = vmatpush.msra.mxu0 %v1551
    %1596 = vmatpush.msra.mxu0 %v1547
    %1597 = vmatpush.msra.mxu0 %v1543
    %1598 = vmatpush.msra.mxu0 %v1539
    %1599 = vmatpush.msra.mxu0 %v1535
    %1600 = vmatpush.msra.mxu0 %v1531
    %1601 = vmatpush.msra.mxu0 %v1527
    %1602 = vmatpush.msra.mxu0 %v1523
    %1603 = vmatmul.f32.gmra.mxu0 %v1516
    %v1604 = vpop.f32.mrf.mxu0
    %v1605 = vadd.f32 0.0, %v1604
    %1606 = vdwg.mxu0
    %1607 = vmatpush.msra.mxu0 %v1584
    %1608 = vmatpush.msra.mxu0 %v1580
    %1609 = vmatpush.msra.mxu0 %v1576
    %1610 = vmatpush.msra.mxu0 %v1572
    %1611 = vmatpush.msra.mxu0 %v1568
    %1612 = vmatpush.msra.mxu0 %v1564
    %1613 = vmatpush.msra.mxu0 %v1560
    %1614 = vmatpush.msra.mxu0 %v1556
    %1615 = vmatpush.msra.mxu0 %v1552
    %1616 = vmatpush.msra.mxu0 %v1548
    %1617 = vmatpush.msra.mxu0 %v1544
    %1618 = vmatpush.msra.mxu0 %v1540
    %1619 = vmatpush.msra.mxu0 %v1536
    %1620 = vmatpush.msra.mxu0 %v1532
    %1621 = vmatpush.msra.mxu0 %v1528
    %1622 = vmatpush.msra.mxu0 %v1524
    %1623 = vmatmul.f32.gmra.mxu0 %v1516
    %v1624 = vpop.f32.mrf.mxu0
    %v1625 = vadd.f32 0.0, %v1624
    %1626 = vdwg.mxu0
    %1627 = vmatpush.msra.mxu0 %v1585
    %1628 = vmatpush.msra.mxu0 %v1581
    %1629 = vmatpush.msra.mxu0 %v1577
    %1630 = vmatpush.msra.mxu0 %v1573
    %1631 = vmatpush.msra.mxu0 %v1569
    %1632 = vmatpush.msra.mxu0 %v1565
    %1633 = vmatpush.msra.mxu0 %v1561
    %1634 = vmatpush.msra.mxu0 %v1557
    %1635 = vmatpush.msra.mxu0 %v1553
    %1636 = vmatpush.msra.mxu0 %v1549
    %1637 = vmatpush.msra.mxu0 %v1545
    %1638 = vmatpush.msra.mxu0 %v1541
    %1639 = vmatpush.msra.mxu0 %v1537
    %1640 = vmatpush.msra.mxu0 %v1533
    %1641 = vmatpush.msra.mxu0 %v1529
    %1642 = vmatpush.msra.mxu0 %v1525
    %1643 = vmatmul.f32.gmra.mxu0 %v1516
    %v1644 = vpop.f32.mrf.mxu0
    %v1645 = vadd.f32 0.0, %v1644
    %1646 = vdwg.mxu0
    %1647 = vmatpush.msra.mxu0 %v1586
    %1648 = vmatpush.msra.mxu0 %v1582
    %1649 = vmatpush.msra.mxu0 %v1578
    %1650 = vmatpush.msra.mxu0 %v1574
    %1651 = vmatpush.msra.mxu0 %v1570
    %1652 = vmatpush.msra.mxu0 %v1566
    %1653 = vmatpush.msra.mxu0 %v1562
    %1654 = vmatpush.msra.mxu0 %v1558
    %1655 = vmatpush.msra.mxu0 %v1554
    %1656 = vmatpush.msra.mxu0 %v1550
    %1657 = vmatpush.msra.mxu0 %v1546
    %1658 = vmatpush.msra.mxu0 %v1542
    %1659 = vmatpush.msra.mxu0 %v1538
    %1660 = vmatpush.msra.mxu0 %v1534
    %1661 = vmatpush.msra.mxu0 %v1530
    %1662 = vmatpush.msra.mxu0 %v1526
    %1663 = vmatmul.f32.gmra.mxu0 %v1516
    %v1664 = vpop.f32.mrf.mxu0
    %v1665 = vadd.f32 0.0, %v1664
    %1666 = vdwg.mxu0
    %v1667 = vadd.f32 %v1519, %v1605
    %v1668 = vadd.f32 %v1520, %v1625
    %v1669 = vadd.f32 %v1521, %v1645
    %v1670 = vadd.f32 %v1522, %v1665
    %v1671 = vxor.u32 %v1667, 2147483648
    %v1672 = vxor.u32 %v1668, 2147483648
    %v1673 = vxor.u32 %v1669, 2147483648
    %v1674 = vmul.f32 %v1671, 1.442695
    %v1675 = vpow.pop %v1674
    %v1676 = vmul.f32 %v1672, 1.442695
    %v1677 = vpow.pop %v1676
    %v1678 = vmul.f32 %v1673, 1.442695
    %v1679 = vpow.pop %v1678
    %v1680 = vadd.f32 %v1675, 1.0
    %v1681 = vadd.f32 %v1677, 1.0
    %v1682 = vadd.f32 %v1679, 1.0
    %v1683 = vrcp.pop %v1680
    %v1684 = vmul.f32 %v1680, %v1683
    %v1685 = vsub.f32 1.0, %v1684
    %v1686 = vmul.f32 %v1683, %v1685
    %v1687 = vadd.f32 %v1683, %v1686
    %vm1688 = vweird.f32 %v1680
    %vm1689 = vweird.f32 %v1683
    %vm1690 = vmor %vm1688, %vm1689
    %v1691 = vsel %vm1690, %v1683, %v1687
    %v1692 = vand.u32 2147483647, %v1680
    %vm1693 = vcmp.eq.f32.partialorder %v1692, 8.507059e+37
    %v1694 = vand.u32 %v1680, 2147483648
    %v1695 = vor.u32 1.1754944e-38, %v1694
    %v1696 = vsel %vm1693, %v1695, %v1691
    %v1697 = vmul.f32 1.0, %v1696
    %v1698 = vrcp.pop %v1681
    %v1699 = vmul.f32 %v1681, %v1698
    %v1700 = vsub.f32 1.0, %v1699
    %v1701 = vmul.f32 %v1698, %v1700
    %v1702 = vadd.f32 %v1698, %v1701
    %vm1703 = vweird.f32 %v1681
    %vm1704 = vweird.f32 %v1698
    %vm1705 = vmor %vm1703, %vm1704
    %v1706 = vsel %vm1705, %v1698, %v1702
    %v1707 = vand.u32 2147483647, %v1681
    %vm1708 = vcmp.eq.f32.partialorder %v1707, 8.507059e+37
    %v1709 = vand.u32 %v1681, 2147483648
    %v1710 = vor.u32 1.1754944e-38, %v1709
    %v1711 = vsel %vm1708, %v1710, %v1706
    %v1712 = vmul.f32 1.0, %v1711
    %v1713 = vrcp.pop %v1682
    %v1714 = vmul.f32 %v1682, %v1713
    %v1715 = vsub.f32 1.0, %v1714
    %v1716 = vmul.f32 %v1713, %v1715
    %v1717 = vadd.f32 %v1713, %v1716
    %vm1718 = vweird.f32 %v1682
    %vm1719 = vweird.f32 %v1713
    %vm1720 = vmor %vm1718, %vm1719
    %v1721 = vsel %vm1720, %v1713, %v1717
    %v1722 = vand.u32 2147483647, %v1682
    %vm1723 = vcmp.eq.f32.partialorder %v1722, 8.507059e+37
    %v1724 = vand.u32 %v1682, 2147483648
    %v1725 = vor.u32 1.1754944e-38, %v1724
    %v1726 = vsel %vm1723, %v1725, %v1721
    %v1727 = vmul.f32 1.0, %v1726
    %v1728 = vtanh.pop %v1670
    %v1729 = vmul.f32 %v1712, %v1514
    %v1730 = vmul.f32 %v1697, %v1728
    %v1731 = vadd.f32 %v1729, %v1730
    %v1732 = vtanh.pop %v1731
    %v1733 = vmul.f32 %v1727, %v1732
    %1734 = vst [vmem:[#allocation2 + $0x20] sm:$0xff] %v1733
    %1735 = vst [vmem:[#allocation3 + $0x18] sm:$0xff] %v1733
    %v1736 = vld [vmem:[#allocation4 + $0xa0] sm:$0xff]
    %v1737 = vld [vmem:[#allocation4 + $0xa8] sm:$0xff]
    %v1738 = vld [vmem:[#allocation4 + $0xb0] sm:$0xff]
    %v1739 = vld [vmem:[#allocation4 + $0xb8] sm:$0xff]
    %v1740 = vld [vmem:[#allocation9] sm:$0xff]
    %v1741 = vld [vmem:[#allocation9 + $0x8] sm:$0xff]
    %v1742 = vld [vmem:[#allocation9 + $0x10] sm:$0xff]
    %v1743 = vld [vmem:[#allocation9 + $0x18] sm:$0xff]
    %v1744 = vld [vmem:[#allocation9 + $0x20] sm:$0xff]
    %v1745 = vld [vmem:[#allocation9 + $0x28] sm:$0xff]
    %v1746 = vld [vmem:[#allocation9 + $0x30] sm:$0xff]
    %v1747 = vld [vmem:[#allocation9 + $0x38] sm:$0xff]
    %v1748 = vld [vmem:[#allocation9 + $0x40] sm:$0xff]
    %v1749 = vld [vmem:[#allocation9 + $0x48] sm:$0xff]
    %v1750 = vld [vmem:[#allocation9 + $0x50] sm:$0xff]
    %v1751 = vld [vmem:[#allocation9 + $0x58] sm:$0xff]
    %v1752 = vld [vmem:[#allocation9 + $0x60] sm:$0xff]
    %v1753 = vld [vmem:[#allocation9 + $0x68] sm:$0xff]
    %v1754 = vld [vmem:[#allocation9 + $0x70] sm:$0xff]
    %v1755 = vld [vmem:[#allocation9 + $0x78] sm:$0xff]
    %v1756 = vld [vmem:[#allocation9 + $0x80] sm:$0xff]
    %v1757 = vld [vmem:[#allocation9 + $0x88] sm:$0xff]
    %v1758 = vld [vmem:[#allocation9 + $0x90] sm:$0xff]
    %v1759 = vld [vmem:[#allocation9 + $0x98] sm:$0xff]
    %v1760 = vld [vmem:[#allocation9 + $0xa0] sm:$0xff]
    %v1761 = vld [vmem:[#allocation9 + $0xa8] sm:$0xff]
    %v1762 = vld [vmem:[#allocation9 + $0xb0] sm:$0xff]
    %v1763 = vld [vmem:[#allocation9 + $0xb8] sm:$0xff]
    %v1764 = vld [vmem:[#allocation9 + $0xc0] sm:$0xff]
    %v1765 = vld [vmem:[#allocation9 + $0xc8] sm:$0xff]
    %v1766 = vld [vmem:[#allocation9 + $0xd0] sm:$0xff]
    %v1767 = vld [vmem:[#allocation9 + $0xd8] sm:$0xff]
    %v1768 = vld [vmem:[#allocation9 + $0xe0] sm:$0xff]
    %v1769 = vld [vmem:[#allocation9 + $0xe8] sm:$0xff]
    %v1770 = vld [vmem:[#allocation9 + $0xf0] sm:$0xff]
    %v1771 = vld [vmem:[#allocation9 + $0xf8] sm:$0xff]
    %v1772 = vld [vmem:[#allocation9 + $0x100] sm:$0xff]
    %v1773 = vld [vmem:[#allocation9 + $0x108] sm:$0xff]
    %v1774 = vld [vmem:[#allocation9 + $0x110] sm:$0xff]
    %v1775 = vld [vmem:[#allocation9 + $0x118] sm:$0xff]
    %v1776 = vld [vmem:[#allocation9 + $0x120] sm:$0xff]
    %v1777 = vld [vmem:[#allocation9 + $0x128] sm:$0xff]
    %v1778 = vld [vmem:[#allocation9 + $0x130] sm:$0xff]
    %v1779 = vld [vmem:[#allocation9 + $0x138] sm:$0xff]
    %v1780 = vld [vmem:[#allocation9 + $0x140] sm:$0xff]
    %v1781 = vld [vmem:[#allocation9 + $0x148] sm:$0xff]
    %v1782 = vld [vmem:[#allocation9 + $0x150] sm:$0xff]
    %v1783 = vld [vmem:[#allocation9 + $0x158] sm:$0xff]
    %v1784 = vld [vmem:[#allocation9 + $0x160] sm:$0xff]
    %v1785 = vld [vmem:[#allocation9 + $0x168] sm:$0xff]
    %v1786 = vld [vmem:[#allocation9 + $0x170] sm:$0xff]
    %v1787 = vld [vmem:[#allocation9 + $0x178] sm:$0xff]
    %v1788 = vld [vmem:[#allocation9 + $0x180] sm:$0xff]
    %v1789 = vld [vmem:[#allocation9 + $0x188] sm:$0xff]
    %v1790 = vld [vmem:[#allocation9 + $0x190] sm:$0xff]
    %v1791 = vld [vmem:[#allocation9 + $0x198] sm:$0xff]
    %v1792 = vld [vmem:[#allocation9 + $0x1a0] sm:$0xff]
    %v1793 = vld [vmem:[#allocation9 + $0x1a8] sm:$0xff]
    %v1794 = vld [vmem:[#allocation9 + $0x1b0] sm:$0xff]
    %v1795 = vld [vmem:[#allocation9 + $0x1b8] sm:$0xff]
    %v1796 = vld [vmem:[#allocation9 + $0x1c0] sm:$0xff]
    %v1797 = vld [vmem:[#allocation9 + $0x1c8] sm:$0xff]
    %v1798 = vld [vmem:[#allocation9 + $0x1d0] sm:$0xff]
    %v1799 = vld [vmem:[#allocation9 + $0x1d8] sm:$0xff]
    %v1800 = vld [vmem:[#allocation9 + $0x1e0] sm:$0xff]
    %v1801 = vld [vmem:[#allocation9 + $0x1e8] sm:$0xff]
    %v1802 = vld [vmem:[#allocation9 + $0x1f0] sm:$0xff]
    %v1803 = vld [vmem:[#allocation9 + $0x1f8] sm:$0xff]
    %1804 = vmatpush.msra.mxu0 %v1800
    %1805 = vmatpush.msra.mxu0 %v1796
    %1806 = vmatpush.msra.mxu0 %v1792
    %1807 = vmatpush.msra.mxu0 %v1788
    %1808 = vmatpush.msra.mxu0 %v1784
    %1809 = vmatpush.msra.mxu0 %v1780
    %1810 = vmatpush.msra.mxu0 %v1776
    %1811 = vmatpush.msra.mxu0 %v1772
    %1812 = vmatpush.msra.mxu0 %v1768
    %1813 = vmatpush.msra.mxu0 %v1764
    %1814 = vmatpush.msra.mxu0 %v1760
    %1815 = vmatpush.msra.mxu0 %v1756
    %1816 = vmatpush.msra.mxu0 %v1752
    %1817 = vmatpush.msra.mxu0 %v1748
    %1818 = vmatpush.msra.mxu0 %v1744
    %1819 = vmatpush.msra.mxu0 %v1740
    %1820 = vmatmul.f32.gmra.mxu0 %v1733
    %v1821 = vpop.f32.mrf.mxu0
    %v1822 = vadd.f32 0.0, %v1821
    %1823 = vdwg.mxu0
    %1824 = vmatpush.msra.mxu0 %v1801
    %1825 = vmatpush.msra.mxu0 %v1797
    %1826 = vmatpush.msra.mxu0 %v1793
    %1827 = vmatpush.msra.mxu0 %v1789
    %1828 = vmatpush.msra.mxu0 %v1785
    %1829 = vmatpush.msra.mxu0 %v1781
    %1830 = vmatpush.msra.mxu0 %v1777
    %1831 = vmatpush.msra.mxu0 %v1773
    %1832 = vmatpush.msra.mxu0 %v1769
    %1833 = vmatpush.msra.mxu0 %v1765
    %1834 = vmatpush.msra.mxu0 %v1761
    %1835 = vmatpush.msra.mxu0 %v1757
    %1836 = vmatpush.msra.mxu0 %v1753
    %1837 = vmatpush.msra.mxu0 %v1749
    %1838 = vmatpush.msra.mxu0 %v1745
    %1839 = vmatpush.msra.mxu0 %v1741
    %1840 = vmatmul.f32.gmra.mxu0 %v1733
    %v1841 = vpop.f32.mrf.mxu0
    %v1842 = vadd.f32 0.0, %v1841
    %1843 = vdwg.mxu0
    %1844 = vmatpush.msra.mxu0 %v1802
    %1845 = vmatpush.msra.mxu0 %v1798
    %1846 = vmatpush.msra.mxu0 %v1794
    %1847 = vmatpush.msra.mxu0 %v1790
    %1848 = vmatpush.msra.mxu0 %v1786
    %1849 = vmatpush.msra.mxu0 %v1782
    %1850 = vmatpush.msra.mxu0 %v1778
    %1851 = vmatpush.msra.mxu0 %v1774
    %1852 = vmatpush.msra.mxu0 %v1770
    %1853 = vmatpush.msra.mxu0 %v1766
    %1854 = vmatpush.msra.mxu0 %v1762
    %1855 = vmatpush.msra.mxu0 %v1758
    %1856 = vmatpush.msra.mxu0 %v1754
    %1857 = vmatpush.msra.mxu0 %v1750
    %1858 = vmatpush.msra.mxu0 %v1746
    %1859 = vmatpush.msra.mxu0 %v1742
    %1860 = vmatmul.f32.gmra.mxu0 %v1733
    %v1861 = vpop.f32.mrf.mxu0
    %v1862 = vadd.f32 0.0, %v1861
    %1863 = vdwg.mxu0
    %1864 = vmatpush.msra.mxu0 %v1803
    %1865 = vmatpush.msra.mxu0 %v1799
    %1866 = vmatpush.msra.mxu0 %v1795
    %1867 = vmatpush.msra.mxu0 %v1791
    %1868 = vmatpush.msra.mxu0 %v1787
    %1869 = vmatpush.msra.mxu0 %v1783
    %1870 = vmatpush.msra.mxu0 %v1779
    %1871 = vmatpush.msra.mxu0 %v1775
    %1872 = vmatpush.msra.mxu0 %v1771
    %1873 = vmatpush.msra.mxu0 %v1767
    %1874 = vmatpush.msra.mxu0 %v1763
    %1875 = vmatpush.msra.mxu0 %v1759
    %1876 = vmatpush.msra.mxu0 %v1755
    %1877 = vmatpush.msra.mxu0 %v1751
    %1878 = vmatpush.msra.mxu0 %v1747
    %1879 = vmatpush.msra.mxu0 %v1743
    %1880 = vmatmul.f32.gmra.mxu0 %v1733
    %v1881 = vpop.f32.mrf.mxu0
    %v1882 = vadd.f32 0.0, %v1881
    %1883 = vdwg.mxu0
    %v1884 = vadd.f32 %v1736, %v1822
    %v1885 = vadd.f32 %v1737, %v1842
    %v1886 = vadd.f32 %v1738, %v1862
    %v1887 = vadd.f32 %v1739, %v1882
    %v1888 = vxor.u32 %v1884, 2147483648
    %v1889 = vxor.u32 %v1885, 2147483648
    %v1890 = vxor.u32 %v1886, 2147483648
    %v1891 = vmul.f32 %v1888, 1.442695
    %v1892 = vpow.pop %v1891
    %v1893 = vmul.f32 %v1889, 1.442695
    %v1894 = vpow.pop %v1893
    %v1895 = vmul.f32 %v1890, 1.442695
    %v1896 = vpow.pop %v1895
    %v1897 = vadd.f32 %v1892, 1.0
    %v1898 = vadd.f32 %v1894, 1.0
    %v1899 = vadd.f32 %v1896, 1.0
    %v1900 = vrcp.pop %v1897
    %v1901 = vmul.f32 %v1897, %v1900
    %v1902 = vsub.f32 1.0, %v1901
    %v1903 = vmul.f32 %v1900, %v1902
    %v1904 = vadd.f32 %v1900, %v1903
    %vm1905 = vweird.f32 %v1897
    %vm1906 = vweird.f32 %v1900
    %vm1907 = vmor %vm1905, %vm1906
    %v1908 = vsel %vm1907, %v1900, %v1904
    %v1909 = vand.u32 2147483647, %v1897
    %vm1910 = vcmp.eq.f32.partialorder %v1909, 8.507059e+37
    %v1911 = vand.u32 %v1897, 2147483648
    %v1912 = vor.u32 1.1754944e-38, %v1911
    %v1913 = vsel %vm1910, %v1912, %v1908
    %v1914 = vmul.f32 1.0, %v1913
    %v1915 = vrcp.pop %v1898
    %v1916 = vmul.f32 %v1898, %v1915
    %v1917 = vsub.f32 1.0, %v1916
    %v1918 = vmul.f32 %v1915, %v1917
    %v1919 = vadd.f32 %v1915, %v1918
    %vm1920 = vweird.f32 %v1898
    %vm1921 = vweird.f32 %v1915
    %vm1922 = vmor %vm1920, %vm1921
    %v1923 = vsel %vm1922, %v1915, %v1919
    %v1924 = vand.u32 2147483647, %v1898
    %vm1925 = vcmp.eq.f32.partialorder %v1924, 8.507059e+37
    %v1926 = vand.u32 %v1898, 2147483648
    %v1927 = vor.u32 1.1754944e-38, %v1926
    %v1928 = vsel %vm1925, %v1927, %v1923
    %v1929 = vmul.f32 1.0, %v1928
    %v1930 = vrcp.pop %v1899
    %v1931 = vmul.f32 %v1899, %v1930
    %v1932 = vsub.f32 1.0, %v1931
    %v1933 = vmul.f32 %v1930, %v1932
    %v1934 = vadd.f32 %v1930, %v1933
    %vm1935 = vweird.f32 %v1899
    %vm1936 = vweird.f32 %v1930
    %vm1937 = vmor %vm1935, %vm1936
    %v1938 = vsel %vm1937, %v1930, %v1934
    %v1939 = vand.u32 2147483647, %v1899
    %vm1940 = vcmp.eq.f32.partialorder %v1939, 8.507059e+37
    %v1941 = vand.u32 %v1899, 2147483648
    %v1942 = vor.u32 1.1754944e-38, %v1941
    %v1943 = vsel %vm1940, %v1942, %v1938
    %v1944 = vmul.f32 1.0, %v1943
    %v1945 = vtanh.pop %v1887
    %v1946 = vmul.f32 %v1929, %v1731
    %v1947 = vmul.f32 %v1914, %v1945
    %v1948 = vadd.f32 %v1946, %v1947
    %v1949 = vtanh.pop %v1948
    %v1950 = vmul.f32 %v1944, %v1949
    %1951 = vst [vmem:[#allocation2 + $0x28] sm:$0xff] %v1950
    %1952 = vst [vmem:[#allocation3 + $0x10] sm:$0xff] %v1950
    %v1953 = vld [vmem:[#allocation4 + $0xc0] sm:$0xff]
    %v1954 = vld [vmem:[#allocation4 + $0xc8] sm:$0xff]
    %v1955 = vld [vmem:[#allocation4 + $0xd0] sm:$0xff]
    %v1956 = vld [vmem:[#allocation4 + $0xd8] sm:$0xff]
    %v1957 = vld [vmem:[#allocation9] sm:$0xff]
    %v1958 = vld [vmem:[#allocation9 + $0x8] sm:$0xff]
    %v1959 = vld [vmem:[#allocation9 + $0x10] sm:$0xff]
    %v1960 = vld [vmem:[#allocation9 + $0x18] sm:$0xff]
    %v1961 = vld [vmem:[#allocation9 + $0x20] sm:$0xff]
    %v1962 = vld [vmem:[#allocation9 + $0x28] sm:$0xff]
    %v1963 = vld [vmem:[#allocation9 + $0x30] sm:$0xff]
    %v1964 = vld [vmem:[#allocation9 + $0x38] sm:$0xff]
    %v1965 = vld [vmem:[#allocation9 + $0x40] sm:$0xff]
    %v1966 = vld [vmem:[#allocation9 + $0x48] sm:$0xff]
    %v1967 = vld [vmem:[#allocation9 + $0x50] sm:$0xff]
    %v1968 = vld [vmem:[#allocation9 + $0x58] sm:$0xff]
    %v1969 = vld [vmem:[#allocation9 + $0x60] sm:$0xff]
    %v1970 = vld [vmem:[#allocation9 + $0x68] sm:$0xff]
    %v1971 = vld [vmem:[#allocation9 + $0x70] sm:$0xff]
    %v1972 = vld [vmem:[#allocation9 + $0x78] sm:$0xff]
    %v1973 = vld [vmem:[#allocation9 + $0x80] sm:$0xff]
    %v1974 = vld [vmem:[#allocation9 + $0x88] sm:$0xff]
    %v1975 = vld [vmem:[#allocation9 + $0x90] sm:$0xff]
    %v1976 = vld [vmem:[#allocation9 + $0x98] sm:$0xff]
    %v1977 = vld [vmem:[#allocation9 + $0xa0] sm:$0xff]
    %v1978 = vld [vmem:[#allocation9 + $0xa8] sm:$0xff]
    %v1979 = vld [vmem:[#allocation9 + $0xb0] sm:$0xff]
    %v1980 = vld [vmem:[#allocation9 + $0xb8] sm:$0xff]
    %v1981 = vld [vmem:[#allocation9 + $0xc0] sm:$0xff]
    %v1982 = vld [vmem:[#allocation9 + $0xc8] sm:$0xff]
    %v1983 = vld [vmem:[#allocation9 + $0xd0] sm:$0xff]
    %v1984 = vld [vmem:[#allocation9 + $0xd8] sm:$0xff]
    %v1985 = vld [vmem:[#allocation9 + $0xe0] sm:$0xff]
    %v1986 = vld [vmem:[#allocation9 + $0xe8] sm:$0xff]
    %v1987 = vld [vmem:[#allocation9 + $0xf0] sm:$0xff]
    %v1988 = vld [vmem:[#allocation9 + $0xf8] sm:$0xff]
    %v1989 = vld [vmem:[#allocation9 + $0x100] sm:$0xff]
    %v1990 = vld [vmem:[#allocation9 + $0x108] sm:$0xff]
    %v1991 = vld [vmem:[#allocation9 + $0x110] sm:$0xff]
    %v1992 = vld [vmem:[#allocation9 + $0x118] sm:$0xff]
    %v1993 = vld [vmem:[#allocation9 + $0x120] sm:$0xff]
    %v1994 = vld [vmem:[#allocation9 + $0x128] sm:$0xff]
    %v1995 = vld [vmem:[#allocation9 + $0x130] sm:$0xff]
    %v1996 = vld [vmem:[#allocation9 + $0x138] sm:$0xff]
    %v1997 = vld [vmem:[#allocation9 + $0x140] sm:$0xff]
    %v1998 = vld [vmem:[#allocation9 + $0x148] sm:$0xff]
    %v1999 = vld [vmem:[#allocation9 + $0x150] sm:$0xff]
    %v2000 = vld [vmem:[#allocation9 + $0x158] sm:$0xff]
    %v2001 = vld [vmem:[#allocation9 + $0x160] sm:$0xff]
    %v2002 = vld [vmem:[#allocation9 + $0x168] sm:$0xff]
    %v2003 = vld [vmem:[#allocation9 + $0x170] sm:$0xff]
    %v2004 = vld [vmem:[#allocation9 + $0x178] sm:$0xff]
    %v2005 = vld [vmem:[#allocation9 + $0x180] sm:$0xff]
    %v2006 = vld [vmem:[#allocation9 + $0x188] sm:$0xff]
    %v2007 = vld [vmem:[#allocation9 + $0x190] sm:$0xff]
    %v2008 = vld [vmem:[#allocation9 + $0x198] sm:$0xff]
    %v2009 = vld [vmem:[#allocation9 + $0x1a0] sm:$0xff]
    %v2010 = vld [vmem:[#allocation9 + $0x1a8] sm:$0xff]
    %v2011 = vld [vmem:[#allocation9 + $0x1b0] sm:$0xff]
    %v2012 = vld [vmem:[#allocation9 + $0x1b8] sm:$0xff]
    %v2013 = vld [vmem:[#allocation9 + $0x1c0] sm:$0xff]
    %v2014 = vld [vmem:[#allocation9 + $0x1c8] sm:$0xff]
    %v2015 = vld [vmem:[#allocation9 + $0x1d0] sm:$0xff]
    %v2016 = vld [vmem:[#allocation9 + $0x1d8] sm:$0xff]
    %v2017 = vld [vmem:[#allocation9 + $0x1e0] sm:$0xff]
    %v2018 = vld [vmem:[#allocation9 + $0x1e8] sm:$0xff]
    %v2019 = vld [vmem:[#allocation9 + $0x1f0] sm:$0xff]
    %v2020 = vld [vmem:[#allocation9 + $0x1f8] sm:$0xff]
    %2021 = vmatpush.msra.mxu0 %v2017
    %2022 = vmatpush.msra.mxu0 %v2013
    %2023 = vmatpush.msra.mxu0 %v2009
    %2024 = vmatpush.msra.mxu0 %v2005
    %2025 = vmatpush.msra.mxu0 %v2001
    %2026 = vmatpush.msra.mxu0 %v1997
    %2027 = vmatpush.msra.mxu0 %v1993
    %2028 = vmatpush.msra.mxu0 %v1989
    %2029 = vmatpush.msra.mxu0 %v1985
    %2030 = vmatpush.msra.mxu0 %v1981
    %2031 = vmatpush.msra.mxu0 %v1977
    %2032 = vmatpush.msra.mxu0 %v1973
    %2033 = vmatpush.msra.mxu0 %v1969
    %2034 = vmatpush.msra.mxu0 %v1965
    %2035 = vmatpush.msra.mxu0 %v1961
    %2036 = vmatpush.msra.mxu0 %v1957
    %2037 = vmatmul.f32.gmra.mxu0 %v1950
    %v2038 = vpop.f32.mrf.mxu0
    %v2039 = vadd.f32 0.0, %v2038
    %2040 = vdwg.mxu0
    %2041 = vmatpush.msra.mxu0 %v2018
    %2042 = vmatpush.msra.mxu0 %v2014
    %2043 = vmatpush.msra.mxu0 %v2010
    %2044 = vmatpush.msra.mxu0 %v2006
    %2045 = vmatpush.msra.mxu0 %v2002
    %2046 = vmatpush.msra.mxu0 %v1998
    %2047 = vmatpush.msra.mxu0 %v1994
    %2048 = vmatpush.msra.mxu0 %v1990
    %2049 = vmatpush.msra.mxu0 %v1986
    %2050 = vmatpush.msra.mxu0 %v1982
    %2051 = vmatpush.msra.mxu0 %v1978
    %2052 = vmatpush.msra.mxu0 %v1974
    %2053 = vmatpush.msra.mxu0 %v1970
    %2054 = vmatpush.msra.mxu0 %v1966
    %2055 = vmatpush.msra.mxu0 %v1962
    %2056 = vmatpush.msra.mxu0 %v1958
    %2057 = vmatmul.f32.gmra.mxu0 %v1950
    %v2058 = vpop.f32.mrf.mxu0
    %v2059 = vadd.f32 0.0, %v2058
    %2060 = vdwg.mxu0
    %2061 = vmatpush.msra.mxu0 %v2019
    %2062 = vmatpush.msra.mxu0 %v2015
    %2063 = vmatpush.msra.mxu0 %v2011
    %2064 = vmatpush.msra.mxu0 %v2007
    %2065 = vmatpush.msra.mxu0 %v2003
    %2066 = vmatpush.msra.mxu0 %v1999
    %2067 = vmatpush.msra.mxu0 %v1995
    %2068 = vmatpush.msra.mxu0 %v1991
    %2069 = vmatpush.msra.mxu0 %v1987
    %2070 = vmatpush.msra.mxu0 %v1983
    %2071 = vmatpush.msra.mxu0 %v1979
    %2072 = vmatpush.msra.mxu0 %v1975
    %2073 = vmatpush.msra.mxu0 %v1971
    %2074 = vmatpush.msra.mxu0 %v1967
    %2075 = vmatpush.msra.mxu0 %v1963
    %2076 = vmatpush.msra.mxu0 %v1959
    %2077 = vmatmul.f32.gmra.mxu0 %v1950
    %v2078 = vpop.f32.mrf.mxu0
    %v2079 = vadd.f32 0.0, %v2078
    %2080 = vdwg.mxu0
    %2081 = vmatpush.msra.mxu0 %v2020
    %2082 = vmatpush.msra.mxu0 %v2016
    %2083 = vmatpush.msra.mxu0 %v2012
    %2084 = vmatpush.msra.mxu0 %v2008
    %2085 = vmatpush.msra.mxu0 %v2004
    %2086 = vmatpush.msra.mxu0 %v2000
    %2087 = vmatpush.msra.mxu0 %v1996
    %2088 = vmatpush.msra.mxu0 %v1992
    %2089 = vmatpush.msra.mxu0 %v1988
    %2090 = vmatpush.msra.mxu0 %v1984
    %2091 = vmatpush.msra.mxu0 %v1980
    %2092 = vmatpush.msra.mxu0 %v1976
    %2093 = vmatpush.msra.mxu0 %v1972
    %2094 = vmatpush.msra.mxu0 %v1968
    %2095 = vmatpush.msra.mxu0 %v1964
    %2096 = vmatpush.msra.mxu0 %v1960
    %2097 = vmatmul.f32.gmra.mxu0 %v1950
    %v2098 = vpop.f32.mrf.mxu0
    %v2099 = vadd.f32 0.0, %v2098
    %2100 = vdwg.mxu0
    %v2101 = vadd.f32 %v1953, %v2039
    %v2102 = vadd.f32 %v1954, %v2059
    %v2103 = vadd.f32 %v1955, %v2079
    %v2104 = vadd.f32 %v1956, %v2099
    %v2105 = vxor.u32 %v2101, 2147483648
    %v2106 = vxor.u32 %v2102, 2147483648
    %v2107 = vxor.u32 %v2103, 2147483648
    %v2108 = vmul.f32 %v2105, 1.442695
    %v2109 = vpow.pop %v2108
    %v2110 = vmul.f32 %v2106, 1.442695
    %v2111 = vpow.pop %v2110
    %v2112 = vmul.f32 %v2107, 1.442695
    %v2113 = vpow.pop %v2112
    %v2114 = vadd.f32 %v2109, 1.0
    %v2115 = vadd.f32 %v2111, 1.0
    %v2116 = vadd.f32 %v2113, 1.0
    %v2117 = vrcp.pop %v2114
    %v2118 = vmul.f32 %v2114, %v2117
    %v2119 = vsub.f32 1.0, %v2118
    %v2120 = vmul.f32 %v2117, %v2119
    %v2121 = vadd.f32 %v2117, %v2120
    %vm2122 = vweird.f32 %v2114
    %vm2123 = vweird.f32 %v2117
    %vm2124 = vmor %vm2122, %vm2123
    %v2125 = vsel %vm2124, %v2117, %v2121
    %v2126 = vand.u32 2147483647, %v2114
    %vm2127 = vcmp.eq.f32.partialorder %v2126, 8.507059e+37
    %v2128 = vand.u32 %v2114, 2147483648
    %v2129 = vor.u32 1.1754944e-38, %v2128
    %v2130 = vsel %vm2127, %v2129, %v2125
    %v2131 = vmul.f32 1.0, %v2130
    %v2132 = vrcp.pop %v2115
    %v2133 = vmul.f32 %v2115, %v2132
    %v2134 = vsub.f32 1.0, %v2133
    %v2135 = vmul.f32 %v2132, %v2134
    %v2136 = vadd.f32 %v2132, %v2135
    %vm2137 = vweird.f32 %v2115
    %vm2138 = vweird.f32 %v2132
    %vm2139 = vmor %vm2137, %vm2138
    %v2140 = vsel %vm2139, %v2132, %v2136
    %v2141 = vand.u32 2147483647, %v2115
    %vm2142 = vcmp.eq.f32.partialorder %v2141, 8.507059e+37
    %v2143 = vand.u32 %v2115, 2147483648
    %v2144 = vor.u32 1.1754944e-38, %v2143
    %v2145 = vsel %vm2142, %v2144, %v2140
    %v2146 = vmul.f32 1.0, %v2145
    %v2147 = vrcp.pop %v2116
    %v2148 = vmul.f32 %v2116, %v2147
    %v2149 = vsub.f32 1.0, %v2148
    %v2150 = vmul.f32 %v2147, %v2149
    %v2151 = vadd.f32 %v2147, %v2150
    %vm2152 = vweird.f32 %v2116
    %vm2153 = vweird.f32 %v2147
    %vm2154 = vmor %vm2152, %vm2153
    %v2155 = vsel %vm2154, %v2147, %v2151
    %v2156 = vand.u32 2147483647, %v2116
    %vm2157 = vcmp.eq.f32.partialorder %v2156, 8.507059e+37
    %v2158 = vand.u32 %v2116, 2147483648
    %v2159 = vor.u32 1.1754944e-38, %v2158
    %v2160 = vsel %vm2157, %v2159, %v2155
    %v2161 = vmul.f32 1.0, %v2160
    %v2162 = vtanh.pop %v2104
    %v2163 = vmul.f32 %v2146, %v1948
    %v2164 = vmul.f32 %v2131, %v2162
    %v2165 = vadd.f32 %v2163, %v2164
    %v2166 = vtanh.pop %v2165
    %v2167 = vmul.f32 %v2161, %v2166
    %2168 = vst [vmem:[#allocation2 + $0x30] sm:$0xff] %v2167
    %2169 = vst [vmem:[#allocation3 + $0x8] sm:$0xff] %v2167
    %v2170 = vld [vmem:[#allocation4 + $0xe0] sm:$0xff]
    %v2171 = vld [vmem:[#allocation4 + $0xe8] sm:$0xff]
    %v2172 = vld [vmem:[#allocation4 + $0xf0] sm:$0xff]
    %v2173 = vld [vmem:[#allocation4 + $0xf8] sm:$0xff]
    %v2174 = vld [vmem:[#allocation9] sm:$0xff]
    %v2175 = vld [vmem:[#allocation9 + $0x8] sm:$0xff]
    %v2176 = vld [vmem:[#allocation9 + $0x10] sm:$0xff]
    %v2177 = vld [vmem:[#allocation9 + $0x18] sm:$0xff]
    %v2178 = vld [vmem:[#allocation9 + $0x20] sm:$0xff]
    %v2179 = vld [vmem:[#allocation9 + $0x28] sm:$0xff]
    %v2180 = vld [vmem:[#allocation9 + $0x30] sm:$0xff]
    %v2181 = vld [vmem:[#allocation9 + $0x38] sm:$0xff]
    %v2182 = vld [vmem:[#allocation9 + $0x40] sm:$0xff]
    %v2183 = vld [vmem:[#allocation9 + $0x48] sm:$0xff]
    %v2184 = vld [vmem:[#allocation9 + $0x50] sm:$0xff]
    %v2185 = vld [vmem:[#allocation9 + $0x58] sm:$0xff]
    %v2186 = vld [vmem:[#allocation9 + $0x60] sm:$0xff]
    %v2187 = vld [vmem:[#allocation9 + $0x68] sm:$0xff]
    %v2188 = vld [vmem:[#allocation9 + $0x70] sm:$0xff]
    %v2189 = vld [vmem:[#allocation9 + $0x78] sm:$0xff]
    %v2190 = vld [vmem:[#allocation9 + $0x80] sm:$0xff]
    %v2191 = vld [vmem:[#allocation9 + $0x88] sm:$0xff]
    %v2192 = vld [vmem:[#allocation9 + $0x90] sm:$0xff]
    %v2193 = vld [vmem:[#allocation9 + $0x98] sm:$0xff]
    %v2194 = vld [vmem:[#allocation9 + $0xa0] sm:$0xff]
    %v2195 = vld [vmem:[#allocation9 + $0xa8] sm:$0xff]
    %v2196 = vld [vmem:[#allocation9 + $0xb0] sm:$0xff]
    %v2197 = vld [vmem:[#allocation9 + $0xb8] sm:$0xff]
    %v2198 = vld [vmem:[#allocation9 + $0xc0] sm:$0xff]
    %v2199 = vld [vmem:[#allocation9 + $0xc8] sm:$0xff]
    %v2200 = vld [vmem:[#allocation9 + $0xd0] sm:$0xff]
    %v2201 = vld [vmem:[#allocation9 + $0xd8] sm:$0xff]
    %v2202 = vld [vmem:[#allocation9 + $0xe0] sm:$0xff]
    %v2203 = vld [vmem:[#allocation9 + $0xe8] sm:$0xff]
    %v2204 = vld [vmem:[#allocation9 + $0xf0] sm:$0xff]
    %v2205 = vld [vmem:[#allocation9 + $0xf8] sm:$0xff]
    %v2206 = vld [vmem:[#allocation9 + $0x100] sm:$0xff]
    %v2207 = vld [vmem:[#allocation9 + $0x108] sm:$0xff]
    %v2208 = vld [vmem:[#allocation9 + $0x110] sm:$0xff]
    %v2209 = vld [vmem:[#allocation9 + $0x118] sm:$0xff]
    %v2210 = vld [vmem:[#allocation9 + $0x120] sm:$0xff]
    %v2211 = vld [vmem:[#allocation9 + $0x128] sm:$0xff]
    %v2212 = vld [vmem:[#allocation9 + $0x130] sm:$0xff]
    %v2213 = vld [vmem:[#allocation9 + $0x138] sm:$0xff]
    %v2214 = vld [vmem:[#allocation9 + $0x140] sm:$0xff]
    %v2215 = vld [vmem:[#allocation9 + $0x148] sm:$0xff]
    %v2216 = vld [vmem:[#allocation9 + $0x150] sm:$0xff]
    %v2217 = vld [vmem:[#allocation9 + $0x158] sm:$0xff]
    %v2218 = vld [vmem:[#allocation9 + $0x160] sm:$0xff]
    %v2219 = vld [vmem:[#allocation9 + $0x168] sm:$0xff]
    %v2220 = vld [vmem:[#allocation9 + $0x170] sm:$0xff]
    %v2221 = vld [vmem:[#allocation9 + $0x178] sm:$0xff]
    %v2222 = vld [vmem:[#allocation9 + $0x180] sm:$0xff]
    %v2223 = vld [vmem:[#allocation9 + $0x188] sm:$0xff]
    %v2224 = vld [vmem:[#allocation9 + $0x190] sm:$0xff]
    %v2225 = vld [vmem:[#allocation9 + $0x198] sm:$0xff]
    %v2226 = vld [vmem:[#allocation9 + $0x1a0] sm:$0xff]
    %v2227 = vld [vmem:[#allocation9 + $0x1a8] sm:$0xff]
    %v2228 = vld [vmem:[#allocation9 + $0x1b0] sm:$0xff]
    %v2229 = vld [vmem:[#allocation9 + $0x1b8] sm:$0xff]
    %v2230 = vld [vmem:[#allocation9 + $0x1c0] sm:$0xff]
    %v2231 = vld [vmem:[#allocation9 + $0x1c8] sm:$0xff]
    %v2232 = vld [vmem:[#allocation9 + $0x1d0] sm:$0xff]
    %v2233 = vld [vmem:[#allocation9 + $0x1d8] sm:$0xff]
    %v2234 = vld [vmem:[#allocation9 + $0x1e0] sm:$0xff]
    %v2235 = vld [vmem:[#allocation9 + $0x1e8] sm:$0xff]
    %v2236 = vld [vmem:[#allocation9 + $0x1f0] sm:$0xff]
    %v2237 = vld [vmem:[#allocation9 + $0x1f8] sm:$0xff]
    %2238 = vmatpush.msra.mxu0 %v2234
    %2239 = vmatpush.msra.mxu0 %v2230
    %2240 = vmatpush.msra.mxu0 %v2226
    %2241 = vmatpush.msra.mxu0 %v2222
    %2242 = vmatpush.msra.mxu0 %v2218
    %2243 = vmatpush.msra.mxu0 %v2214
    %2244 = vmatpush.msra.mxu0 %v2210
    %2245 = vmatpush.msra.mxu0 %v2206
    %2246 = vmatpush.msra.mxu0 %v2202
    %2247 = vmatpush.msra.mxu0 %v2198
    %2248 = vmatpush.msra.mxu0 %v2194
    %2249 = vmatpush.msra.mxu0 %v2190
    %2250 = vmatpush.msra.mxu0 %v2186
    %2251 = vmatpush.msra.mxu0 %v2182
    %2252 = vmatpush.msra.mxu0 %v2178
    %2253 = vmatpush.msra.mxu0 %v2174
    %2254 = vmatmul.f32.gmra.mxu0 %v2167
    %v2255 = vpop.f32.mrf.mxu0
    %v2256 = vadd.f32 0.0, %v2255
    %2257 = vdwg.mxu0
    %2258 = vmatpush.msra.mxu0 %v2235
    %2259 = vmatpush.msra.mxu0 %v2231
    %2260 = vmatpush.msra.mxu0 %v2227
    %2261 = vmatpush.msra.mxu0 %v2223
    %2262 = vmatpush.msra.mxu0 %v2219
    %2263 = vmatpush.msra.mxu0 %v2215
    %2264 = vmatpush.msra.mxu0 %v2211
    %2265 = vmatpush.msra.mxu0 %v2207
    %2266 = vmatpush.msra.mxu0 %v2203
    %2267 = vmatpush.msra.mxu0 %v2199
    %2268 = vmatpush.msra.mxu0 %v2195
    %2269 = vmatpush.msra.mxu0 %v2191
    %2270 = vmatpush.msra.mxu0 %v2187
    %2271 = vmatpush.msra.mxu0 %v2183
    %2272 = vmatpush.msra.mxu0 %v2179
    %2273 = vmatpush.msra.mxu0 %v2175
    %2274 = vmatmul.f32.gmra.mxu0 %v2167
    %v2275 = vpop.f32.mrf.mxu0
    %v2276 = vadd.f32 0.0, %v2275
    %2277 = vdwg.mxu0
    %2278 = vmatpush.msra.mxu0 %v2236
    %2279 = vmatpush.msra.mxu0 %v2232
    %2280 = vmatpush.msra.mxu0 %v2228
    %2281 = vmatpush.msra.mxu0 %v2224
    %2282 = vmatpush.msra.mxu0 %v2220
    %2283 = vmatpush.msra.mxu0 %v2216
    %2284 = vmatpush.msra.mxu0 %v2212
    %2285 = vmatpush.msra.mxu0 %v2208
    %2286 = vmatpush.msra.mxu0 %v2204
    %2287 = vmatpush.msra.mxu0 %v2200
    %2288 = vmatpush.msra.mxu0 %v2196
    %2289 = vmatpush.msra.mxu0 %v2192
    %2290 = vmatpush.msra.mxu0 %v2188
    %2291 = vmatpush.msra.mxu0 %v2184
    %2292 = vmatpush.msra.mxu0 %v2180
    %2293 = vmatpush.msra.mxu0 %v2176
    %2294 = vmatmul.f32.gmra.mxu0 %v2167
    %v2295 = vpop.f32.mrf.mxu0
    %v2296 = vadd.f32 0.0, %v2295
    %2297 = vdwg.mxu0
    %2298 = vmatpush.msra.mxu0 %v2237
    %2299 = vmatpush.msra.mxu0 %v2233
    %2300 = vmatpush.msra.mxu0 %v2229
    %2301 = vmatpush.msra.mxu0 %v2225
    %2302 = vmatpush.msra.mxu0 %v2221
    %2303 = vmatpush.msra.mxu0 %v2217
    %2304 = vmatpush.msra.mxu0 %v2213
    %2305 = vmatpush.msra.mxu0 %v2209
    %2306 = vmatpush.msra.mxu0 %v2205
    %2307 = vmatpush.msra.mxu0 %v2201
    %2308 = vmatpush.msra.mxu0 %v2197
    %2309 = vmatpush.msra.mxu0 %v2193
    %2310 = vmatpush.msra.mxu0 %v2189
    %2311 = vmatpush.msra.mxu0 %v2185
    %2312 = vmatpush.msra.mxu0 %v2181
    %2313 = vmatpush.msra.mxu0 %v2177
    %2314 = vmatmul.f32.gmra.mxu0 %v2167
    %v2315 = vpop.f32.mrf.mxu0
    %v2316 = vadd.f32 0.0, %v2315
    %2317 = vdwg.mxu0
    %v2318 = vadd.f32 %v2170, %v2256
    %v2319 = vadd.f32 %v2171, %v2276
    %v2320 = vadd.f32 %v2172, %v2296
    %v2321 = vadd.f32 %v2173, %v2316
    %v2322 = vxor.u32 %v2318, 2147483648
    %v2323 = vxor.u32 %v2319, 2147483648
    %v2324 = vxor.u32 %v2320, 2147483648
    %v2325 = vmul.f32 %v2322, 1.442695
    %v2326 = vpow.pop %v2325
    %v2327 = vmul.f32 %v2323, 1.442695
    %v2328 = vpow.pop %v2327
    %v2329 = vmul.f32 %v2324, 1.442695
    %v2330 = vpow.pop %v2329
    %v2331 = vadd.f32 %v2326, 1.0
    %v2332 = vadd.f32 %v2328, 1.0
    %v2333 = vadd.f32 %v2330, 1.0
    %v2334 = vrcp.pop %v2331
    %v2335 = vmul.f32 %v2331, %v2334
    %v2336 = vsub.f32 1.0, %v2335
    %v2337 = vmul.f32 %v2334, %v2336
    %v2338 = vadd.f32 %v2334, %v2337
    %vm2339 = vweird.f32 %v2331
    %vm2340 = vweird.f32 %v2334
    %vm2341 = vmor %vm2339, %vm2340
    %v2342 = vsel %vm2341, %v2334, %v2338
    %v2343 = vand.u32 2147483647, %v2331
    %vm2344 = vcmp.eq.f32.partialorder %v2343, 8.507059e+37
    %v2345 = vand.u32 %v2331, 2147483648
    %v2346 = vor.u32 1.1754944e-38, %v2345
    %v2347 = vsel %vm2344, %v2346, %v2342
    %v2348 = vmul.f32 1.0, %v2347
    %v2349 = vrcp.pop %v2332
    %v2350 = vmul.f32 %v2332, %v2349
    %v2351 = vsub.f32 1.0, %v2350
    %v2352 = vmul.f32 %v2349, %v2351
    %v2353 = vadd.f32 %v2349, %v2352
    %vm2354 = vweird.f32 %v2332
    %vm2355 = vweird.f32 %v2349
    %vm2356 = vmor %vm2354, %vm2355
    %v2357 = vsel %vm2356, %v2349, %v2353
    %v2358 = vand.u32 2147483647, %v2332
    %vm2359 = vcmp.eq.f32.partialorder %v2358, 8.507059e+37
    %v2360 = vand.u32 %v2332, 2147483648
    %v2361 = vor.u32 1.1754944e-38, %v2360
    %v2362 = vsel %vm2359, %v2361, %v2357
    %v2363 = vmul.f32 1.0, %v2362
    %v2364 = vrcp.pop %v2333
    %v2365 = vmul.f32 %v2333, %v2364
    %v2366 = vsub.f32 1.0, %v2365
    %v2367 = vmul.f32 %v2364, %v2366
    %v2368 = vadd.f32 %v2364, %v2367
    %vm2369 = vweird.f32 %v2333
    %vm2370 = vweird.f32 %v2364
    %vm2371 = vmor %vm2369, %vm2370
    %v2372 = vsel %vm2371, %v2364, %v2368
    %v2373 = vand.u32 2147483647, %v2333
    %vm2374 = vcmp.eq.f32.partialorder %v2373, 8.507059e+37
    %v2375 = vand.u32 %v2333, 2147483648
    %v2376 = vor.u32 1.1754944e-38, %v2375
    %v2377 = vsel %vm2374, %v2376, %v2372
    %v2378 = vmul.f32 1.0, %v2377
    %v2379 = vtanh.pop %v2321
    %v2380 = vmul.f32 %v2363, %v2165
    %v2381 = vmul.f32 %v2348, %v2379
    %v2382 = vadd.f32 %v2380, %v2381
    %v2383 = vtanh.pop %v2382
    %v2384 = vmul.f32 %v2378, %v2383
    %2385 = vst [vmem:[#allocation2 + $0x38] sm:$0xff] %v2384
    %2386 = vst [vmem:[#allocation3] sm:$0xff] %v2384
    %v2387 = vld [vmem:[#allocation2] sm:$0xff]
    %v2388 = vld [vmem:[#allocation2 + $0x8] sm:$0xff]
    %v2389 = vld [vmem:[#allocation2 + $0x10] sm:$0xff]
    %v2390 = vld [vmem:[#allocation2 + $0x18] sm:$0xff]
    %v2391 = vld [vmem:[#allocation2 + $0x20] sm:$0xff]
    %v2392 = vld [vmem:[#allocation2 + $0x28] sm:$0xff]
    %v2393 = vld [vmem:[#allocation2 + $0x30] sm:$0xff]
    %v2394 = vld [vmem:[#allocation2 + $0x38] sm:$0xff]
    %s2395 = scalar_lea.vmem [#allocation5], 512
    %v2396 = vld [vmem:[%s2395] sm:$0xff]
    %v2397 = vld [vmem:[%s2395 + $0x8] sm:$0xff]
    %v2398 = vld [vmem:[%s2395 + $0x10] sm:$0xff]
    %v2399 = vld [vmem:[%s2395 + $0x18] sm:$0xff]
    %v2400 = vld [vmem:[%s2395 + $0x20] sm:$0xff]
    %v2401 = vld [vmem:[%s2395 + $0x28] sm:$0xff]
    %v2402 = vld [vmem:[%s2395 + $0x30] sm:$0xff]
    %v2403 = vld [vmem:[%s2395 + $0x38] sm:$0xff]
    %v2404 = vld [vmem:[%s2395 + $0x40] sm:$0xff]
    %v2405 = vld [vmem:[%s2395 + $0x48] sm:$0xff]
    %v2406 = vld [vmem:[%s2395 + $0x50] sm:$0xff]
    %v2407 = vld [vmem:[%s2395 + $0x58] sm:$0xff]
    %v2408 = vld [vmem:[%s2395 + $0x60] sm:$0xff]
    %v2409 = vld [vmem:[%s2395 + $0x68] sm:$0xff]
    %v2410 = vld [vmem:[%s2395 + $0x70] sm:$0xff]
    %v2411 = vld [vmem:[%s2395 + $0x78] sm:$0xff]
    %v2412 = vld [vmem:[%s2395 + $0x80] sm:$0xff]
    %v2413 = vld [vmem:[%s2395 + $0x88] sm:$0xff]
    %v2414 = vld [vmem:[%s2395 + $0x90] sm:$0xff]
    %v2415 = vld [vmem:[%s2395 + $0x98] sm:$0xff]
    %v2416 = vld [vmem:[%s2395 + $0xa0] sm:$0xff]
    %v2417 = vld [vmem:[%s2395 + $0xa8] sm:$0xff]
    %v2418 = vld [vmem:[%s2395 + $0xb0] sm:$0xff]
    %v2419 = vld [vmem:[%s2395 + $0xb8] sm:$0xff]
    %v2420 = vld [vmem:[%s2395 + $0xc0] sm:$0xff]
    %v2421 = vld [vmem:[%s2395 + $0xc8] sm:$0xff]
    %v2422 = vld [vmem:[%s2395 + $0xd0] sm:$0xff]
    %v2423 = vld [vmem:[%s2395 + $0xd8] sm:$0xff]
    %v2424 = vld [vmem:[%s2395 + $0xe0] sm:$0xff]
    %v2425 = vld [vmem:[%s2395 + $0xe8] sm:$0xff]
    %v2426 = vld [vmem:[%s2395 + $0xf0] sm:$0xff]
    %v2427 = vld [vmem:[%s2395 + $0xf8] sm:$0xff]
    %v2428 = vld [vmem:[%s2395 + $0x100] sm:$0xff]
    %v2429 = vld [vmem:[%s2395 + $0x108] sm:$0xff]
    %v2430 = vld [vmem:[%s2395 + $0x110] sm:$0xff]
    %v2431 = vld [vmem:[%s2395 + $0x118] sm:$0xff]
    %v2432 = vld [vmem:[%s2395 + $0x120] sm:$0xff]
    %v2433 = vld [vmem:[%s2395 + $0x128] sm:$0xff]
    %v2434 = vld [vmem:[%s2395 + $0x130] sm:$0xff]
    %v2435 = vld [vmem:[%s2395 + $0x138] sm:$0xff]
    %v2436 = vld [vmem:[%s2395 + $0x140] sm:$0xff]
    %v2437 = vld [vmem:[%s2395 + $0x148] sm:$0xff]
    %v2438 = vld [vmem:[%s2395 + $0x150] sm:$0xff]
    %v2439 = vld [vmem:[%s2395 + $0x158] sm:$0xff]
    %v2440 = vld [vmem:[%s2395 + $0x160] sm:$0xff]
    %v2441 = vld [vmem:[%s2395 + $0x168] sm:$0xff]
    %v2442 = vld [vmem:[%s2395 + $0x170] sm:$0xff]
    %v2443 = vld [vmem:[%s2395 + $0x178] sm:$0xff]
    %v2444 = vld [vmem:[%s2395 + $0x180] sm:$0xff]
    %v2445 = vld [vmem:[%s2395 + $0x188] sm:$0xff]
    %v2446 = vld [vmem:[%s2395 + $0x190] sm:$0xff]
    %v2447 = vld [vmem:[%s2395 + $0x198] sm:$0xff]
    %v2448 = vld [vmem:[%s2395 + $0x1a0] sm:$0xff]
    %v2449 = vld [vmem:[%s2395 + $0x1a8] sm:$0xff]
    %v2450 = vld [vmem:[%s2395 + $0x1b0] sm:$0xff]
    %v2451 = vld [vmem:[%s2395 + $0x1b8] sm:$0xff]
    %v2452 = vld [vmem:[%s2395 + $0x1c0] sm:$0xff]
    %v2453 = vld [vmem:[%s2395 + $0x1c8] sm:$0xff]
    %v2454 = vld [vmem:[%s2395 + $0x1d0] sm:$0xff]
    %v2455 = vld [vmem:[%s2395 + $0x1d8] sm:$0xff]
    %v2456 = vld [vmem:[%s2395 + $0x1e0] sm:$0xff]
    %v2457 = vld [vmem:[%s2395 + $0x1e8] sm:$0xff]
    %v2458 = vld [vmem:[%s2395 + $0x1f0] sm:$0xff]
    %v2459 = vld [vmem:[%s2395 + $0x1f8] sm:$0xff]
    %v2460 = vld [vmem:[#allocation3] sm:$0xff]
    %v2461 = vld [vmem:[#allocation3 + $0x8] sm:$0xff]
    %v2462 = vld [vmem:[#allocation3 + $0x10] sm:$0xff]
    %v2463 = vld [vmem:[#allocation3 + $0x18] sm:$0xff]
    %v2464 = vld [vmem:[#allocation3 + $0x20] sm:$0xff]
    %v2465 = vld [vmem:[#allocation3 + $0x28] sm:$0xff]
    %v2466 = vld [vmem:[#allocation3 + $0x30] sm:$0xff]
    %v2467 = vld [vmem:[#allocation3 + $0x38] sm:$0xff]
    %s2468 = scalar_lea.vmem [#allocation7], 512
    %v2469 = vld [vmem:[%s2468] sm:$0xff]
    %v2470 = vld [vmem:[%s2468 + $0x8] sm:$0xff]
    %v2471 = vld [vmem:[%s2468 + $0x10] sm:$0xff]
    %v2472 = vld [vmem:[%s2468 + $0x18] sm:$0xff]
    %v2473 = vld [vmem:[%s2468 + $0x20] sm:$0xff]
    %v2474 = vld [vmem:[%s2468 + $0x28] sm:$0xff]
    %v2475 = vld [vmem:[%s2468 + $0x30] sm:$0xff]
    %v2476 = vld [vmem:[%s2468 + $0x38] sm:$0xff]
    %v2477 = vld [vmem:[%s2468 + $0x40] sm:$0xff]
    %v2478 = vld [vmem:[%s2468 + $0x48] sm:$0xff]
    %v2479 = vld [vmem:[%s2468 + $0x50] sm:$0xff]
    %v2480 = vld [vmem:[%s2468 + $0x58] sm:$0xff]
    %v2481 = vld [vmem:[%s2468 + $0x60] sm:$0xff]
    %v2482 = vld [vmem:[%s2468 + $0x68] sm:$0xff]
    %v2483 = vld [vmem:[%s2468 + $0x70] sm:$0xff]
    %v2484 = vld [vmem:[%s2468 + $0x78] sm:$0xff]
    %v2485 = vld [vmem:[%s2468 + $0x80] sm:$0xff]
    %v2486 = vld [vmem:[%s2468 + $0x88] sm:$0xff]
    %v2487 = vld [vmem:[%s2468 + $0x90] sm:$0xff]
    %v2488 = vld [vmem:[%s2468 + $0x98] sm:$0xff]
    %v2489 = vld [vmem:[%s2468 + $0xa0] sm:$0xff]
    %v2490 = vld [vmem:[%s2468 + $0xa8] sm:$0xff]
    %v2491 = vld [vmem:[%s2468 + $0xb0] sm:$0xff]
    %v2492 = vld [vmem:[%s2468 + $0xb8] sm:$0xff]
    %v2493 = vld [vmem:[%s2468 + $0xc0] sm:$0xff]
    %v2494 = vld [vmem:[%s2468 + $0xc8] sm:$0xff]
    %v2495 = vld [vmem:[%s2468 + $0xd0] sm:$0xff]
    %v2496 = vld [vmem:[%s2468 + $0xd8] sm:$0xff]
    %v2497 = vld [vmem:[%s2468 + $0xe0] sm:$0xff]
    %v2498 = vld [vmem:[%s2468 + $0xe8] sm:$0xff]
    %v2499 = vld [vmem:[%s2468 + $0xf0] sm:$0xff]
    %v2500 = vld [vmem:[%s2468 + $0xf8] sm:$0xff]
    %v2501 = vld [vmem:[%s2468 + $0x100] sm:$0xff]
    %v2502 = vld [vmem:[%s2468 + $0x108] sm:$0xff]
    %v2503 = vld [vmem:[%s2468 + $0x110] sm:$0xff]
    %v2504 = vld [vmem:[%s2468 + $0x118] sm:$0xff]
    %v2505 = vld [vmem:[%s2468 + $0x120] sm:$0xff]
    %v2506 = vld [vmem:[%s2468 + $0x128] sm:$0xff]
    %v2507 = vld [vmem:[%s2468 + $0x130] sm:$0xff]
    %v2508 = vld [vmem:[%s2468 + $0x138] sm:$0xff]
    %v2509 = vld [vmem:[%s2468 + $0x140] sm:$0xff]
    %v2510 = vld [vmem:[%s2468 + $0x148] sm:$0xff]
    %v2511 = vld [vmem:[%s2468 + $0x150] sm:$0xff]
    %v2512 = vld [vmem:[%s2468 + $0x158] sm:$0xff]
    %v2513 = vld [vmem:[%s2468 + $0x160] sm:$0xff]
    %v2514 = vld [vmem:[%s2468 + $0x168] sm:$0xff]
    %v2515 = vld [vmem:[%s2468 + $0x170] sm:$0xff]
    %v2516 = vld [vmem:[%s2468 + $0x178] sm:$0xff]
    %v2517 = vld [vmem:[%s2468 + $0x180] sm:$0xff]
    %v2518 = vld [vmem:[%s2468 + $0x188] sm:$0xff]
    %v2519 = vld [vmem:[%s2468 + $0x190] sm:$0xff]
    %v2520 = vld [vmem:[%s2468 + $0x198] sm:$0xff]
    %v2521 = vld [vmem:[%s2468 + $0x1a0] sm:$0xff]
    %v2522 = vld [vmem:[%s2468 + $0x1a8] sm:$0xff]
    %v2523 = vld [vmem:[%s2468 + $0x1b0] sm:$0xff]
    %v2524 = vld [vmem:[%s2468 + $0x1b8] sm:$0xff]
    %v2525 = vld [vmem:[%s2468 + $0x1c0] sm:$0xff]
    %v2526 = vld [vmem:[%s2468 + $0x1c8] sm:$0xff]
    %v2527 = vld [vmem:[%s2468 + $0x1d0] sm:$0xff]
    %v2528 = vld [vmem:[%s2468 + $0x1d8] sm:$0xff]
    %v2529 = vld [vmem:[%s2468 + $0x1e0] sm:$0xff]
    %v2530 = vld [vmem:[%s2468 + $0x1e8] sm:$0xff]
    %v2531 = vld [vmem:[%s2468 + $0x1f0] sm:$0xff]
    %v2532 = vld [vmem:[%s2468 + $0x1f8] sm:$0xff]
    %2533 = vmatpush.msra.mxu0 %v2529
    %2534 = vmatpush.msra.mxu0 %v2525
    %2535 = vmatpush.msra.mxu0 %v2521
    %2536 = vmatpush.msra.mxu0 %v2517
    %2537 = vmatpush.msra.mxu0 %v2513
    %2538 = vmatpush.msra.mxu0 %v2509
    %2539 = vmatpush.msra.mxu0 %v2505
    %2540 = vmatpush.msra.mxu0 %v2501
    %2541 = vmatpush.msra.mxu0 %v2497
    %2542 = vmatpush.msra.mxu0 %v2493
    %2543 = vmatpush.msra.mxu0 %v2489
    %2544 = vmatpush.msra.mxu0 %v2485
    %2545 = vmatpush.msra.mxu0 %v2481
    %2546 = vmatpush.msra.mxu0 %v2477
    %2547 = vmatpush.msra.mxu0 %v2473
    %2548 = vmatpush.msra.mxu0 %v2469
    %2549 = vmatmul.f32.gmra.mxu0 %v2460
    %v2550 = vpop.f32.mrf.mxu0
    %v2551 = vadd.f32 0.0, %v2550
    %2552 = vmatmul.f32.gmra.mxu0 %v2461
    %v2553 = vpop.f32.mrf.mxu0
    %v2554 = vadd.f32 0.0, %v2553
    %2555 = vmatmul.f32.gmra.mxu0 %v2462
    %v2556 = vpop.f32.mrf.mxu0
    %v2557 = vadd.f32 0.0, %v2556
    %2558 = vmatmul.f32.gmra.mxu0 %v2463
    %v2559 = vpop.f32.mrf.mxu0
    %v2560 = vadd.f32 0.0, %v2559
    %2561 = vmatmul.f32.gmra.mxu0 %v2464
    %v2562 = vpop.f32.mrf.mxu0
    %v2563 = vadd.f32 0.0, %v2562
    %2564 = vmatmul.f32.gmra.mxu0 %v2465
    %v2565 = vpop.f32.mrf.mxu0
    %v2566 = vadd.f32 0.0, %v2565
    %2567 = vmatmul.f32.gmra.mxu0 %v2466
    %v2568 = vpop.f32.mrf.mxu0
    %v2569 = vadd.f32 0.0, %v2568
    %2570 = vmatmul.f32.gmra.mxu0 %v2467
    %v2571 = vpop.f32.mrf.mxu0
    %v2572 = vadd.f32 0.0, %v2571
    %2573 = vdwg.mxu0
    %2574 = vmatpush.msra.mxu0 %v2530
    %2575 = vmatpush.msra.mxu0 %v2526
    %2576 = vmatpush.msra.mxu0 %v2522
    %2577 = vmatpush.msra.mxu0 %v2518
    %2578 = vmatpush.msra.mxu0 %v2514
    %2579 = vmatpush.msra.mxu0 %v2510
    %2580 = vmatpush.msra.mxu0 %v2506
    %2581 = vmatpush.msra.mxu0 %v2502
    %2582 = vmatpush.msra.mxu0 %v2498
    %2583 = vmatpush.msra.mxu0 %v2494
    %2584 = vmatpush.msra.mxu0 %v2490
    %2585 = vmatpush.msra.mxu0 %v2486
    %2586 = vmatpush.msra.mxu0 %v2482
    %2587 = vmatpush.msra.mxu0 %v2478
    %2588 = vmatpush.msra.mxu0 %v2474
    %2589 = vmatpush.msra.mxu0 %v2470
    %2590 = vmatmul.f32.gmra.mxu0 %v2460
    %v2591 = vpop.f32.mrf.mxu0
    %v2592 = vadd.f32 0.0, %v2591
    %2593 = vmatmul.f32.gmra.mxu0 %v2461
    %v2594 = vpop.f32.mrf.mxu0
    %v2595 = vadd.f32 0.0, %v2594
    %2596 = vmatmul.f32.gmra.mxu0 %v2462
    %v2597 = vpop.f32.mrf.mxu0
    %v2598 = vadd.f32 0.0, %v2597
    %2599 = vmatmul.f32.gmra.mxu0 %v2463
    %v2600 = vpop.f32.mrf.mxu0
    %v2601 = vadd.f32 0.0, %v2600
    %2602 = vmatmul.f32.gmra.mxu0 %v2464
    %v2603 = vpop.f32.mrf.mxu0
    %v2604 = vadd.f32 0.0, %v2603
    %2605 = vmatmul.f32.gmra.mxu0 %v2465
    %v2606 = vpop.f32.mrf.mxu0
    %v2607 = vadd.f32 0.0, %v2606
    %2608 = vmatmul.f32.gmra.mxu0 %v2466
    %v2609 = vpop.f32.mrf.mxu0
    %v2610 = vadd.f32 0.0, %v2609
    %2611 = vmatmul.f32.gmra.mxu0 %v2467
    %v2612 = vpop.f32.mrf.mxu0
    %v2613 = vadd.f32 0.0, %v2612
    %2614 = vdwg.mxu0
    %2615 = vmatpush.msra.mxu0 %v2531
    %2616 = vmatpush.msra.mxu0 %v2527
    %2617 = vmatpush.msra.mxu0 %v2523
    %2618 = vmatpush.msra.mxu0 %v2519
    %2619 = vmatpush.msra.mxu0 %v2515
    %2620 = vmatpush.msra.mxu0 %v2511
    %2621 = vmatpush.msra.mxu0 %v2507
    %2622 = vmatpush.msra.mxu0 %v2503
    %2623 = vmatpush.msra.mxu0 %v2499
    %2624 = vmatpush.msra.mxu0 %v2495
    %2625 = vmatpush.msra.mxu0 %v2491
    %2626 = vmatpush.msra.mxu0 %v2487
    %2627 = vmatpush.msra.mxu0 %v2483
    %2628 = vmatpush.msra.mxu0 %v2479
    %2629 = vmatpush.msra.mxu0 %v2475
    %2630 = vmatpush.msra.mxu0 %v2471
    %2631 = vmatmul.f32.gmra.mxu0 %v2460
    %v2632 = vpop.f32.mrf.mxu0
    %v2633 = vadd.f32 0.0, %v2632
    %2634 = vmatmul.f32.gmra.mxu0 %v2461
    %v2635 = vpop.f32.mrf.mxu0
    %v2636 = vadd.f32 0.0, %v2635
    %2637 = vmatmul.f32.gmra.mxu0 %v2462
    %v2638 = vpop.f32.mrf.mxu0
    %v2639 = vadd.f32 0.0, %v2638
    %2640 = vmatmul.f32.gmra.mxu0 %v2463
    %v2641 = vpop.f32.mrf.mxu0
    %v2642 = vadd.f32 0.0, %v2641
    %2643 = vmatmul.f32.gmra.mxu0 %v2464
    %v2644 = vpop.f32.mrf.mxu0
    %v2645 = vadd.f32 0.0, %v2644
    %2646 = vmatmul.f32.gmra.mxu0 %v2465
    %v2647 = vpop.f32.mrf.mxu0
    %v2648 = vadd.f32 0.0, %v2647
    %2649 = vmatmul.f32.gmra.mxu0 %v2466
    %v2650 = vpop.f32.mrf.mxu0
    %v2651 = vadd.f32 0.0, %v2650
    %2652 = vmatmul.f32.gmra.mxu0 %v2467
    %v2653 = vpop.f32.mrf.mxu0
    %v2654 = vadd.f32 0.0, %v2653
    %2655 = vdwg.mxu0
    %2656 = vmatpush.msra.mxu0 %v2532
    %2657 = vmatpush.msra.mxu0 %v2528
    %2658 = vmatpush.msra.mxu0 %v2524
    %2659 = vmatpush.msra.mxu0 %v2520
    %2660 = vmatpush.msra.mxu0 %v2516
    %2661 = vmatpush.msra.mxu0 %v2512
    %2662 = vmatpush.msra.mxu0 %v2508
    %2663 = vmatpush.msra.mxu0 %v2504
    %2664 = vmatpush.msra.mxu0 %v2500
    %2665 = vmatpush.msra.mxu0 %v2496
    %2666 = vmatpush.msra.mxu0 %v2492
    %2667 = vmatpush.msra.mxu0 %v2488
    %2668 = vmatpush.msra.mxu0 %v2484
    %2669 = vmatpush.msra.mxu0 %v2480
    %2670 = vmatpush.msra.mxu0 %v2476
    %2671 = vmatpush.msra.mxu0 %v2472
    %2672 = vmatmul.f32.gmra.mxu0 %v2460
    %v2673 = vpop.f32.mrf.mxu0
    %v2674 = vadd.f32 0.0, %v2673
    %2675 = vmatmul.f32.gmra.mxu0 %v2461
    %v2676 = vpop.f32.mrf.mxu0
    %v2677 = vadd.f32 0.0, %v2676
    %2678 = vmatmul.f32.gmra.mxu0 %v2462
    %v2679 = vpop.f32.mrf.mxu0
    %v2680 = vadd.f32 0.0, %v2679
    %2681 = vmatmul.f32.gmra.mxu0 %v2463
    %v2682 = vpop.f32.mrf.mxu0
    %v2683 = vadd.f32 0.0, %v2682
    %2684 = vmatmul.f32.gmra.mxu0 %v2464
    %v2685 = vpop.f32.mrf.mxu0
    %v2686 = vadd.f32 0.0, %v2685
    %2687 = vmatmul.f32.gmra.mxu0 %v2465
    %v2688 = vpop.f32.mrf.mxu0
    %v2689 = vadd.f32 0.0, %v2688
    %2690 = vmatmul.f32.gmra.mxu0 %v2466
    %v2691 = vpop.f32.mrf.mxu0
    %v2692 = vadd.f32 0.0, %v2691
    %2693 = vmatmul.f32.gmra.mxu0 %v2467
    %v2694 = vpop.f32.mrf.mxu0
    %v2695 = vadd.f32 0.0, %v2694
    %2696 = vdwg.mxu0
    %2697 = vmatpush.msra.mxu0 %v2456
    %2698 = vmatpush.msra.mxu0 %v2452
    %2699 = vmatpush.msra.mxu0 %v2448
    %2700 = vmatpush.msra.mxu0 %v2444
    %2701 = vmatpush.msra.mxu0 %v2440
    %2702 = vmatpush.msra.mxu0 %v2436
    %2703 = vmatpush.msra.mxu0 %v2432
    %2704 = vmatpush.msra.mxu0 %v2428
    %2705 = vmatpush.msra.mxu0 %v2424
    %2706 = vmatpush.msra.mxu0 %v2420
    %2707 = vmatpush.msra.mxu0 %v2416
    %2708 = vmatpush.msra.mxu0 %v2412
    %2709 = vmatpush.msra.mxu0 %v2408
    %2710 = vmatpush.msra.mxu0 %v2404
    %2711 = vmatpush.msra.mxu0 %v2400
    %2712 = vmatpush.msra.mxu0 %v2396
    %2713 = vmatmul.f32.gmra.mxu0 %v2387
    %v2714 = vpop.f32.mrf.mxu0
    %v2715 = vadd.f32 %v2551, %v2714
    %2716 = vmatmul.f32.gmra.mxu0 %v2388
    %v2717 = vpop.f32.mrf.mxu0
    %v2718 = vadd.f32 %v2554, %v2717
    %2719 = vmatmul.f32.gmra.mxu0 %v2389
    %v2720 = vpop.f32.mrf.mxu0
    %v2721 = vadd.f32 %v2557, %v2720
    %2722 = vmatmul.f32.gmra.mxu0 %v2390
    %v2723 = vpop.f32.mrf.mxu0
    %v2724 = vadd.f32 %v2560, %v2723
    %2725 = vmatmul.f32.gmra.mxu0 %v2391
    %v2726 = vpop.f32.mrf.mxu0
    %v2727 = vadd.f32 %v2563, %v2726
    %2728 = vmatmul.f32.gmra.mxu0 %v2392
    %v2729 = vpop.f32.mrf.mxu0
    %v2730 = vadd.f32 %v2566, %v2729
    %2731 = vmatmul.f32.gmra.mxu0 %v2393
    %v2732 = vpop.f32.mrf.mxu0
    %v2733 = vadd.f32 %v2569, %v2732
    %2734 = vmatmul.f32.gmra.mxu0 %v2394
    %v2735 = vpop.f32.mrf.mxu0
    %v2736 = vadd.f32 %v2572, %v2735
    %2737 = vdwg.mxu0
    %2738 = vmatpush.msra.mxu0 %v2457
    %2739 = vmatpush.msra.mxu0 %v2453
    %2740 = vmatpush.msra.mxu0 %v2449
    %2741 = vmatpush.msra.mxu0 %v2445
    %2742 = vmatpush.msra.mxu0 %v2441
    %2743 = vmatpush.msra.mxu0 %v2437
    %2744 = vmatpush.msra.mxu0 %v2433
    %2745 = vmatpush.msra.mxu0 %v2429
    %2746 = vmatpush.msra.mxu0 %v2425
    %2747 = vmatpush.msra.mxu0 %v2421
    %2748 = vmatpush.msra.mxu0 %v2417
    %2749 = vmatpush.msra.mxu0 %v2413
    %2750 = vmatpush.msra.mxu0 %v2409
    %2751 = vmatpush.msra.mxu0 %v2405
    %2752 = vmatpush.msra.mxu0 %v2401
    %2753 = vmatpush.msra.mxu0 %v2397
    %2754 = vmatmul.f32.gmra.mxu0 %v2387
    %v2755 = vpop.f32.mrf.mxu0
    %v2756 = vadd.f32 %v2592, %v2755
    %2757 = vmatmul.f32.gmra.mxu0 %v2388
    %v2758 = vpop.f32.mrf.mxu0
    %v2759 = vadd.f32 %v2595, %v2758
    %2760 = vmatmul.f32.gmra.mxu0 %v2389
    %v2761 = vpop.f32.mrf.mxu0
    %v2762 = vadd.f32 %v2598, %v2761
    %2763 = vmatmul.f32.gmra.mxu0 %v2390
    %v2764 = vpop.f32.mrf.mxu0
    %v2765 = vadd.f32 %v2601, %v2764
    %2766 = vmatmul.f32.gmra.mxu0 %v2391
    %v2767 = vpop.f32.mrf.mxu0
    %v2768 = vadd.f32 %v2604, %v2767
    %2769 = vmatmul.f32.gmra.mxu0 %v2392
    %v2770 = vpop.f32.mrf.mxu0
    %v2771 = vadd.f32 %v2607, %v2770
    %2772 = vmatmul.f32.gmra.mxu0 %v2393
    %v2773 = vpop.f32.mrf.mxu0
    %v2774 = vadd.f32 %v2610, %v2773
    %2775 = vmatmul.f32.gmra.mxu0 %v2394
    %v2776 = vpop.f32.mrf.mxu0
    %v2777 = vadd.f32 %v2613, %v2776
    %2778 = vdwg.mxu0
    %2779 = vmatpush.msra.mxu0 %v2458
    %2780 = vmatpush.msra.mxu0 %v2454
    %2781 = vmatpush.msra.mxu0 %v2450
    %2782 = vmatpush.msra.mxu0 %v2446
    %2783 = vmatpush.msra.mxu0 %v2442
    %2784 = vmatpush.msra.mxu0 %v2438
    %2785 = vmatpush.msra.mxu0 %v2434
    %2786 = vmatpush.msra.mxu0 %v2430
    %2787 = vmatpush.msra.mxu0 %v2426
    %2788 = vmatpush.msra.mxu0 %v2422
    %2789 = vmatpush.msra.mxu0 %v2418
    %2790 = vmatpush.msra.mxu0 %v2414
    %2791 = vmatpush.msra.mxu0 %v2410
    %2792 = vmatpush.msra.mxu0 %v2406
    %2793 = vmatpush.msra.mxu0 %v2402
    %2794 = vmatpush.msra.mxu0 %v2398
    %2795 = vmatmul.f32.gmra.mxu0 %v2387
    %v2796 = vpop.f32.mrf.mxu0
    %v2797 = vadd.f32 %v2633, %v2796
    %2798 = vmatmul.f32.gmra.mxu0 %v2388
    %v2799 = vpop.f32.mrf.mxu0
    %v2800 = vadd.f32 %v2636, %v2799
    %2801 = vmatmul.f32.gmra.mxu0 %v2389
    %v2802 = vpop.f32.mrf.mxu0
    %v2803 = vadd.f32 %v2639, %v2802
    %2804 = vmatmul.f32.gmra.mxu0 %v2390
    %v2805 = vpop.f32.mrf.mxu0
    %v2806 = vadd.f32 %v2642, %v2805
    %2807 = vmatmul.f32.gmra.mxu0 %v2391
    %v2808 = vpop.f32.mrf.mxu0
    %v2809 = vadd.f32 %v2645, %v2808
    %2810 = vmatmul.f32.gmra.mxu0 %v2392
    %v2811 = vpop.f32.mrf.mxu0
    %v2812 = vadd.f32 %v2648, %v2811
    %2813 = vmatmul.f32.gmra.mxu0 %v2393
    %v2814 = vpop.f32.mrf.mxu0
    %v2815 = vadd.f32 %v2651, %v2814
    %2816 = vmatmul.f32.gmra.mxu0 %v2394
    %v2817 = vpop.f32.mrf.mxu0
    %v2818 = vadd.f32 %v2654, %v2817
    %2819 = vdwg.mxu0
    %2820 = vmatpush.msra.mxu0 %v2459
    %2821 = vmatpush.msra.mxu0 %v2455
    %2822 = vmatpush.msra.mxu0 %v2451
    %2823 = vmatpush.msra.mxu0 %v2447
    %2824 = vmatpush.msra.mxu0 %v2443
    %2825 = vmatpush.msra.mxu0 %v2439
    %2826 = vmatpush.msra.mxu0 %v2435
    %2827 = vmatpush.msra.mxu0 %v2431
    %2828 = vmatpush.msra.mxu0 %v2427
    %2829 = vmatpush.msra.mxu0 %v2423
    %2830 = vmatpush.msra.mxu0 %v2419
    %2831 = vmatpush.msra.mxu0 %v2415
    %2832 = vmatpush.msra.mxu0 %v2411
    %2833 = vmatpush.msra.mxu0 %v2407
    %2834 = vmatpush.msra.mxu0 %v2403
    %2835 = vmatpush.msra.mxu0 %v2399
    %2836 = vmatmul.f32.gmra.mxu0 %v2387
    %v2837 = vpop.f32.mrf.mxu0
    %v2838 = vadd.f32 %v2674, %v2837
    %2839 = vmatmul.f32.gmra.mxu0 %v2388
    %v2840 = vpop.f32.mrf.mxu0
    %v2841 = vadd.f32 %v2677, %v2840
    %2842 = vmatmul.f32.gmra.mxu0 %v2389
    %v2843 = vpop.f32.mrf.mxu0
    %v2844 = vadd.f32 %v2680, %v2843
    %2845 = vmatmul.f32.gmra.mxu0 %v2390
    %v2846 = vpop.f32.mrf.mxu0
    %v2847 = vadd.f32 %v2683, %v2846
    %2848 = vmatmul.f32.gmra.mxu0 %v2391
    %v2849 = vpop.f32.mrf.mxu0
    %v2850 = vadd.f32 %v2686, %v2849
    %2851 = vmatmul.f32.gmra.mxu0 %v2392
    %v2852 = vpop.f32.mrf.mxu0
    %v2853 = vadd.f32 %v2689, %v2852
    %2854 = vmatmul.f32.gmra.mxu0 %v2393
    %v2855 = vpop.f32.mrf.mxu0
    %v2856 = vadd.f32 %v2692, %v2855
    %2857 = vmatmul.f32.gmra.mxu0 %v2394
    %v2858 = vpop.f32.mrf.mxu0
    %v2859 = vadd.f32 %v2695, %v2858
    %2860 = vdwg.mxu0
    %s2861 = scalar_lea.vmem %s4, 4
    %v2862 = vld [vmem:[%s2861] sm:$0xf]
    %v2864 = vperm.slane %v2862, 0
    %v2865 = vperm.slane %v2862, 1
    %v2866 = vperm.slane %v2862, 2
    %v2867 = vperm.slane %v2862, 3
    %v2872 = vadd.f32 %v2715, %v2864
    %v2873 = vadd.f32 %v2756, %v2865
    %v2874 = vadd.f32 %v2797, %v2866
    %v2875 = vadd.f32 %v2838, %v2867
    %v2876 = vadd.f32 %v2718, %v2864
    %v2877 = vadd.f32 %v2759, %v2865
    %v2878 = vadd.f32 %v2800, %v2866
    %v2879 = vadd.f32 %v2841, %v2867
    %v2880 = vadd.f32 %v2721, %v2864
    %v2881 = vadd.f32 %v2762, %v2865
    %v2882 = vadd.f32 %v2803, %v2866
    %v2883 = vadd.f32 %v2844, %v2867
    %v2884 = vadd.f32 %v2724, %v2864
    %v2885 = vadd.f32 %v2765, %v2865
    %v2886 = vadd.f32 %v2806, %v2866
    %v2887 = vadd.f32 %v2847, %v2867
    %v2888 = vadd.f32 %v2727, %v2864
    %v2889 = vadd.f32 %v2768, %v2865
    %v2890 = vadd.f32 %v2809, %v2866
    %v2891 = vadd.f32 %v2850, %v2867
    %v2892 = vadd.f32 %v2730, %v2864
    %v2893 = vadd.f32 %v2771, %v2865
    %v2894 = vadd.f32 %v2812, %v2866
    %v2895 = vadd.f32 %v2853, %v2867
    %v2896 = vadd.f32 %v2733, %v2864
    %v2897 = vadd.f32 %v2774, %v2865
    %v2898 = vadd.f32 %v2815, %v2866
    %v2899 = vadd.f32 %v2856, %v2867
    %v2900 = vadd.f32 %v2736, %v2864
    %v2901 = vadd.f32 %v2777, %v2865
    %v2902 = vadd.f32 %v2818, %v2866
    %v2903 = vadd.f32 %v2859, %v2867
    %2904 = vst [vmem:[#allocation4] sm:$0xff] %v2872
    %2905 = vst [vmem:[#allocation4 + $0x8] sm:$0xff] %v2873
    %2906 = vst [vmem:[#allocation4 + $0x10] sm:$0xff] %v2874
    %2907 = vst [vmem:[#allocation4 + $0x18] sm:$0xff] %v2875
    %2908 = vst [vmem:[#allocation4 + $0x20] sm:$0xff] %v2876
    %2909 = vst [vmem:[#allocation4 + $0x28] sm:$0xff] %v2877
    %2910 = vst [vmem:[#allocation4 + $0x30] sm:$0xff] %v2878
    %2911 = vst [vmem:[#allocation4 + $0x38] sm:$0xff] %v2879
    %2912 = vst [vmem:[#allocation4 + $0x40] sm:$0xff] %v2880
    %2913 = vst [vmem:[#allocation4 + $0x48] sm:$0xff] %v2881
    %2914 = vst [vmem:[#allocation4 + $0x50] sm:$0xff] %v2882
    %2915 = vst [vmem:[#allocation4 + $0x58] sm:$0xff] %v2883
    %2916 = vst [vmem:[#allocation4 + $0x60] sm:$0xff] %v2884
    %2917 = vst [vmem:[#allocation4 + $0x68] sm:$0xff] %v2885
    %2918 = vst [vmem:[#allocation4 + $0x70] sm:$0xff] %v2886
    %2919 = vst [vmem:[#allocation4 + $0x78] sm:$0xff] %v2887
    %2920 = vst [vmem:[#allocation4 + $0x80] sm:$0xff] %v2888
    %2921 = vst [vmem:[#allocation4 + $0x88] sm:$0xff] %v2889
    %2922 = vst [vmem:[#allocation4 + $0x90] sm:$0xff] %v2890
    %2923 = vst [vmem:[#allocation4 + $0x98] sm:$0xff] %v2891
    %2924 = vst [vmem:[#allocation4 + $0xa0] sm:$0xff] %v2892
    %2925 = vst [vmem:[#allocation4 + $0xa8] sm:$0xff] %v2893
    %2926 = vst [vmem:[#allocation4 + $0xb0] sm:$0xff] %v2894
    %2927 = vst [vmem:[#allocation4 + $0xb8] sm:$0xff] %v2895
    %2928 = vst [vmem:[#allocation4 + $0xc0] sm:$0xff] %v2896
    %2929 = vst [vmem:[#allocation4 + $0xc8] sm:$0xff] %v2897
    %2930 = vst [vmem:[#allocation4 + $0xd0] sm:$0xff] %v2898
    %2931 = vst [vmem:[#allocation4 + $0xd8] sm:$0xff] %v2899
    %2932 = vst [vmem:[#allocation4 + $0xe0] sm:$0xff] %v2900
    %2933 = vst [vmem:[#allocation4 + $0xe8] sm:$0xff] %v2901
    %2934 = vst [vmem:[#allocation4 + $0xf0] sm:$0xff] %v2902
    %2935 = vst [vmem:[#allocation4 + $0xf8] sm:$0xff] %v2903
    %v2936 = vld [vmem:[#allocation4] sm:$0xff]
    %v2937 = vld [vmem:[#allocation4 + $0x8] sm:$0xff]
    %v2938 = vld [vmem:[#allocation4 + $0x10] sm:$0xff]
    %v2939 = vld [vmem:[#allocation4 + $0x18] sm:$0xff]
    %s2940 = scalar_lea.vmem [#allocation9], 512
    %v2941 = vld [vmem:[%s2940] sm:$0xff]
    %v2942 = vld [vmem:[%s2940 + $0x8] sm:$0xff]
    %v2943 = vld [vmem:[%s2940 + $0x10] sm:$0xff]
    %v2944 = vld [vmem:[%s2940 + $0x18] sm:$0xff]
    %v2945 = vld [vmem:[%s2940 + $0x20] sm:$0xff]
    %v2946 = vld [vmem:[%s2940 + $0x28] sm:$0xff]
    %v2947 = vld [vmem:[%s2940 + $0x30] sm:$0xff]
    %v2948 = vld [vmem:[%s2940 + $0x38] sm:$0xff]
    %v2949 = vld [vmem:[%s2940 + $0x40] sm:$0xff]
    %v2950 = vld [vmem:[%s2940 + $0x48] sm:$0xff]
    %v2951 = vld [vmem:[%s2940 + $0x50] sm:$0xff]
    %v2952 = vld [vmem:[%s2940 + $0x58] sm:$0xff]
    %v2953 = vld [vmem:[%s2940 + $0x60] sm:$0xff]
    %v2954 = vld [vmem:[%s2940 + $0x68] sm:$0xff]
    %v2955 = vld [vmem:[%s2940 + $0x70] sm:$0xff]
    %v2956 = vld [vmem:[%s2940 + $0x78] sm:$0xff]
    %v2957 = vld [vmem:[%s2940 + $0x80] sm:$0xff]
    %v2958 = vld [vmem:[%s2940 + $0x88] sm:$0xff]
    %v2959 = vld [vmem:[%s2940 + $0x90] sm:$0xff]
    %v2960 = vld [vmem:[%s2940 + $0x98] sm:$0xff]
    %v2961 = vld [vmem:[%s2940 + $0xa0] sm:$0xff]
    %v2962 = vld [vmem:[%s2940 + $0xa8] sm:$0xff]
    %v2963 = vld [vmem:[%s2940 + $0xb0] sm:$0xff]
    %v2964 = vld [vmem:[%s2940 + $0xb8] sm:$0xff]
    %v2965 = vld [vmem:[%s2940 + $0xc0] sm:$0xff]
    %v2966 = vld [vmem:[%s2940 + $0xc8] sm:$0xff]
    %v2967 = vld [vmem:[%s2940 + $0xd0] sm:$0xff]
    %v2968 = vld [vmem:[%s2940 + $0xd8] sm:$0xff]
    %v2969 = vld [vmem:[%s2940 + $0xe0] sm:$0xff]
    %v2970 = vld [vmem:[%s2940 + $0xe8] sm:$0xff]
    %v2971 = vld [vmem:[%s2940 + $0xf0] sm:$0xff]
    %v2972 = vld [vmem:[%s2940 + $0xf8] sm:$0xff]
    %v2973 = vld [vmem:[%s2940 + $0x100] sm:$0xff]
    %v2974 = vld [vmem:[%s2940 + $0x108] sm:$0xff]
    %v2975 = vld [vmem:[%s2940 + $0x110] sm:$0xff]
    %v2976 = vld [vmem:[%s2940 + $0x118] sm:$0xff]
    %v2977 = vld [vmem:[%s2940 + $0x120] sm:$0xff]
    %v2978 = vld [vmem:[%s2940 + $0x128] sm:$0xff]
    %v2979 = vld [vmem:[%s2940 + $0x130] sm:$0xff]
    %v2980 = vld [vmem:[%s2940 + $0x138] sm:$0xff]
    %v2981 = vld [vmem:[%s2940 + $0x140] sm:$0xff]
    %v2982 = vld [vmem:[%s2940 + $0x148] sm:$0xff]
    %v2983 = vld [vmem:[%s2940 + $0x150] sm:$0xff]
    %v2984 = vld [vmem:[%s2940 + $0x158] sm:$0xff]
    %v2985 = vld [vmem:[%s2940 + $0x160] sm:$0xff]
    %v2986 = vld [vmem:[%s2940 + $0x168] sm:$0xff]
    %v2987 = vld [vmem:[%s2940 + $0x170] sm:$0xff]
    %v2988 = vld [vmem:[%s2940 + $0x178] sm:$0xff]
    %v2989 = vld [vmem:[%s2940 + $0x180] sm:$0xff]
    %v2990 = vld [vmem:[%s2940 + $0x188] sm:$0xff]
    %v2991 = vld [vmem:[%s2940 + $0x190] sm:$0xff]
    %v2992 = vld [vmem:[%s2940 + $0x198] sm:$0xff]
    %v2993 = vld [vmem:[%s2940 + $0x1a0] sm:$0xff]
    %v2994 = vld [vmem:[%s2940 + $0x1a8] sm:$0xff]
    %v2995 = vld [vmem:[%s2940 + $0x1b0] sm:$0xff]
    %v2996 = vld [vmem:[%s2940 + $0x1b8] sm:$0xff]
    %v2997 = vld [vmem:[%s2940 + $0x1c0] sm:$0xff]
    %v2998 = vld [vmem:[%s2940 + $0x1c8] sm:$0xff]
    %v2999 = vld [vmem:[%s2940 + $0x1d0] sm:$0xff]
    %v3000 = vld [vmem:[%s2940 + $0x1d8] sm:$0xff]
    %v3001 = vld [vmem:[%s2940 + $0x1e0] sm:$0xff]
    %v3002 = vld [vmem:[%s2940 + $0x1e8] sm:$0xff]
    %v3003 = vld [vmem:[%s2940 + $0x1f0] sm:$0xff]
    %v3004 = vld [vmem:[%s2940 + $0x1f8] sm:$0xff]
    %3005 = vmatpush.msra.mxu0 %v3001
    %3006 = vmatpush.msra.mxu0 %v2997
    %3007 = vmatpush.msra.mxu0 %v2993
    %3008 = vmatpush.msra.mxu0 %v2989
    %3009 = vmatpush.msra.mxu0 %v2985
    %3010 = vmatpush.msra.mxu0 %v2981
    %3011 = vmatpush.msra.mxu0 %v2977
    %3012 = vmatpush.msra.mxu0 %v2973
    %3013 = vmatpush.msra.mxu0 %v2969
    %3014 = vmatpush.msra.mxu0 %v2965
    %3015 = vmatpush.msra.mxu0 %v2961
    %3016 = vmatpush.msra.mxu0 %v2957
    %3017 = vmatpush.msra.mxu0 %v2953
    %3018 = vmatpush.msra.mxu0 %v2949
    %3019 = vmatpush.msra.mxu0 %v2945
    %3020 = vmatpush.msra.mxu0 %v2941
    %3021 = vmatmul.f32.gmra.mxu0 0.0
    %v3022 = vpop.f32.mrf.mxu0
    %v3023 = vadd.f32 0.0, %v3022
    %3024 = vdwg.mxu0
    %3025 = vmatpush.msra.mxu0 %v3002
    %3026 = vmatpush.msra.mxu0 %v2998
    %3027 = vmatpush.msra.mxu0 %v2994
    %3028 = vmatpush.msra.mxu0 %v2990
    %3029 = vmatpush.msra.mxu0 %v2986
    %3030 = vmatpush.msra.mxu0 %v2982
    %3031 = vmatpush.msra.mxu0 %v2978
    %3032 = vmatpush.msra.mxu0 %v2974
    %3033 = vmatpush.msra.mxu0 %v2970
    %3034 = vmatpush.msra.mxu0 %v2966
    %3035 = vmatpush.msra.mxu0 %v2962
    %3036 = vmatpush.msra.mxu0 %v2958
    %3037 = vmatpush.msra.mxu0 %v2954
    %3038 = vmatpush.msra.mxu0 %v2950
    %3039 = vmatpush.msra.mxu0 %v2946
    %3040 = vmatpush.msra.mxu0 %v2942
    %3041 = vmatmul.f32.gmra.mxu0 0.0
    %v3042 = vpop.f32.mrf.mxu0
    %v3043 = vadd.f32 0.0, %v3042
    %3044 = vdwg.mxu0
    %3045 = vmatpush.msra.mxu0 %v3003
    %3046 = vmatpush.msra.mxu0 %v2999
    %3047 = vmatpush.msra.mxu0 %v2995
    %3048 = vmatpush.msra.mxu0 %v2991
    %3049 = vmatpush.msra.mxu0 %v2987
    %3050 = vmatpush.msra.mxu0 %v2983
    %3051 = vmatpush.msra.mxu0 %v2979
    %3052 = vmatpush.msra.mxu0 %v2975
    %3053 = vmatpush.msra.mxu0 %v2971
    %3054 = vmatpush.msra.mxu0 %v2967
    %3055 = vmatpush.msra.mxu0 %v2963
    %3056 = vmatpush.msra.mxu0 %v2959
    %3057 = vmatpush.msra.mxu0 %v2955
    %3058 = vmatpush.msra.mxu0 %v2951
    %3059 = vmatpush.msra.mxu0 %v2947
    %3060 = vmatpush.msra.mxu0 %v2943
    %3061 = vmatmul.f32.gmra.mxu0 0.0
    %v3062 = vpop.f32.mrf.mxu0
    %v3063 = vadd.f32 0.0, %v3062
    %3064 = vdwg.mxu0
    %3065 = vmatpush.msra.mxu0 %v3004
    %3066 = vmatpush.msra.mxu0 %v3000
    %3067 = vmatpush.msra.mxu0 %v2996
    %3068 = vmatpush.msra.mxu0 %v2992
    %3069 = vmatpush.msra.mxu0 %v2988
    %3070 = vmatpush.msra.mxu0 %v2984
    %3071 = vmatpush.msra.mxu0 %v2980
    %3072 = vmatpush.msra.mxu0 %v2976
    %3073 = vmatpush.msra.mxu0 %v2972
    %3074 = vmatpush.msra.mxu0 %v2968
    %3075 = vmatpush.msra.mxu0 %v2964
    %3076 = vmatpush.msra.mxu0 %v2960
    %3077 = vmatpush.msra.mxu0 %v2956
    %3078 = vmatpush.msra.mxu0 %v2952
    %3079 = vmatpush.msra.mxu0 %v2948
    %3080 = vmatpush.msra.mxu0 %v2944
    %3081 = vmatmul.f32.gmra.mxu0 0.0
    %v3082 = vpop.f32.mrf.mxu0
    %v3083 = vadd.f32 0.0, %v3082
    %3084 = vdwg.mxu0
    %v3085 = vadd.f32 %v2936, %v3023
    %v3086 = vadd.f32 %v2937, %v3043
    %v3087 = vadd.f32 %v2938, %v3063
    %v3088 = vadd.f32 %v2939, %v3083
    %v3089 = vxor.u32 %v3085, 2147483648
    %v3090 = vxor.u32 %v3086, 2147483648
    %v3091 = vxor.u32 %v3087, 2147483648
    %v3092 = vmul.f32 %v3089, 1.442695
    %v3093 = vpow.pop %v3092
    %v3094 = vmul.f32 %v3090, 1.442695
    %v3095 = vpow.pop %v3094
    %v3096 = vmul.f32 %v3091, 1.442695
    %v3097 = vpow.pop %v3096
    %v3098 = vadd.f32 %v3093, 1.0
    %v3099 = vadd.f32 %v3095, 1.0
    %v3100 = vadd.f32 %v3097, 1.0
    %v3101 = vrcp.pop %v3098
    %v3102 = vmul.f32 %v3098, %v3101
    %v3103 = vsub.f32 1.0, %v3102
    %v3104 = vmul.f32 %v3101, %v3103
    %v3105 = vadd.f32 %v3101, %v3104
    %vm3106 = vweird.f32 %v3098
    %vm3107 = vweird.f32 %v3101
    %vm3108 = vmor %vm3106, %vm3107
    %v3109 = vsel %vm3108, %v3101, %v3105
    %v3110 = vand.u32 2147483647, %v3098
    %vm3111 = vcmp.eq.f32.partialorder %v3110, 8.507059e+37
    %v3112 = vand.u32 %v3098, 2147483648
    %v3113 = vor.u32 1.1754944e-38, %v3112
    %v3114 = vsel %vm3111, %v3113, %v3109
    %v3115 = vmul.f32 1.0, %v3114
    %v3116 = vrcp.pop %v3099
    %v3117 = vmul.f32 %v3099, %v3116
    %v3118 = vsub.f32 1.0, %v3117
    %v3119 = vmul.f32 %v3116, %v3118
    %v3120 = vadd.f32 %v3116, %v3119
    %vm3121 = vweird.f32 %v3099
    %vm3122 = vweird.f32 %v3116
    %vm3123 = vmor %vm3121, %vm3122
    %v3124 = vsel %vm3123, %v3116, %v3120
    %v3125 = vand.u32 2147483647, %v3099
    %vm3126 = vcmp.eq.f32.partialorder %v3125, 8.507059e+37
    %v3127 = vand.u32 %v3099, 2147483648
    %v3128 = vor.u32 1.1754944e-38, %v3127
    %v3129 = vsel %vm3126, %v3128, %v3124
    %v3130 = vmul.f32 1.0, %v3129
    %v3131 = vrcp.pop %v3100
    %v3132 = vmul.f32 %v3100, %v3131
    %v3133 = vsub.f32 1.0, %v3132
    %v3134 = vmul.f32 %v3131, %v3133
    %v3135 = vadd.f32 %v3131, %v3134
    %vm3136 = vweird.f32 %v3100
    %vm3137 = vweird.f32 %v3131
    %vm3138 = vmor %vm3136, %vm3137
    %v3139 = vsel %vm3138, %v3131, %v3135
    %v3140 = vand.u32 2147483647, %v3100
    %vm3141 = vcmp.eq.f32.partialorder %v3140, 8.507059e+37
    %v3142 = vand.u32 %v3100, 2147483648
    %v3143 = vor.u32 1.1754944e-38, %v3142
    %v3144 = vsel %vm3141, %v3143, %v3139
    %v3145 = vmul.f32 1.0, %v3144
    %v3146 = vtanh.pop %v3088
    %v3147 = vmul.f32 %v3130, 0.0
    %v3148 = vmul.f32 %v3115, %v3146
    %v3149 = vadd.f32 %v3147, %v3148
    %v3150 = vtanh.pop %v3149
    %v3151 = vmul.f32 %v3145, %v3150
    %3152 = vst [vmem:[#allocation2] sm:$0xff] %v3151
    %3153 = vst [vmem:[#allocation3 + $0x38] sm:$0xff] %v3151
    %v3154 = vld [vmem:[#allocation4 + $0x20] sm:$0xff]
    %v3155 = vld [vmem:[#allocation4 + $0x28] sm:$0xff]
    %v3156 = vld [vmem:[#allocation4 + $0x30] sm:$0xff]
    %v3157 = vld [vmem:[#allocation4 + $0x38] sm:$0xff]
    %v3158 = vld [vmem:[%s2940] sm:$0xff]
    %v3159 = vld [vmem:[%s2940 + $0x8] sm:$0xff]
    %v3160 = vld [vmem:[%s2940 + $0x10] sm:$0xff]
    %v3161 = vld [vmem:[%s2940 + $0x18] sm:$0xff]
    %v3162 = vld [vmem:[%s2940 + $0x20] sm:$0xff]
    %v3163 = vld [vmem:[%s2940 + $0x28] sm:$0xff]
    %v3164 = vld [vmem:[%s2940 + $0x30] sm:$0xff]
    %v3165 = vld [vmem:[%s2940 + $0x38] sm:$0xff]
    %v3166 = vld [vmem:[%s2940 + $0x40] sm:$0xff]
    %v3167 = vld [vmem:[%s2940 + $0x48] sm:$0xff]
    %v3168 = vld [vmem:[%s2940 + $0x50] sm:$0xff]
    %v3169 = vld [vmem:[%s2940 + $0x58] sm:$0xff]
    %v3170 = vld [vmem:[%s2940 + $0x60] sm:$0xff]
    %v3171 = vld [vmem:[%s2940 + $0x68] sm:$0xff]
    %v3172 = vld [vmem:[%s2940 + $0x70] sm:$0xff]
    %v3173 = vld [vmem:[%s2940 + $0x78] sm:$0xff]
    %v3174 = vld [vmem:[%s2940 + $0x80] sm:$0xff]
    %v3175 = vld [vmem:[%s2940 + $0x88] sm:$0xff]
    %v3176 = vld [vmem:[%s2940 + $0x90] sm:$0xff]
    %v3177 = vld [vmem:[%s2940 + $0x98] sm:$0xff]
    %v3178 = vld [vmem:[%s2940 + $0xa0] sm:$0xff]
    %v3179 = vld [vmem:[%s2940 + $0xa8] sm:$0xff]
    %v3180 = vld [vmem:[%s2940 + $0xb0] sm:$0xff]
    %v3181 = vld [vmem:[%s2940 + $0xb8] sm:$0xff]
    %v3182 = vld [vmem:[%s2940 + $0xc0] sm:$0xff]
    %v3183 = vld [vmem:[%s2940 + $0xc8] sm:$0xff]
    %v3184 = vld [vmem:[%s2940 + $0xd0] sm:$0xff]
    %v3185 = vld [vmem:[%s2940 + $0xd8] sm:$0xff]
    %v3186 = vld [vmem:[%s2940 + $0xe0] sm:$0xff]
    %v3187 = vld [vmem:[%s2940 + $0xe8] sm:$0xff]
    %v3188 = vld [vmem:[%s2940 + $0xf0] sm:$0xff]
    %v3189 = vld [vmem:[%s2940 + $0xf8] sm:$0xff]
    %v3190 = vld [vmem:[%s2940 + $0x100] sm:$0xff]
    %v3191 = vld [vmem:[%s2940 + $0x108] sm:$0xff]
    %v3192 = vld [vmem:[%s2940 + $0x110] sm:$0xff]
    %v3193 = vld [vmem:[%s2940 + $0x118] sm:$0xff]
    %v3194 = vld [vmem:[%s2940 + $0x120] sm:$0xff]
    %v3195 = vld [vmem:[%s2940 + $0x128] sm:$0xff]
    %v3196 = vld [vmem:[%s2940 + $0x130] sm:$0xff]
    %v3197 = vld [vmem:[%s2940 + $0x138] sm:$0xff]
    %v3198 = vld [vmem:[%s2940 + $0x140] sm:$0xff]
    %v3199 = vld [vmem:[%s2940 + $0x148] sm:$0xff]
    %v3200 = vld [vmem:[%s2940 + $0x150] sm:$0xff]
    %v3201 = vld [vmem:[%s2940 + $0x158] sm:$0xff]
    %v3202 = vld [vmem:[%s2940 + $0x160] sm:$0xff]
    %v3203 = vld [vmem:[%s2940 + $0x168] sm:$0xff]
    %v3204 = vld [vmem:[%s2940 + $0x170] sm:$0xff]
    %v3205 = vld [vmem:[%s2940 + $0x178] sm:$0xff]
    %v3206 = vld [vmem:[%s2940 + $0x180] sm:$0xff]
    %v3207 = vld [vmem:[%s2940 + $0x188] sm:$0xff]
    %v3208 = vld [vmem:[%s2940 + $0x190] sm:$0xff]
    %v3209 = vld [vmem:[%s2940 + $0x198] sm:$0xff]
    %v3210 = vld [vmem:[%s2940 + $0x1a0] sm:$0xff]
    %v3211 = vld [vmem:[%s2940 + $0x1a8] sm:$0xff]
    %v3212 = vld [vmem:[%s2940 + $0x1b0] sm:$0xff]
    %v3213 = vld [vmem:[%s2940 + $0x1b8] sm:$0xff]
    %v3214 = vld [vmem:[%s2940 + $0x1c0] sm:$0xff]
    %v3215 = vld [vmem:[%s2940 + $0x1c8] sm:$0xff]
    %v3216 = vld [vmem:[%s2940 + $0x1d0] sm:$0xff]
    %v3217 = vld [vmem:[%s2940 + $0x1d8] sm:$0xff]
    %v3218 = vld [vmem:[%s2940 + $0x1e0] sm:$0xff]
    %v3219 = vld [vmem:[%s2940 + $0x1e8] sm:$0xff]
    %v3220 = vld [vmem:[%s2940 + $0x1f0] sm:$0xff]
    %v3221 = vld [vmem:[%s2940 + $0x1f8] sm:$0xff]
    %3222 = vmatpush.msra.mxu0 %v3218
    %3223 = vmatpush.msra.mxu0 %v3214
    %3224 = vmatpush.msra.mxu0 %v3210
    %3225 = vmatpush.msra.mxu0 %v3206
    %3226 = vmatpush.msra.mxu0 %v3202
    %3227 = vmatpush.msra.mxu0 %v3198
    %3228 = vmatpush.msra.mxu0 %v3194
    %3229 = vmatpush.msra.mxu0 %v3190
    %3230 = vmatpush.msra.mxu0 %v3186
    %3231 = vmatpush.msra.mxu0 %v3182
    %3232 = vmatpush.msra.mxu0 %v3178
    %3233 = vmatpush.msra.mxu0 %v3174
    %3234 = vmatpush.msra.mxu0 %v3170
    %3235 = vmatpush.msra.mxu0 %v3166
    %3236 = vmatpush.msra.mxu0 %v3162
    %3237 = vmatpush.msra.mxu0 %v3158
    %3238 = vmatmul.f32.gmra.mxu0 %v3151
    %v3239 = vpop.f32.mrf.mxu0
    %v3240 = vadd.f32 0.0, %v3239
    %3241 = vdwg.mxu0
    %3242 = vmatpush.msra.mxu0 %v3219
    %3243 = vmatpush.msra.mxu0 %v3215
    %3244 = vmatpush.msra.mxu0 %v3211
    %3245 = vmatpush.msra.mxu0 %v3207
    %3246 = vmatpush.msra.mxu0 %v3203
    %3247 = vmatpush.msra.mxu0 %v3199
    %3248 = vmatpush.msra.mxu0 %v3195
    %3249 = vmatpush.msra.mxu0 %v3191
    %3250 = vmatpush.msra.mxu0 %v3187
    %3251 = vmatpush.msra.mxu0 %v3183
    %3252 = vmatpush.msra.mxu0 %v3179
    %3253 = vmatpush.msra.mxu0 %v3175
    %3254 = vmatpush.msra.mxu0 %v3171
    %3255 = vmatpush.msra.mxu0 %v3167
    %3256 = vmatpush.msra.mxu0 %v3163
    %3257 = vmatpush.msra.mxu0 %v3159
    %3258 = vmatmul.f32.gmra.mxu0 %v3151
    %v3259 = vpop.f32.mrf.mxu0
    %v3260 = vadd.f32 0.0, %v3259
    %3261 = vdwg.mxu0
    %3262 = vmatpush.msra.mxu0 %v3220
    %3263 = vmatpush.msra.mxu0 %v3216
    %3264 = vmatpush.msra.mxu0 %v3212
    %3265 = vmatpush.msra.mxu0 %v3208
    %3266 = vmatpush.msra.mxu0 %v3204
    %3267 = vmatpush.msra.mxu0 %v3200
    %3268 = vmatpush.msra.mxu0 %v3196
    %3269 = vmatpush.msra.mxu0 %v3192
    %3270 = vmatpush.msra.mxu0 %v3188
    %3271 = vmatpush.msra.mxu0 %v3184
    %3272 = vmatpush.msra.mxu0 %v3180
    %3273 = vmatpush.msra.mxu0 %v3176
    %3274 = vmatpush.msra.mxu0 %v3172
    %3275 = vmatpush.msra.mxu0 %v3168
    %3276 = vmatpush.msra.mxu0 %v3164
    %3277 = vmatpush.msra.mxu0 %v3160
    %3278 = vmatmul.f32.gmra.mxu0 %v3151
    %v3279 = vpop.f32.mrf.mxu0
    %v3280 = vadd.f32 0.0, %v3279
    %3281 = vdwg.mxu0
    %3282 = vmatpush.msra.mxu0 %v3221
    %3283 = vmatpush.msra.mxu0 %v3217
    %3284 = vmatpush.msra.mxu0 %v3213
    %3285 = vmatpush.msra.mxu0 %v3209
    %3286 = vmatpush.msra.mxu0 %v3205
    %3287 = vmatpush.msra.mxu0 %v3201
    %3288 = vmatpush.msra.mxu0 %v3197
    %3289 = vmatpush.msra.mxu0 %v3193
    %3290 = vmatpush.msra.mxu0 %v3189
    %3291 = vmatpush.msra.mxu0 %v3185
    %3292 = vmatpush.msra.mxu0 %v3181
    %3293 = vmatpush.msra.mxu0 %v3177
    %3294 = vmatpush.msra.mxu0 %v3173
    %3295 = vmatpush.msra.mxu0 %v3169
    %3296 = vmatpush.msra.mxu0 %v3165
    %3297 = vmatpush.msra.mxu0 %v3161
    %3298 = vmatmul.f32.gmra.mxu0 %v3151
    %v3299 = vpop.f32.mrf.mxu0
    %v3300 = vadd.f32 0.0, %v3299
    %3301 = vdwg.mxu0
    %v3302 = vadd.f32 %v3154, %v3240
    %v3303 = vadd.f32 %v3155, %v3260
    %v3304 = vadd.f32 %v3156, %v3280
    %v3305 = vadd.f32 %v3157, %v3300
    %v3306 = vxor.u32 %v3302, 2147483648
    %v3307 = vxor.u32 %v3303, 2147483648
    %v3308 = vxor.u32 %v3304, 2147483648
    %v3309 = vmul.f32 %v3306, 1.442695
    %v3310 = vpow.pop %v3309
    %v3311 = vmul.f32 %v3307, 1.442695
    %v3312 = vpow.pop %v3311
    %v3313 = vmul.f32 %v3308, 1.442695
    %v3314 = vpow.pop %v3313
    %v3315 = vadd.f32 %v3310, 1.0
    %v3316 = vadd.f32 %v3312, 1.0
    %v3317 = vadd.f32 %v3314, 1.0
    %v3318 = vrcp.pop %v3315
    %v3319 = vmul.f32 %v3315, %v3318
    %v3320 = vsub.f32 1.0, %v3319
    %v3321 = vmul.f32 %v3318, %v3320
    %v3322 = vadd.f32 %v3318, %v3321
    %vm3323 = vweird.f32 %v3315
    %vm3324 = vweird.f32 %v3318
    %vm3325 = vmor %vm3323, %vm3324
    %v3326 = vsel %vm3325, %v3318, %v3322
    %v3327 = vand.u32 2147483647, %v3315
    %vm3328 = vcmp.eq.f32.partialorder %v3327, 8.507059e+37
    %v3329 = vand.u32 %v3315, 2147483648
    %v3330 = vor.u32 1.1754944e-38, %v3329
    %v3331 = vsel %vm3328, %v3330, %v3326
    %v3332 = vmul.f32 1.0, %v3331
    %v3333 = vrcp.pop %v3316
    %v3334 = vmul.f32 %v3316, %v3333
    %v3335 = vsub.f32 1.0, %v3334
    %v3336 = vmul.f32 %v3333, %v3335
    %v3337 = vadd.f32 %v3333, %v3336
    %vm3338 = vweird.f32 %v3316
    %vm3339 = vweird.f32 %v3333
    %vm3340 = vmor %vm3338, %vm3339
    %v3341 = vsel %vm3340, %v3333, %v3337
    %v3342 = vand.u32 2147483647, %v3316
    %vm3343 = vcmp.eq.f32.partialorder %v3342, 8.507059e+37
    %v3344 = vand.u32 %v3316, 2147483648
    %v3345 = vor.u32 1.1754944e-38, %v3344
    %v3346 = vsel %vm3343, %v3345, %v3341
    %v3347 = vmul.f32 1.0, %v3346
    %v3348 = vrcp.pop %v3317
    %v3349 = vmul.f32 %v3317, %v3348
    %v3350 = vsub.f32 1.0, %v3349
    %v3351 = vmul.f32 %v3348, %v3350
    %v3352 = vadd.f32 %v3348, %v3351
    %vm3353 = vweird.f32 %v3317
    %vm3354 = vweird.f32 %v3348
    %vm3355 = vmor %vm3353, %vm3354
    %v3356 = vsel %vm3355, %v3348, %v3352
    %v3357 = vand.u32 2147483647, %v3317
    %vm3358 = vcmp.eq.f32.partialorder %v3357, 8.507059e+37
    %v3359 = vand.u32 %v3317, 2147483648
    %v3360 = vor.u32 1.1754944e-38, %v3359
    %v3361 = vsel %vm3358, %v3360, %v3356
    %v3362 = vmul.f32 1.0, %v3361
    %v3363 = vtanh.pop %v3305
    %v3364 = vmul.f32 %v3347, %v3149
    %v3365 = vmul.f32 %v3332, %v3363
    %v3366 = vadd.f32 %v3364, %v3365
    %v3367 = vtanh.pop %v3366
    %v3368 = vmul.f32 %v3362, %v3367
    %3369 = vst [vmem:[#allocation2 + $0x8] sm:$0xff] %v3368
    %3370 = vst [vmem:[#allocation3 + $0x30] sm:$0xff] %v3368
    %v3371 = vld [vmem:[#allocation4 + $0x40] sm:$0xff]
    %v3372 = vld [vmem:[#allocation4 + $0x48] sm:$0xff]
    %v3373 = vld [vmem:[#allocation4 + $0x50] sm:$0xff]
    %v3374 = vld [vmem:[#allocation4 + $0x58] sm:$0xff]
    %v3375 = vld [vmem:[%s2940] sm:$0xff]
    %v3376 = vld [vmem:[%s2940 + $0x8] sm:$0xff]
    %v3377 = vld [vmem:[%s2940 + $0x10] sm:$0xff]
    %v3378 = vld [vmem:[%s2940 + $0x18] sm:$0xff]
    %v3379 = vld [vmem:[%s2940 + $0x20] sm:$0xff]
    %v3380 = vld [vmem:[%s2940 + $0x28] sm:$0xff]
    %v3381 = vld [vmem:[%s2940 + $0x30] sm:$0xff]
    %v3382 = vld [vmem:[%s2940 + $0x38] sm:$0xff]
    %v3383 = vld [vmem:[%s2940 + $0x40] sm:$0xff]
    %v3384 = vld [vmem:[%s2940 + $0x48] sm:$0xff]
    %v3385 = vld [vmem:[%s2940 + $0x50] sm:$0xff]
    %v3386 = vld [vmem:[%s2940 + $0x58] sm:$0xff]
    %v3387 = vld [vmem:[%s2940 + $0x60] sm:$0xff]
    %v3388 = vld [vmem:[%s2940 + $0x68] sm:$0xff]
    %v3389 = vld [vmem:[%s2940 + $0x70] sm:$0xff]
    %v3390 = vld [vmem:[%s2940 + $0x78] sm:$0xff]
    %v3391 = vld [vmem:[%s2940 + $0x80] sm:$0xff]
    %v3392 = vld [vmem:[%s2940 + $0x88] sm:$0xff]
    %v3393 = vld [vmem:[%s2940 + $0x90] sm:$0xff]
    %v3394 = vld [vmem:[%s2940 + $0x98] sm:$0xff]
    %v3395 = vld [vmem:[%s2940 + $0xa0] sm:$0xff]
    %v3396 = vld [vmem:[%s2940 + $0xa8] sm:$0xff]
    %v3397 = vld [vmem:[%s2940 + $0xb0] sm:$0xff]
    %v3398 = vld [vmem:[%s2940 + $0xb8] sm:$0xff]
    %v3399 = vld [vmem:[%s2940 + $0xc0] sm:$0xff]
    %v3400 = vld [vmem:[%s2940 + $0xc8] sm:$0xff]
    %v3401 = vld [vmem:[%s2940 + $0xd0] sm:$0xff]
    %v3402 = vld [vmem:[%s2940 + $0xd8] sm:$0xff]
    %v3403 = vld [vmem:[%s2940 + $0xe0] sm:$0xff]
    %v3404 = vld [vmem:[%s2940 + $0xe8] sm:$0xff]
    %v3405 = vld [vmem:[%s2940 + $0xf0] sm:$0xff]
    %v3406 = vld [vmem:[%s2940 + $0xf8] sm:$0xff]
    %v3407 = vld [vmem:[%s2940 + $0x100] sm:$0xff]
    %v3408 = vld [vmem:[%s2940 + $0x108] sm:$0xff]
    %v3409 = vld [vmem:[%s2940 + $0x110] sm:$0xff]
    %v3410 = vld [vmem:[%s2940 + $0x118] sm:$0xff]
    %v3411 = vld [vmem:[%s2940 + $0x120] sm:$0xff]
    %v3412 = vld [vmem:[%s2940 + $0x128] sm:$0xff]
    %v3413 = vld [vmem:[%s2940 + $0x130] sm:$0xff]
    %v3414 = vld [vmem:[%s2940 + $0x138] sm:$0xff]
    %v3415 = vld [vmem:[%s2940 + $0x140] sm:$0xff]
    %v3416 = vld [vmem:[%s2940 + $0x148] sm:$0xff]
    %v3417 = vld [vmem:[%s2940 + $0x150] sm:$0xff]
    %v3418 = vld [vmem:[%s2940 + $0x158] sm:$0xff]
    %v3419 = vld [vmem:[%s2940 + $0x160] sm:$0xff]
    %v3420 = vld [vmem:[%s2940 + $0x168] sm:$0xff]
    %v3421 = vld [vmem:[%s2940 + $0x170] sm:$0xff]
    %v3422 = vld [vmem:[%s2940 + $0x178] sm:$0xff]
    %v3423 = vld [vmem:[%s2940 + $0x180] sm:$0xff]
    %v3424 = vld [vmem:[%s2940 + $0x188] sm:$0xff]
    %v3425 = vld [vmem:[%s2940 + $0x190] sm:$0xff]
    %v3426 = vld [vmem:[%s2940 + $0x198] sm:$0xff]
    %v3427 = vld [vmem:[%s2940 + $0x1a0] sm:$0xff]
    %v3428 = vld [vmem:[%s2940 + $0x1a8] sm:$0xff]
    %v3429 = vld [vmem:[%s2940 + $0x1b0] sm:$0xff]
    %v3430 = vld [vmem:[%s2940 + $0x1b8] sm:$0xff]
    %v3431 = vld [vmem:[%s2940 + $0x1c0] sm:$0xff]
    %v3432 = vld [vmem:[%s2940 + $0x1c8] sm:$0xff]
    %v3433 = vld [vmem:[%s2940 + $0x1d0] sm:$0xff]
    %v3434 = vld [vmem:[%s2940 + $0x1d8] sm:$0xff]
    %v3435 = vld [vmem:[%s2940 + $0x1e0] sm:$0xff]
    %v3436 = vld [vmem:[%s2940 + $0x1e8] sm:$0xff]
    %v3437 = vld [vmem:[%s2940 + $0x1f0] sm:$0xff]
    %v3438 = vld [vmem:[%s2940 + $0x1f8] sm:$0xff]
    %3439 = vmatpush.msra.mxu0 %v3435
    %3440 = vmatpush.msra.mxu0 %v3431
    %3441 = vmatpush.msra.mxu0 %v3427
    %3442 = vmatpush.msra.mxu0 %v3423
    %3443 = vmatpush.msra.mxu0 %v3419
    %3444 = vmatpush.msra.mxu0 %v3415
    %3445 = vmatpush.msra.mxu0 %v3411
    %3446 = vmatpush.msra.mxu0 %v3407
    %3447 = vmatpush.msra.mxu0 %v3403
    %3448 = vmatpush.msra.mxu0 %v3399
    %3449 = vmatpush.msra.mxu0 %v3395
    %3450 = vmatpush.msra.mxu0 %v3391
    %3451 = vmatpush.msra.mxu0 %v3387
    %3452 = vmatpush.msra.mxu0 %v3383
    %3453 = vmatpush.msra.mxu0 %v3379
    %3454 = vmatpush.msra.mxu0 %v3375
    %3455 = vmatmul.f32.gmra.mxu0 %v3368
    %v3456 = vpop.f32.mrf.mxu0
    %v3457 = vadd.f32 0.0, %v3456
    %3458 = vdwg.mxu0
    %3459 = vmatpush.msra.mxu0 %v3436
    %3460 = vmatpush.msra.mxu0 %v3432
    %3461 = vmatpush.msra.mxu0 %v3428
    %3462 = vmatpush.msra.mxu0 %v3424
    %3463 = vmatpush.msra.mxu0 %v3420
    %3464 = vmatpush.msra.mxu0 %v3416
    %3465 = vmatpush.msra.mxu0 %v3412
    %3466 = vmatpush.msra.mxu0 %v3408
    %3467 = vmatpush.msra.mxu0 %v3404
    %3468 = vmatpush.msra.mxu0 %v3400
    %3469 = vmatpush.msra.mxu0 %v3396
    %3470 = vmatpush.msra.mxu0 %v3392
    %3471 = vmatpush.msra.mxu0 %v3388
    %3472 = vmatpush.msra.mxu0 %v3384
    %3473 = vmatpush.msra.mxu0 %v3380
    %3474 = vmatpush.msra.mxu0 %v3376
    %3475 = vmatmul.f32.gmra.mxu0 %v3368
    %v3476 = vpop.f32.mrf.mxu0
    %v3477 = vadd.f32 0.0, %v3476
    %3478 = vdwg.mxu0
    %3479 = vmatpush.msra.mxu0 %v3437
    %3480 = vmatpush.msra.mxu0 %v3433
    %3481 = vmatpush.msra.mxu0 %v3429
    %3482 = vmatpush.msra.mxu0 %v3425
    %3483 = vmatpush.msra.mxu0 %v3421
    %3484 = vmatpush.msra.mxu0 %v3417
    %3485 = vmatpush.msra.mxu0 %v3413
    %3486 = vmatpush.msra.mxu0 %v3409
    %3487 = vmatpush.msra.mxu0 %v3405
    %3488 = vmatpush.msra.mxu0 %v3401
    %3489 = vmatpush.msra.mxu0 %v3397
    %3490 = vmatpush.msra.mxu0 %v3393
    %3491 = vmatpush.msra.mxu0 %v3389
    %3492 = vmatpush.msra.mxu0 %v3385
    %3493 = vmatpush.msra.mxu0 %v3381
    %3494 = vmatpush.msra.mxu0 %v3377
    %3495 = vmatmul.f32.gmra.mxu0 %v3368
    %v3496 = vpop.f32.mrf.mxu0
    %v3497 = vadd.f32 0.0, %v3496
    %3498 = vdwg.mxu0
    %3499 = vmatpush.msra.mxu0 %v3438
    %3500 = vmatpush.msra.mxu0 %v3434
    %3501 = vmatpush.msra.mxu0 %v3430
    %3502 = vmatpush.msra.mxu0 %v3426
    %3503 = vmatpush.msra.mxu0 %v3422
    %3504 = vmatpush.msra.mxu0 %v3418
    %3505 = vmatpush.msra.mxu0 %v3414
    %3506 = vmatpush.msra.mxu0 %v3410
    %3507 = vmatpush.msra.mxu0 %v3406
    %3508 = vmatpush.msra.mxu0 %v3402
    %3509 = vmatpush.msra.mxu0 %v3398
    %3510 = vmatpush.msra.mxu0 %v3394
    %3511 = vmatpush.msra.mxu0 %v3390
    %3512 = vmatpush.msra.mxu0 %v3386
    %3513 = vmatpush.msra.mxu0 %v3382
    %3514 = vmatpush.msra.mxu0 %v3378
    %3515 = vmatmul.f32.gmra.mxu0 %v3368
    %v3516 = vpop.f32.mrf.mxu0
    %v3517 = vadd.f32 0.0, %v3516
    %3518 = vdwg.mxu0
    %v3519 = vadd.f32 %v3371, %v3457
    %v3520 = vadd.f32 %v3372, %v3477
    %v3521 = vadd.f32 %v3373, %v3497
    %v3522 = vadd.f32 %v3374, %v3517
    %v3523 = vxor.u32 %v3519, 2147483648
    %v3524 = vxor.u32 %v3520, 2147483648
    %v3525 = vxor.u32 %v3521, 2147483648
    %v3526 = vmul.f32 %v3523, 1.442695
    %v3527 = vpow.pop %v3526
    %v3528 = vmul.f32 %v3524, 1.442695
    %v3529 = vpow.pop %v3528
    %v3530 = vmul.f32 %v3525, 1.442695
    %v3531 = vpow.pop %v3530
    %v3532 = vadd.f32 %v3527, 1.0
    %v3533 = vadd.f32 %v3529, 1.0
    %v3534 = vadd.f32 %v3531, 1.0
    %v3535 = vrcp.pop %v3532
    %v3536 = vmul.f32 %v3532, %v3535
    %v3537 = vsub.f32 1.0, %v3536
    %v3538 = vmul.f32 %v3535, %v3537
    %v3539 = vadd.f32 %v3535, %v3538
    %vm3540 = vweird.f32 %v3532
    %vm3541 = vweird.f32 %v3535
    %vm3542 = vmor %vm3540, %vm3541
    %v3543 = vsel %vm3542, %v3535, %v3539
    %v3544 = vand.u32 2147483647, %v3532
    %vm3545 = vcmp.eq.f32.partialorder %v3544, 8.507059e+37
    %v3546 = vand.u32 %v3532, 2147483648
    %v3547 = vor.u32 1.1754944e-38, %v3546
    %v3548 = vsel %vm3545, %v3547, %v3543
    %v3549 = vmul.f32 1.0, %v3548
    %v3550 = vrcp.pop %v3533
    %v3551 = vmul.f32 %v3533, %v3550
    %v3552 = vsub.f32 1.0, %v3551
    %v3553 = vmul.f32 %v3550, %v3552
    %v3554 = vadd.f32 %v3550, %v3553
    %vm3555 = vweird.f32 %v3533
    %vm3556 = vweird.f32 %v3550
    %vm3557 = vmor %vm3555, %vm3556
    %v3558 = vsel %vm3557, %v3550, %v3554
    %v3559 = vand.u32 2147483647, %v3533
    %vm3560 = vcmp.eq.f32.partialorder %v3559, 8.507059e+37
    %v3561 = vand.u32 %v3533, 2147483648
    %v3562 = vor.u32 1.1754944e-38, %v3561
    %v3563 = vsel %vm3560, %v3562, %v3558
    %v3564 = vmul.f32 1.0, %v3563
    %v3565 = vrcp.pop %v3534
    %v3566 = vmul.f32 %v3534, %v3565
    %v3567 = vsub.f32 1.0, %v3566
    %v3568 = vmul.f32 %v3565, %v3567
    %v3569 = vadd.f32 %v3565, %v3568
    %vm3570 = vweird.f32 %v3534
    %vm3571 = vweird.f32 %v3565
    %vm3572 = vmor %vm3570, %vm3571
    %v3573 = vsel %vm3572, %v3565, %v3569
    %v3574 = vand.u32 2147483647, %v3534
    %vm3575 = vcmp.eq.f32.partialorder %v3574, 8.507059e+37
    %v3576 = vand.u32 %v3534, 2147483648
    %v3577 = vor.u32 1.1754944e-38, %v3576
    %v3578 = vsel %vm3575, %v3577, %v3573
    %v3579 = vmul.f32 1.0, %v3578
    %v3580 = vtanh.pop %v3522
    %v3581 = vmul.f32 %v3564, %v3366
    %v3582 = vmul.f32 %v3549, %v3580
    %v3583 = vadd.f32 %v3581, %v3582
    %v3584 = vtanh.pop %v3583
    %v3585 = vmul.f32 %v3579, %v3584
    %3586 = vst [vmem:[#allocation2 + $0x10] sm:$0xff] %v3585
    %3587 = vst [vmem:[#allocation3 + $0x28] sm:$0xff] %v3585
    %v3588 = vld [vmem:[#allocation4 + $0x60] sm:$0xff]
    %v3589 = vld [vmem:[#allocation4 + $0x68] sm:$0xff]
    %v3590 = vld [vmem:[#allocation4 + $0x70] sm:$0xff]
    %v3591 = vld [vmem:[#allocation4 + $0x78] sm:$0xff]
    %v3592 = vld [vmem:[%s2940] sm:$0xff]
    %v3593 = vld [vmem:[%s2940 + $0x8] sm:$0xff]
    %v3594 = vld [vmem:[%s2940 + $0x10] sm:$0xff]
    %v3595 = vld [vmem:[%s2940 + $0x18] sm:$0xff]
    %v3596 = vld [vmem:[%s2940 + $0x20] sm:$0xff]
    %v3597 = vld [vmem:[%s2940 + $0x28] sm:$0xff]
    %v3598 = vld [vmem:[%s2940 + $0x30] sm:$0xff]
    %v3599 = vld [vmem:[%s2940 + $0x38] sm:$0xff]
    %v3600 = vld [vmem:[%s2940 + $0x40] sm:$0xff]
    %v3601 = vld [vmem:[%s2940 + $0x48] sm:$0xff]
    %v3602 = vld [vmem:[%s2940 + $0x50] sm:$0xff]
    %v3603 = vld [vmem:[%s2940 + $0x58] sm:$0xff]
    %v3604 = vld [vmem:[%s2940 + $0x60] sm:$0xff]
    %v3605 = vld [vmem:[%s2940 + $0x68] sm:$0xff]
    %v3606 = vld [vmem:[%s2940 + $0x70] sm:$0xff]
    %v3607 = vld [vmem:[%s2940 + $0x78] sm:$0xff]
    %v3608 = vld [vmem:[%s2940 + $0x80] sm:$0xff]
    %v3609 = vld [vmem:[%s2940 + $0x88] sm:$0xff]
    %v3610 = vld [vmem:[%s2940 + $0x90] sm:$0xff]
    %v3611 = vld [vmem:[%s2940 + $0x98] sm:$0xff]
    %v3612 = vld [vmem:[%s2940 + $0xa0] sm:$0xff]
    %v3613 = vld [vmem:[%s2940 + $0xa8] sm:$0xff]
    %v3614 = vld [vmem:[%s2940 + $0xb0] sm:$0xff]
    %v3615 = vld [vmem:[%s2940 + $0xb8] sm:$0xff]
    %v3616 = vld [vmem:[%s2940 + $0xc0] sm:$0xff]
    %v3617 = vld [vmem:[%s2940 + $0xc8] sm:$0xff]
    %v3618 = vld [vmem:[%s2940 + $0xd0] sm:$0xff]
    %v3619 = vld [vmem:[%s2940 + $0xd8] sm:$0xff]
    %v3620 = vld [vmem:[%s2940 + $0xe0] sm:$0xff]
    %v3621 = vld [vmem:[%s2940 + $0xe8] sm:$0xff]
    %v3622 = vld [vmem:[%s2940 + $0xf0] sm:$0xff]
    %v3623 = vld [vmem:[%s2940 + $0xf8] sm:$0xff]
    %v3624 = vld [vmem:[%s2940 + $0x100] sm:$0xff]
    %v3625 = vld [vmem:[%s2940 + $0x108] sm:$0xff]
    %v3626 = vld [vmem:[%s2940 + $0x110] sm:$0xff]
    %v3627 = vld [vmem:[%s2940 + $0x118] sm:$0xff]
    %v3628 = vld [vmem:[%s2940 + $0x120] sm:$0xff]
    %v3629 = vld [vmem:[%s2940 + $0x128] sm:$0xff]
    %v3630 = vld [vmem:[%s2940 + $0x130] sm:$0xff]
    %v3631 = vld [vmem:[%s2940 + $0x138] sm:$0xff]
    %v3632 = vld [vmem:[%s2940 + $0x140] sm:$0xff]
    %v3633 = vld [vmem:[%s2940 + $0x148] sm:$0xff]
    %v3634 = vld [vmem:[%s2940 + $0x150] sm:$0xff]
    %v3635 = vld [vmem:[%s2940 + $0x158] sm:$0xff]
    %v3636 = vld [vmem:[%s2940 + $0x160] sm:$0xff]
    %v3637 = vld [vmem:[%s2940 + $0x168] sm:$0xff]
    %v3638 = vld [vmem:[%s2940 + $0x170] sm:$0xff]
    %v3639 = vld [vmem:[%s2940 + $0x178] sm:$0xff]
    %v3640 = vld [vmem:[%s2940 + $0x180] sm:$0xff]
    %v3641 = vld [vmem:[%s2940 + $0x188] sm:$0xff]
    %v3642 = vld [vmem:[%s2940 + $0x190] sm:$0xff]
    %v3643 = vld [vmem:[%s2940 + $0x198] sm:$0xff]
    %v3644 = vld [vmem:[%s2940 + $0x1a0] sm:$0xff]
    %v3645 = vld [vmem:[%s2940 + $0x1a8] sm:$0xff]
    %v3646 = vld [vmem:[%s2940 + $0x1b0] sm:$0xff]
    %v3647 = vld [vmem:[%s2940 + $0x1b8] sm:$0xff]
    %v3648 = vld [vmem:[%s2940 + $0x1c0] sm:$0xff]
    %v3649 = vld [vmem:[%s2940 + $0x1c8] sm:$0xff]
    %v3650 = vld [vmem:[%s2940 + $0x1d0] sm:$0xff]
    %v3651 = vld [vmem:[%s2940 + $0x1d8] sm:$0xff]
    %v3652 = vld [vmem:[%s2940 + $0x1e0] sm:$0xff]
    %v3653 = vld [vmem:[%s2940 + $0x1e8] sm:$0xff]
    %v3654 = vld [vmem:[%s2940 + $0x1f0] sm:$0xff]
    %v3655 = vld [vmem:[%s2940 + $0x1f8] sm:$0xff]
    %3656 = vmatpush.msra.mxu0 %v3652
    %3657 = vmatpush.msra.mxu0 %v3648
    %3658 = vmatpush.msra.mxu0 %v3644
    %3659 = vmatpush.msra.mxu0 %v3640
    %3660 = vmatpush.msra.mxu0 %v3636
    %3661 = vmatpush.msra.mxu0 %v3632
    %3662 = vmatpush.msra.mxu0 %v3628
    %3663 = vmatpush.msra.mxu0 %v3624
    %3664 = vmatpush.msra.mxu0 %v3620
    %3665 = vmatpush.msra.mxu0 %v3616
    %3666 = vmatpush.msra.mxu0 %v3612
    %3667 = vmatpush.msra.mxu0 %v3608
    %3668 = vmatpush.msra.mxu0 %v3604
    %3669 = vmatpush.msra.mxu0 %v3600
    %3670 = vmatpush.msra.mxu0 %v3596
    %3671 = vmatpush.msra.mxu0 %v3592
    %3672 = vmatmul.f32.gmra.mxu0 %v3585
    %v3673 = vpop.f32.mrf.mxu0
    %v3674 = vadd.f32 0.0, %v3673
    %3675 = vdwg.mxu0
    %3676 = vmatpush.msra.mxu0 %v3653
    %3677 = vmatpush.msra.mxu0 %v3649
    %3678 = vmatpush.msra.mxu0 %v3645
    %3679 = vmatpush.msra.mxu0 %v3641
    %3680 = vmatpush.msra.mxu0 %v3637
    %3681 = vmatpush.msra.mxu0 %v3633
    %3682 = vmatpush.msra.mxu0 %v3629
    %3683 = vmatpush.msra.mxu0 %v3625
    %3684 = vmatpush.msra.mxu0 %v3621
    %3685 = vmatpush.msra.mxu0 %v3617
    %3686 = vmatpush.msra.mxu0 %v3613
    %3687 = vmatpush.msra.mxu0 %v3609
    %3688 = vmatpush.msra.mxu0 %v3605
    %3689 = vmatpush.msra.mxu0 %v3601
    %3690 = vmatpush.msra.mxu0 %v3597
    %3691 = vmatpush.msra.mxu0 %v3593
    %3692 = vmatmul.f32.gmra.mxu0 %v3585
    %v3693 = vpop.f32.mrf.mxu0
    %v3694 = vadd.f32 0.0, %v3693
    %3695 = vdwg.mxu0
    %3696 = vmatpush.msra.mxu0 %v3654
    %3697 = vmatpush.msra.mxu0 %v3650
    %3698 = vmatpush.msra.mxu0 %v3646
    %3699 = vmatpush.msra.mxu0 %v3642
    %3700 = vmatpush.msra.mxu0 %v3638
    %3701 = vmatpush.msra.mxu0 %v3634
    %3702 = vmatpush.msra.mxu0 %v3630
    %3703 = vmatpush.msra.mxu0 %v3626
    %3704 = vmatpush.msra.mxu0 %v3622
    %3705 = vmatpush.msra.mxu0 %v3618
    %3706 = vmatpush.msra.mxu0 %v3614
    %3707 = vmatpush.msra.mxu0 %v3610
    %3708 = vmatpush.msra.mxu0 %v3606
    %3709 = vmatpush.msra.mxu0 %v3602
    %3710 = vmatpush.msra.mxu0 %v3598
    %3711 = vmatpush.msra.mxu0 %v3594
    %3712 = vmatmul.f32.gmra.mxu0 %v3585
    %v3713 = vpop.f32.mrf.mxu0
    %v3714 = vadd.f32 0.0, %v3713
    %3715 = vdwg.mxu0
    %3716 = vmatpush.msra.mxu0 %v3655
    %3717 = vmatpush.msra.mxu0 %v3651
    %3718 = vmatpush.msra.mxu0 %v3647
    %3719 = vmatpush.msra.mxu0 %v3643
    %3720 = vmatpush.msra.mxu0 %v3639
    %3721 = vmatpush.msra.mxu0 %v3635
    %3722 = vmatpush.msra.mxu0 %v3631
    %3723 = vmatpush.msra.mxu0 %v3627
    %3724 = vmatpush.msra.mxu0 %v3623
    %3725 = vmatpush.msra.mxu0 %v3619
    %3726 = vmatpush.msra.mxu0 %v3615
    %3727 = vmatpush.msra.mxu0 %v3611
    %3728 = vmatpush.msra.mxu0 %v3607
    %3729 = vmatpush.msra.mxu0 %v3603
    %3730 = vmatpush.msra.mxu0 %v3599
    %3731 = vmatpush.msra.mxu0 %v3595
    %3732 = vmatmul.f32.gmra.mxu0 %v3585
    %v3733 = vpop.f32.mrf.mxu0
    %v3734 = vadd.f32 0.0, %v3733
    %3735 = vdwg.mxu0
    %v3736 = vadd.f32 %v3588, %v3674
    %v3737 = vadd.f32 %v3589, %v3694
    %v3738 = vadd.f32 %v3590, %v3714
    %v3739 = vadd.f32 %v3591, %v3734
    %v3740 = vxor.u32 %v3736, 2147483648
    %v3741 = vxor.u32 %v3737, 2147483648
    %v3742 = vxor.u32 %v3738, 2147483648
    %v3743 = vmul.f32 %v3740, 1.442695
    %v3744 = vpow.pop %v3743
    %v3745 = vmul.f32 %v3741, 1.442695
    %v3746 = vpow.pop %v3745
    %v3747 = vmul.f32 %v3742, 1.442695
    %v3748 = vpow.pop %v3747
    %v3749 = vadd.f32 %v3744, 1.0
    %v3750 = vadd.f32 %v3746, 1.0
    %v3751 = vadd.f32 %v3748, 1.0
    %v3752 = vrcp.pop %v3749
    %v3753 = vmul.f32 %v3749, %v3752
    %v3754 = vsub.f32 1.0, %v3753
    %v3755 = vmul.f32 %v3752, %v3754
    %v3756 = vadd.f32 %v3752, %v3755
    %vm3757 = vweird.f32 %v3749
    %vm3758 = vweird.f32 %v3752
    %vm3759 = vmor %vm3757, %vm3758
    %v3760 = vsel %vm3759, %v3752, %v3756
    %v3761 = vand.u32 2147483647, %v3749
    %vm3762 = vcmp.eq.f32.partialorder %v3761, 8.507059e+37
    %v3763 = vand.u32 %v3749, 2147483648
    %v3764 = vor.u32 1.1754944e-38, %v3763
    %v3765 = vsel %vm3762, %v3764, %v3760
    %v3766 = vmul.f32 1.0, %v3765
    %v3767 = vrcp.pop %v3750
    %v3768 = vmul.f32 %v3750, %v3767
    %v3769 = vsub.f32 1.0, %v3768
    %v3770 = vmul.f32 %v3767, %v3769
    %v3771 = vadd.f32 %v3767, %v3770
    %vm3772 = vweird.f32 %v3750
    %vm3773 = vweird.f32 %v3767
    %vm3774 = vmor %vm3772, %vm3773
    %v3775 = vsel %vm3774, %v3767, %v3771
    %v3776 = vand.u32 2147483647, %v3750
    %vm3777 = vcmp.eq.f32.partialorder %v3776, 8.507059e+37
    %v3778 = vand.u32 %v3750, 2147483648
    %v3779 = vor.u32 1.1754944e-38, %v3778
    %v3780 = vsel %vm3777, %v3779, %v3775
    %v3781 = vmul.f32 1.0, %v3780
    %v3782 = vrcp.pop %v3751
    %v3783 = vmul.f32 %v3751, %v3782
    %v3784 = vsub.f32 1.0, %v3783
    %v3785 = vmul.f32 %v3782, %v3784
    %v3786 = vadd.f32 %v3782, %v3785
    %vm3787 = vweird.f32 %v3751
    %vm3788 = vweird.f32 %v3782
    %vm3789 = vmor %vm3787, %vm3788
    %v3790 = vsel %vm3789, %v3782, %v3786
    %v3791 = vand.u32 2147483647, %v3751
    %vm3792 = vcmp.eq.f32.partialorder %v3791, 8.507059e+37
    %v3793 = vand.u32 %v3751, 2147483648
    %v3794 = vor.u32 1.1754944e-38, %v3793
    %v3795 = vsel %vm3792, %v3794, %v3790
    %v3796 = vmul.f32 1.0, %v3795
    %v3797 = vtanh.pop %v3739
    %v3798 = vmul.f32 %v3781, %v3583
    %v3799 = vmul.f32 %v3766, %v3797
    %v3800 = vadd.f32 %v3798, %v3799
    %v3801 = vtanh.pop %v3800
    %v3802 = vmul.f32 %v3796, %v3801
    %3803 = vst [vmem:[#allocation2 + $0x18] sm:$0xff] %v3802
    %3804 = vst [vmem:[#allocation3 + $0x20] sm:$0xff] %v3802
    %v3805 = vld [vmem:[#allocation4 + $0x80] sm:$0xff]
    %v3806 = vld [vmem:[#allocation4 + $0x88] sm:$0xff]
    %v3807 = vld [vmem:[#allocation4 + $0x90] sm:$0xff]
    %v3808 = vld [vmem:[#allocation4 + $0x98] sm:$0xff]
    %v3809 = vld [vmem:[%s2940] sm:$0xff]
    %v3810 = vld [vmem:[%s2940 + $0x8] sm:$0xff]
    %v3811 = vld [vmem:[%s2940 + $0x10] sm:$0xff]
    %v3812 = vld [vmem:[%s2940 + $0x18] sm:$0xff]
    %v3813 = vld [vmem:[%s2940 + $0x20] sm:$0xff]
    %v3814 = vld [vmem:[%s2940 + $0x28] sm:$0xff]
    %v3815 = vld [vmem:[%s2940 + $0x30] sm:$0xff]
    %v3816 = vld [vmem:[%s2940 + $0x38] sm:$0xff]
    %v3817 = vld [vmem:[%s2940 + $0x40] sm:$0xff]
    %v3818 = vld [vmem:[%s2940 + $0x48] sm:$0xff]
    %v3819 = vld [vmem:[%s2940 + $0x50] sm:$0xff]
    %v3820 = vld [vmem:[%s2940 + $0x58] sm:$0xff]
    %v3821 = vld [vmem:[%s2940 + $0x60] sm:$0xff]
    %v3822 = vld [vmem:[%s2940 + $0x68] sm:$0xff]
    %v3823 = vld [vmem:[%s2940 + $0x70] sm:$0xff]
    %v3824 = vld [vmem:[%s2940 + $0x78] sm:$0xff]
    %v3825 = vld [vmem:[%s2940 + $0x80] sm:$0xff]
    %v3826 = vld [vmem:[%s2940 + $0x88] sm:$0xff]
    %v3827 = vld [vmem:[%s2940 + $0x90] sm:$0xff]
    %v3828 = vld [vmem:[%s2940 + $0x98] sm:$0xff]
    %v3829 = vld [vmem:[%s2940 + $0xa0] sm:$0xff]
    %v3830 = vld [vmem:[%s2940 + $0xa8] sm:$0xff]
    %v3831 = vld [vmem:[%s2940 + $0xb0] sm:$0xff]
    %v3832 = vld [vmem:[%s2940 + $0xb8] sm:$0xff]
    %v3833 = vld [vmem:[%s2940 + $0xc0] sm:$0xff]
    %v3834 = vld [vmem:[%s2940 + $0xc8] sm:$0xff]
    %v3835 = vld [vmem:[%s2940 + $0xd0] sm:$0xff]
    %v3836 = vld [vmem:[%s2940 + $0xd8] sm:$0xff]
    %v3837 = vld [vmem:[%s2940 + $0xe0] sm:$0xff]
    %v3838 = vld [vmem:[%s2940 + $0xe8] sm:$0xff]
    %v3839 = vld [vmem:[%s2940 + $0xf0] sm:$0xff]
    %v3840 = vld [vmem:[%s2940 + $0xf8] sm:$0xff]
    %v3841 = vld [vmem:[%s2940 + $0x100] sm:$0xff]
    %v3842 = vld [vmem:[%s2940 + $0x108] sm:$0xff]
    %v3843 = vld [vmem:[%s2940 + $0x110] sm:$0xff]
    %v3844 = vld [vmem:[%s2940 + $0x118] sm:$0xff]
    %v3845 = vld [vmem:[%s2940 + $0x120] sm:$0xff]
    %v3846 = vld [vmem:[%s2940 + $0x128] sm:$0xff]
    %v3847 = vld [vmem:[%s2940 + $0x130] sm:$0xff]
    %v3848 = vld [vmem:[%s2940 + $0x138] sm:$0xff]
    %v3849 = vld [vmem:[%s2940 + $0x140] sm:$0xff]
    %v3850 = vld [vmem:[%s2940 + $0x148] sm:$0xff]
    %v3851 = vld [vmem:[%s2940 + $0x150] sm:$0xff]
    %v3852 = vld [vmem:[%s2940 + $0x158] sm:$0xff]
    %v3853 = vld [vmem:[%s2940 + $0x160] sm:$0xff]
    %v3854 = vld [vmem:[%s2940 + $0x168] sm:$0xff]
    %v3855 = vld [vmem:[%s2940 + $0x170] sm:$0xff]
    %v3856 = vld [vmem:[%s2940 + $0x178] sm:$0xff]
    %v3857 = vld [vmem:[%s2940 + $0x180] sm:$0xff]
    %v3858 = vld [vmem:[%s2940 + $0x188] sm:$0xff]
    %v3859 = vld [vmem:[%s2940 + $0x190] sm:$0xff]
    %v3860 = vld [vmem:[%s2940 + $0x198] sm:$0xff]
    %v3861 = vld [vmem:[%s2940 + $0x1a0] sm:$0xff]
    %v3862 = vld [vmem:[%s2940 + $0x1a8] sm:$0xff]
    %v3863 = vld [vmem:[%s2940 + $0x1b0] sm:$0xff]
    %v3864 = vld [vmem:[%s2940 + $0x1b8] sm:$0xff]
    %v3865 = vld [vmem:[%s2940 + $0x1c0] sm:$0xff]
    %v3866 = vld [vmem:[%s2940 + $0x1c8] sm:$0xff]
    %v3867 = vld [vmem:[%s2940 + $0x1d0] sm:$0xff]
    %v3868 = vld [vmem:[%s2940 + $0x1d8] sm:$0xff]
    %v3869 = vld [vmem:[%s2940 + $0x1e0] sm:$0xff]
    %v3870 = vld [vmem:[%s2940 + $0x1e8] sm:$0xff]
    %v3871 = vld [vmem:[%s2940 + $0x1f0] sm:$0xff]
    %v3872 = vld [vmem:[%s2940 + $0x1f8] sm:$0xff]
    %3873 = vmatpush.msra.mxu0 %v3869
    %3874 = vmatpush.msra.mxu0 %v3865
    %3875 = vmatpush.msra.mxu0 %v3861
    %3876 = vmatpush.msra.mxu0 %v3857
    %3877 = vmatpush.msra.mxu0 %v3853
    %3878 = vmatpush.msra.mxu0 %v3849
    %3879 = vmatpush.msra.mxu0 %v3845
    %3880 = vmatpush.msra.mxu0 %v3841
    %3881 = vmatpush.msra.mxu0 %v3837
    %3882 = vmatpush.msra.mxu0 %v3833
    %3883 = vmatpush.msra.mxu0 %v3829
    %3884 = vmatpush.msra.mxu0 %v3825
    %3885 = vmatpush.msra.mxu0 %v3821
    %3886 = vmatpush.msra.mxu0 %v3817
    %3887 = vmatpush.msra.mxu0 %v3813
    %3888 = vmatpush.msra.mxu0 %v3809
    %3889 = vmatmul.f32.gmra.mxu0 %v3802
    %v3890 = vpop.f32.mrf.mxu0
    %v3891 = vadd.f32 0.0, %v3890
    %3892 = vdwg.mxu0
    %3893 = vmatpush.msra.mxu0 %v3870
    %3894 = vmatpush.msra.mxu0 %v3866
    %3895 = vmatpush.msra.mxu0 %v3862
    %3896 = vmatpush.msra.mxu0 %v3858
    %3897 = vmatpush.msra.mxu0 %v3854
    %3898 = vmatpush.msra.mxu0 %v3850
    %3899 = vmatpush.msra.mxu0 %v3846
    %3900 = vmatpush.msra.mxu0 %v3842
    %3901 = vmatpush.msra.mxu0 %v3838
    %3902 = vmatpush.msra.mxu0 %v3834
    %3903 = vmatpush.msra.mxu0 %v3830
    %3904 = vmatpush.msra.mxu0 %v3826
    %3905 = vmatpush.msra.mxu0 %v3822
    %3906 = vmatpush.msra.mxu0 %v3818
    %3907 = vmatpush.msra.mxu0 %v3814
    %3908 = vmatpush.msra.mxu0 %v3810
    %3909 = vmatmul.f32.gmra.mxu0 %v3802
    %v3910 = vpop.f32.mrf.mxu0
    %v3911 = vadd.f32 0.0, %v3910
    %3912 = vdwg.mxu0
    %3913 = vmatpush.msra.mxu0 %v3871
    %3914 = vmatpush.msra.mxu0 %v3867
    %3915 = vmatpush.msra.mxu0 %v3863
    %3916 = vmatpush.msra.mxu0 %v3859
    %3917 = vmatpush.msra.mxu0 %v3855
    %3918 = vmatpush.msra.mxu0 %v3851
    %3919 = vmatpush.msra.mxu0 %v3847
    %3920 = vmatpush.msra.mxu0 %v3843
    %3921 = vmatpush.msra.mxu0 %v3839
    %3922 = vmatpush.msra.mxu0 %v3835
    %3923 = vmatpush.msra.mxu0 %v3831
    %3924 = vmatpush.msra.mxu0 %v3827
    %3925 = vmatpush.msra.mxu0 %v3823
    %3926 = vmatpush.msra.mxu0 %v3819
    %3927 = vmatpush.msra.mxu0 %v3815
    %3928 = vmatpush.msra.mxu0 %v3811
    %3929 = vmatmul.f32.gmra.mxu0 %v3802
    %v3930 = vpop.f32.mrf.mxu0
    %v3931 = vadd.f32 0.0, %v3930
    %3932 = vdwg.mxu0
    %3933 = vmatpush.msra.mxu0 %v3872
    %3934 = vmatpush.msra.mxu0 %v3868
    %3935 = vmatpush.msra.mxu0 %v3864
    %3936 = vmatpush.msra.mxu0 %v3860
    %3937 = vmatpush.msra.mxu0 %v3856
    %3938 = vmatpush.msra.mxu0 %v3852
    %3939 = vmatpush.msra.mxu0 %v3848
    %3940 = vmatpush.msra.mxu0 %v3844
    %3941 = vmatpush.msra.mxu0 %v3840
    %3942 = vmatpush.msra.mxu0 %v3836
    %3943 = vmatpush.msra.mxu0 %v3832
    %3944 = vmatpush.msra.mxu0 %v3828
    %3945 = vmatpush.msra.mxu0 %v3824
    %3946 = vmatpush.msra.mxu0 %v3820
    %3947 = vmatpush.msra.mxu0 %v3816
    %3948 = vmatpush.msra.mxu0 %v3812
    %3949 = vmatmul.f32.gmra.mxu0 %v3802
    %v3950 = vpop.f32.mrf.mxu0
    %v3951 = vadd.f32 0.0, %v3950
    %3952 = vdwg.mxu0
    %v3953 = vadd.f32 %v3805, %v3891
    %v3954 = vadd.f32 %v3806, %v3911
    %v3955 = vadd.f32 %v3807, %v3931
    %v3956 = vadd.f32 %v3808, %v3951
    %v3957 = vxor.u32 %v3953, 2147483648
    %v3958 = vxor.u32 %v3954, 2147483648
    %v3959 = vxor.u32 %v3955, 2147483648
    %v3960 = vmul.f32 %v3957, 1.442695
    %v3961 = vpow.pop %v3960
    %v3962 = vmul.f32 %v3958, 1.442695
    %v3963 = vpow.pop %v3962
    %v3964 = vmul.f32 %v3959, 1.442695
    %v3965 = vpow.pop %v3964
    %v3966 = vadd.f32 %v3961, 1.0
    %v3967 = vadd.f32 %v3963, 1.0
    %v3968 = vadd.f32 %v3965, 1.0
    %v3969 = vrcp.pop %v3966
    %v3970 = vmul.f32 %v3966, %v3969
    %v3971 = vsub.f32 1.0, %v3970
    %v3972 = vmul.f32 %v3969, %v3971
    %v3973 = vadd.f32 %v3969, %v3972
    %vm3974 = vweird.f32 %v3966
    %vm3975 = vweird.f32 %v3969
    %vm3976 = vmor %vm3974, %vm3975
    %v3977 = vsel %vm3976, %v3969, %v3973
    %v3978 = vand.u32 2147483647, %v3966
    %vm3979 = vcmp.eq.f32.partialorder %v3978, 8.507059e+37
    %v3980 = vand.u32 %v3966, 2147483648
    %v3981 = vor.u32 1.1754944e-38, %v3980
    %v3982 = vsel %vm3979, %v3981, %v3977
    %v3983 = vmul.f32 1.0, %v3982
    %v3984 = vrcp.pop %v3967
    %v3985 = vmul.f32 %v3967, %v3984
    %v3986 = vsub.f32 1.0, %v3985
    %v3987 = vmul.f32 %v3984, %v3986
    %v3988 = vadd.f32 %v3984, %v3987
    %vm3989 = vweird.f32 %v3967
    %vm3990 = vweird.f32 %v3984
    %vm3991 = vmor %vm3989, %vm3990
    %v3992 = vsel %vm3991, %v3984, %v3988
    %v3993 = vand.u32 2147483647, %v3967
    %vm3994 = vcmp.eq.f32.partialorder %v3993, 8.507059e+37
    %v3995 = vand.u32 %v3967, 2147483648
    %v3996 = vor.u32 1.1754944e-38, %v3995
    %v3997 = vsel %vm3994, %v3996, %v3992
    %v3998 = vmul.f32 1.0, %v3997
    %v3999 = vrcp.pop %v3968
    %v4000 = vmul.f32 %v3968, %v3999
    %v4001 = vsub.f32 1.0, %v4000
    %v4002 = vmul.f32 %v3999, %v4001
    %v4003 = vadd.f32 %v3999, %v4002
    %vm4004 = vweird.f32 %v3968
    %vm4005 = vweird.f32 %v3999
    %vm4006 = vmor %vm4004, %vm4005
    %v4007 = vsel %vm4006, %v3999, %v4003
    %v4008 = vand.u32 2147483647, %v3968
    %vm4009 = vcmp.eq.f32.partialorder %v4008, 8.507059e+37
    %v4010 = vand.u32 %v3968, 2147483648
    %v4011 = vor.u32 1.1754944e-38, %v4010
    %v4012 = vsel %vm4009, %v4011, %v4007
    %v4013 = vmul.f32 1.0, %v4012
    %v4014 = vtanh.pop %v3956
    %v4015 = vmul.f32 %v3998, %v3800
    %v4016 = vmul.f32 %v3983, %v4014
    %v4017 = vadd.f32 %v4015, %v4016
    %v4018 = vtanh.pop %v4017
    %v4019 = vmul.f32 %v4013, %v4018
    %4020 = vst [vmem:[#allocation2 + $0x20] sm:$0xff] %v4019
    %4021 = vst [vmem:[#allocation3 + $0x18] sm:$0xff] %v4019
    %v4022 = vld [vmem:[#allocation4 + $0xa0] sm:$0xff]
    %v4023 = vld [vmem:[#allocation4 + $0xa8] sm:$0xff]
    %v4024 = vld [vmem:[#allocation4 + $0xb0] sm:$0xff]
    %v4025 = vld [vmem:[#allocation4 + $0xb8] sm:$0xff]
    %v4026 = vld [vmem:[%s2940] sm:$0xff]
    %v4027 = vld [vmem:[%s2940 + $0x8] sm:$0xff]
    %v4028 = vld [vmem:[%s2940 + $0x10] sm:$0xff]
    %v4029 = vld [vmem:[%s2940 + $0x18] sm:$0xff]
    %v4030 = vld [vmem:[%s2940 + $0x20] sm:$0xff]
    %v4031 = vld [vmem:[%s2940 + $0x28] sm:$0xff]
    %v4032 = vld [vmem:[%s2940 + $0x30] sm:$0xff]
    %v4033 = vld [vmem:[%s2940 + $0x38] sm:$0xff]
    %v4034 = vld [vmem:[%s2940 + $0x40] sm:$0xff]
    %v4035 = vld [vmem:[%s2940 + $0x48] sm:$0xff]
    %v4036 = vld [vmem:[%s2940 + $0x50] sm:$0xff]
    %v4037 = vld [vmem:[%s2940 + $0x58] sm:$0xff]
    %v4038 = vld [vmem:[%s2940 + $0x60] sm:$0xff]
    %v4039 = vld [vmem:[%s2940 + $0x68] sm:$0xff]
    %v4040 = vld [vmem:[%s2940 + $0x70] sm:$0xff]
    %v4041 = vld [vmem:[%s2940 + $0x78] sm:$0xff]
    %v4042 = vld [vmem:[%s2940 + $0x80] sm:$0xff]
    %v4043 = vld [vmem:[%s2940 + $0x88] sm:$0xff]
    %v4044 = vld [vmem:[%s2940 + $0x90] sm:$0xff]
    %v4045 = vld [vmem:[%s2940 + $0x98] sm:$0xff]
    %v4046 = vld [vmem:[%s2940 + $0xa0] sm:$0xff]
    %v4047 = vld [vmem:[%s2940 + $0xa8] sm:$0xff]
    %v4048 = vld [vmem:[%s2940 + $0xb0] sm:$0xff]
    %v4049 = vld [vmem:[%s2940 + $0xb8] sm:$0xff]
    %v4050 = vld [vmem:[%s2940 + $0xc0] sm:$0xff]
    %v4051 = vld [vmem:[%s2940 + $0xc8] sm:$0xff]
    %v4052 = vld [vmem:[%s2940 + $0xd0] sm:$0xff]
    %v4053 = vld [vmem:[%s2940 + $0xd8] sm:$0xff]
    %v4054 = vld [vmem:[%s2940 + $0xe0] sm:$0xff]
    %v4055 = vld [vmem:[%s2940 + $0xe8] sm:$0xff]
    %v4056 = vld [vmem:[%s2940 + $0xf0] sm:$0xff]
    %v4057 = vld [vmem:[%s2940 + $0xf8] sm:$0xff]
    %v4058 = vld [vmem:[%s2940 + $0x100] sm:$0xff]
    %v4059 = vld [vmem:[%s2940 + $0x108] sm:$0xff]
    %v4060 = vld [vmem:[%s2940 + $0x110] sm:$0xff]
    %v4061 = vld [vmem:[%s2940 + $0x118] sm:$0xff]
    %v4062 = vld [vmem:[%s2940 + $0x120] sm:$0xff]
    %v4063 = vld [vmem:[%s2940 + $0x128] sm:$0xff]
    %v4064 = vld [vmem:[%s2940 + $0x130] sm:$0xff]
    %v4065 = vld [vmem:[%s2940 + $0x138] sm:$0xff]
    %v4066 = vld [vmem:[%s2940 + $0x140] sm:$0xff]
    %v4067 = vld [vmem:[%s2940 + $0x148] sm:$0xff]
    %v4068 = vld [vmem:[%s2940 + $0x150] sm:$0xff]
    %v4069 = vld [vmem:[%s2940 + $0x158] sm:$0xff]
    %v4070 = vld [vmem:[%s2940 + $0x160] sm:$0xff]
    %v4071 = vld [vmem:[%s2940 + $0x168] sm:$0xff]
    %v4072 = vld [vmem:[%s2940 + $0x170] sm:$0xff]
    %v4073 = vld [vmem:[%s2940 + $0x178] sm:$0xff]
    %v4074 = vld [vmem:[%s2940 + $0x180] sm:$0xff]
    %v4075 = vld [vmem:[%s2940 + $0x188] sm:$0xff]
    %v4076 = vld [vmem:[%s2940 + $0x190] sm:$0xff]
    %v4077 = vld [vmem:[%s2940 + $0x198] sm:$0xff]
    %v4078 = vld [vmem:[%s2940 + $0x1a0] sm:$0xff]
    %v4079 = vld [vmem:[%s2940 + $0x1a8] sm:$0xff]
    %v4080 = vld [vmem:[%s2940 + $0x1b0] sm:$0xff]
    %v4081 = vld [vmem:[%s2940 + $0x1b8] sm:$0xff]
    %v4082 = vld [vmem:[%s2940 + $0x1c0] sm:$0xff]
    %v4083 = vld [vmem:[%s2940 + $0x1c8] sm:$0xff]
    %v4084 = vld [vmem:[%s2940 + $0x1d0] sm:$0xff]
    %v4085 = vld [vmem:[%s2940 + $0x1d8] sm:$0xff]
    %v4086 = vld [vmem:[%s2940 + $0x1e0] sm:$0xff]
    %v4087 = vld [vmem:[%s2940 + $0x1e8] sm:$0xff]
    %v4088 = vld [vmem:[%s2940 + $0x1f0] sm:$0xff]
    %v4089 = vld [vmem:[%s2940 + $0x1f8] sm:$0xff]
    %4090 = vmatpush.msra.mxu0 %v4086
    %4091 = vmatpush.msra.mxu0 %v4082
    %4092 = vmatpush.msra.mxu0 %v4078
    %4093 = vmatpush.msra.mxu0 %v4074
    %4094 = vmatpush.msra.mxu0 %v4070
    %4095 = vmatpush.msra.mxu0 %v4066
    %4096 = vmatpush.msra.mxu0 %v4062
    %4097 = vmatpush.msra.mxu0 %v4058
    %4098 = vmatpush.msra.mxu0 %v4054
    %4099 = vmatpush.msra.mxu0 %v4050
    %4100 = vmatpush.msra.mxu0 %v4046
    %4101 = vmatpush.msra.mxu0 %v4042
    %4102 = vmatpush.msra.mxu0 %v4038
    %4103 = vmatpush.msra.mxu0 %v4034
    %4104 = vmatpush.msra.mxu0 %v4030
    %4105 = vmatpush.msra.mxu0 %v4026
    %4106 = vmatmul.f32.gmra.mxu0 %v4019
    %v4107 = vpop.f32.mrf.mxu0
    %v4108 = vadd.f32 0.0, %v4107
    %4109 = vdwg.mxu0
    %4110 = vmatpush.msra.mxu0 %v4087
    %4111 = vmatpush.msra.mxu0 %v4083
    %4112 = vmatpush.msra.mxu0 %v4079
    %4113 = vmatpush.msra.mxu0 %v4075
    %4114 = vmatpush.msra.mxu0 %v4071
    %4115 = vmatpush.msra.mxu0 %v4067
    %4116 = vmatpush.msra.mxu0 %v4063
    %4117 = vmatpush.msra.mxu0 %v4059
    %4118 = vmatpush.msra.mxu0 %v4055
    %4119 = vmatpush.msra.mxu0 %v4051
    %4120 = vmatpush.msra.mxu0 %v4047
    %4121 = vmatpush.msra.mxu0 %v4043
    %4122 = vmatpush.msra.mxu0 %v4039
    %4123 = vmatpush.msra.mxu0 %v4035
    %4124 = vmatpush.msra.mxu0 %v4031
    %4125 = vmatpush.msra.mxu0 %v4027
    %4126 = vmatmul.f32.gmra.mxu0 %v4019
    %v4127 = vpop.f32.mrf.mxu0
    %v4128 = vadd.f32 0.0, %v4127
    %4129 = vdwg.mxu0
    %4130 = vmatpush.msra.mxu0 %v4088
    %4131 = vmatpush.msra.mxu0 %v4084
    %4132 = vmatpush.msra.mxu0 %v4080
    %4133 = vmatpush.msra.mxu0 %v4076
    %4134 = vmatpush.msra.mxu0 %v4072
    %4135 = vmatpush.msra.mxu0 %v4068
    %4136 = vmatpush.msra.mxu0 %v4064
    %4137 = vmatpush.msra.mxu0 %v4060
    %4138 = vmatpush.msra.mxu0 %v4056
    %4139 = vmatpush.msra.mxu0 %v4052
    %4140 = vmatpush.msra.mxu0 %v4048
    %4141 = vmatpush.msra.mxu0 %v4044
    %4142 = vmatpush.msra.mxu0 %v4040
    %4143 = vmatpush.msra.mxu0 %v4036
    %4144 = vmatpush.msra.mxu0 %v4032
    %4145 = vmatpush.msra.mxu0 %v4028
    %4146 = vmatmul.f32.gmra.mxu0 %v4019
    %v4147 = vpop.f32.mrf.mxu0
    %v4148 = vadd.f32 0.0, %v4147
    %4149 = vdwg.mxu0
    %4150 = vmatpush.msra.mxu0 %v4089
    %4151 = vmatpush.msra.mxu0 %v4085
    %4152 = vmatpush.msra.mxu0 %v4081
    %4153 = vmatpush.msra.mxu0 %v4077
    %4154 = vmatpush.msra.mxu0 %v4073
    %4155 = vmatpush.msra.mxu0 %v4069
    %4156 = vmatpush.msra.mxu0 %v4065
    %4157 = vmatpush.msra.mxu0 %v4061
    %4158 = vmatpush.msra.mxu0 %v4057
    %4159 = vmatpush.msra.mxu0 %v4053
    %4160 = vmatpush.msra.mxu0 %v4049
    %4161 = vmatpush.msra.mxu0 %v4045
    %4162 = vmatpush.msra.mxu0 %v4041
    %4163 = vmatpush.msra.mxu0 %v4037
    %4164 = vmatpush.msra.mxu0 %v4033
    %4165 = vmatpush.msra.mxu0 %v4029
    %4166 = vmatmul.f32.gmra.mxu0 %v4019
    %v4167 = vpop.f32.mrf.mxu0
    %v4168 = vadd.f32 0.0, %v4167
    %4169 = vdwg.mxu0
    %v4170 = vadd.f32 %v4022, %v4108
    %v4171 = vadd.f32 %v4023, %v4128
    %v4172 = vadd.f32 %v4024, %v4148
    %v4173 = vadd.f32 %v4025, %v4168
    %v4174 = vxor.u32 %v4170, 2147483648
    %v4175 = vxor.u32 %v4171, 2147483648
    %v4176 = vxor.u32 %v4172, 2147483648
    %v4177 = vmul.f32 %v4174, 1.442695
    %v4178 = vpow.pop %v4177
    %v4179 = vmul.f32 %v4175, 1.442695
    %v4180 = vpow.pop %v4179
    %v4181 = vmul.f32 %v4176, 1.442695
    %v4182 = vpow.pop %v4181
    %v4183 = vadd.f32 %v4178, 1.0
    %v4184 = vadd.f32 %v4180, 1.0
    %v4185 = vadd.f32 %v4182, 1.0
    %v4186 = vrcp.pop %v4183
    %v4187 = vmul.f32 %v4183, %v4186
    %v4188 = vsub.f32 1.0, %v4187
    %v4189 = vmul.f32 %v4186, %v4188
    %v4190 = vadd.f32 %v4186, %v4189
    %vm4191 = vweird.f32 %v4183
    %vm4192 = vweird.f32 %v4186
    %vm4193 = vmor %vm4191, %vm4192
    %v4194 = vsel %vm4193, %v4186, %v4190
    %v4195 = vand.u32 2147483647, %v4183
    %vm4196 = vcmp.eq.f32.partialorder %v4195, 8.507059e+37
    %v4197 = vand.u32 %v4183, 2147483648
    %v4198 = vor.u32 1.1754944e-38, %v4197
    %v4199 = vsel %vm4196, %v4198, %v4194
    %v4200 = vmul.f32 1.0, %v4199
    %v4201 = vrcp.pop %v4184
    %v4202 = vmul.f32 %v4184, %v4201
    %v4203 = vsub.f32 1.0, %v4202
    %v4204 = vmul.f32 %v4201, %v4203
    %v4205 = vadd.f32 %v4201, %v4204
    %vm4206 = vweird.f32 %v4184
    %vm4207 = vweird.f32 %v4201
    %vm4208 = vmor %vm4206, %vm4207
    %v4209 = vsel %vm4208, %v4201, %v4205
    %v4210 = vand.u32 2147483647, %v4184
    %vm4211 = vcmp.eq.f32.partialorder %v4210, 8.507059e+37
    %v4212 = vand.u32 %v4184, 2147483648
    %v4213 = vor.u32 1.1754944e-38, %v4212
    %v4214 = vsel %vm4211, %v4213, %v4209
    %v4215 = vmul.f32 1.0, %v4214
    %v4216 = vrcp.pop %v4185
    %v4217 = vmul.f32 %v4185, %v4216
    %v4218 = vsub.f32 1.0, %v4217
    %v4219 = vmul.f32 %v4216, %v4218
    %v4220 = vadd.f32 %v4216, %v4219
    %vm4221 = vweird.f32 %v4185
    %vm4222 = vweird.f32 %v4216
    %vm4223 = vmor %vm4221, %vm4222
    %v4224 = vsel %vm4223, %v4216, %v4220
    %v4225 = vand.u32 2147483647, %v4185
    %vm4226 = vcmp.eq.f32.partialorder %v4225, 8.507059e+37
    %v4227 = vand.u32 %v4185, 2147483648
    %v4228 = vor.u32 1.1754944e-38, %v4227
    %v4229 = vsel %vm4226, %v4228, %v4224
    %v4230 = vmul.f32 1.0, %v4229
    %v4231 = vtanh.pop %v4173
    %v4232 = vmul.f32 %v4215, %v4017
    %v4233 = vmul.f32 %v4200, %v4231
    %v4234 = vadd.f32 %v4232, %v4233
    %v4235 = vtanh.pop %v4234
    %v4236 = vmul.f32 %v4230, %v4235
    %4237 = vst [vmem:[#allocation2 + $0x28] sm:$0xff] %v4236
    %4238 = vst [vmem:[#allocation3 + $0x10] sm:$0xff] %v4236
    %v4239 = vld [vmem:[#allocation4 + $0xc0] sm:$0xff]
    %v4240 = vld [vmem:[#allocation4 + $0xc8] sm:$0xff]
    %v4241 = vld [vmem:[#allocation4 + $0xd0] sm:$0xff]
    %v4242 = vld [vmem:[#allocation4 + $0xd8] sm:$0xff]
    %v4243 = vld [vmem:[%s2940] sm:$0xff]
    %v4244 = vld [vmem:[%s2940 + $0x8] sm:$0xff]
    %v4245 = vld [vmem:[%s2940 + $0x10] sm:$0xff]
    %v4246 = vld [vmem:[%s2940 + $0x18] sm:$0xff]
    %v4247 = vld [vmem:[%s2940 + $0x20] sm:$0xff]
    %v4248 = vld [vmem:[%s2940 + $0x28] sm:$0xff]
    %v4249 = vld [vmem:[%s2940 + $0x30] sm:$0xff]
    %v4250 = vld [vmem:[%s2940 + $0x38] sm:$0xff]
    %v4251 = vld [vmem:[%s2940 + $0x40] sm:$0xff]
    %v4252 = vld [vmem:[%s2940 + $0x48] sm:$0xff]
    %v4253 = vld [vmem:[%s2940 + $0x50] sm:$0xff]
    %v4254 = vld [vmem:[%s2940 + $0x58] sm:$0xff]
    %v4255 = vld [vmem:[%s2940 + $0x60] sm:$0xff]
    %v4256 = vld [vmem:[%s2940 + $0x68] sm:$0xff]
    %v4257 = vld [vmem:[%s2940 + $0x70] sm:$0xff]
    %v4258 = vld [vmem:[%s2940 + $0x78] sm:$0xff]
    %v4259 = vld [vmem:[%s2940 + $0x80] sm:$0xff]
    %v4260 = vld [vmem:[%s2940 + $0x88] sm:$0xff]
    %v4261 = vld [vmem:[%s2940 + $0x90] sm:$0xff]
    %v4262 = vld [vmem:[%s2940 + $0x98] sm:$0xff]
    %v4263 = vld [vmem:[%s2940 + $0xa0] sm:$0xff]
    %v4264 = vld [vmem:[%s2940 + $0xa8] sm:$0xff]
    %v4265 = vld [vmem:[%s2940 + $0xb0] sm:$0xff]
    %v4266 = vld [vmem:[%s2940 + $0xb8] sm:$0xff]
    %v4267 = vld [vmem:[%s2940 + $0xc0] sm:$0xff]
    %v4268 = vld [vmem:[%s2940 + $0xc8] sm:$0xff]
    %v4269 = vld [vmem:[%s2940 + $0xd0] sm:$0xff]
    %v4270 = vld [vmem:[%s2940 + $0xd8] sm:$0xff]
    %v4271 = vld [vmem:[%s2940 + $0xe0] sm:$0xff]
    %v4272 = vld [vmem:[%s2940 + $0xe8] sm:$0xff]
    %v4273 = vld [vmem:[%s2940 + $0xf0] sm:$0xff]
    %v4274 = vld [vmem:[%s2940 + $0xf8] sm:$0xff]
    %v4275 = vld [vmem:[%s2940 + $0x100] sm:$0xff]
    %v4276 = vld [vmem:[%s2940 + $0x108] sm:$0xff]
    %v4277 = vld [vmem:[%s2940 + $0x110] sm:$0xff]
    %v4278 = vld [vmem:[%s2940 + $0x118] sm:$0xff]
    %v4279 = vld [vmem:[%s2940 + $0x120] sm:$0xff]
    %v4280 = vld [vmem:[%s2940 + $0x128] sm:$0xff]
    %v4281 = vld [vmem:[%s2940 + $0x130] sm:$0xff]
    %v4282 = vld [vmem:[%s2940 + $0x138] sm:$0xff]
    %v4283 = vld [vmem:[%s2940 + $0x140] sm:$0xff]
    %v4284 = vld [vmem:[%s2940 + $0x148] sm:$0xff]
    %v4285 = vld [vmem:[%s2940 + $0x150] sm:$0xff]
    %v4286 = vld [vmem:[%s2940 + $0x158] sm:$0xff]
    %v4287 = vld [vmem:[%s2940 + $0x160] sm:$0xff]
    %v4288 = vld [vmem:[%s2940 + $0x168] sm:$0xff]
    %v4289 = vld [vmem:[%s2940 + $0x170] sm:$0xff]
    %v4290 = vld [vmem:[%s2940 + $0x178] sm:$0xff]
    %v4291 = vld [vmem:[%s2940 + $0x180] sm:$0xff]
    %v4292 = vld [vmem:[%s2940 + $0x188] sm:$0xff]
    %v4293 = vld [vmem:[%s2940 + $0x190] sm:$0xff]
    %v4294 = vld [vmem:[%s2940 + $0x198] sm:$0xff]
    %v4295 = vld [vmem:[%s2940 + $0x1a0] sm:$0xff]
    %v4296 = vld [vmem:[%s2940 + $0x1a8] sm:$0xff]
    %v4297 = vld [vmem:[%s2940 + $0x1b0] sm:$0xff]
    %v4298 = vld [vmem:[%s2940 + $0x1b8] sm:$0xff]
    %v4299 = vld [vmem:[%s2940 + $0x1c0] sm:$0xff]
    %v4300 = vld [vmem:[%s2940 + $0x1c8] sm:$0xff]
    %v4301 = vld [vmem:[%s2940 + $0x1d0] sm:$0xff]
    %v4302 = vld [vmem:[%s2940 + $0x1d8] sm:$0xff]
    %v4303 = vld [vmem:[%s2940 + $0x1e0] sm:$0xff]
    %v4304 = vld [vmem:[%s2940 + $0x1e8] sm:$0xff]
    %v4305 = vld [vmem:[%s2940 + $0x1f0] sm:$0xff]
    %v4306 = vld [vmem:[%s2940 + $0x1f8] sm:$0xff]
    %4307 = vmatpush.msra.mxu0 %v4303
    %4308 = vmatpush.msra.mxu0 %v4299
    %4309 = vmatpush.msra.mxu0 %v4295
    %4310 = vmatpush.msra.mxu0 %v4291
    %4311 = vmatpush.msra.mxu0 %v4287
    %4312 = vmatpush.msra.mxu0 %v4283
    %4313 = vmatpush.msra.mxu0 %v4279
    %4314 = vmatpush.msra.mxu0 %v4275
    %4315 = vmatpush.msra.mxu0 %v4271
    %4316 = vmatpush.msra.mxu0 %v4267
    %4317 = vmatpush.msra.mxu0 %v4263
    %4318 = vmatpush.msra.mxu0 %v4259
    %4319 = vmatpush.msra.mxu0 %v4255
    %4320 = vmatpush.msra.mxu0 %v4251
    %4321 = vmatpush.msra.mxu0 %v4247
    %4322 = vmatpush.msra.mxu0 %v4243
    %4323 = vmatmul.f32.gmra.mxu0 %v4236
    %v4324 = vpop.f32.mrf.mxu0
    %v4325 = vadd.f32 0.0, %v4324
    %4326 = vdwg.mxu0
    %4327 = vmatpush.msra.mxu0 %v4304
    %4328 = vmatpush.msra.mxu0 %v4300
    %4329 = vmatpush.msra.mxu0 %v4296
    %4330 = vmatpush.msra.mxu0 %v4292
    %4331 = vmatpush.msra.mxu0 %v4288
    %4332 = vmatpush.msra.mxu0 %v4284
    %4333 = vmatpush.msra.mxu0 %v4280
    %4334 = vmatpush.msra.mxu0 %v4276
    %4335 = vmatpush.msra.mxu0 %v4272
    %4336 = vmatpush.msra.mxu0 %v4268
    %4337 = vmatpush.msra.mxu0 %v4264
    %4338 = vmatpush.msra.mxu0 %v4260
    %4339 = vmatpush.msra.mxu0 %v4256
    %4340 = vmatpush.msra.mxu0 %v4252
    %4341 = vmatpush.msra.mxu0 %v4248
    %4342 = vmatpush.msra.mxu0 %v4244
    %4343 = vmatmul.f32.gmra.mxu0 %v4236
    %v4344 = vpop.f32.mrf.mxu0
    %v4345 = vadd.f32 0.0, %v4344
    %4346 = vdwg.mxu0
    %4347 = vmatpush.msra.mxu0 %v4305
    %4348 = vmatpush.msra.mxu0 %v4301
    %4349 = vmatpush.msra.mxu0 %v4297
    %4350 = vmatpush.msra.mxu0 %v4293
    %4351 = vmatpush.msra.mxu0 %v4289
    %4352 = vmatpush.msra.mxu0 %v4285
    %4353 = vmatpush.msra.mxu0 %v4281
    %4354 = vmatpush.msra.mxu0 %v4277
    %4355 = vmatpush.msra.mxu0 %v4273
    %4356 = vmatpush.msra.mxu0 %v4269
    %4357 = vmatpush.msra.mxu0 %v4265
    %4358 = vmatpush.msra.mxu0 %v4261
    %4359 = vmatpush.msra.mxu0 %v4257
    %4360 = vmatpush.msra.mxu0 %v4253
    %4361 = vmatpush.msra.mxu0 %v4249
    %4362 = vmatpush.msra.mxu0 %v4245
    %4363 = vmatmul.f32.gmra.mxu0 %v4236
    %v4364 = vpop.f32.mrf.mxu0
    %v4365 = vadd.f32 0.0, %v4364
    %4366 = vdwg.mxu0
    %4367 = vmatpush.msra.mxu0 %v4306
    %4368 = vmatpush.msra.mxu0 %v4302
    %4369 = vmatpush.msra.mxu0 %v4298
    %4370 = vmatpush.msra.mxu0 %v4294
    %4371 = vmatpush.msra.mxu0 %v4290
    %4372 = vmatpush.msra.mxu0 %v4286
    %4373 = vmatpush.msra.mxu0 %v4282
    %4374 = vmatpush.msra.mxu0 %v4278
    %4375 = vmatpush.msra.mxu0 %v4274
    %4376 = vmatpush.msra.mxu0 %v4270
    %4377 = vmatpush.msra.mxu0 %v4266
    %4378 = vmatpush.msra.mxu0 %v4262
    %4379 = vmatpush.msra.mxu0 %v4258
    %4380 = vmatpush.msra.mxu0 %v4254
    %4381 = vmatpush.msra.mxu0 %v4250
    %4382 = vmatpush.msra.mxu0 %v4246
    %4383 = vmatmul.f32.gmra.mxu0 %v4236
    %v4384 = vpop.f32.mrf.mxu0
    %v4385 = vadd.f32 0.0, %v4384
    %4386 = vdwg.mxu0
    %v4387 = vadd.f32 %v4239, %v4325
    %v4388 = vadd.f32 %v4240, %v4345
    %v4389 = vadd.f32 %v4241, %v4365
    %v4390 = vadd.f32 %v4242, %v4385
    %v4391 = vxor.u32 %v4387, 2147483648
    %v4392 = vxor.u32 %v4388, 2147483648
    %v4393 = vxor.u32 %v4389, 2147483648
    %v4394 = vmul.f32 %v4391, 1.442695
    %v4395 = vpow.pop %v4394
    %v4396 = vmul.f32 %v4392, 1.442695
    %v4397 = vpow.pop %v4396
    %v4398 = vmul.f32 %v4393, 1.442695
    %v4399 = vpow.pop %v4398
    %v4400 = vadd.f32 %v4395, 1.0
    %v4401 = vadd.f32 %v4397, 1.0
    %v4402 = vadd.f32 %v4399, 1.0
    %v4403 = vrcp.pop %v4400
    %v4404 = vmul.f32 %v4400, %v4403
    %v4405 = vsub.f32 1.0, %v4404
    %v4406 = vmul.f32 %v4403, %v4405
    %v4407 = vadd.f32 %v4403, %v4406
    %vm4408 = vweird.f32 %v4400
    %vm4409 = vweird.f32 %v4403
    %vm4410 = vmor %vm4408, %vm4409
    %v4411 = vsel %vm4410, %v4403, %v4407
    %v4412 = vand.u32 2147483647, %v4400
    %vm4413 = vcmp.eq.f32.partialorder %v4412, 8.507059e+37
    %v4414 = vand.u32 %v4400, 2147483648
    %v4415 = vor.u32 1.1754944e-38, %v4414
    %v4416 = vsel %vm4413, %v4415, %v4411
    %v4417 = vmul.f32 1.0, %v4416
    %v4418 = vrcp.pop %v4401
    %v4419 = vmul.f32 %v4401, %v4418
    %v4420 = vsub.f32 1.0, %v4419
    %v4421 = vmul.f32 %v4418, %v4420
    %v4422 = vadd.f32 %v4418, %v4421
    %vm4423 = vweird.f32 %v4401
    %vm4424 = vweird.f32 %v4418
    %vm4425 = vmor %vm4423, %vm4424
    %v4426 = vsel %vm4425, %v4418, %v4422
    %v4427 = vand.u32 2147483647, %v4401
    %vm4428 = vcmp.eq.f32.partialorder %v4427, 8.507059e+37
    %v4429 = vand.u32 %v4401, 2147483648
    %v4430 = vor.u32 1.1754944e-38, %v4429
    %v4431 = vsel %vm4428, %v4430, %v4426
    %v4432 = vmul.f32 1.0, %v4431
    %v4433 = vrcp.pop %v4402
    %v4434 = vmul.f32 %v4402, %v4433
    %v4435 = vsub.f32 1.0, %v4434
    %v4436 = vmul.f32 %v4433, %v4435
    %v4437 = vadd.f32 %v4433, %v4436
    %vm4438 = vweird.f32 %v4402
    %vm4439 = vweird.f32 %v4433
    %vm4440 = vmor %vm4438, %vm4439
    %v4441 = vsel %vm4440, %v4433, %v4437
    %v4442 = vand.u32 2147483647, %v4402
    %vm4443 = vcmp.eq.f32.partialorder %v4442, 8.507059e+37
    %v4444 = vand.u32 %v4402, 2147483648
    %v4445 = vor.u32 1.1754944e-38, %v4444
    %v4446 = vsel %vm4443, %v4445, %v4441
    %v4447 = vmul.f32 1.0, %v4446
    %v4448 = vtanh.pop %v4390
    %v4449 = vmul.f32 %v4432, %v4234
    %v4450 = vmul.f32 %v4417, %v4448
    %v4451 = vadd.f32 %v4449, %v4450
    %v4452 = vtanh.pop %v4451
    %v4453 = vmul.f32 %v4447, %v4452
    %4454 = vst [vmem:[#allocation2 + $0x30] sm:$0xff] %v4453
    %4455 = vst [vmem:[#allocation3 + $0x8] sm:$0xff] %v4453
    %v4456 = vld [vmem:[#allocation4 + $0xe0] sm:$0xff]
    %v4457 = vld [vmem:[#allocation4 + $0xe8] sm:$0xff]
    %v4458 = vld [vmem:[#allocation4 + $0xf0] sm:$0xff]
    %v4459 = vld [vmem:[#allocation4 + $0xf8] sm:$0xff]
    %v4460 = vld [vmem:[%s2940] sm:$0xff]
    %v4461 = vld [vmem:[%s2940 + $0x8] sm:$0xff]
    %v4462 = vld [vmem:[%s2940 + $0x10] sm:$0xff]
    %v4463 = vld [vmem:[%s2940 + $0x18] sm:$0xff]
    %v4464 = vld [vmem:[%s2940 + $0x20] sm:$0xff]
    %v4465 = vld [vmem:[%s2940 + $0x28] sm:$0xff]
    %v4466 = vld [vmem:[%s2940 + $0x30] sm:$0xff]
    %v4467 = vld [vmem:[%s2940 + $0x38] sm:$0xff]
    %v4468 = vld [vmem:[%s2940 + $0x40] sm:$0xff]
    %v4469 = vld [vmem:[%s2940 + $0x48] sm:$0xff]
    %v4470 = vld [vmem:[%s2940 + $0x50] sm:$0xff]
    %v4471 = vld [vmem:[%s2940 + $0x58] sm:$0xff]
    %v4472 = vld [vmem:[%s2940 + $0x60] sm:$0xff]
    %v4473 = vld [vmem:[%s2940 + $0x68] sm:$0xff]
    %v4474 = vld [vmem:[%s2940 + $0x70] sm:$0xff]
    %v4475 = vld [vmem:[%s2940 + $0x78] sm:$0xff]
    %v4476 = vld [vmem:[%s2940 + $0x80] sm:$0xff]
    %v4477 = vld [vmem:[%s2940 + $0x88] sm:$0xff]
    %v4478 = vld [vmem:[%s2940 + $0x90] sm:$0xff]
    %v4479 = vld [vmem:[%s2940 + $0x98] sm:$0xff]
    %v4480 = vld [vmem:[%s2940 + $0xa0] sm:$0xff]
    %v4481 = vld [vmem:[%s2940 + $0xa8] sm:$0xff]
    %v4482 = vld [vmem:[%s2940 + $0xb0] sm:$0xff]
    %v4483 = vld [vmem:[%s2940 + $0xb8] sm:$0xff]
    %v4484 = vld [vmem:[%s2940 + $0xc0] sm:$0xff]
    %v4485 = vld [vmem:[%s2940 + $0xc8] sm:$0xff]
    %v4486 = vld [vmem:[%s2940 + $0xd0] sm:$0xff]
    %v4487 = vld [vmem:[%s2940 + $0xd8] sm:$0xff]
    %v4488 = vld [vmem:[%s2940 + $0xe0] sm:$0xff]
    %v4489 = vld [vmem:[%s2940 + $0xe8] sm:$0xff]
    %v4490 = vld [vmem:[%s2940 + $0xf0] sm:$0xff]
    %v4491 = vld [vmem:[%s2940 + $0xf8] sm:$0xff]
    %v4492 = vld [vmem:[%s2940 + $0x100] sm:$0xff]
    %v4493 = vld [vmem:[%s2940 + $0x108] sm:$0xff]
    %v4494 = vld [vmem:[%s2940 + $0x110] sm:$0xff]
    %v4495 = vld [vmem:[%s2940 + $0x118] sm:$0xff]
    %v4496 = vld [vmem:[%s2940 + $0x120] sm:$0xff]
    %v4497 = vld [vmem:[%s2940 + $0x128] sm:$0xff]
    %v4498 = vld [vmem:[%s2940 + $0x130] sm:$0xff]
    %v4499 = vld [vmem:[%s2940 + $0x138] sm:$0xff]
    %v4500 = vld [vmem:[%s2940 + $0x140] sm:$0xff]
    %v4501 = vld [vmem:[%s2940 + $0x148] sm:$0xff]
    %v4502 = vld [vmem:[%s2940 + $0x150] sm:$0xff]
    %v4503 = vld [vmem:[%s2940 + $0x158] sm:$0xff]
    %v4504 = vld [vmem:[%s2940 + $0x160] sm:$0xff]
    %v4505 = vld [vmem:[%s2940 + $0x168] sm:$0xff]
    %v4506 = vld [vmem:[%s2940 + $0x170] sm:$0xff]
    %v4507 = vld [vmem:[%s2940 + $0x178] sm:$0xff]
    %v4508 = vld [vmem:[%s2940 + $0x180] sm:$0xff]
    %v4509 = vld [vmem:[%s2940 + $0x188] sm:$0xff]
    %v4510 = vld [vmem:[%s2940 + $0x190] sm:$0xff]
    %v4511 = vld [vmem:[%s2940 + $0x198] sm:$0xff]
    %v4512 = vld [vmem:[%s2940 + $0x1a0] sm:$0xff]
    %v4513 = vld [vmem:[%s2940 + $0x1a8] sm:$0xff]
    %v4514 = vld [vmem:[%s2940 + $0x1b0] sm:$0xff]
    %v4515 = vld [vmem:[%s2940 + $0x1b8] sm:$0xff]
    %v4516 = vld [vmem:[%s2940 + $0x1c0] sm:$0xff]
    %v4517 = vld [vmem:[%s2940 + $0x1c8] sm:$0xff]
    %v4518 = vld [vmem:[%s2940 + $0x1d0] sm:$0xff]
    %v4519 = vld [vmem:[%s2940 + $0x1d8] sm:$0xff]
    %v4520 = vld [vmem:[%s2940 + $0x1e0] sm:$0xff]
    %v4521 = vld [vmem:[%s2940 + $0x1e8] sm:$0xff]
    %v4522 = vld [vmem:[%s2940 + $0x1f0] sm:$0xff]
    %v4523 = vld [vmem:[%s2940 + $0x1f8] sm:$0xff]
    %4524 = vmatpush.msra.mxu0 %v4520
    %4525 = vmatpush.msra.mxu0 %v4516
    %4526 = vmatpush.msra.mxu0 %v4512
    %4527 = vmatpush.msra.mxu0 %v4508
    %4528 = vmatpush.msra.mxu0 %v4504
    %4529 = vmatpush.msra.mxu0 %v4500
    %4530 = vmatpush.msra.mxu0 %v4496
    %4531 = vmatpush.msra.mxu0 %v4492
    %4532 = vmatpush.msra.mxu0 %v4488
    %4533 = vmatpush.msra.mxu0 %v4484
    %4534 = vmatpush.msra.mxu0 %v4480
    %4535 = vmatpush.msra.mxu0 %v4476
    %4536 = vmatpush.msra.mxu0 %v4472
    %4537 = vmatpush.msra.mxu0 %v4468
    %4538 = vmatpush.msra.mxu0 %v4464
    %4539 = vmatpush.msra.mxu0 %v4460
    %4540 = vmatmul.f32.gmra.mxu0 %v4453
    %v4541 = vpop.f32.mrf.mxu0
    %v4542 = vadd.f32 0.0, %v4541
    %4543 = vdwg.mxu0
    %4544 = vmatpush.msra.mxu0 %v4521
    %4545 = vmatpush.msra.mxu0 %v4517
    %4546 = vmatpush.msra.mxu0 %v4513
    %4547 = vmatpush.msra.mxu0 %v4509
    %4548 = vmatpush.msra.mxu0 %v4505
    %4549 = vmatpush.msra.mxu0 %v4501
    %4550 = vmatpush.msra.mxu0 %v4497
    %4551 = vmatpush.msra.mxu0 %v4493
    %4552 = vmatpush.msra.mxu0 %v4489
    %4553 = vmatpush.msra.mxu0 %v4485
    %4554 = vmatpush.msra.mxu0 %v4481
    %4555 = vmatpush.msra.mxu0 %v4477
    %4556 = vmatpush.msra.mxu0 %v4473
    %4557 = vmatpush.msra.mxu0 %v4469
    %4558 = vmatpush.msra.mxu0 %v4465
    %4559 = vmatpush.msra.mxu0 %v4461
    %4560 = vmatmul.f32.gmra.mxu0 %v4453
    %v4561 = vpop.f32.mrf.mxu0
    %v4562 = vadd.f32 0.0, %v4561
    %4563 = vdwg.mxu0
    %4564 = vmatpush.msra.mxu0 %v4522
    %4565 = vmatpush.msra.mxu0 %v4518
    %4566 = vmatpush.msra.mxu0 %v4514
    %4567 = vmatpush.msra.mxu0 %v4510
    %4568 = vmatpush.msra.mxu0 %v4506
    %4569 = vmatpush.msra.mxu0 %v4502
    %4570 = vmatpush.msra.mxu0 %v4498
    %4571 = vmatpush.msra.mxu0 %v4494
    %4572 = vmatpush.msra.mxu0 %v4490
    %4573 = vmatpush.msra.mxu0 %v4486
    %4574 = vmatpush.msra.mxu0 %v4482
    %4575 = vmatpush.msra.mxu0 %v4478
    %4576 = vmatpush.msra.mxu0 %v4474
    %4577 = vmatpush.msra.mxu0 %v4470
    %4578 = vmatpush.msra.mxu0 %v4466
    %4579 = vmatpush.msra.mxu0 %v4462
    %4580 = vmatmul.f32.gmra.mxu0 %v4453
    %v4581 = vpop.f32.mrf.mxu0
    %v4582 = vadd.f32 0.0, %v4581
    %4583 = vdwg.mxu0
    %4584 = vmatpush.msra.mxu0 %v4523
    %4585 = vmatpush.msra.mxu0 %v4519
    %4586 = vmatpush.msra.mxu0 %v4515
    %4587 = vmatpush.msra.mxu0 %v4511
    %4588 = vmatpush.msra.mxu0 %v4507
    %4589 = vmatpush.msra.mxu0 %v4503
    %4590 = vmatpush.msra.mxu0 %v4499
    %4591 = vmatpush.msra.mxu0 %v4495
    %4592 = vmatpush.msra.mxu0 %v4491
    %4593 = vmatpush.msra.mxu0 %v4487
    %4594 = vmatpush.msra.mxu0 %v4483
    %4595 = vmatpush.msra.mxu0 %v4479
    %4596 = vmatpush.msra.mxu0 %v4475
    %4597 = vmatpush.msra.mxu0 %v4471
    %4598 = vmatpush.msra.mxu0 %v4467
    %4599 = vmatpush.msra.mxu0 %v4463
    %4600 = vmatmul.f32.gmra.mxu0 %v4453
    %v4601 = vpop.f32.mrf.mxu0
    %v4602 = vadd.f32 0.0, %v4601
    %4603 = vdwg.mxu0
    %v4604 = vadd.f32 %v4456, %v4542
    %v4605 = vadd.f32 %v4457, %v4562
    %v4606 = vadd.f32 %v4458, %v4582
    %v4607 = vadd.f32 %v4459, %v4602
    %v4608 = vxor.u32 %v4604, 2147483648
    %v4609 = vxor.u32 %v4605, 2147483648
    %v4610 = vxor.u32 %v4606, 2147483648
    %v4611 = vmul.f32 %v4608, 1.442695
    %v4612 = vpow.pop %v4611
    %v4613 = vmul.f32 %v4609, 1.442695
    %v4614 = vpow.pop %v4613
    %v4615 = vmul.f32 %v4610, 1.442695
    %v4616 = vpow.pop %v4615
    %v4617 = vadd.f32 %v4612, 1.0
    %v4618 = vadd.f32 %v4614, 1.0
    %v4619 = vadd.f32 %v4616, 1.0
    %v4620 = vrcp.pop %v4617
    %v4621 = vmul.f32 %v4617, %v4620
    %v4622 = vsub.f32 1.0, %v4621
    %v4623 = vmul.f32 %v4620, %v4622
    %v4624 = vadd.f32 %v4620, %v4623
    %vm4625 = vweird.f32 %v4617
    %vm4626 = vweird.f32 %v4620
    %vm4627 = vmor %vm4625, %vm4626
    %v4628 = vsel %vm4627, %v4620, %v4624
    %v4629 = vand.u32 2147483647, %v4617
    %vm4630 = vcmp.eq.f32.partialorder %v4629, 8.507059e+37
    %v4631 = vand.u32 %v4617, 2147483648
    %v4632 = vor.u32 1.1754944e-38, %v4631
    %v4633 = vsel %vm4630, %v4632, %v4628
    %v4634 = vmul.f32 1.0, %v4633
    %v4635 = vrcp.pop %v4618
    %v4636 = vmul.f32 %v4618, %v4635
    %v4637 = vsub.f32 1.0, %v4636
    %v4638 = vmul.f32 %v4635, %v4637
    %v4639 = vadd.f32 %v4635, %v4638
    %vm4640 = vweird.f32 %v4618
    %vm4641 = vweird.f32 %v4635
    %vm4642 = vmor %vm4640, %vm4641
    %v4643 = vsel %vm4642, %v4635, %v4639
    %v4644 = vand.u32 2147483647, %v4618
    %vm4645 = vcmp.eq.f32.partialorder %v4644, 8.507059e+37
    %v4646 = vand.u32 %v4618, 2147483648
    %v4647 = vor.u32 1.1754944e-38, %v4646
    %v4648 = vsel %vm4645, %v4647, %v4643
    %v4649 = vmul.f32 1.0, %v4648
    %v4650 = vrcp.pop %v4619
    %v4651 = vmul.f32 %v4619, %v4650
    %v4652 = vsub.f32 1.0, %v4651
    %v4653 = vmul.f32 %v4650, %v4652
    %v4654 = vadd.f32 %v4650, %v4653
    %vm4655 = vweird.f32 %v4619
    %vm4656 = vweird.f32 %v4650
    %vm4657 = vmor %vm4655, %vm4656
    %v4658 = vsel %vm4657, %v4650, %v4654
    %v4659 = vand.u32 2147483647, %v4619
    %vm4660 = vcmp.eq.f32.partialorder %v4659, 8.507059e+37
    %v4661 = vand.u32 %v4619, 2147483648
    %v4662 = vor.u32 1.1754944e-38, %v4661
    %v4663 = vsel %vm4660, %v4662, %v4658
    %v4664 = vmul.f32 1.0, %v4663
    %v4665 = vtanh.pop %v4607
    %v4666 = vmul.f32 %v4649, %v4451
    %v4667 = vmul.f32 %v4634, %v4665
    %v4668 = vadd.f32 %v4666, %v4667
    %v4669 = vtanh.pop %v4668
    %v4670 = vmul.f32 %v4664, %v4669
    %4671 = vst [vmem:[#allocation2 + $0x38] sm:$0xff] %v4670
    %4672 = vst [vmem:[#allocation3] sm:$0xff] %v4670
    %v4673 = vld [vmem:[#allocation2] sm:$0xff]
    %v4674 = vld [vmem:[#allocation2 + $0x8] sm:$0xff]
    %v4675 = vld [vmem:[#allocation2 + $0x10] sm:$0xff]
    %v4676 = vld [vmem:[#allocation2 + $0x18] sm:$0xff]
    %v4677 = vld [vmem:[#allocation2 + $0x20] sm:$0xff]
    %v4678 = vld [vmem:[#allocation2 + $0x28] sm:$0xff]
    %v4679 = vld [vmem:[#allocation2 + $0x30] sm:$0xff]
    %v4680 = vld [vmem:[#allocation2 + $0x38] sm:$0xff]
    %s4681 = scalar_lea.vmem [#allocation5], 1024
    %v4682 = vld [vmem:[%s4681] sm:$0xff]
    %v4683 = vld [vmem:[%s4681 + $0x8] sm:$0xff]
    %v4684 = vld [vmem:[%s4681 + $0x10] sm:$0xff]
    %v4685 = vld [vmem:[%s4681 + $0x18] sm:$0xff]
    %v4686 = vld [vmem:[%s4681 + $0x20] sm:$0xff]
    %v4687 = vld [vmem:[%s4681 + $0x28] sm:$0xff]
    %v4688 = vld [vmem:[%s4681 + $0x30] sm:$0xff]
    %v4689 = vld [vmem:[%s4681 + $0x38] sm:$0xff]
    %v4690 = vld [vmem:[%s4681 + $0x40] sm:$0xff]
    %v4691 = vld [vmem:[%s4681 + $0x48] sm:$0xff]
    %v4692 = vld [vmem:[%s4681 + $0x50] sm:$0xff]
    %v4693 = vld [vmem:[%s4681 + $0x58] sm:$0xff]
    %v4694 = vld [vmem:[%s4681 + $0x60] sm:$0xff]
    %v4695 = vld [vmem:[%s4681 + $0x68] sm:$0xff]
    %v4696 = vld [vmem:[%s4681 + $0x70] sm:$0xff]
    %v4697 = vld [vmem:[%s4681 + $0x78] sm:$0xff]
    %v4698 = vld [vmem:[%s4681 + $0x80] sm:$0xff]
    %v4699 = vld [vmem:[%s4681 + $0x88] sm:$0xff]
    %v4700 = vld [vmem:[%s4681 + $0x90] sm:$0xff]
    %v4701 = vld [vmem:[%s4681 + $0x98] sm:$0xff]
    %v4702 = vld [vmem:[%s4681 + $0xa0] sm:$0xff]
    %v4703 = vld [vmem:[%s4681 + $0xa8] sm:$0xff]
    %v4704 = vld [vmem:[%s4681 + $0xb0] sm:$0xff]
    %v4705 = vld [vmem:[%s4681 + $0xb8] sm:$0xff]
    %v4706 = vld [vmem:[%s4681 + $0xc0] sm:$0xff]
    %v4707 = vld [vmem:[%s4681 + $0xc8] sm:$0xff]
    %v4708 = vld [vmem:[%s4681 + $0xd0] sm:$0xff]
    %v4709 = vld [vmem:[%s4681 + $0xd8] sm:$0xff]
    %v4710 = vld [vmem:[%s4681 + $0xe0] sm:$0xff]
    %v4711 = vld [vmem:[%s4681 + $0xe8] sm:$0xff]
    %v4712 = vld [vmem:[%s4681 + $0xf0] sm:$0xff]
    %v4713 = vld [vmem:[%s4681 + $0xf8] sm:$0xff]
    %v4714 = vld [vmem:[%s4681 + $0x100] sm:$0xff]
    %v4715 = vld [vmem:[%s4681 + $0x108] sm:$0xff]
    %v4716 = vld [vmem:[%s4681 + $0x110] sm:$0xff]
    %v4717 = vld [vmem:[%s4681 + $0x118] sm:$0xff]
    %v4718 = vld [vmem:[%s4681 + $0x120] sm:$0xff]
    %v4719 = vld [vmem:[%s4681 + $0x128] sm:$0xff]
    %v4720 = vld [vmem:[%s4681 + $0x130] sm:$0xff]
    %v4721 = vld [vmem:[%s4681 + $0x138] sm:$0xff]
    %v4722 = vld [vmem:[%s4681 + $0x140] sm:$0xff]
    %v4723 = vld [vmem:[%s4681 + $0x148] sm:$0xff]
    %v4724 = vld [vmem:[%s4681 + $0x150] sm:$0xff]
    %v4725 = vld [vmem:[%s4681 + $0x158] sm:$0xff]
    %v4726 = vld [vmem:[%s4681 + $0x160] sm:$0xff]
    %v4727 = vld [vmem:[%s4681 + $0x168] sm:$0xff]
    %v4728 = vld [vmem:[%s4681 + $0x170] sm:$0xff]
    %v4729 = vld [vmem:[%s4681 + $0x178] sm:$0xff]
    %v4730 = vld [vmem:[%s4681 + $0x180] sm:$0xff]
    %v4731 = vld [vmem:[%s4681 + $0x188] sm:$0xff]
    %v4732 = vld [vmem:[%s4681 + $0x190] sm:$0xff]
    %v4733 = vld [vmem:[%s4681 + $0x198] sm:$0xff]
    %v4734 = vld [vmem:[%s4681 + $0x1a0] sm:$0xff]
    %v4735 = vld [vmem:[%s4681 + $0x1a8] sm:$0xff]
    %v4736 = vld [vmem:[%s4681 + $0x1b0] sm:$0xff]
    %v4737 = vld [vmem:[%s4681 + $0x1b8] sm:$0xff]
    %v4738 = vld [vmem:[%s4681 + $0x1c0] sm:$0xff]
    %v4739 = vld [vmem:[%s4681 + $0x1c8] sm:$0xff]
    %v4740 = vld [vmem:[%s4681 + $0x1d0] sm:$0xff]
    %v4741 = vld [vmem:[%s4681 + $0x1d8] sm:$0xff]
    %v4742 = vld [vmem:[%s4681 + $0x1e0] sm:$0xff]
    %v4743 = vld [vmem:[%s4681 + $0x1e8] sm:$0xff]
    %v4744 = vld [vmem:[%s4681 + $0x1f0] sm:$0xff]
    %v4745 = vld [vmem:[%s4681 + $0x1f8] sm:$0xff]
    %v4746 = vld [vmem:[#allocation3] sm:$0xff]
    %v4747 = vld [vmem:[#allocation3 + $0x8] sm:$0xff]
    %v4748 = vld [vmem:[#allocation3 + $0x10] sm:$0xff]
    %v4749 = vld [vmem:[#allocation3 + $0x18] sm:$0xff]
    %v4750 = vld [vmem:[#allocation3 + $0x20] sm:$0xff]
    %v4751 = vld [vmem:[#allocation3 + $0x28] sm:$0xff]
    %v4752 = vld [vmem:[#allocation3 + $0x30] sm:$0xff]
    %v4753 = vld [vmem:[#allocation3 + $0x38] sm:$0xff]
    %s4754 = scalar_lea.vmem [#allocation7], 1024
    %v4755 = vld [vmem:[%s4754] sm:$0xff]
    %v4756 = vld [vmem:[%s4754 + $0x8] sm:$0xff]
    %v4757 = vld [vmem:[%s4754 + $0x10] sm:$0xff]
    %v4758 = vld [vmem:[%s4754 + $0x18] sm:$0xff]
    %v4759 = vld [vmem:[%s4754 + $0x20] sm:$0xff]
    %v4760 = vld [vmem:[%s4754 + $0x28] sm:$0xff]
    %v4761 = vld [vmem:[%s4754 + $0x30] sm:$0xff]
    %v4762 = vld [vmem:[%s4754 + $0x38] sm:$0xff]
    %v4763 = vld [vmem:[%s4754 + $0x40] sm:$0xff]
    %v4764 = vld [vmem:[%s4754 + $0x48] sm:$0xff]
    %v4765 = vld [vmem:[%s4754 + $0x50] sm:$0xff]
    %v4766 = vld [vmem:[%s4754 + $0x58] sm:$0xff]
    %v4767 = vld [vmem:[%s4754 + $0x60] sm:$0xff]
    %v4768 = vld [vmem:[%s4754 + $0x68] sm:$0xff]
    %v4769 = vld [vmem:[%s4754 + $0x70] sm:$0xff]
    %v4770 = vld [vmem:[%s4754 + $0x78] sm:$0xff]
    %v4771 = vld [vmem:[%s4754 + $0x80] sm:$0xff]
    %v4772 = vld [vmem:[%s4754 + $0x88] sm:$0xff]
    %v4773 = vld [vmem:[%s4754 + $0x90] sm:$0xff]
    %v4774 = vld [vmem:[%s4754 + $0x98] sm:$0xff]
    %v4775 = vld [vmem:[%s4754 + $0xa0] sm:$0xff]
    %v4776 = vld [vmem:[%s4754 + $0xa8] sm:$0xff]
    %v4777 = vld [vmem:[%s4754 + $0xb0] sm:$0xff]
    %v4778 = vld [vmem:[%s4754 + $0xb8] sm:$0xff]
    %v4779 = vld [vmem:[%s4754 + $0xc0] sm:$0xff]
    %v4780 = vld [vmem:[%s4754 + $0xc8] sm:$0xff]
    %v4781 = vld [vmem:[%s4754 + $0xd0] sm:$0xff]
    %v4782 = vld [vmem:[%s4754 + $0xd8] sm:$0xff]
    %v4783 = vld [vmem:[%s4754 + $0xe0] sm:$0xff]
    %v4784 = vld [vmem:[%s4754 + $0xe8] sm:$0xff]
    %v4785 = vld [vmem:[%s4754 + $0xf0] sm:$0xff]
    %v4786 = vld [vmem:[%s4754 + $0xf8] sm:$0xff]
    %v4787 = vld [vmem:[%s4754 + $0x100] sm:$0xff]
    %v4788 = vld [vmem:[%s4754 + $0x108] sm:$0xff]
    %v4789 = vld [vmem:[%s4754 + $0x110] sm:$0xff]
    %v4790 = vld [vmem:[%s4754 + $0x118] sm:$0xff]
    %v4791 = vld [vmem:[%s4754 + $0x120] sm:$0xff]
    %v4792 = vld [vmem:[%s4754 + $0x128] sm:$0xff]
    %v4793 = vld [vmem:[%s4754 + $0x130] sm:$0xff]
    %v4794 = vld [vmem:[%s4754 + $0x138] sm:$0xff]
    %v4795 = vld [vmem:[%s4754 + $0x140] sm:$0xff]
    %v4796 = vld [vmem:[%s4754 + $0x148] sm:$0xff]
    %v4797 = vld [vmem:[%s4754 + $0x150] sm:$0xff]
    %v4798 = vld [vmem:[%s4754 + $0x158] sm:$0xff]
    %v4799 = vld [vmem:[%s4754 + $0x160] sm:$0xff]
    %v4800 = vld [vmem:[%s4754 + $0x168] sm:$0xff]
    %v4801 = vld [vmem:[%s4754 + $0x170] sm:$0xff]
    %v4802 = vld [vmem:[%s4754 + $0x178] sm:$0xff]
    %v4803 = vld [vmem:[%s4754 + $0x180] sm:$0xff]
    %v4804 = vld [vmem:[%s4754 + $0x188] sm:$0xff]
    %v4805 = vld [vmem:[%s4754 + $0x190] sm:$0xff]
    %v4806 = vld [vmem:[%s4754 + $0x198] sm:$0xff]
    %v4807 = vld [vmem:[%s4754 + $0x1a0] sm:$0xff]
    %v4808 = vld [vmem:[%s4754 + $0x1a8] sm:$0xff]
    %v4809 = vld [vmem:[%s4754 + $0x1b0] sm:$0xff]
    %v4810 = vld [vmem:[%s4754 + $0x1b8] sm:$0xff]
    %v4811 = vld [vmem:[%s4754 + $0x1c0] sm:$0xff]
    %v4812 = vld [vmem:[%s4754 + $0x1c8] sm:$0xff]
    %v4813 = vld [vmem:[%s4754 + $0x1d0] sm:$0xff]
    %v4814 = vld [vmem:[%s4754 + $0x1d8] sm:$0xff]
    %v4815 = vld [vmem:[%s4754 + $0x1e0] sm:$0xff]
    %v4816 = vld [vmem:[%s4754 + $0x1e8] sm:$0xff]
    %v4817 = vld [vmem:[%s4754 + $0x1f0] sm:$0xff]
    %v4818 = vld [vmem:[%s4754 + $0x1f8] sm:$0xff]
    %4819 = vmatpush.msra.mxu0 %v4815
    %4820 = vmatpush.msra.mxu0 %v4811
    %4821 = vmatpush.msra.mxu0 %v4807
    %4822 = vmatpush.msra.mxu0 %v4803
    %4823 = vmatpush.msra.mxu0 %v4799
    %4824 = vmatpush.msra.mxu0 %v4795
    %4825 = vmatpush.msra.mxu0 %v4791
    %4826 = vmatpush.msra.mxu0 %v4787
    %4827 = vmatpush.msra.mxu0 %v4783
    %4828 = vmatpush.msra.mxu0 %v4779
    %4829 = vmatpush.msra.mxu0 %v4775
    %4830 = vmatpush.msra.mxu0 %v4771
    %4831 = vmatpush.msra.mxu0 %v4767
    %4832 = vmatpush.msra.mxu0 %v4763
    %4833 = vmatpush.msra.mxu0 %v4759
    %4834 = vmatpush.msra.mxu0 %v4755
    %4835 = vmatmul.f32.gmra.mxu0 %v4746
    %v4836 = vpop.f32.mrf.mxu0
    %v4837 = vadd.f32 0.0, %v4836
    %4838 = vmatmul.f32.gmra.mxu0 %v4747
    %v4839 = vpop.f32.mrf.mxu0
    %v4840 = vadd.f32 0.0, %v4839
    %4841 = vmatmul.f32.gmra.mxu0 %v4748
    %v4842 = vpop.f32.mrf.mxu0
    %v4843 = vadd.f32 0.0, %v4842
    %4844 = vmatmul.f32.gmra.mxu0 %v4749
    %v4845 = vpop.f32.mrf.mxu0
    %v4846 = vadd.f32 0.0, %v4845
    %4847 = vmatmul.f32.gmra.mxu0 %v4750
    %v4848 = vpop.f32.mrf.mxu0
    %v4849 = vadd.f32 0.0, %v4848
    %4850 = vmatmul.f32.gmra.mxu0 %v4751
    %v4851 = vpop.f32.mrf.mxu0
    %v4852 = vadd.f32 0.0, %v4851
    %4853 = vmatmul.f32.gmra.mxu0 %v4752
    %v4854 = vpop.f32.mrf.mxu0
    %v4855 = vadd.f32 0.0, %v4854
    %4856 = vmatmul.f32.gmra.mxu0 %v4753
    %v4857 = vpop.f32.mrf.mxu0
    %v4858 = vadd.f32 0.0, %v4857
    %4859 = vdwg.mxu0
    %4860 = vmatpush.msra.mxu0 %v4816
    %4861 = vmatpush.msra.mxu0 %v4812
    %4862 = vmatpush.msra.mxu0 %v4808
    %4863 = vmatpush.msra.mxu0 %v4804
    %4864 = vmatpush.msra.mxu0 %v4800
    %4865 = vmatpush.msra.mxu0 %v4796
    %4866 = vmatpush.msra.mxu0 %v4792
    %4867 = vmatpush.msra.mxu0 %v4788
    %4868 = vmatpush.msra.mxu0 %v4784
    %4869 = vmatpush.msra.mxu0 %v4780
    %4870 = vmatpush.msra.mxu0 %v4776
    %4871 = vmatpush.msra.mxu0 %v4772
    %4872 = vmatpush.msra.mxu0 %v4768
    %4873 = vmatpush.msra.mxu0 %v4764
    %4874 = vmatpush.msra.mxu0 %v4760
    %4875 = vmatpush.msra.mxu0 %v4756
    %4876 = vmatmul.f32.gmra.mxu0 %v4746
    %v4877 = vpop.f32.mrf.mxu0
    %v4878 = vadd.f32 0.0, %v4877
    %4879 = vmatmul.f32.gmra.mxu0 %v4747
    %v4880 = vpop.f32.mrf.mxu0
    %v4881 = vadd.f32 0.0, %v4880
    %4882 = vmatmul.f32.gmra.mxu0 %v4748
    %v4883 = vpop.f32.mrf.mxu0
    %v4884 = vadd.f32 0.0, %v4883
    %4885 = vmatmul.f32.gmra.mxu0 %v4749
    %v4886 = vpop.f32.mrf.mxu0
    %v4887 = vadd.f32 0.0, %v4886
    %4888 = vmatmul.f32.gmra.mxu0 %v4750
    %v4889 = vpop.f32.mrf.mxu0
    %v4890 = vadd.f32 0.0, %v4889
    %4891 = vmatmul.f32.gmra.mxu0 %v4751
    %v4892 = vpop.f32.mrf.mxu0
    %v4893 = vadd.f32 0.0, %v4892
    %4894 = vmatmul.f32.gmra.mxu0 %v4752
    %v4895 = vpop.f32.mrf.mxu0
    %v4896 = vadd.f32 0.0, %v4895
    %4897 = vmatmul.f32.gmra.mxu0 %v4753
    %v4898 = vpop.f32.mrf.mxu0
    %v4899 = vadd.f32 0.0, %v4898
    %4900 = vdwg.mxu0
    %4901 = vmatpush.msra.mxu0 %v4817
    %4902 = vmatpush.msra.mxu0 %v4813
    %4903 = vmatpush.msra.mxu0 %v4809
    %4904 = vmatpush.msra.mxu0 %v4805
    %4905 = vmatpush.msra.mxu0 %v4801
    %4906 = vmatpush.msra.mxu0 %v4797
    %4907 = vmatpush.msra.mxu0 %v4793
    %4908 = vmatpush.msra.mxu0 %v4789
    %4909 = vmatpush.msra.mxu0 %v4785
    %4910 = vmatpush.msra.mxu0 %v4781
    %4911 = vmatpush.msra.mxu0 %v4777
    %4912 = vmatpush.msra.mxu0 %v4773
    %4913 = vmatpush.msra.mxu0 %v4769
    %4914 = vmatpush.msra.mxu0 %v4765
    %4915 = vmatpush.msra.mxu0 %v4761
    %4916 = vmatpush.msra.mxu0 %v4757
    %4917 = vmatmul.f32.gmra.mxu0 %v4746
    %v4918 = vpop.f32.mrf.mxu0
    %v4919 = vadd.f32 0.0, %v4918
    %4920 = vmatmul.f32.gmra.mxu0 %v4747
    %v4921 = vpop.f32.mrf.mxu0
    %v4922 = vadd.f32 0.0, %v4921
    %4923 = vmatmul.f32.gmra.mxu0 %v4748
    %v4924 = vpop.f32.mrf.mxu0
    %v4925 = vadd.f32 0.0, %v4924
    %4926 = vmatmul.f32.gmra.mxu0 %v4749
    %v4927 = vpop.f32.mrf.mxu0
    %v4928 = vadd.f32 0.0, %v4927
    %4929 = vmatmul.f32.gmra.mxu0 %v4750
    %v4930 = vpop.f32.mrf.mxu0
    %v4931 = vadd.f32 0.0, %v4930
    %4932 = vmatmul.f32.gmra.mxu0 %v4751
    %v4933 = vpop.f32.mrf.mxu0
    %v4934 = vadd.f32 0.0, %v4933
    %4935 = vmatmul.f32.gmra.mxu0 %v4752
    %v4936 = vpop.f32.mrf.mxu0
    %v4937 = vadd.f32 0.0, %v4936
    %4938 = vmatmul.f32.gmra.mxu0 %v4753
    %v4939 = vpop.f32.mrf.mxu0
    %v4940 = vadd.f32 0.0, %v4939
    %4941 = vdwg.mxu0
    %4942 = vmatpush.msra.mxu0 %v4818
    %4943 = vmatpush.msra.mxu0 %v4814
    %4944 = vmatpush.msra.mxu0 %v4810
    %4945 = vmatpush.msra.mxu0 %v4806
    %4946 = vmatpush.msra.mxu0 %v4802
    %4947 = vmatpush.msra.mxu0 %v4798
    %4948 = vmatpush.msra.mxu0 %v4794
    %4949 = vmatpush.msra.mxu0 %v4790
    %4950 = vmatpush.msra.mxu0 %v4786
    %4951 = vmatpush.msra.mxu0 %v4782
    %4952 = vmatpush.msra.mxu0 %v4778
    %4953 = vmatpush.msra.mxu0 %v4774
    %4954 = vmatpush.msra.mxu0 %v4770
    %4955 = vmatpush.msra.mxu0 %v4766
    %4956 = vmatpush.msra.mxu0 %v4762
    %4957 = vmatpush.msra.mxu0 %v4758
    %4958 = vmatmul.f32.gmra.mxu0 %v4746
    %v4959 = vpop.f32.mrf.mxu0
    %v4960 = vadd.f32 0.0, %v4959
    %4961 = vmatmul.f32.gmra.mxu0 %v4747
    %v4962 = vpop.f32.mrf.mxu0
    %v4963 = vadd.f32 0.0, %v4962
    %4964 = vmatmul.f32.gmra.mxu0 %v4748
    %v4965 = vpop.f32.mrf.mxu0
    %v4966 = vadd.f32 0.0, %v4965
    %4967 = vmatmul.f32.gmra.mxu0 %v4749
    %v4968 = vpop.f32.mrf.mxu0
    %v4969 = vadd.f32 0.0, %v4968
    %4970 = vmatmul.f32.gmra.mxu0 %v4750
    %v4971 = vpop.f32.mrf.mxu0
    %v4972 = vadd.f32 0.0, %v4971
    %4973 = vmatmul.f32.gmra.mxu0 %v4751
    %v4974 = vpop.f32.mrf.mxu0
    %v4975 = vadd.f32 0.0, %v4974
    %4976 = vmatmul.f32.gmra.mxu0 %v4752
    %v4977 = vpop.f32.mrf.mxu0
    %v4978 = vadd.f32 0.0, %v4977
    %4979 = vmatmul.f32.gmra.mxu0 %v4753
    %v4980 = vpop.f32.mrf.mxu0
    %v4981 = vadd.f32 0.0, %v4980
    %4982 = vdwg.mxu0
    %4983 = vmatpush.msra.mxu0 %v4742
    %4984 = vmatpush.msra.mxu0 %v4738
    %4985 = vmatpush.msra.mxu0 %v4734
    %4986 = vmatpush.msra.mxu0 %v4730
    %4987 = vmatpush.msra.mxu0 %v4726
    %4988 = vmatpush.msra.mxu0 %v4722
    %4989 = vmatpush.msra.mxu0 %v4718
    %4990 = vmatpush.msra.mxu0 %v4714
    %4991 = vmatpush.msra.mxu0 %v4710
    %4992 = vmatpush.msra.mxu0 %v4706
    %4993 = vmatpush.msra.mxu0 %v4702
    %4994 = vmatpush.msra.mxu0 %v4698
    %4995 = vmatpush.msra.mxu0 %v4694
    %4996 = vmatpush.msra.mxu0 %v4690
    %4997 = vmatpush.msra.mxu0 %v4686
    %4998 = vmatpush.msra.mxu0 %v4682
    %4999 = vmatmul.f32.gmra.mxu0 %v4673
    %v5000 = vpop.f32.mrf.mxu0
    %v5001 = vadd.f32 %v4837, %v5000
    %5002 = vmatmul.f32.gmra.mxu0 %v4674
    %v5003 = vpop.f32.mrf.mxu0
    %v5004 = vadd.f32 %v4840, %v5003
    %5005 = vmatmul.f32.gmra.mxu0 %v4675
    %v5006 = vpop.f32.mrf.mxu0
    %v5007 = vadd.f32 %v4843, %v5006
    %5008 = vmatmul.f32.gmra.mxu0 %v4676
    %v5009 = vpop.f32.mrf.mxu0
    %v5010 = vadd.f32 %v4846, %v5009
    %5011 = vmatmul.f32.gmra.mxu0 %v4677
    %v5012 = vpop.f32.mrf.mxu0
    %v5013 = vadd.f32 %v4849, %v5012
    %5014 = vmatmul.f32.gmra.mxu0 %v4678
    %v5015 = vpop.f32.mrf.mxu0
    %v5016 = vadd.f32 %v4852, %v5015
    %5017 = vmatmul.f32.gmra.mxu0 %v4679
    %v5018 = vpop.f32.mrf.mxu0
    %v5019 = vadd.f32 %v4855, %v5018
    %5020 = vmatmul.f32.gmra.mxu0 %v4680
    %v5021 = vpop.f32.mrf.mxu0
    %v5022 = vadd.f32 %v4858, %v5021
    %5023 = vdwg.mxu0
    %5024 = vmatpush.msra.mxu0 %v4743
    %5025 = vmatpush.msra.mxu0 %v4739
    %5026 = vmatpush.msra.mxu0 %v4735
    %5027 = vmatpush.msra.mxu0 %v4731
    %5028 = vmatpush.msra.mxu0 %v4727
    %5029 = vmatpush.msra.mxu0 %v4723
    %5030 = vmatpush.msra.mxu0 %v4719
    %5031 = vmatpush.msra.mxu0 %v4715
    %5032 = vmatpush.msra.mxu0 %v4711
    %5033 = vmatpush.msra.mxu0 %v4707
    %5034 = vmatpush.msra.mxu0 %v4703
    %5035 = vmatpush.msra.mxu0 %v4699
    %5036 = vmatpush.msra.mxu0 %v4695
    %5037 = vmatpush.msra.mxu0 %v4691
    %5038 = vmatpush.msra.mxu0 %v4687
    %5039 = vmatpush.msra.mxu0 %v4683
    %5040 = vmatmul.f32.gmra.mxu0 %v4673
    %v5041 = vpop.f32.mrf.mxu0
    %v5042 = vadd.f32 %v4878, %v5041
    %5043 = vmatmul.f32.gmra.mxu0 %v4674
    %v5044 = vpop.f32.mrf.mxu0
    %v5045 = vadd.f32 %v4881, %v5044
    %5046 = vmatmul.f32.gmra.mxu0 %v4675
    %v5047 = vpop.f32.mrf.mxu0
    %v5048 = vadd.f32 %v4884, %v5047
    %5049 = vmatmul.f32.gmra.mxu0 %v4676
    %v5050 = vpop.f32.mrf.mxu0
    %v5051 = vadd.f32 %v4887, %v5050
    %5052 = vmatmul.f32.gmra.mxu0 %v4677
    %v5053 = vpop.f32.mrf.mxu0
    %v5054 = vadd.f32 %v4890, %v5053
    %5055 = vmatmul.f32.gmra.mxu0 %v4678
    %v5056 = vpop.f32.mrf.mxu0
    %v5057 = vadd.f32 %v4893, %v5056
    %5058 = vmatmul.f32.gmra.mxu0 %v4679
    %v5059 = vpop.f32.mrf.mxu0
    %v5060 = vadd.f32 %v4896, %v5059
    %5061 = vmatmul.f32.gmra.mxu0 %v4680
    %v5062 = vpop.f32.mrf.mxu0
    %v5063 = vadd.f32 %v4899, %v5062
    %5064 = vdwg.mxu0
    %5065 = vmatpush.msra.mxu0 %v4744
    %5066 = vmatpush.msra.mxu0 %v4740
    %5067 = vmatpush.msra.mxu0 %v4736
    %5068 = vmatpush.msra.mxu0 %v4732
    %5069 = vmatpush.msra.mxu0 %v4728
    %5070 = vmatpush.msra.mxu0 %v4724
    %5071 = vmatpush.msra.mxu0 %v4720
    %5072 = vmatpush.msra.mxu0 %v4716
    %5073 = vmatpush.msra.mxu0 %v4712
    %5074 = vmatpush.msra.mxu0 %v4708
    %5075 = vmatpush.msra.mxu0 %v4704
    %5076 = vmatpush.msra.mxu0 %v4700
    %5077 = vmatpush.msra.mxu0 %v4696
    %5078 = vmatpush.msra.mxu0 %v4692
    %5079 = vmatpush.msra.mxu0 %v4688
    %5080 = vmatpush.msra.mxu0 %v4684
    %5081 = vmatmul.f32.gmra.mxu0 %v4673
    %v5082 = vpop.f32.mrf.mxu0
    %v5083 = vadd.f32 %v4919, %v5082
    %5084 = vmatmul.f32.gmra.mxu0 %v4674
    %v5085 = vpop.f32.mrf.mxu0
    %v5086 = vadd.f32 %v4922, %v5085
    %5087 = vmatmul.f32.gmra.mxu0 %v4675
    %v5088 = vpop.f32.mrf.mxu0
    %v5089 = vadd.f32 %v4925, %v5088
    %5090 = vmatmul.f32.gmra.mxu0 %v4676
    %v5091 = vpop.f32.mrf.mxu0
    %v5092 = vadd.f32 %v4928, %v5091
    %5093 = vmatmul.f32.gmra.mxu0 %v4677
    %v5094 = vpop.f32.mrf.mxu0
    %v5095 = vadd.f32 %v4931, %v5094
    %5096 = vmatmul.f32.gmra.mxu0 %v4678
    %v5097 = vpop.f32.mrf.mxu0
    %v5098 = vadd.f32 %v4934, %v5097
    %5099 = vmatmul.f32.gmra.mxu0 %v4679
    %v5100 = vpop.f32.mrf.mxu0
    %v5101 = vadd.f32 %v4937, %v5100
    %5102 = vmatmul.f32.gmra.mxu0 %v4680
    %v5103 = vpop.f32.mrf.mxu0
    %v5104 = vadd.f32 %v4940, %v5103
    %5105 = vdwg.mxu0
    %5106 = vmatpush.msra.mxu0 %v4745
    %5107 = vmatpush.msra.mxu0 %v4741
    %5108 = vmatpush.msra.mxu0 %v4737
    %5109 = vmatpush.msra.mxu0 %v4733
    %5110 = vmatpush.msra.mxu0 %v4729
    %5111 = vmatpush.msra.mxu0 %v4725
    %5112 = vmatpush.msra.mxu0 %v4721
    %5113 = vmatpush.msra.mxu0 %v4717
    %5114 = vmatpush.msra.mxu0 %v4713
    %5115 = vmatpush.msra.mxu0 %v4709
    %5116 = vmatpush.msra.mxu0 %v4705
    %5117 = vmatpush.msra.mxu0 %v4701
    %5118 = vmatpush.msra.mxu0 %v4697
    %5119 = vmatpush.msra.mxu0 %v4693
    %5120 = vmatpush.msra.mxu0 %v4689
    %5121 = vmatpush.msra.mxu0 %v4685
    %5122 = vmatmul.f32.gmra.mxu0 %v4673
    %v5123 = vpop.f32.mrf.mxu0
    %v5124 = vadd.f32 %v4960, %v5123
    %5125 = vmatmul.f32.gmra.mxu0 %v4674
    %v5126 = vpop.f32.mrf.mxu0
    %v5127 = vadd.f32 %v4963, %v5126
    %5128 = vmatmul.f32.gmra.mxu0 %v4675
    %v5129 = vpop.f32.mrf.mxu0
    %v5130 = vadd.f32 %v4966, %v5129
    %5131 = vmatmul.f32.gmra.mxu0 %v4676
    %v5132 = vpop.f32.mrf.mxu0
    %v5133 = vadd.f32 %v4969, %v5132
    %5134 = vmatmul.f32.gmra.mxu0 %v4677
    %v5135 = vpop.f32.mrf.mxu0
    %v5136 = vadd.f32 %v4972, %v5135
    %5137 = vmatmul.f32.gmra.mxu0 %v4678
    %v5138 = vpop.f32.mrf.mxu0
    %v5139 = vadd.f32 %v4975, %v5138
    %5140 = vmatmul.f32.gmra.mxu0 %v4679
    %v5141 = vpop.f32.mrf.mxu0
    %v5142 = vadd.f32 %v4978, %v5141
    %5143 = vmatmul.f32.gmra.mxu0 %v4680
    %v5144 = vpop.f32.mrf.mxu0
    %v5145 = vadd.f32 %v4981, %v5144
    %5146 = vdwg.mxu0
    %s5147 = scalar_lea.vmem %s4, 8
    %v5148 = vld [vmem:[%s5147] sm:$0xf]
    %v5150 = vperm.slane %v5148, 0
    %v5151 = vperm.slane %v5148, 1
    %v5152 = vperm.slane %v5148, 2
    %v5153 = vperm.slane %v5148, 3
    %v5158 = vadd.f32 %v5001, %v5150
    %v5159 = vadd.f32 %v5042, %v5151
    %v5160 = vadd.f32 %v5083, %v5152
    %v5161 = vadd.f32 %v5124, %v5153
    %v5162 = vadd.f32 %v5004, %v5150
    %v5163 = vadd.f32 %v5045, %v5151
    %v5164 = vadd.f32 %v5086, %v5152
    %v5165 = vadd.f32 %v5127, %v5153
    %v5166 = vadd.f32 %v5007, %v5150
    %v5167 = vadd.f32 %v5048, %v5151
    %v5168 = vadd.f32 %v5089, %v5152
    %v5169 = vadd.f32 %v5130, %v5153
    %v5170 = vadd.f32 %v5010, %v5150
    %v5171 = vadd.f32 %v5051, %v5151
    %v5172 = vadd.f32 %v5092, %v5152
    %v5173 = vadd.f32 %v5133, %v5153
    %v5174 = vadd.f32 %v5013, %v5150
    %v5175 = vadd.f32 %v5054, %v5151
    %v5176 = vadd.f32 %v5095, %v5152
    %v5177 = vadd.f32 %v5136, %v5153
    %v5178 = vadd.f32 %v5016, %v5150
    %v5179 = vadd.f32 %v5057, %v5151
    %v5180 = vadd.f32 %v5098, %v5152
    %v5181 = vadd.f32 %v5139, %v5153
    %v5182 = vadd.f32 %v5019, %v5150
    %v5183 = vadd.f32 %v5060, %v5151
    %v5184 = vadd.f32 %v5101, %v5152
    %v5185 = vadd.f32 %v5142, %v5153
    %v5186 = vadd.f32 %v5022, %v5150
    %v5187 = vadd.f32 %v5063, %v5151
    %v5188 = vadd.f32 %v5104, %v5152
    %v5189 = vadd.f32 %v5145, %v5153
    %5190 = vst [vmem:[#allocation4] sm:$0xff] %v5158
    %5191 = vst [vmem:[#allocation4 + $0x8] sm:$0xff] %v5159
    %5192 = vst [vmem:[#allocation4 + $0x10] sm:$0xff] %v5160
    %5193 = vst [vmem:[#allocation4 + $0x18] sm:$0xff] %v5161
    %5194 = vst [vmem:[#allocation4 + $0x20] sm:$0xff] %v5162
    %5195 = vst [vmem:[#allocation4 + $0x28] sm:$0xff] %v5163
    %5196 = vst [vmem:[#allocation4 + $0x30] sm:$0xff] %v5164
    %5197 = vst [vmem:[#allocation4 + $0x38] sm:$0xff] %v5165
    %5198 = vst [vmem:[#allocation4 + $0x40] sm:$0xff] %v5166
    %5199 = vst [vmem:[#allocation4 + $0x48] sm:$0xff] %v5167
    %5200 = vst [vmem:[#allocation4 + $0x50] sm:$0xff] %v5168
    %5201 = vst [vmem:[#allocation4 + $0x58] sm:$0xff] %v5169
    %5202 = vst [vmem:[#allocation4 + $0x60] sm:$0xff] %v5170
    %5203 = vst [vmem:[#allocation4 + $0x68] sm:$0xff] %v5171
    %5204 = vst [vmem:[#allocation4 + $0x70] sm:$0xff] %v5172
    %5205 = vst [vmem:[#allocation4 + $0x78] sm:$0xff] %v5173
    %5206 = vst [vmem:[#allocation4 + $0x80] sm:$0xff] %v5174
    %5207 = vst [vmem:[#allocation4 + $0x88] sm:$0xff] %v5175
    %5208 = vst [vmem:[#allocation4 + $0x90] sm:$0xff] %v5176
    %5209 = vst [vmem:[#allocation4 + $0x98] sm:$0xff] %v5177
    %5210 = vst [vmem:[#allocation4 + $0xa0] sm:$0xff] %v5178
    %5211 = vst [vmem:[#allocation4 + $0xa8] sm:$0xff] %v5179
    %5212 = vst [vmem:[#allocation4 + $0xb0] sm:$0xff] %v5180
    %5213 = vst [vmem:[#allocation4 + $0xb8] sm:$0xff] %v5181
    %5214 = vst [vmem:[#allocation4 + $0xc0] sm:$0xff] %v5182
    %5215 = vst [vmem:[#allocation4 + $0xc8] sm:$0xff] %v5183
    %5216 = vst [vmem:[#allocation4 + $0xd0] sm:$0xff] %v5184
    %5217 = vst [vmem:[#allocation4 + $0xd8] sm:$0xff] %v5185
    %5218 = vst [vmem:[#allocation4 + $0xe0] sm:$0xff] %v5186
    %5219 = vst [vmem:[#allocation4 + $0xe8] sm:$0xff] %v5187
    %5220 = vst [vmem:[#allocation4 + $0xf0] sm:$0xff] %v5188
    %5221 = vst [vmem:[#allocation4 + $0xf8] sm:$0xff] %v5189
    %v5222 = vld [vmem:[#allocation4] sm:$0xff]
    %v5223 = vld [vmem:[#allocation4 + $0x8] sm:$0xff]
    %v5224 = vld [vmem:[#allocation4 + $0x10] sm:$0xff]
    %v5225 = vld [vmem:[#allocation4 + $0x18] sm:$0xff]
    %s5226 = scalar_lea.vmem [#allocation9], 1024
    %v5227 = vld [vmem:[%s5226] sm:$0xff]
    %v5228 = vld [vmem:[%s5226 + $0x8] sm:$0xff]
    %v5229 = vld [vmem:[%s5226 + $0x10] sm:$0xff]
    %v5230 = vld [vmem:[%s5226 + $0x18] sm:$0xff]
    %v5231 = vld [vmem:[%s5226 + $0x20] sm:$0xff]
    %v5232 = vld [vmem:[%s5226 + $0x28] sm:$0xff]
    %v5233 = vld [vmem:[%s5226 + $0x30] sm:$0xff]
    %v5234 = vld [vmem:[%s5226 + $0x38] sm:$0xff]
    %v5235 = vld [vmem:[%s5226 + $0x40] sm:$0xff]
    %v5236 = vld [vmem:[%s5226 + $0x48] sm:$0xff]
    %v5237 = vld [vmem:[%s5226 + $0x50] sm:$0xff]
    %v5238 = vld [vmem:[%s5226 + $0x58] sm:$0xff]
    %v5239 = vld [vmem:[%s5226 + $0x60] sm:$0xff]
    %v5240 = vld [vmem:[%s5226 + $0x68] sm:$0xff]
    %v5241 = vld [vmem:[%s5226 + $0x70] sm:$0xff]
    %v5242 = vld [vmem:[%s5226 + $0x78] sm:$0xff]
    %v5243 = vld [vmem:[%s5226 + $0x80] sm:$0xff]
    %v5244 = vld [vmem:[%s5226 + $0x88] sm:$0xff]
    %v5245 = vld [vmem:[%s5226 + $0x90] sm:$0xff]
    %v5246 = vld [vmem:[%s5226 + $0x98] sm:$0xff]
    %v5247 = vld [vmem:[%s5226 + $0xa0] sm:$0xff]
    %v5248 = vld [vmem:[%s5226 + $0xa8] sm:$0xff]
    %v5249 = vld [vmem:[%s5226 + $0xb0] sm:$0xff]
    %v5250 = vld [vmem:[%s5226 + $0xb8] sm:$0xff]
    %v5251 = vld [vmem:[%s5226 + $0xc0] sm:$0xff]
    %v5252 = vld [vmem:[%s5226 + $0xc8] sm:$0xff]
    %v5253 = vld [vmem:[%s5226 + $0xd0] sm:$0xff]
    %v5254 = vld [vmem:[%s5226 + $0xd8] sm:$0xff]
    %v5255 = vld [vmem:[%s5226 + $0xe0] sm:$0xff]
    %v5256 = vld [vmem:[%s5226 + $0xe8] sm:$0xff]
    %v5257 = vld [vmem:[%s5226 + $0xf0] sm:$0xff]
    %v5258 = vld [vmem:[%s5226 + $0xf8] sm:$0xff]
    %v5259 = vld [vmem:[%s5226 + $0x100] sm:$0xff]
    %v5260 = vld [vmem:[%s5226 + $0x108] sm:$0xff]
    %v5261 = vld [vmem:[%s5226 + $0x110] sm:$0xff]
    %v5262 = vld [vmem:[%s5226 + $0x118] sm:$0xff]
    %v5263 = vld [vmem:[%s5226 + $0x120] sm:$0xff]
    %v5264 = vld [vmem:[%s5226 + $0x128] sm:$0xff]
    %v5265 = vld [vmem:[%s5226 + $0x130] sm:$0xff]
    %v5266 = vld [vmem:[%s5226 + $0x138] sm:$0xff]
    %v5267 = vld [vmem:[%s5226 + $0x140] sm:$0xff]
    %v5268 = vld [vmem:[%s5226 + $0x148] sm:$0xff]
    %v5269 = vld [vmem:[%s5226 + $0x150] sm:$0xff]
    %v5270 = vld [vmem:[%s5226 + $0x158] sm:$0xff]
    %v5271 = vld [vmem:[%s5226 + $0x160] sm:$0xff]
    %v5272 = vld [vmem:[%s5226 + $0x168] sm:$0xff]
    %v5273 = vld [vmem:[%s5226 + $0x170] sm:$0xff]
    %v5274 = vld [vmem:[%s5226 + $0x178] sm:$0xff]
    %v5275 = vld [vmem:[%s5226 + $0x180] sm:$0xff]
    %v5276 = vld [vmem:[%s5226 + $0x188] sm:$0xff]
    %v5277 = vld [vmem:[%s5226 + $0x190] sm:$0xff]
    %v5278 = vld [vmem:[%s5226 + $0x198] sm:$0xff]
    %v5279 = vld [vmem:[%s5226 + $0x1a0] sm:$0xff]
    %v5280 = vld [vmem:[%s5226 + $0x1a8] sm:$0xff]
    %v5281 = vld [vmem:[%s5226 + $0x1b0] sm:$0xff]
    %v5282 = vld [vmem:[%s5226 + $0x1b8] sm:$0xff]
    %v5283 = vld [vmem:[%s5226 + $0x1c0] sm:$0xff]
    %v5284 = vld [vmem:[%s5226 + $0x1c8] sm:$0xff]
    %v5285 = vld [vmem:[%s5226 + $0x1d0] sm:$0xff]
    %v5286 = vld [vmem:[%s5226 + $0x1d8] sm:$0xff]
    %v5287 = vld [vmem:[%s5226 + $0x1e0] sm:$0xff]
    %v5288 = vld [vmem:[%s5226 + $0x1e8] sm:$0xff]
    %v5289 = vld [vmem:[%s5226 + $0x1f0] sm:$0xff]
    %v5290 = vld [vmem:[%s5226 + $0x1f8] sm:$0xff]
    %5291 = vmatpush.msra.mxu0 %v5287
    %5292 = vmatpush.msra.mxu0 %v5283
    %5293 = vmatpush.msra.mxu0 %v5279
    %5294 = vmatpush.msra.mxu0 %v5275
    %5295 = vmatpush.msra.mxu0 %v5271
    %5296 = vmatpush.msra.mxu0 %v5267
    %5297 = vmatpush.msra.mxu0 %v5263
    %5298 = vmatpush.msra.mxu0 %v5259
    %5299 = vmatpush.msra.mxu0 %v5255
    %5300 = vmatpush.msra.mxu0 %v5251
    %5301 = vmatpush.msra.mxu0 %v5247
    %5302 = vmatpush.msra.mxu0 %v5243
    %5303 = vmatpush.msra.mxu0 %v5239
    %5304 = vmatpush.msra.mxu0 %v5235
    %5305 = vmatpush.msra.mxu0 %v5231
    %5306 = vmatpush.msra.mxu0 %v5227
    %5307 = vmatmul.f32.gmra.mxu0 0.0
    %v5308 = vpop.f32.mrf.mxu0
    %v5309 = vadd.f32 0.0, %v5308
    %5310 = vdwg.mxu0
    %5311 = vmatpush.msra.mxu0 %v5288
    %5312 = vmatpush.msra.mxu0 %v5284
    %5313 = vmatpush.msra.mxu0 %v5280
    %5314 = vmatpush.msra.mxu0 %v5276
    %5315 = vmatpush.msra.mxu0 %v5272
    %5316 = vmatpush.msra.mxu0 %v5268
    %5317 = vmatpush.msra.mxu0 %v5264
    %5318 = vmatpush.msra.mxu0 %v5260
    %5319 = vmatpush.msra.mxu0 %v5256
    %5320 = vmatpush.msra.mxu0 %v5252
    %5321 = vmatpush.msra.mxu0 %v5248
    %5322 = vmatpush.msra.mxu0 %v5244
    %5323 = vmatpush.msra.mxu0 %v5240
    %5324 = vmatpush.msra.mxu0 %v5236
    %5325 = vmatpush.msra.mxu0 %v5232
    %5326 = vmatpush.msra.mxu0 %v5228
    %5327 = vmatmul.f32.gmra.mxu0 0.0
    %v5328 = vpop.f32.mrf.mxu0
    %v5329 = vadd.f32 0.0, %v5328
    %5330 = vdwg.mxu0
    %5331 = vmatpush.msra.mxu0 %v5289
    %5332 = vmatpush.msra.mxu0 %v5285
    %5333 = vmatpush.msra.mxu0 %v5281
    %5334 = vmatpush.msra.mxu0 %v5277
    %5335 = vmatpush.msra.mxu0 %v5273
    %5336 = vmatpush.msra.mxu0 %v5269
    %5337 = vmatpush.msra.mxu0 %v5265
    %5338 = vmatpush.msra.mxu0 %v5261
    %5339 = vmatpush.msra.mxu0 %v5257
    %5340 = vmatpush.msra.mxu0 %v5253
    %5341 = vmatpush.msra.mxu0 %v5249
    %5342 = vmatpush.msra.mxu0 %v5245
    %5343 = vmatpush.msra.mxu0 %v5241
    %5344 = vmatpush.msra.mxu0 %v5237
    %5345 = vmatpush.msra.mxu0 %v5233
    %5346 = vmatpush.msra.mxu0 %v5229
    %5347 = vmatmul.f32.gmra.mxu0 0.0
    %v5348 = vpop.f32.mrf.mxu0
    %v5349 = vadd.f32 0.0, %v5348
    %5350 = vdwg.mxu0
    %5351 = vmatpush.msra.mxu0 %v5290
    %5352 = vmatpush.msra.mxu0 %v5286
    %5353 = vmatpush.msra.mxu0 %v5282
    %5354 = vmatpush.msra.mxu0 %v5278
    %5355 = vmatpush.msra.mxu0 %v5274
    %5356 = vmatpush.msra.mxu0 %v5270
    %5357 = vmatpush.msra.mxu0 %v5266
    %5358 = vmatpush.msra.mxu0 %v5262
    %5359 = vmatpush.msra.mxu0 %v5258
    %5360 = vmatpush.msra.mxu0 %v5254
    %5361 = vmatpush.msra.mxu0 %v5250
    %5362 = vmatpush.msra.mxu0 %v5246
    %5363 = vmatpush.msra.mxu0 %v5242
    %5364 = vmatpush.msra.mxu0 %v5238
    %5365 = vmatpush.msra.mxu0 %v5234
    %5366 = vmatpush.msra.mxu0 %v5230
    %5367 = vmatmul.f32.gmra.mxu0 0.0
    %v5368 = vpop.f32.mrf.mxu0
    %v5369 = vadd.f32 0.0, %v5368
    %5370 = vdwg.mxu0
    %v5371 = vadd.f32 %v5222, %v5309
    %v5372 = vadd.f32 %v5223, %v5329
    %v5373 = vadd.f32 %v5224, %v5349
    %v5374 = vadd.f32 %v5225, %v5369
    %v5375 = vxor.u32 %v5371, 2147483648
    %v5376 = vxor.u32 %v5372, 2147483648
    %v5377 = vxor.u32 %v5373, 2147483648
    %v5378 = vmul.f32 %v5375, 1.442695
    %v5379 = vpow.pop %v5378
    %v5380 = vmul.f32 %v5376, 1.442695
    %v5381 = vpow.pop %v5380
    %v5382 = vmul.f32 %v5377, 1.442695
    %v5383 = vpow.pop %v5382
    %v5384 = vadd.f32 %v5379, 1.0
    %v5385 = vadd.f32 %v5381, 1.0
    %v5386 = vadd.f32 %v5383, 1.0
    %v5387 = vrcp.pop %v5384
    %v5388 = vmul.f32 %v5384, %v5387
    %v5389 = vsub.f32 1.0, %v5388
    %v5390 = vmul.f32 %v5387, %v5389
    %v5391 = vadd.f32 %v5387, %v5390
    %vm5392 = vweird.f32 %v5384
    %vm5393 = vweird.f32 %v5387
    %vm5394 = vmor %vm5392, %vm5393
    %v5395 = vsel %vm5394, %v5387, %v5391
    %v5396 = vand.u32 2147483647, %v5384
    %vm5397 = vcmp.eq.f32.partialorder %v5396, 8.507059e+37
    %v5398 = vand.u32 %v5384, 2147483648
    %v5399 = vor.u32 1.1754944e-38, %v5398
    %v5400 = vsel %vm5397, %v5399, %v5395
    %v5401 = vmul.f32 1.0, %v5400
    %v5402 = vrcp.pop %v5385
    %v5403 = vmul.f32 %v5385, %v5402
    %v5404 = vsub.f32 1.0, %v5403
    %v5405 = vmul.f32 %v5402, %v5404
    %v5406 = vadd.f32 %v5402, %v5405
    %vm5407 = vweird.f32 %v5385
    %vm5408 = vweird.f32 %v5402
    %vm5409 = vmor %vm5407, %vm5408
    %v5410 = vsel %vm5409, %v5402, %v5406
    %v5411 = vand.u32 2147483647, %v5385
    %vm5412 = vcmp.eq.f32.partialorder %v5411, 8.507059e+37
    %v5413 = vand.u32 %v5385, 2147483648
    %v5414 = vor.u32 1.1754944e-38, %v5413
    %v5415 = vsel %vm5412, %v5414, %v5410
    %v5416 = vmul.f32 1.0, %v5415
    %v5417 = vrcp.pop %v5386
    %v5418 = vmul.f32 %v5386, %v5417
    %v5419 = vsub.f32 1.0, %v5418
    %v5420 = vmul.f32 %v5417, %v5419
    %v5421 = vadd.f32 %v5417, %v5420
    %vm5422 = vweird.f32 %v5386
    %vm5423 = vweird.f32 %v5417
    %vm5424 = vmor %vm5422, %vm5423
    %v5425 = vsel %vm5424, %v5417, %v5421
    %v5426 = vand.u32 2147483647, %v5386
    %vm5427 = vcmp.eq.f32.partialorder %v5426, 8.507059e+37
    %v5428 = vand.u32 %v5386, 2147483648
    %v5429 = vor.u32 1.1754944e-38, %v5428
    %v5430 = vsel %vm5427, %v5429, %v5425
    %v5431 = vmul.f32 1.0, %v5430
    %v5432 = vtanh.pop %v5374
    %v5433 = vmul.f32 %v5416, 0.0
    %v5434 = vmul.f32 %v5401, %v5432
    %v5435 = vadd.f32 %v5433, %v5434
    %v5436 = vtanh.pop %v5435
    %v5437 = vmul.f32 %v5431, %v5436
    %5438 = vst [vmem:[#allocation2] sm:$0xff] %v5437
    %5439 = vst [vmem:[#allocation3 + $0x38] sm:$0xff] %v5437
    %v5440 = vld [vmem:[#allocation4 + $0x20] sm:$0xff]
    %v5441 = vld [vmem:[#allocation4 + $0x28] sm:$0xff]
    %v5442 = vld [vmem:[#allocation4 + $0x30] sm:$0xff]
    %v5443 = vld [vmem:[#allocation4 + $0x38] sm:$0xff]
    %v5444 = vld [vmem:[%s5226] sm:$0xff]
    %v5445 = vld [vmem:[%s5226 + $0x8] sm:$0xff]
    %v5446 = vld [vmem:[%s5226 + $0x10] sm:$0xff]
    %v5447 = vld [vmem:[%s5226 + $0x18] sm:$0xff]
    %v5448 = vld [vmem:[%s5226 + $0x20] sm:$0xff]
    %v5449 = vld [vmem:[%s5226 + $0x28] sm:$0xff]
    %v5450 = vld [vmem:[%s5226 + $0x30] sm:$0xff]
    %v5451 = vld [vmem:[%s5226 + $0x38] sm:$0xff]
    %v5452 = vld [vmem:[%s5226 + $0x40] sm:$0xff]
    %v5453 = vld [vmem:[%s5226 + $0x48] sm:$0xff]
    %v5454 = vld [vmem:[%s5226 + $0x50] sm:$0xff]
    %v5455 = vld [vmem:[%s5226 + $0x58] sm:$0xff]
    %v5456 = vld [vmem:[%s5226 + $0x60] sm:$0xff]
    %v5457 = vld [vmem:[%s5226 + $0x68] sm:$0xff]
    %v5458 = vld [vmem:[%s5226 + $0x70] sm:$0xff]
    %v5459 = vld [vmem:[%s5226 + $0x78] sm:$0xff]
    %v5460 = vld [vmem:[%s5226 + $0x80] sm:$0xff]
    %v5461 = vld [vmem:[%s5226 + $0x88] sm:$0xff]
    %v5462 = vld [vmem:[%s5226 + $0x90] sm:$0xff]
    %v5463 = vld [vmem:[%s5226 + $0x98] sm:$0xff]
    %v5464 = vld [vmem:[%s5226 + $0xa0] sm:$0xff]
    %v5465 = vld [vmem:[%s5226 + $0xa8] sm:$0xff]
    %v5466 = vld [vmem:[%s5226 + $0xb0] sm:$0xff]
    %v5467 = vld [vmem:[%s5226 + $0xb8] sm:$0xff]
    %v5468 = vld [vmem:[%s5226 + $0xc0] sm:$0xff]
    %v5469 = vld [vmem:[%s5226 + $0xc8] sm:$0xff]
    %v5470 = vld [vmem:[%s5226 + $0xd0] sm:$0xff]
    %v5471 = vld [vmem:[%s5226 + $0xd8] sm:$0xff]
    %v5472 = vld [vmem:[%s5226 + $0xe0] sm:$0xff]
    %v5473 = vld [vmem:[%s5226 + $0xe8] sm:$0xff]
    %v5474 = vld [vmem:[%s5226 + $0xf0] sm:$0xff]
    %v5475 = vld [vmem:[%s5226 + $0xf8] sm:$0xff]
    %v5476 = vld [vmem:[%s5226 + $0x100] sm:$0xff]
    %v5477 = vld [vmem:[%s5226 + $0x108] sm:$0xff]
    %v5478 = vld [vmem:[%s5226 + $0x110] sm:$0xff]
    %v5479 = vld [vmem:[%s5226 + $0x118] sm:$0xff]
    %v5480 = vld [vmem:[%s5226 + $0x120] sm:$0xff]
    %v5481 = vld [vmem:[%s5226 + $0x128] sm:$0xff]
    %v5482 = vld [vmem:[%s5226 + $0x130] sm:$0xff]
    %v5483 = vld [vmem:[%s5226 + $0x138] sm:$0xff]
    %v5484 = vld [vmem:[%s5226 + $0x140] sm:$0xff]
    %v5485 = vld [vmem:[%s5226 + $0x148] sm:$0xff]
    %v5486 = vld [vmem:[%s5226 + $0x150] sm:$0xff]
    %v5487 = vld [vmem:[%s5226 + $0x158] sm:$0xff]
    %v5488 = vld [vmem:[%s5226 + $0x160] sm:$0xff]
    %v5489 = vld [vmem:[%s5226 + $0x168] sm:$0xff]
    %v5490 = vld [vmem:[%s5226 + $0x170] sm:$0xff]
    %v5491 = vld [vmem:[%s5226 + $0x178] sm:$0xff]
    %v5492 = vld [vmem:[%s5226 + $0x180] sm:$0xff]
    %v5493 = vld [vmem:[%s5226 + $0x188] sm:$0xff]
    %v5494 = vld [vmem:[%s5226 + $0x190] sm:$0xff]
    %v5495 = vld [vmem:[%s5226 + $0x198] sm:$0xff]
    %v5496 = vld [vmem:[%s5226 + $0x1a0] sm:$0xff]
    %v5497 = vld [vmem:[%s5226 + $0x1a8] sm:$0xff]
    %v5498 = vld [vmem:[%s5226 + $0x1b0] sm:$0xff]
    %v5499 = vld [vmem:[%s5226 + $0x1b8] sm:$0xff]
    %v5500 = vld [vmem:[%s5226 + $0x1c0] sm:$0xff]
    %v5501 = vld [vmem:[%s5226 + $0x1c8] sm:$0xff]
    %v5502 = vld [vmem:[%s5226 + $0x1d0] sm:$0xff]
    %v5503 = vld [vmem:[%s5226 + $0x1d8] sm:$0xff]
    %v5504 = vld [vmem:[%s5226 + $0x1e0] sm:$0xff]
    %v5505 = vld [vmem:[%s5226 + $0x1e8] sm:$0xff]
    %v5506 = vld [vmem:[%s5226 + $0x1f0] sm:$0xff]
    %v5507 = vld [vmem:[%s5226 + $0x1f8] sm:$0xff]
    %5508 = vmatpush.msra.mxu0 %v5504
    %5509 = vmatpush.msra.mxu0 %v5500
    %5510 = vmatpush.msra.mxu0 %v5496
    %5511 = vmatpush.msra.mxu0 %v5492
    %5512 = vmatpush.msra.mxu0 %v5488
    %5513 = vmatpush.msra.mxu0 %v5484
    %5514 = vmatpush.msra.mxu0 %v5480
    %5515 = vmatpush.msra.mxu0 %v5476
    %5516 = vmatpush.msra.mxu0 %v5472
    %5517 = vmatpush.msra.mxu0 %v5468
    %5518 = vmatpush.msra.mxu0 %v5464
    %5519 = vmatpush.msra.mxu0 %v5460
    %5520 = vmatpush.msra.mxu0 %v5456
    %5521 = vmatpush.msra.mxu0 %v5452
    %5522 = vmatpush.msra.mxu0 %v5448
    %5523 = vmatpush.msra.mxu0 %v5444
    %5524 = vmatmul.f32.gmra.mxu0 %v5437
    %v5525 = vpop.f32.mrf.mxu0
    %v5526 = vadd.f32 0.0, %v5525
    %5527 = vdwg.mxu0
    %5528 = vmatpush.msra.mxu0 %v5505
    %5529 = vmatpush.msra.mxu0 %v5501
    %5530 = vmatpush.msra.mxu0 %v5497
    %5531 = vmatpush.msra.mxu0 %v5493
    %5532 = vmatpush.msra.mxu0 %v5489
    %5533 = vmatpush.msra.mxu0 %v5485
    %5534 = vmatpush.msra.mxu0 %v5481
    %5535 = vmatpush.msra.mxu0 %v5477
    %5536 = vmatpush.msra.mxu0 %v5473
    %5537 = vmatpush.msra.mxu0 %v5469
    %5538 = vmatpush.msra.mxu0 %v5465
    %5539 = vmatpush.msra.mxu0 %v5461
    %5540 = vmatpush.msra.mxu0 %v5457
    %5541 = vmatpush.msra.mxu0 %v5453
    %5542 = vmatpush.msra.mxu0 %v5449
    %5543 = vmatpush.msra.mxu0 %v5445
    %5544 = vmatmul.f32.gmra.mxu0 %v5437
    %v5545 = vpop.f32.mrf.mxu0
    %v5546 = vadd.f32 0.0, %v5545
    %5547 = vdwg.mxu0
    %5548 = vmatpush.msra.mxu0 %v5506
    %5549 = vmatpush.msra.mxu0 %v5502
    %5550 = vmatpush.msra.mxu0 %v5498
    %5551 = vmatpush.msra.mxu0 %v5494
    %5552 = vmatpush.msra.mxu0 %v5490
    %5553 = vmatpush.msra.mxu0 %v5486
    %5554 = vmatpush.msra.mxu0 %v5482
    %5555 = vmatpush.msra.mxu0 %v5478
    %5556 = vmatpush.msra.mxu0 %v5474
    %5557 = vmatpush.msra.mxu0 %v5470
    %5558 = vmatpush.msra.mxu0 %v5466
    %5559 = vmatpush.msra.mxu0 %v5462
    %5560 = vmatpush.msra.mxu0 %v5458
    %5561 = vmatpush.msra.mxu0 %v5454
    %5562 = vmatpush.msra.mxu0 %v5450
    %5563 = vmatpush.msra.mxu0 %v5446
    %5564 = vmatmul.f32.gmra.mxu0 %v5437
    %v5565 = vpop.f32.mrf.mxu0
    %v5566 = vadd.f32 0.0, %v5565
    %5567 = vdwg.mxu0
    %5568 = vmatpush.msra.mxu0 %v5507
    %5569 = vmatpush.msra.mxu0 %v5503
    %5570 = vmatpush.msra.mxu0 %v5499
    %5571 = vmatpush.msra.mxu0 %v5495
    %5572 = vmatpush.msra.mxu0 %v5491
    %5573 = vmatpush.msra.mxu0 %v5487
    %5574 = vmatpush.msra.mxu0 %v5483
    %5575 = vmatpush.msra.mxu0 %v5479
    %5576 = vmatpush.msra.mxu0 %v5475
    %5577 = vmatpush.msra.mxu0 %v5471
    %5578 = vmatpush.msra.mxu0 %v5467
    %5579 = vmatpush.msra.mxu0 %v5463
    %5580 = vmatpush.msra.mxu0 %v5459
    %5581 = vmatpush.msra.mxu0 %v5455
    %5582 = vmatpush.msra.mxu0 %v5451
    %5583 = vmatpush.msra.mxu0 %v5447
    %5584 = vmatmul.f32.gmra.mxu0 %v5437
    %v5585 = vpop.f32.mrf.mxu0
    %v5586 = vadd.f32 0.0, %v5585
    %5587 = vdwg.mxu0
    %v5588 = vadd.f32 %v5440, %v5526
    %v5589 = vadd.f32 %v5441, %v5546
    %v5590 = vadd.f32 %v5442, %v5566
    %v5591 = vadd.f32 %v5443, %v5586
    %v5592 = vxor.u32 %v5588, 2147483648
    %v5593 = vxor.u32 %v5589, 2147483648
    %v5594 = vxor.u32 %v5590, 2147483648
    %v5595 = vmul.f32 %v5592, 1.442695
    %v5596 = vpow.pop %v5595
    %v5597 = vmul.f32 %v5593, 1.442695
    %v5598 = vpow.pop %v5597
    %v5599 = vmul.f32 %v5594, 1.442695
    %v5600 = vpow.pop %v5599
    %v5601 = vadd.f32 %v5596, 1.0
    %v5602 = vadd.f32 %v5598, 1.0
    %v5603 = vadd.f32 %v5600, 1.0
    %v5604 = vrcp.pop %v5601
    %v5605 = vmul.f32 %v5601, %v5604
    %v5606 = vsub.f32 1.0, %v5605
    %v5607 = vmul.f32 %v5604, %v5606
    %v5608 = vadd.f32 %v5604, %v5607
    %vm5609 = vweird.f32 %v5601
    %vm5610 = vweird.f32 %v5604
    %vm5611 = vmor %vm5609, %vm5610
    %v5612 = vsel %vm5611, %v5604, %v5608
    %v5613 = vand.u32 2147483647, %v5601
    %vm5614 = vcmp.eq.f32.partialorder %v5613, 8.507059e+37
    %v5615 = vand.u32 %v5601, 2147483648
    %v5616 = vor.u32 1.1754944e-38, %v5615
    %v5617 = vsel %vm5614, %v5616, %v5612
    %v5618 = vmul.f32 1.0, %v5617
    %v5619 = vrcp.pop %v5602
    %v5620 = vmul.f32 %v5602, %v5619
    %v5621 = vsub.f32 1.0, %v5620
    %v5622 = vmul.f32 %v5619, %v5621
    %v5623 = vadd.f32 %v5619, %v5622
    %vm5624 = vweird.f32 %v5602
    %vm5625 = vweird.f32 %v5619
    %vm5626 = vmor %vm5624, %vm5625
    %v5627 = vsel %vm5626, %v5619, %v5623
    %v5628 = vand.u32 2147483647, %v5602
    %vm5629 = vcmp.eq.f32.partialorder %v5628, 8.507059e+37
    %v5630 = vand.u32 %v5602, 2147483648
    %v5631 = vor.u32 1.1754944e-38, %v5630
    %v5632 = vsel %vm5629, %v5631, %v5627
    %v5633 = vmul.f32 1.0, %v5632
    %v5634 = vrcp.pop %v5603
    %v5635 = vmul.f32 %v5603, %v5634
    %v5636 = vsub.f32 1.0, %v5635
    %v5637 = vmul.f32 %v5634, %v5636
    %v5638 = vadd.f32 %v5634, %v5637
    %vm5639 = vweird.f32 %v5603
    %vm5640 = vweird.f32 %v5634
    %vm5641 = vmor %vm5639, %vm5640
    %v5642 = vsel %vm5641, %v5634, %v5638
    %v5643 = vand.u32 2147483647, %v5603
    %vm5644 = vcmp.eq.f32.partialorder %v5643, 8.507059e+37
    %v5645 = vand.u32 %v5603, 2147483648
    %v5646 = vor.u32 1.1754944e-38, %v5645
    %v5647 = vsel %vm5644, %v5646, %v5642
    %v5648 = vmul.f32 1.0, %v5647
    %v5649 = vtanh.pop %v5591
    %v5650 = vmul.f32 %v5633, %v5435
    %v5651 = vmul.f32 %v5618, %v5649
    %v5652 = vadd.f32 %v5650, %v5651
    %v5653 = vtanh.pop %v5652
    %v5654 = vmul.f32 %v5648, %v5653
    %5655 = vst [vmem:[#allocation2 + $0x8] sm:$0xff] %v5654
    %5656 = vst [vmem:[#allocation3 + $0x30] sm:$0xff] %v5654
    %v5657 = vld [vmem:[#allocation4 + $0x40] sm:$0xff]
    %v5658 = vld [vmem:[#allocation4 + $0x48] sm:$0xff]
    %v5659 = vld [vmem:[#allocation4 + $0x50] sm:$0xff]
    %v5660 = vld [vmem:[#allocation4 + $0x58] sm:$0xff]
    %v5661 = vld [vmem:[%s5226] sm:$0xff]
    %v5662 = vld [vmem:[%s5226 + $0x8] sm:$0xff]
    %v5663 = vld [vmem:[%s5226 + $0x10] sm:$0xff]
    %v5664 = vld [vmem:[%s5226 + $0x18] sm:$0xff]
    %v5665 = vld [vmem:[%s5226 + $0x20] sm:$0xff]
    %v5666 = vld [vmem:[%s5226 + $0x28] sm:$0xff]
    %v5667 = vld [vmem:[%s5226 + $0x30] sm:$0xff]
    %v5668 = vld [vmem:[%s5226 + $0x38] sm:$0xff]
    %v5669 = vld [vmem:[%s5226 + $0x40] sm:$0xff]
    %v5670 = vld [vmem:[%s5226 + $0x48] sm:$0xff]
    %v5671 = vld [vmem:[%s5226 + $0x50] sm:$0xff]
    %v5672 = vld [vmem:[%s5226 + $0x58] sm:$0xff]
    %v5673 = vld [vmem:[%s5226 + $0x60] sm:$0xff]
    %v5674 = vld [vmem:[%s5226 + $0x68] sm:$0xff]
    %v5675 = vld [vmem:[%s5226 + $0x70] sm:$0xff]
    %v5676 = vld [vmem:[%s5226 + $0x78] sm:$0xff]
    %v5677 = vld [vmem:[%s5226 + $0x80] sm:$0xff]
    %v5678 = vld [vmem:[%s5226 + $0x88] sm:$0xff]
    %v5679 = vld [vmem:[%s5226 + $0x90] sm:$0xff]
    %v5680 = vld [vmem:[%s5226 + $0x98] sm:$0xff]
    %v5681 = vld [vmem:[%s5226 + $0xa0] sm:$0xff]
    %v5682 = vld [vmem:[%s5226 + $0xa8] sm:$0xff]
    %v5683 = vld [vmem:[%s5226 + $0xb0] sm:$0xff]
    %v5684 = vld [vmem:[%s5226 + $0xb8] sm:$0xff]
    %v5685 = vld [vmem:[%s5226 + $0xc0] sm:$0xff]
    %v5686 = vld [vmem:[%s5226 + $0xc8] sm:$0xff]
    %v5687 = vld [vmem:[%s5226 + $0xd0] sm:$0xff]
    %v5688 = vld [vmem:[%s5226 + $0xd8] sm:$0xff]
    %v5689 = vld [vmem:[%s5226 + $0xe0] sm:$0xff]
    %v5690 = vld [vmem:[%s5226 + $0xe8] sm:$0xff]
    %v5691 = vld [vmem:[%s5226 + $0xf0] sm:$0xff]
    %v5692 = vld [vmem:[%s5226 + $0xf8] sm:$0xff]
    %v5693 = vld [vmem:[%s5226 + $0x100] sm:$0xff]
    %v5694 = vld [vmem:[%s5226 + $0x108] sm:$0xff]
    %v5695 = vld [vmem:[%s5226 + $0x110] sm:$0xff]
    %v5696 = vld [vmem:[%s5226 + $0x118] sm:$0xff]
    %v5697 = vld [vmem:[%s5226 + $0x120] sm:$0xff]
    %v5698 = vld [vmem:[%s5226 + $0x128] sm:$0xff]
    %v5699 = vld [vmem:[%s5226 + $0x130] sm:$0xff]
    %v5700 = vld [vmem:[%s5226 + $0x138] sm:$0xff]
    %v5701 = vld [vmem:[%s5226 + $0x140] sm:$0xff]
    %v5702 = vld [vmem:[%s5226 + $0x148] sm:$0xff]
    %v5703 = vld [vmem:[%s5226 + $0x150] sm:$0xff]
    %v5704 = vld [vmem:[%s5226 + $0x158] sm:$0xff]
    %v5705 = vld [vmem:[%s5226 + $0x160] sm:$0xff]
    %v5706 = vld [vmem:[%s5226 + $0x168] sm:$0xff]
    %v5707 = vld [vmem:[%s5226 + $0x170] sm:$0xff]
    %v5708 = vld [vmem:[%s5226 + $0x178] sm:$0xff]
    %v5709 = vld [vmem:[%s5226 + $0x180] sm:$0xff]
    %v5710 = vld [vmem:[%s5226 + $0x188] sm:$0xff]
    %v5711 = vld [vmem:[%s5226 + $0x190] sm:$0xff]
    %v5712 = vld [vmem:[%s5226 + $0x198] sm:$0xff]
    %v5713 = vld [vmem:[%s5226 + $0x1a0] sm:$0xff]
    %v5714 = vld [vmem:[%s5226 + $0x1a8] sm:$0xff]
    %v5715 = vld [vmem:[%s5226 + $0x1b0] sm:$0xff]
    %v5716 = vld [vmem:[%s5226 + $0x1b8] sm:$0xff]
    %v5717 = vld [vmem:[%s5226 + $0x1c0] sm:$0xff]
    %v5718 = vld [vmem:[%s5226 + $0x1c8] sm:$0xff]
    %v5719 = vld [vmem:[%s5226 + $0x1d0] sm:$0xff]
    %v5720 = vld [vmem:[%s5226 + $0x1d8] sm:$0xff]
    %v5721 = vld [vmem:[%s5226 + $0x1e0] sm:$0xff]
    %v5722 = vld [vmem:[%s5226 + $0x1e8] sm:$0xff]
    %v5723 = vld [vmem:[%s5226 + $0x1f0] sm:$0xff]
    %v5724 = vld [vmem:[%s5226 + $0x1f8] sm:$0xff]
    %5725 = vmatpush.msra.mxu0 %v5721
    %5726 = vmatpush.msra.mxu0 %v5717
    %5727 = vmatpush.msra.mxu0 %v5713
    %5728 = vmatpush.msra.mxu0 %v5709
    %5729 = vmatpush.msra.mxu0 %v5705
    %5730 = vmatpush.msra.mxu0 %v5701
    %5731 = vmatpush.msra.mxu0 %v5697
    %5732 = vmatpush.msra.mxu0 %v5693
    %5733 = vmatpush.msra.mxu0 %v5689
    %5734 = vmatpush.msra.mxu0 %v5685
    %5735 = vmatpush.msra.mxu0 %v5681
    %5736 = vmatpush.msra.mxu0 %v5677
    %5737 = vmatpush.msra.mxu0 %v5673
    %5738 = vmatpush.msra.mxu0 %v5669
    %5739 = vmatpush.msra.mxu0 %v5665
    %5740 = vmatpush.msra.mxu0 %v5661
    %5741 = vmatmul.f32.gmra.mxu0 %v5654
    %v5742 = vpop.f32.mrf.mxu0
    %v5743 = vadd.f32 0.0, %v5742
    %5744 = vdwg.mxu0
    %5745 = vmatpush.msra.mxu0 %v5722
    %5746 = vmatpush.msra.mxu0 %v5718
    %5747 = vmatpush.msra.mxu0 %v5714
    %5748 = vmatpush.msra.mxu0 %v5710
    %5749 = vmatpush.msra.mxu0 %v5706
    %5750 = vmatpush.msra.mxu0 %v5702
    %5751 = vmatpush.msra.mxu0 %v5698
    %5752 = vmatpush.msra.mxu0 %v5694
    %5753 = vmatpush.msra.mxu0 %v5690
    %5754 = vmatpush.msra.mxu0 %v5686
    %5755 = vmatpush.msra.mxu0 %v5682
    %5756 = vmatpush.msra.mxu0 %v5678
    %5757 = vmatpush.msra.mxu0 %v5674
    %5758 = vmatpush.msra.mxu0 %v5670
    %5759 = vmatpush.msra.mxu0 %v5666
    %5760 = vmatpush.msra.mxu0 %v5662
    %5761 = vmatmul.f32.gmra.mxu0 %v5654
    %v5762 = vpop.f32.mrf.mxu0
    %v5763 = vadd.f32 0.0, %v5762
    %5764 = vdwg.mxu0
    %5765 = vmatpush.msra.mxu0 %v5723
    %5766 = vmatpush.msra.mxu0 %v5719
    %5767 = vmatpush.msra.mxu0 %v5715
    %5768 = vmatpush.msra.mxu0 %v5711
    %5769 = vmatpush.msra.mxu0 %v5707
    %5770 = vmatpush.msra.mxu0 %v5703
    %5771 = vmatpush.msra.mxu0 %v5699
    %5772 = vmatpush.msra.mxu0 %v5695
    %5773 = vmatpush.msra.mxu0 %v5691
    %5774 = vmatpush.msra.mxu0 %v5687
    %5775 = vmatpush.msra.mxu0 %v5683
    %5776 = vmatpush.msra.mxu0 %v5679
    %5777 = vmatpush.msra.mxu0 %v5675
    %5778 = vmatpush.msra.mxu0 %v5671
    %5779 = vmatpush.msra.mxu0 %v5667
    %5780 = vmatpush.msra.mxu0 %v5663
    %5781 = vmatmul.f32.gmra.mxu0 %v5654
    %v5782 = vpop.f32.mrf.mxu0
    %v5783 = vadd.f32 0.0, %v5782
    %5784 = vdwg.mxu0
    %5785 = vmatpush.msra.mxu0 %v5724
    %5786 = vmatpush.msra.mxu0 %v5720
    %5787 = vmatpush.msra.mxu0 %v5716
    %5788 = vmatpush.msra.mxu0 %v5712
    %5789 = vmatpush.msra.mxu0 %v5708
    %5790 = vmatpush.msra.mxu0 %v5704
    %5791 = vmatpush.msra.mxu0 %v5700
    %5792 = vmatpush.msra.mxu0 %v5696
    %5793 = vmatpush.msra.mxu0 %v5692
    %5794 = vmatpush.msra.mxu0 %v5688
    %5795 = vmatpush.msra.mxu0 %v5684
    %5796 = vmatpush.msra.mxu0 %v5680
    %5797 = vmatpush.msra.mxu0 %v5676
    %5798 = vmatpush.msra.mxu0 %v5672
    %5799 = vmatpush.msra.mxu0 %v5668
    %5800 = vmatpush.msra.mxu0 %v5664
    %5801 = vmatmul.f32.gmra.mxu0 %v5654
    %v5802 = vpop.f32.mrf.mxu0
    %v5803 = vadd.f32 0.0, %v5802
    %5804 = vdwg.mxu0
    %v5805 = vadd.f32 %v5657, %v5743
    %v5806 = vadd.f32 %v5658, %v5763
    %v5807 = vadd.f32 %v5659, %v5783
    %v5808 = vadd.f32 %v5660, %v5803
    %v5809 = vxor.u32 %v5805, 2147483648
    %v5810 = vxor.u32 %v5806, 2147483648
    %v5811 = vxor.u32 %v5807, 2147483648
    %v5812 = vmul.f32 %v5809, 1.442695
    %v5813 = vpow.pop %v5812
    %v5814 = vmul.f32 %v5810, 1.442695
    %v5815 = vpow.pop %v5814
    %v5816 = vmul.f32 %v5811, 1.442695
    %v5817 = vpow.pop %v5816
    %v5818 = vadd.f32 %v5813, 1.0
    %v5819 = vadd.f32 %v5815, 1.0
    %v5820 = vadd.f32 %v5817, 1.0
    %v5821 = vrcp.pop %v5818
    %v5822 = vmul.f32 %v5818, %v5821
    %v5823 = vsub.f32 1.0, %v5822
    %v5824 = vmul.f32 %v5821, %v5823
    %v5825 = vadd.f32 %v5821, %v5824
    %vm5826 = vweird.f32 %v5818
    %vm5827 = vweird.f32 %v5821
    %vm5828 = vmor %vm5826, %vm5827
    %v5829 = vsel %vm5828, %v5821, %v5825
    %v5830 = vand.u32 2147483647, %v5818
    %vm5831 = vcmp.eq.f32.partialorder %v5830, 8.507059e+37
    %v5832 = vand.u32 %v5818, 2147483648
    %v5833 = vor.u32 1.1754944e-38, %v5832
    %v5834 = vsel %vm5831, %v5833, %v5829
    %v5835 = vmul.f32 1.0, %v5834
    %v5836 = vrcp.pop %v5819
    %v5837 = vmul.f32 %v5819, %v5836
    %v5838 = vsub.f32 1.0, %v5837
    %v5839 = vmul.f32 %v5836, %v5838
    %v5840 = vadd.f32 %v5836, %v5839
    %vm5841 = vweird.f32 %v5819
    %vm5842 = vweird.f32 %v5836
    %vm5843 = vmor %vm5841, %vm5842
    %v5844 = vsel %vm5843, %v5836, %v5840
    %v5845 = vand.u32 2147483647, %v5819
    %vm5846 = vcmp.eq.f32.partialorder %v5845, 8.507059e+37
    %v5847 = vand.u32 %v5819, 2147483648
    %v5848 = vor.u32 1.1754944e-38, %v5847
    %v5849 = vsel %vm5846, %v5848, %v5844
    %v5850 = vmul.f32 1.0, %v5849
    %v5851 = vrcp.pop %v5820
    %v5852 = vmul.f32 %v5820, %v5851
    %v5853 = vsub.f32 1.0, %v5852
    %v5854 = vmul.f32 %v5851, %v5853
    %v5855 = vadd.f32 %v5851, %v5854
    %vm5856 = vweird.f32 %v5820
    %vm5857 = vweird.f32 %v5851
    %vm5858 = vmor %vm5856, %vm5857
    %v5859 = vsel %vm5858, %v5851, %v5855
    %v5860 = vand.u32 2147483647, %v5820
    %vm5861 = vcmp.eq.f32.partialorder %v5860, 8.507059e+37
    %v5862 = vand.u32 %v5820, 2147483648
    %v5863 = vor.u32 1.1754944e-38, %v5862
    %v5864 = vsel %vm5861, %v5863, %v5859
    %v5865 = vmul.f32 1.0, %v5864
    %v5866 = vtanh.pop %v5808
    %v5867 = vmul.f32 %v5850, %v5652
    %v5868 = vmul.f32 %v5835, %v5866
    %v5869 = vadd.f32 %v5867, %v5868
    %v5870 = vtanh.pop %v5869
    %v5871 = vmul.f32 %v5865, %v5870
    %5872 = vst [vmem:[#allocation2 + $0x10] sm:$0xff] %v5871
    %5873 = vst [vmem:[#allocation3 + $0x28] sm:$0xff] %v5871
    %v5874 = vld [vmem:[#allocation4 + $0x60] sm:$0xff]
    %v5875 = vld [vmem:[#allocation4 + $0x68] sm:$0xff]
    %v5876 = vld [vmem:[#allocation4 + $0x70] sm:$0xff]
    %v5877 = vld [vmem:[#allocation4 + $0x78] sm:$0xff]
    %v5878 = vld [vmem:[%s5226] sm:$0xff]
    %v5879 = vld [vmem:[%s5226 + $0x8] sm:$0xff]
    %v5880 = vld [vmem:[%s5226 + $0x10] sm:$0xff]
    %v5881 = vld [vmem:[%s5226 + $0x18] sm:$0xff]
    %v5882 = vld [vmem:[%s5226 + $0x20] sm:$0xff]
    %v5883 = vld [vmem:[%s5226 + $0x28] sm:$0xff]
    %v5884 = vld [vmem:[%s5226 + $0x30] sm:$0xff]
    %v5885 = vld [vmem:[%s5226 + $0x38] sm:$0xff]
    %v5886 = vld [vmem:[%s5226 + $0x40] sm:$0xff]
    %v5887 = vld [vmem:[%s5226 + $0x48] sm:$0xff]
    %v5888 = vld [vmem:[%s5226 + $0x50] sm:$0xff]
    %v5889 = vld [vmem:[%s5226 + $0x58] sm:$0xff]
    %v5890 = vld [vmem:[%s5226 + $0x60] sm:$0xff]
    %v5891 = vld [vmem:[%s5226 + $0x68] sm:$0xff]
    %v5892 = vld [vmem:[%s5226 + $0x70] sm:$0xff]
    %v5893 = vld [vmem:[%s5226 + $0x78] sm:$0xff]
    %v5894 = vld [vmem:[%s5226 + $0x80] sm:$0xff]
    %v5895 = vld [vmem:[%s5226 + $0x88] sm:$0xff]
    %v5896 = vld [vmem:[%s5226 + $0x90] sm:$0xff]
    %v5897 = vld [vmem:[%s5226 + $0x98] sm:$0xff]
    %v5898 = vld [vmem:[%s5226 + $0xa0] sm:$0xff]
    %v5899 = vld [vmem:[%s5226 + $0xa8] sm:$0xff]
    %v5900 = vld [vmem:[%s5226 + $0xb0] sm:$0xff]
    %v5901 = vld [vmem:[%s5226 + $0xb8] sm:$0xff]
    %v5902 = vld [vmem:[%s5226 + $0xc0] sm:$0xff]
    %v5903 = vld [vmem:[%s5226 + $0xc8] sm:$0xff]
    %v5904 = vld [vmem:[%s5226 + $0xd0] sm:$0xff]
    %v5905 = vld [vmem:[%s5226 + $0xd8] sm:$0xff]
    %v5906 = vld [vmem:[%s5226 + $0xe0] sm:$0xff]
    %v5907 = vld [vmem:[%s5226 + $0xe8] sm:$0xff]
    %v5908 = vld [vmem:[%s5226 + $0xf0] sm:$0xff]
    %v5909 = vld [vmem:[%s5226 + $0xf8] sm:$0xff]
    %v5910 = vld [vmem:[%s5226 + $0x100] sm:$0xff]
    %v5911 = vld [vmem:[%s5226 + $0x108] sm:$0xff]
    %v5912 = vld [vmem:[%s5226 + $0x110] sm:$0xff]
    %v5913 = vld [vmem:[%s5226 + $0x118] sm:$0xff]
    %v5914 = vld [vmem:[%s5226 + $0x120] sm:$0xff]
    %v5915 = vld [vmem:[%s5226 + $0x128] sm:$0xff]
    %v5916 = vld [vmem:[%s5226 + $0x130] sm:$0xff]
    %v5917 = vld [vmem:[%s5226 + $0x138] sm:$0xff]
    %v5918 = vld [vmem:[%s5226 + $0x140] sm:$0xff]
    %v5919 = vld [vmem:[%s5226 + $0x148] sm:$0xff]
    %v5920 = vld [vmem:[%s5226 + $0x150] sm:$0xff]
    %v5921 = vld [vmem:[%s5226 + $0x158] sm:$0xff]
    %v5922 = vld [vmem:[%s5226 + $0x160] sm:$0xff]
    %v5923 = vld [vmem:[%s5226 + $0x168] sm:$0xff]
    %v5924 = vld [vmem:[%s5226 + $0x170] sm:$0xff]
    %v5925 = vld [vmem:[%s5226 + $0x178] sm:$0xff]
    %v5926 = vld [vmem:[%s5226 + $0x180] sm:$0xff]
    %v5927 = vld [vmem:[%s5226 + $0x188] sm:$0xff]
    %v5928 = vld [vmem:[%s5226 + $0x190] sm:$0xff]
    %v5929 = vld [vmem:[%s5226 + $0x198] sm:$0xff]
    %v5930 = vld [vmem:[%s5226 + $0x1a0] sm:$0xff]
    %v5931 = vld [vmem:[%s5226 + $0x1a8] sm:$0xff]
    %v5932 = vld [vmem:[%s5226 + $0x1b0] sm:$0xff]
    %v5933 = vld [vmem:[%s5226 + $0x1b8] sm:$0xff]
    %v5934 = vld [vmem:[%s5226 + $0x1c0] sm:$0xff]
    %v5935 = vld [vmem:[%s5226 + $0x1c8] sm:$0xff]
    %v5936 = vld [vmem:[%s5226 + $0x1d0] sm:$0xff]
    %v5937 = vld [vmem:[%s5226 + $0x1d8] sm:$0xff]
    %v5938 = vld [vmem:[%s5226 + $0x1e0] sm:$0xff]
    %v5939 = vld [vmem:[%s5226 + $0x1e8] sm:$0xff]
    %v5940 = vld [vmem:[%s5226 + $0x1f0] sm:$0xff]
    %v5941 = vld [vmem:[%s5226 + $0x1f8] sm:$0xff]
    %5942 = vmatpush.msra.mxu0 %v5938
    %5943 = vmatpush.msra.mxu0 %v5934
    %5944 = vmatpush.msra.mxu0 %v5930
    %5945 = vmatpush.msra.mxu0 %v5926
    %5946 = vmatpush.msra.mxu0 %v5922
    %5947 = vmatpush.msra.mxu0 %v5918
    %5948 = vmatpush.msra.mxu0 %v5914
    %5949 = vmatpush.msra.mxu0 %v5910
    %5950 = vmatpush.msra.mxu0 %v5906
    %5951 = vmatpush.msra.mxu0 %v5902
    %5952 = vmatpush.msra.mxu0 %v5898
    %5953 = vmatpush.msra.mxu0 %v5894
    %5954 = vmatpush.msra.mxu0 %v5890
    %5955 = vmatpush.msra.mxu0 %v5886
    %5956 = vmatpush.msra.mxu0 %v5882
    %5957 = vmatpush.msra.mxu0 %v5878
    %5958 = vmatmul.f32.gmra.mxu0 %v5871
    %v5959 = vpop.f32.mrf.mxu0
    %v5960 = vadd.f32 0.0, %v5959
    %5961 = vdwg.mxu0
    %5962 = vmatpush.msra.mxu0 %v5939
    %5963 = vmatpush.msra.mxu0 %v5935
    %5964 = vmatpush.msra.mxu0 %v5931
    %5965 = vmatpush.msra.mxu0 %v5927
    %5966 = vmatpush.msra.mxu0 %v5923
    %5967 = vmatpush.msra.mxu0 %v5919
    %5968 = vmatpush.msra.mxu0 %v5915
    %5969 = vmatpush.msra.mxu0 %v5911
    %5970 = vmatpush.msra.mxu0 %v5907
    %5971 = vmatpush.msra.mxu0 %v5903
    %5972 = vmatpush.msra.mxu0 %v5899
    %5973 = vmatpush.msra.mxu0 %v5895
    %5974 = vmatpush.msra.mxu0 %v5891
    %5975 = vmatpush.msra.mxu0 %v5887
    %5976 = vmatpush.msra.mxu0 %v5883
    %5977 = vmatpush.msra.mxu0 %v5879
    %5978 = vmatmul.f32.gmra.mxu0 %v5871
    %v5979 = vpop.f32.mrf.mxu0
    %v5980 = vadd.f32 0.0, %v5979
    %5981 = vdwg.mxu0
    %5982 = vmatpush.msra.mxu0 %v5940
    %5983 = vmatpush.msra.mxu0 %v5936
    %5984 = vmatpush.msra.mxu0 %v5932
    %5985 = vmatpush.msra.mxu0 %v5928
    %5986 = vmatpush.msra.mxu0 %v5924
    %5987 = vmatpush.msra.mxu0 %v5920
    %5988 = vmatpush.msra.mxu0 %v5916
    %5989 = vmatpush.msra.mxu0 %v5912
    %5990 = vmatpush.msra.mxu0 %v5908
    %5991 = vmatpush.msra.mxu0 %v5904
    %5992 = vmatpush.msra.mxu0 %v5900
    %5993 = vmatpush.msra.mxu0 %v5896
    %5994 = vmatpush.msra.mxu0 %v5892
    %5995 = vmatpush.msra.mxu0 %v5888
    %5996 = vmatpush.msra.mxu0 %v5884
    %5997 = vmatpush.msra.mxu0 %v5880
    %5998 = vmatmul.f32.gmra.mxu0 %v5871
    %v5999 = vpop.f32.mrf.mxu0
    %v6000 = vadd.f32 0.0, %v5999
    %6001 = vdwg.mxu0
    %6002 = vmatpush.msra.mxu0 %v5941
    %6003 = vmatpush.msra.mxu0 %v5937
    %6004 = vmatpush.msra.mxu0 %v5933
    %6005 = vmatpush.msra.mxu0 %v5929
    %6006 = vmatpush.msra.mxu0 %v5925
    %6007 = vmatpush.msra.mxu0 %v5921
    %6008 = vmatpush.msra.mxu0 %v5917
    %6009 = vmatpush.msra.mxu0 %v5913
    %6010 = vmatpush.msra.mxu0 %v5909
    %6011 = vmatpush.msra.mxu0 %v5905
    %6012 = vmatpush.msra.mxu0 %v5901
    %6013 = vmatpush.msra.mxu0 %v5897
    %6014 = vmatpush.msra.mxu0 %v5893
    %6015 = vmatpush.msra.mxu0 %v5889
    %6016 = vmatpush.msra.mxu0 %v5885
    %6017 = vmatpush.msra.mxu0 %v5881
    %6018 = vmatmul.f32.gmra.mxu0 %v5871
    %v6019 = vpop.f32.mrf.mxu0
    %v6020 = vadd.f32 0.0, %v6019
    %6021 = vdwg.mxu0
    %v6022 = vadd.f32 %v5874, %v5960
    %v6023 = vadd.f32 %v5875, %v5980
    %v6024 = vadd.f32 %v5876, %v6000
    %v6025 = vadd.f32 %v5877, %v6020
    %v6026 = vxor.u32 %v6022, 2147483648
    %v6027 = vxor.u32 %v6023, 2147483648
    %v6028 = vxor.u32 %v6024, 2147483648
    %v6029 = vmul.f32 %v6026, 1.442695
    %v6030 = vpow.pop %v6029
    %v6031 = vmul.f32 %v6027, 1.442695
    %v6032 = vpow.pop %v6031
    %v6033 = vmul.f32 %v6028, 1.442695
    %v6034 = vpow.pop %v6033
    %v6035 = vadd.f32 %v6030, 1.0
    %v6036 = vadd.f32 %v6032, 1.0
    %v6037 = vadd.f32 %v6034, 1.0
    %v6038 = vrcp.pop %v6035
    %v6039 = vmul.f32 %v6035, %v6038
    %v6040 = vsub.f32 1.0, %v6039
    %v6041 = vmul.f32 %v6038, %v6040
    %v6042 = vadd.f32 %v6038, %v6041
    %vm6043 = vweird.f32 %v6035
    %vm6044 = vweird.f32 %v6038
    %vm6045 = vmor %vm6043, %vm6044
    %v6046 = vsel %vm6045, %v6038, %v6042
    %v6047 = vand.u32 2147483647, %v6035
    %vm6048 = vcmp.eq.f32.partialorder %v6047, 8.507059e+37
    %v6049 = vand.u32 %v6035, 2147483648
    %v6050 = vor.u32 1.1754944e-38, %v6049
    %v6051 = vsel %vm6048, %v6050, %v6046
    %v6052 = vmul.f32 1.0, %v6051
    %v6053 = vrcp.pop %v6036
    %v6054 = vmul.f32 %v6036, %v6053
    %v6055 = vsub.f32 1.0, %v6054
    %v6056 = vmul.f32 %v6053, %v6055
    %v6057 = vadd.f32 %v6053, %v6056
    %vm6058 = vweird.f32 %v6036
    %vm6059 = vweird.f32 %v6053
    %vm6060 = vmor %vm6058, %vm6059
    %v6061 = vsel %vm6060, %v6053, %v6057
    %v6062 = vand.u32 2147483647, %v6036
    %vm6063 = vcmp.eq.f32.partialorder %v6062, 8.507059e+37
    %v6064 = vand.u32 %v6036, 2147483648
    %v6065 = vor.u32 1.1754944e-38, %v6064
    %v6066 = vsel %vm6063, %v6065, %v6061
    %v6067 = vmul.f32 1.0, %v6066
    %v6068 = vrcp.pop %v6037
    %v6069 = vmul.f32 %v6037, %v6068
    %v6070 = vsub.f32 1.0, %v6069
    %v6071 = vmul.f32 %v6068, %v6070
    %v6072 = vadd.f32 %v6068, %v6071
    %vm6073 = vweird.f32 %v6037
    %vm6074 = vweird.f32 %v6068
    %vm6075 = vmor %vm6073, %vm6074
    %v6076 = vsel %vm6075, %v6068, %v6072
    %v6077 = vand.u32 2147483647, %v6037
    %vm6078 = vcmp.eq.f32.partialorder %v6077, 8.507059e+37
    %v6079 = vand.u32 %v6037, 2147483648
    %v6080 = vor.u32 1.1754944e-38, %v6079
    %v6081 = vsel %vm6078, %v6080, %v6076
    %v6082 = vmul.f32 1.0, %v6081
    %v6083 = vtanh.pop %v6025
    %v6084 = vmul.f32 %v6067, %v5869
    %v6085 = vmul.f32 %v6052, %v6083
    %v6086 = vadd.f32 %v6084, %v6085
    %v6087 = vtanh.pop %v6086
    %v6088 = vmul.f32 %v6082, %v6087
    %6089 = vst [vmem:[#allocation2 + $0x18] sm:$0xff] %v6088
    %6090 = vst [vmem:[#allocation3 + $0x20] sm:$0xff] %v6088
    %v6091 = vld [vmem:[#allocation4 + $0x80] sm:$0xff]
    %v6092 = vld [vmem:[#allocation4 + $0x88] sm:$0xff]
    %v6093 = vld [vmem:[#allocation4 + $0x90] sm:$0xff]
    %v6094 = vld [vmem:[#allocation4 + $0x98] sm:$0xff]
    %v6095 = vld [vmem:[%s5226] sm:$0xff]
    %v6096 = vld [vmem:[%s5226 + $0x8] sm:$0xff]
    %v6097 = vld [vmem:[%s5226 + $0x10] sm:$0xff]
    %v6098 = vld [vmem:[%s5226 + $0x18] sm:$0xff]
    %v6099 = vld [vmem:[%s5226 + $0x20] sm:$0xff]
    %v6100 = vld [vmem:[%s5226 + $0x28] sm:$0xff]
    %v6101 = vld [vmem:[%s5226 + $0x30] sm:$0xff]
    %v6102 = vld [vmem:[%s5226 + $0x38] sm:$0xff]
    %v6103 = vld [vmem:[%s5226 + $0x40] sm:$0xff]
    %v6104 = vld [vmem:[%s5226 + $0x48] sm:$0xff]
    %v6105 = vld [vmem:[%s5226 + $0x50] sm:$0xff]
    %v6106 = vld [vmem:[%s5226 + $0x58] sm:$0xff]
    %v6107 = vld [vmem:[%s5226 + $0x60] sm:$0xff]
    %v6108 = vld [vmem:[%s5226 + $0x68] sm:$0xff]
    %v6109 = vld [vmem:[%s5226 + $0x70] sm:$0xff]
    %v6110 = vld [vmem:[%s5226 + $0x78] sm:$0xff]
    %v6111 = vld [vmem:[%s5226 + $0x80] sm:$0xff]
    %v6112 = vld [vmem:[%s5226 + $0x88] sm:$0xff]
    %v6113 = vld [vmem:[%s5226 + $0x90] sm:$0xff]
    %v6114 = vld [vmem:[%s5226 + $0x98] sm:$0xff]
    %v6115 = vld [vmem:[%s5226 + $0xa0] sm:$0xff]
    %v6116 = vld [vmem:[%s5226 + $0xa8] sm:$0xff]
    %v6117 = vld [vmem:[%s5226 + $0xb0] sm:$0xff]
    %v6118 = vld [vmem:[%s5226 + $0xb8] sm:$0xff]
    %v6119 = vld [vmem:[%s5226 + $0xc0] sm:$0xff]
    %v6120 = vld [vmem:[%s5226 + $0xc8] sm:$0xff]
    %v6121 = vld [vmem:[%s5226 + $0xd0] sm:$0xff]
    %v6122 = vld [vmem:[%s5226 + $0xd8] sm:$0xff]
    %v6123 = vld [vmem:[%s5226 + $0xe0] sm:$0xff]
    %v6124 = vld [vmem:[%s5226 + $0xe8] sm:$0xff]
    %v6125 = vld [vmem:[%s5226 + $0xf0] sm:$0xff]
    %v6126 = vld [vmem:[%s5226 + $0xf8] sm:$0xff]
    %v6127 = vld [vmem:[%s5226 + $0x100] sm:$0xff]
    %v6128 = vld [vmem:[%s5226 + $0x108] sm:$0xff]
    %v6129 = vld [vmem:[%s5226 + $0x110] sm:$0xff]
    %v6130 = vld [vmem:[%s5226 + $0x118] sm:$0xff]
    %v6131 = vld [vmem:[%s5226 + $0x120] sm:$0xff]
    %v6132 = vld [vmem:[%s5226 + $0x128] sm:$0xff]
    %v6133 = vld [vmem:[%s5226 + $0x130] sm:$0xff]
    %v6134 = vld [vmem:[%s5226 + $0x138] sm:$0xff]
    %v6135 = vld [vmem:[%s5226 + $0x140] sm:$0xff]
    %v6136 = vld [vmem:[%s5226 + $0x148] sm:$0xff]
    %v6137 = vld [vmem:[%s5226 + $0x150] sm:$0xff]
    %v6138 = vld [vmem:[%s5226 + $0x158] sm:$0xff]
    %v6139 = vld [vmem:[%s5226 + $0x160] sm:$0xff]
    %v6140 = vld [vmem:[%s5226 + $0x168] sm:$0xff]
    %v6141 = vld [vmem:[%s5226 + $0x170] sm:$0xff]
    %v6142 = vld [vmem:[%s5226 + $0x178] sm:$0xff]
    %v6143 = vld [vmem:[%s5226 + $0x180] sm:$0xff]
    %v6144 = vld [vmem:[%s5226 + $0x188] sm:$0xff]
    %v6145 = vld [vmem:[%s5226 + $0x190] sm:$0xff]
    %v6146 = vld [vmem:[%s5226 + $0x198] sm:$0xff]
    %v6147 = vld [vmem:[%s5226 + $0x1a0] sm:$0xff]
    %v6148 = vld [vmem:[%s5226 + $0x1a8] sm:$0xff]
    %v6149 = vld [vmem:[%s5226 + $0x1b0] sm:$0xff]
    %v6150 = vld [vmem:[%s5226 + $0x1b8] sm:$0xff]
    %v6151 = vld [vmem:[%s5226 + $0x1c0] sm:$0xff]
    %v6152 = vld [vmem:[%s5226 + $0x1c8] sm:$0xff]
    %v6153 = vld [vmem:[%s5226 + $0x1d0] sm:$0xff]
    %v6154 = vld [vmem:[%s5226 + $0x1d8] sm:$0xff]
    %v6155 = vld [vmem:[%s5226 + $0x1e0] sm:$0xff]
    %v6156 = vld [vmem:[%s5226 + $0x1e8] sm:$0xff]
    %v6157 = vld [vmem:[%s5226 + $0x1f0] sm:$0xff]
    %v6158 = vld [vmem:[%s5226 + $0x1f8] sm:$0xff]
    %6159 = vmatpush.msra.mxu0 %v6155
    %6160 = vmatpush.msra.mxu0 %v6151
    %6161 = vmatpush.msra.mxu0 %v6147
    %6162 = vmatpush.msra.mxu0 %v6143
    %6163 = vmatpush.msra.mxu0 %v6139
    %6164 = vmatpush.msra.mxu0 %v6135
    %6165 = vmatpush.msra.mxu0 %v6131
    %6166 = vmatpush.msra.mxu0 %v6127
    %6167 = vmatpush.msra.mxu0 %v6123
    %6168 = vmatpush.msra.mxu0 %v6119
    %6169 = vmatpush.msra.mxu0 %v6115
    %6170 = vmatpush.msra.mxu0 %v6111
    %6171 = vmatpush.msra.mxu0 %v6107
    %6172 = vmatpush.msra.mxu0 %v6103
    %6173 = vmatpush.msra.mxu0 %v6099
    %6174 = vmatpush.msra.mxu0 %v6095
    %6175 = vmatmul.f32.gmra.mxu0 %v6088
    %v6176 = vpop.f32.mrf.mxu0
    %v6177 = vadd.f32 0.0, %v6176
    %6178 = vdwg.mxu0
    %6179 = vmatpush.msra.mxu0 %v6156
    %6180 = vmatpush.msra.mxu0 %v6152
    %6181 = vmatpush.msra.mxu0 %v6148
    %6182 = vmatpush.msra.mxu0 %v6144
    %6183 = vmatpush.msra.mxu0 %v6140
    %6184 = vmatpush.msra.mxu0 %v6136
    %6185 = vmatpush.msra.mxu0 %v6132
    %6186 = vmatpush.msra.mxu0 %v6128
    %6187 = vmatpush.msra.mxu0 %v6124
    %6188 = vmatpush.msra.mxu0 %v6120
    %6189 = vmatpush.msra.mxu0 %v6116
    %6190 = vmatpush.msra.mxu0 %v6112
    %6191 = vmatpush.msra.mxu0 %v6108
    %6192 = vmatpush.msra.mxu0 %v6104
    %6193 = vmatpush.msra.mxu0 %v6100
    %6194 = vmatpush.msra.mxu0 %v6096
    %6195 = vmatmul.f32.gmra.mxu0 %v6088
    %v6196 = vpop.f32.mrf.mxu0
    %v6197 = vadd.f32 0.0, %v6196
    %6198 = vdwg.mxu0
    %6199 = vmatpush.msra.mxu0 %v6157
    %6200 = vmatpush.msra.mxu0 %v6153
    %6201 = vmatpush.msra.mxu0 %v6149
    %6202 = vmatpush.msra.mxu0 %v6145
    %6203 = vmatpush.msra.mxu0 %v6141
    %6204 = vmatpush.msra.mxu0 %v6137
    %6205 = vmatpush.msra.mxu0 %v6133
    %6206 = vmatpush.msra.mxu0 %v6129
    %6207 = vmatpush.msra.mxu0 %v6125
    %6208 = vmatpush.msra.mxu0 %v6121
    %6209 = vmatpush.msra.mxu0 %v6117
    %6210 = vmatpush.msra.mxu0 %v6113
    %6211 = vmatpush.msra.mxu0 %v6109
    %6212 = vmatpush.msra.mxu0 %v6105
    %6213 = vmatpush.msra.mxu0 %v6101
    %6214 = vmatpush.msra.mxu0 %v6097
    %6215 = vmatmul.f32.gmra.mxu0 %v6088
    %v6216 = vpop.f32.mrf.mxu0
    %v6217 = vadd.f32 0.0, %v6216
    %6218 = vdwg.mxu0
    %6219 = vmatpush.msra.mxu0 %v6158
    %6220 = vmatpush.msra.mxu0 %v6154
    %6221 = vmatpush.msra.mxu0 %v6150
    %6222 = vmatpush.msra.mxu0 %v6146
    %6223 = vmatpush.msra.mxu0 %v6142
    %6224 = vmatpush.msra.mxu0 %v6138
    %6225 = vmatpush.msra.mxu0 %v6134
    %6226 = vmatpush.msra.mxu0 %v6130
    %6227 = vmatpush.msra.mxu0 %v6126
    %6228 = vmatpush.msra.mxu0 %v6122
    %6229 = vmatpush.msra.mxu0 %v6118
    %6230 = vmatpush.msra.mxu0 %v6114
    %6231 = vmatpush.msra.mxu0 %v6110
    %6232 = vmatpush.msra.mxu0 %v6106
    %6233 = vmatpush.msra.mxu0 %v6102
    %6234 = vmatpush.msra.mxu0 %v6098
    %6235 = vmatmul.f32.gmra.mxu0 %v6088
    %v6236 = vpop.f32.mrf.mxu0
    %v6237 = vadd.f32 0.0, %v6236
    %6238 = vdwg.mxu0
    %v6239 = vadd.f32 %v6091, %v6177
    %v6240 = vadd.f32 %v6092, %v6197
    %v6241 = vadd.f32 %v6093, %v6217
    %v6242 = vadd.f32 %v6094, %v6237
    %v6243 = vxor.u32 %v6239, 2147483648
    %v6244 = vxor.u32 %v6240, 2147483648
    %v6245 = vxor.u32 %v6241, 2147483648
    %v6246 = vmul.f32 %v6243, 1.442695
    %v6247 = vpow.pop %v6246
    %v6248 = vmul.f32 %v6244, 1.442695
    %v6249 = vpow.pop %v6248
    %v6250 = vmul.f32 %v6245, 1.442695
    %v6251 = vpow.pop %v6250
    %v6252 = vadd.f32 %v6247, 1.0
    %v6253 = vadd.f32 %v6249, 1.0
    %v6254 = vadd.f32 %v6251, 1.0
    %v6255 = vrcp.pop %v6252
    %v6256 = vmul.f32 %v6252, %v6255
    %v6257 = vsub.f32 1.0, %v6256
    %v6258 = vmul.f32 %v6255, %v6257
    %v6259 = vadd.f32 %v6255, %v6258
    %vm6260 = vweird.f32 %v6252
    %vm6261 = vweird.f32 %v6255
    %vm6262 = vmor %vm6260, %vm6261
    %v6263 = vsel %vm6262, %v6255, %v6259
    %v6264 = vand.u32 2147483647, %v6252
    %vm6265 = vcmp.eq.f32.partialorder %v6264, 8.507059e+37
    %v6266 = vand.u32 %v6252, 2147483648
    %v6267 = vor.u32 1.1754944e-38, %v6266
    %v6268 = vsel %vm6265, %v6267, %v6263
    %v6269 = vmul.f32 1.0, %v6268
    %v6270 = vrcp.pop %v6253
    %v6271 = vmul.f32 %v6253, %v6270
    %v6272 = vsub.f32 1.0, %v6271
    %v6273 = vmul.f32 %v6270, %v6272
    %v6274 = vadd.f32 %v6270, %v6273
    %vm6275 = vweird.f32 %v6253
    %vm6276 = vweird.f32 %v6270
    %vm6277 = vmor %vm6275, %vm6276
    %v6278 = vsel %vm6277, %v6270, %v6274
    %v6279 = vand.u32 2147483647, %v6253
    %vm6280 = vcmp.eq.f32.partialorder %v6279, 8.507059e+37
    %v6281 = vand.u32 %v6253, 2147483648
    %v6282 = vor.u32 1.1754944e-38, %v6281
    %v6283 = vsel %vm6280, %v6282, %v6278
    %v6284 = vmul.f32 1.0, %v6283
    %v6285 = vrcp.pop %v6254
    %v6286 = vmul.f32 %v6254, %v6285
    %v6287 = vsub.f32 1.0, %v6286
    %v6288 = vmul.f32 %v6285, %v6287
    %v6289 = vadd.f32 %v6285, %v6288
    %vm6290 = vweird.f32 %v6254
    %vm6291 = vweird.f32 %v6285
    %vm6292 = vmor %vm6290, %vm6291
    %v6293 = vsel %vm6292, %v6285, %v6289
    %v6294 = vand.u32 2147483647, %v6254
    %vm6295 = vcmp.eq.f32.partialorder %v6294, 8.507059e+37
    %v6296 = vand.u32 %v6254, 2147483648
    %v6297 = vor.u32 1.1754944e-38, %v6296
    %v6298 = vsel %vm6295, %v6297, %v6293
    %v6299 = vmul.f32 1.0, %v6298
    %v6300 = vtanh.pop %v6242
    %v6301 = vmul.f32 %v6284, %v6086
    %v6302 = vmul.f32 %v6269, %v6300
    %v6303 = vadd.f32 %v6301, %v6302
    %v6304 = vtanh.pop %v6303
    %v6305 = vmul.f32 %v6299, %v6304
    %6306 = vst [vmem:[#allocation2 + $0x20] sm:$0xff] %v6305
    %6307 = vst [vmem:[#allocation3 + $0x18] sm:$0xff] %v6305
    %v6308 = vld [vmem:[#allocation4 + $0xa0] sm:$0xff]
    %v6309 = vld [vmem:[#allocation4 + $0xa8] sm:$0xff]
    %v6310 = vld [vmem:[#allocation4 + $0xb0] sm:$0xff]
    %v6311 = vld [vmem:[#allocation4 + $0xb8] sm:$0xff]
    %v6312 = vld [vmem:[%s5226] sm:$0xff]
    %v6313 = vld [vmem:[%s5226 + $0x8] sm:$0xff]
    %v6314 = vld [vmem:[%s5226 + $0x10] sm:$0xff]
    %v6315 = vld [vmem:[%s5226 + $0x18] sm:$0xff]
    %v6316 = vld [vmem:[%s5226 + $0x20] sm:$0xff]
    %v6317 = vld [vmem:[%s5226 + $0x28] sm:$0xff]
    %v6318 = vld [vmem:[%s5226 + $0x30] sm:$0xff]
    %v6319 = vld [vmem:[%s5226 + $0x38] sm:$0xff]
    %v6320 = vld [vmem:[%s5226 + $0x40] sm:$0xff]
    %v6321 = vld [vmem:[%s5226 + $0x48] sm:$0xff]
    %v6322 = vld [vmem:[%s5226 + $0x50] sm:$0xff]
    %v6323 = vld [vmem:[%s5226 + $0x58] sm:$0xff]
    %v6324 = vld [vmem:[%s5226 + $0x60] sm:$0xff]
    %v6325 = vld [vmem:[%s5226 + $0x68] sm:$0xff]
    %v6326 = vld [vmem:[%s5226 + $0x70] sm:$0xff]
    %v6327 = vld [vmem:[%s5226 + $0x78] sm:$0xff]
    %v6328 = vld [vmem:[%s5226 + $0x80] sm:$0xff]
    %v6329 = vld [vmem:[%s5226 + $0x88] sm:$0xff]
    %v6330 = vld [vmem:[%s5226 + $0x90] sm:$0xff]
    %v6331 = vld [vmem:[%s5226 + $0x98] sm:$0xff]
    %v6332 = vld [vmem:[%s5226 + $0xa0] sm:$0xff]
    %v6333 = vld [vmem:[%s5226 + $0xa8] sm:$0xff]
    %v6334 = vld [vmem:[%s5226 + $0xb0] sm:$0xff]
    %v6335 = vld [vmem:[%s5226 + $0xb8] sm:$0xff]
    %v6336 = vld [vmem:[%s5226 + $0xc0] sm:$0xff]
    %v6337 = vld [vmem:[%s5226 + $0xc8] sm:$0xff]
    %v6338 = vld [vmem:[%s5226 + $0xd0] sm:$0xff]
    %v6339 = vld [vmem:[%s5226 + $0xd8] sm:$0xff]
    %v6340 = vld [vmem:[%s5226 + $0xe0] sm:$0xff]
    %v6341 = vld [vmem:[%s5226 + $0xe8] sm:$0xff]
    %v6342 = vld [vmem:[%s5226 + $0xf0] sm:$0xff]
    %v6343 = vld [vmem:[%s5226 + $0xf8] sm:$0xff]
    %v6344 = vld [vmem:[%s5226 + $0x100] sm:$0xff]
    %v6345 = vld [vmem:[%s5226 + $0x108] sm:$0xff]
    %v6346 = vld [vmem:[%s5226 + $0x110] sm:$0xff]
    %v6347 = vld [vmem:[%s5226 + $0x118] sm:$0xff]
    %v6348 = vld [vmem:[%s5226 + $0x120] sm:$0xff]
    %v6349 = vld [vmem:[%s5226 + $0x128] sm:$0xff]
    %v6350 = vld [vmem:[%s5226 + $0x130] sm:$0xff]
    %v6351 = vld [vmem:[%s5226 + $0x138] sm:$0xff]
    %v6352 = vld [vmem:[%s5226 + $0x140] sm:$0xff]
    %v6353 = vld [vmem:[%s5226 + $0x148] sm:$0xff]
    %v6354 = vld [vmem:[%s5226 + $0x150] sm:$0xff]
    %v6355 = vld [vmem:[%s5226 + $0x158] sm:$0xff]
    %v6356 = vld [vmem:[%s5226 + $0x160] sm:$0xff]
    %v6357 = vld [vmem:[%s5226 + $0x168] sm:$0xff]
    %v6358 = vld [vmem:[%s5226 + $0x170] sm:$0xff]
    %v6359 = vld [vmem:[%s5226 + $0x178] sm:$0xff]
    %v6360 = vld [vmem:[%s5226 + $0x180] sm:$0xff]
    %v6361 = vld [vmem:[%s5226 + $0x188] sm:$0xff]
    %v6362 = vld [vmem:[%s5226 + $0x190] sm:$0xff]
    %v6363 = vld [vmem:[%s5226 + $0x198] sm:$0xff]
    %v6364 = vld [vmem:[%s5226 + $0x1a0] sm:$0xff]
    %v6365 = vld [vmem:[%s5226 + $0x1a8] sm:$0xff]
    %v6366 = vld [vmem:[%s5226 + $0x1b0] sm:$0xff]
    %v6367 = vld [vmem:[%s5226 + $0x1b8] sm:$0xff]
    %v6368 = vld [vmem:[%s5226 + $0x1c0] sm:$0xff]
    %v6369 = vld [vmem:[%s5226 + $0x1c8] sm:$0xff]
    %v6370 = vld [vmem:[%s5226 + $0x1d0] sm:$0xff]
    %v6371 = vld [vmem:[%s5226 + $0x1d8] sm:$0xff]
    %v6372 = vld [vmem:[%s5226 + $0x1e0] sm:$0xff]
    %v6373 = vld [vmem:[%s5226 + $0x1e8] sm:$0xff]
    %v6374 = vld [vmem:[%s5226 + $0x1f0] sm:$0xff]
    %v6375 = vld [vmem:[%s5226 + $0x1f8] sm:$0xff]
    %6376 = vmatpush.msra.mxu0 %v6372
    %6377 = vmatpush.msra.mxu0 %v6368
    %6378 = vmatpush.msra.mxu0 %v6364
    %6379 = vmatpush.msra.mxu0 %v6360
    %6380 = vmatpush.msra.mxu0 %v6356
    %6381 = vmatpush.msra.mxu0 %v6352
    %6382 = vmatpush.msra.mxu0 %v6348
    %6383 = vmatpush.msra.mxu0 %v6344
    %6384 = vmatpush.msra.mxu0 %v6340
    %6385 = vmatpush.msra.mxu0 %v6336
    %6386 = vmatpush.msra.mxu0 %v6332
    %6387 = vmatpush.msra.mxu0 %v6328
    %6388 = vmatpush.msra.mxu0 %v6324
    %6389 = vmatpush.msra.mxu0 %v6320
    %6390 = vmatpush.msra.mxu0 %v6316
    %6391 = vmatpush.msra.mxu0 %v6312
    %6392 = vmatmul.f32.gmra.mxu0 %v6305
    %v6393 = vpop.f32.mrf.mxu0
    %v6394 = vadd.f32 0.0, %v6393
    %6395 = vdwg.mxu0
    %6396 = vmatpush.msra.mxu0 %v6373
    %6397 = vmatpush.msra.mxu0 %v6369
    %6398 = vmatpush.msra.mxu0 %v6365
    %6399 = vmatpush.msra.mxu0 %v6361
    %6400 = vmatpush.msra.mxu0 %v6357
    %6401 = vmatpush.msra.mxu0 %v6353
    %6402 = vmatpush.msra.mxu0 %v6349
    %6403 = vmatpush.msra.mxu0 %v6345
    %6404 = vmatpush.msra.mxu0 %v6341
    %6405 = vmatpush.msra.mxu0 %v6337
    %6406 = vmatpush.msra.mxu0 %v6333
    %6407 = vmatpush.msra.mxu0 %v6329
    %6408 = vmatpush.msra.mxu0 %v6325
    %6409 = vmatpush.msra.mxu0 %v6321
    %6410 = vmatpush.msra.mxu0 %v6317
    %6411 = vmatpush.msra.mxu0 %v6313
    %6412 = vmatmul.f32.gmra.mxu0 %v6305
    %v6413 = vpop.f32.mrf.mxu0
    %v6414 = vadd.f32 0.0, %v6413
    %6415 = vdwg.mxu0
    %6416 = vmatpush.msra.mxu0 %v6374
    %6417 = vmatpush.msra.mxu0 %v6370
    %6418 = vmatpush.msra.mxu0 %v6366
    %6419 = vmatpush.msra.mxu0 %v6362
    %6420 = vmatpush.msra.mxu0 %v6358
    %6421 = vmatpush.msra.mxu0 %v6354
    %6422 = vmatpush.msra.mxu0 %v6350
    %6423 = vmatpush.msra.mxu0 %v6346
    %6424 = vmatpush.msra.mxu0 %v6342
    %6425 = vmatpush.msra.mxu0 %v6338
    %6426 = vmatpush.msra.mxu0 %v6334
    %6427 = vmatpush.msra.mxu0 %v6330
    %6428 = vmatpush.msra.mxu0 %v6326
    %6429 = vmatpush.msra.mxu0 %v6322
    %6430 = vmatpush.msra.mxu0 %v6318
    %6431 = vmatpush.msra.mxu0 %v6314
    %6432 = vmatmul.f32.gmra.mxu0 %v6305
    %v6433 = vpop.f32.mrf.mxu0
    %v6434 = vadd.f32 0.0, %v6433
    %6435 = vdwg.mxu0
    %6436 = vmatpush.msra.mxu0 %v6375
    %6437 = vmatpush.msra.mxu0 %v6371
    %6438 = vmatpush.msra.mxu0 %v6367
    %6439 = vmatpush.msra.mxu0 %v6363
    %6440 = vmatpush.msra.mxu0 %v6359
    %6441 = vmatpush.msra.mxu0 %v6355
    %6442 = vmatpush.msra.mxu0 %v6351
    %6443 = vmatpush.msra.mxu0 %v6347
    %6444 = vmatpush.msra.mxu0 %v6343
    %6445 = vmatpush.msra.mxu0 %v6339
    %6446 = vmatpush.msra.mxu0 %v6335
    %6447 = vmatpush.msra.mxu0 %v6331
    %6448 = vmatpush.msra.mxu0 %v6327
    %6449 = vmatpush.msra.mxu0 %v6323
    %6450 = vmatpush.msra.mxu0 %v6319
    %6451 = vmatpush.msra.mxu0 %v6315
    %6452 = vmatmul.f32.gmra.mxu0 %v6305
    %v6453 = vpop.f32.mrf.mxu0
    %v6454 = vadd.f32 0.0, %v6453
    %6455 = vdwg.mxu0
    %v6456 = vadd.f32 %v6308, %v6394
    %v6457 = vadd.f32 %v6309, %v6414
    %v6458 = vadd.f32 %v6310, %v6434
    %v6459 = vadd.f32 %v6311, %v6454
    %v6460 = vxor.u32 %v6456, 2147483648
    %v6461 = vxor.u32 %v6457, 2147483648
    %v6462 = vxor.u32 %v6458, 2147483648
    %v6463 = vmul.f32 %v6460, 1.442695
    %v6464 = vpow.pop %v6463
    %v6465 = vmul.f32 %v6461, 1.442695
    %v6466 = vpow.pop %v6465
    %v6467 = vmul.f32 %v6462, 1.442695
    %v6468 = vpow.pop %v6467
    %v6469 = vadd.f32 %v6464, 1.0
    %v6470 = vadd.f32 %v6466, 1.0
    %v6471 = vadd.f32 %v6468, 1.0
    %v6472 = vrcp.pop %v6469
    %v6473 = vmul.f32 %v6469, %v6472
    %v6474 = vsub.f32 1.0, %v6473
    %v6475 = vmul.f32 %v6472, %v6474
    %v6476 = vadd.f32 %v6472, %v6475
    %vm6477 = vweird.f32 %v6469
    %vm6478 = vweird.f32 %v6472
    %vm6479 = vmor %vm6477, %vm6478
    %v6480 = vsel %vm6479, %v6472, %v6476
    %v6481 = vand.u32 2147483647, %v6469
    %vm6482 = vcmp.eq.f32.partialorder %v6481, 8.507059e+37
    %v6483 = vand.u32 %v6469, 2147483648
    %v6484 = vor.u32 1.1754944e-38, %v6483
    %v6485 = vsel %vm6482, %v6484, %v6480
    %v6486 = vmul.f32 1.0, %v6485
    %v6487 = vrcp.pop %v6470
    %v6488 = vmul.f32 %v6470, %v6487
    %v6489 = vsub.f32 1.0, %v6488
    %v6490 = vmul.f32 %v6487, %v6489
    %v6491 = vadd.f32 %v6487, %v6490
    %vm6492 = vweird.f32 %v6470
    %vm6493 = vweird.f32 %v6487
    %vm6494 = vmor %vm6492, %vm6493
    %v6495 = vsel %vm6494, %v6487, %v6491
    %v6496 = vand.u32 2147483647, %v6470
    %vm6497 = vcmp.eq.f32.partialorder %v6496, 8.507059e+37
    %v6498 = vand.u32 %v6470, 2147483648
    %v6499 = vor.u32 1.1754944e-38, %v6498
    %v6500 = vsel %vm6497, %v6499, %v6495
    %v6501 = vmul.f32 1.0, %v6500
    %v6502 = vrcp.pop %v6471
    %v6503 = vmul.f32 %v6471, %v6502
    %v6504 = vsub.f32 1.0, %v6503
    %v6505 = vmul.f32 %v6502, %v6504
    %v6506 = vadd.f32 %v6502, %v6505
    %vm6507 = vweird.f32 %v6471
    %vm6508 = vweird.f32 %v6502
    %vm6509 = vmor %vm6507, %vm6508
    %v6510 = vsel %vm6509, %v6502, %v6506
    %v6511 = vand.u32 2147483647, %v6471
    %vm6512 = vcmp.eq.f32.partialorder %v6511, 8.507059e+37
    %v6513 = vand.u32 %v6471, 2147483648
    %v6514 = vor.u32 1.1754944e-38, %v6513
    %v6515 = vsel %vm6512, %v6514, %v6510
    %v6516 = vmul.f32 1.0, %v6515
    %v6517 = vtanh.pop %v6459
    %v6518 = vmul.f32 %v6501, %v6303
    %v6519 = vmul.f32 %v6486, %v6517
    %v6520 = vadd.f32 %v6518, %v6519
    %v6521 = vtanh.pop %v6520
    %v6522 = vmul.f32 %v6516, %v6521
    %6523 = vst [vmem:[#allocation2 + $0x28] sm:$0xff] %v6522
    %6524 = vst [vmem:[#allocation3 + $0x10] sm:$0xff] %v6522
    %v6525 = vld [vmem:[#allocation4 + $0xc0] sm:$0xff]
    %v6526 = vld [vmem:[#allocation4 + $0xc8] sm:$0xff]
    %v6527 = vld [vmem:[#allocation4 + $0xd0] sm:$0xff]
    %v6528 = vld [vmem:[#allocation4 + $0xd8] sm:$0xff]
    %v6529 = vld [vmem:[%s5226] sm:$0xff]
    %v6530 = vld [vmem:[%s5226 + $0x8] sm:$0xff]
    %v6531 = vld [vmem:[%s5226 + $0x10] sm:$0xff]
    %v6532 = vld [vmem:[%s5226 + $0x18] sm:$0xff]
    %v6533 = vld [vmem:[%s5226 + $0x20] sm:$0xff]
    %v6534 = vld [vmem:[%s5226 + $0x28] sm:$0xff]
    %v6535 = vld [vmem:[%s5226 + $0x30] sm:$0xff]
    %v6536 = vld [vmem:[%s5226 + $0x38] sm:$0xff]
    %v6537 = vld [vmem:[%s5226 + $0x40] sm:$0xff]
    %v6538 = vld [vmem:[%s5226 + $0x48] sm:$0xff]
    %v6539 = vld [vmem:[%s5226 + $0x50] sm:$0xff]
    %v6540 = vld [vmem:[%s5226 + $0x58] sm:$0xff]
    %v6541 = vld [vmem:[%s5226 + $0x60] sm:$0xff]
    %v6542 = vld [vmem:[%s5226 + $0x68] sm:$0xff]
    %v6543 = vld [vmem:[%s5226 + $0x70] sm:$0xff]
    %v6544 = vld [vmem:[%s5226 + $0x78] sm:$0xff]
    %v6545 = vld [vmem:[%s5226 + $0x80] sm:$0xff]
    %v6546 = vld [vmem:[%s5226 + $0x88] sm:$0xff]
    %v6547 = vld [vmem:[%s5226 + $0x90] sm:$0xff]
    %v6548 = vld [vmem:[%s5226 + $0x98] sm:$0xff]
    %v6549 = vld [vmem:[%s5226 + $0xa0] sm:$0xff]
    %v6550 = vld [vmem:[%s5226 + $0xa8] sm:$0xff]
    %v6551 = vld [vmem:[%s5226 + $0xb0] sm:$0xff]
    %v6552 = vld [vmem:[%s5226 + $0xb8] sm:$0xff]
    %v6553 = vld [vmem:[%s5226 + $0xc0] sm:$0xff]
    %v6554 = vld [vmem:[%s5226 + $0xc8] sm:$0xff]
    %v6555 = vld [vmem:[%s5226 + $0xd0] sm:$0xff]
    %v6556 = vld [vmem:[%s5226 + $0xd8] sm:$0xff]
    %v6557 = vld [vmem:[%s5226 + $0xe0] sm:$0xff]
    %v6558 = vld [vmem:[%s5226 + $0xe8] sm:$0xff]
    %v6559 = vld [vmem:[%s5226 + $0xf0] sm:$0xff]
    %v6560 = vld [vmem:[%s5226 + $0xf8] sm:$0xff]
    %v6561 = vld [vmem:[%s5226 + $0x100] sm:$0xff]
    %v6562 = vld [vmem:[%s5226 + $0x108] sm:$0xff]
    %v6563 = vld [vmem:[%s5226 + $0x110] sm:$0xff]
    %v6564 = vld [vmem:[%s5226 + $0x118] sm:$0xff]
    %v6565 = vld [vmem:[%s5226 + $0x120] sm:$0xff]
    %v6566 = vld [vmem:[%s5226 + $0x128] sm:$0xff]
    %v6567 = vld [vmem:[%s5226 + $0x130] sm:$0xff]
    %v6568 = vld [vmem:[%s5226 + $0x138] sm:$0xff]
    %v6569 = vld [vmem:[%s5226 + $0x140] sm:$0xff]
    %v6570 = vld [vmem:[%s5226 + $0x148] sm:$0xff]
    %v6571 = vld [vmem:[%s5226 + $0x150] sm:$0xff]
    %v6572 = vld [vmem:[%s5226 + $0x158] sm:$0xff]
    %v6573 = vld [vmem:[%s5226 + $0x160] sm:$0xff]
    %v6574 = vld [vmem:[%s5226 + $0x168] sm:$0xff]
    %v6575 = vld [vmem:[%s5226 + $0x170] sm:$0xff]
    %v6576 = vld [vmem:[%s5226 + $0x178] sm:$0xff]
    %v6577 = vld [vmem:[%s5226 + $0x180] sm:$0xff]
    %v6578 = vld [vmem:[%s5226 + $0x188] sm:$0xff]
    %v6579 = vld [vmem:[%s5226 + $0x190] sm:$0xff]
    %v6580 = vld [vmem:[%s5226 + $0x198] sm:$0xff]
    %v6581 = vld [vmem:[%s5226 + $0x1a0] sm:$0xff]
    %v6582 = vld [vmem:[%s5226 + $0x1a8] sm:$0xff]
    %v6583 = vld [vmem:[%s5226 + $0x1b0] sm:$0xff]
    %v6584 = vld [vmem:[%s5226 + $0x1b8] sm:$0xff]
    %v6585 = vld [vmem:[%s5226 + $0x1c0] sm:$0xff]
    %v6586 = vld [vmem:[%s5226 + $0x1c8] sm:$0xff]
    %v6587 = vld [vmem:[%s5226 + $0x1d0] sm:$0xff]
    %v6588 = vld [vmem:[%s5226 + $0x1d8] sm:$0xff]
    %v6589 = vld [vmem:[%s5226 + $0x1e0] sm:$0xff]
    %v6590 = vld [vmem:[%s5226 + $0x1e8] sm:$0xff]
    %v6591 = vld [vmem:[%s5226 + $0x1f0] sm:$0xff]
    %v6592 = vld [vmem:[%s5226 + $0x1f8] sm:$0xff]
    %6593 = vmatpush.msra.mxu0 %v6589
    %6594 = vmatpush.msra.mxu0 %v6585
    %6595 = vmatpush.msra.mxu0 %v6581
    %6596 = vmatpush.msra.mxu0 %v6577
    %6597 = vmatpush.msra.mxu0 %v6573
    %6598 = vmatpush.msra.mxu0 %v6569
    %6599 = vmatpush.msra.mxu0 %v6565
    %6600 = vmatpush.msra.mxu0 %v6561
    %6601 = vmatpush.msra.mxu0 %v6557
    %6602 = vmatpush.msra.mxu0 %v6553
    %6603 = vmatpush.msra.mxu0 %v6549
    %6604 = vmatpush.msra.mxu0 %v6545
    %6605 = vmatpush.msra.mxu0 %v6541
    %6606 = vmatpush.msra.mxu0 %v6537
    %6607 = vmatpush.msra.mxu0 %v6533
    %6608 = vmatpush.msra.mxu0 %v6529
    %6609 = vmatmul.f32.gmra.mxu0 %v6522
    %v6610 = vpop.f32.mrf.mxu0
    %v6611 = vadd.f32 0.0, %v6610
    %6612 = vdwg.mxu0
    %6613 = vmatpush.msra.mxu0 %v6590
    %6614 = vmatpush.msra.mxu0 %v6586
    %6615 = vmatpush.msra.mxu0 %v6582
    %6616 = vmatpush.msra.mxu0 %v6578
    %6617 = vmatpush.msra.mxu0 %v6574
    %6618 = vmatpush.msra.mxu0 %v6570
    %6619 = vmatpush.msra.mxu0 %v6566
    %6620 = vmatpush.msra.mxu0 %v6562
    %6621 = vmatpush.msra.mxu0 %v6558
    %6622 = vmatpush.msra.mxu0 %v6554
    %6623 = vmatpush.msra.mxu0 %v6550
    %6624 = vmatpush.msra.mxu0 %v6546
    %6625 = vmatpush.msra.mxu0 %v6542
    %6626 = vmatpush.msra.mxu0 %v6538
    %6627 = vmatpush.msra.mxu0 %v6534
    %6628 = vmatpush.msra.mxu0 %v6530
    %6629 = vmatmul.f32.gmra.mxu0 %v6522
    %v6630 = vpop.f32.mrf.mxu0
    %v6631 = vadd.f32 0.0, %v6630
    %6632 = vdwg.mxu0
    %6633 = vmatpush.msra.mxu0 %v6591
    %6634 = vmatpush.msra.mxu0 %v6587
    %6635 = vmatpush.msra.mxu0 %v6583
    %6636 = vmatpush.msra.mxu0 %v6579
    %6637 = vmatpush.msra.mxu0 %v6575
    %6638 = vmatpush.msra.mxu0 %v6571
    %6639 = vmatpush.msra.mxu0 %v6567
    %6640 = vmatpush.msra.mxu0 %v6563
    %6641 = vmatpush.msra.mxu0 %v6559
    %6642 = vmatpush.msra.mxu0 %v6555
    %6643 = vmatpush.msra.mxu0 %v6551
    %6644 = vmatpush.msra.mxu0 %v6547
    %6645 = vmatpush.msra.mxu0 %v6543
    %6646 = vmatpush.msra.mxu0 %v6539
    %6647 = vmatpush.msra.mxu0 %v6535
    %6648 = vmatpush.msra.mxu0 %v6531
    %6649 = vmatmul.f32.gmra.mxu0 %v6522
    %v6650 = vpop.f32.mrf.mxu0
    %v6651 = vadd.f32 0.0, %v6650
    %6652 = vdwg.mxu0
    %6653 = vmatpush.msra.mxu0 %v6592
    %6654 = vmatpush.msra.mxu0 %v6588
    %6655 = vmatpush.msra.mxu0 %v6584
    %6656 = vmatpush.msra.mxu0 %v6580
    %6657 = vmatpush.msra.mxu0 %v6576
    %6658 = vmatpush.msra.mxu0 %v6572
    %6659 = vmatpush.msra.mxu0 %v6568
    %6660 = vmatpush.msra.mxu0 %v6564
    %6661 = vmatpush.msra.mxu0 %v6560
    %6662 = vmatpush.msra.mxu0 %v6556
    %6663 = vmatpush.msra.mxu0 %v6552
    %6664 = vmatpush.msra.mxu0 %v6548
    %6665 = vmatpush.msra.mxu0 %v6544
    %6666 = vmatpush.msra.mxu0 %v6540
    %6667 = vmatpush.msra.mxu0 %v6536
    %6668 = vmatpush.msra.mxu0 %v6532
    %6669 = vmatmul.f32.gmra.mxu0 %v6522
    %v6670 = vpop.f32.mrf.mxu0
    %v6671 = vadd.f32 0.0, %v6670
    %6672 = vdwg.mxu0
    %v6673 = vadd.f32 %v6525, %v6611
    %v6674 = vadd.f32 %v6526, %v6631
    %v6675 = vadd.f32 %v6527, %v6651
    %v6676 = vadd.f32 %v6528, %v6671
    %v6677 = vxor.u32 %v6673, 2147483648
    %v6678 = vxor.u32 %v6674, 2147483648
    %v6679 = vxor.u32 %v6675, 2147483648
    %v6680 = vmul.f32 %v6677, 1.442695
    %v6681 = vpow.pop %v6680
    %v6682 = vmul.f32 %v6678, 1.442695
    %v6683 = vpow.pop %v6682
    %v6684 = vmul.f32 %v6679, 1.442695
    %v6685 = vpow.pop %v6684
    %v6686 = vadd.f32 %v6681, 1.0
    %v6687 = vadd.f32 %v6683, 1.0
    %v6688 = vadd.f32 %v6685, 1.0
    %v6689 = vrcp.pop %v6686
    %v6690 = vmul.f32 %v6686, %v6689
    %v6691 = vsub.f32 1.0, %v6690
    %v6692 = vmul.f32 %v6689, %v6691
    %v6693 = vadd.f32 %v6689, %v6692
    %vm6694 = vweird.f32 %v6686
    %vm6695 = vweird.f32 %v6689
    %vm6696 = vmor %vm6694, %vm6695
    %v6697 = vsel %vm6696, %v6689, %v6693
    %v6698 = vand.u32 2147483647, %v6686
    %vm6699 = vcmp.eq.f32.partialorder %v6698, 8.507059e+37
    %v6700 = vand.u32 %v6686, 2147483648
    %v6701 = vor.u32 1.1754944e-38, %v6700
    %v6702 = vsel %vm6699, %v6701, %v6697
    %v6703 = vmul.f32 1.0, %v6702
    %v6704 = vrcp.pop %v6687
    %v6705 = vmul.f32 %v6687, %v6704
    %v6706 = vsub.f32 1.0, %v6705
    %v6707 = vmul.f32 %v6704, %v6706
    %v6708 = vadd.f32 %v6704, %v6707
    %vm6709 = vweird.f32 %v6687
    %vm6710 = vweird.f32 %v6704
    %vm6711 = vmor %vm6709, %vm6710
    %v6712 = vsel %vm6711, %v6704, %v6708
    %v6713 = vand.u32 2147483647, %v6687
    %vm6714 = vcmp.eq.f32.partialorder %v6713, 8.507059e+37
    %v6715 = vand.u32 %v6687, 2147483648
    %v6716 = vor.u32 1.1754944e-38, %v6715
    %v6717 = vsel %vm6714, %v6716, %v6712
    %v6718 = vmul.f32 1.0, %v6717
    %v6719 = vrcp.pop %v6688
    %v6720 = vmul.f32 %v6688, %v6719
    %v6721 = vsub.f32 1.0, %v6720
    %v6722 = vmul.f32 %v6719, %v6721
    %v6723 = vadd.f32 %v6719, %v6722
    %vm6724 = vweird.f32 %v6688
    %vm6725 = vweird.f32 %v6719
    %vm6726 = vmor %vm6724, %vm6725
    %v6727 = vsel %vm6726, %v6719, %v6723
    %v6728 = vand.u32 2147483647, %v6688
    %vm6729 = vcmp.eq.f32.partialorder %v6728, 8.507059e+37
    %v6730 = vand.u32 %v6688, 2147483648
    %v6731 = vor.u32 1.1754944e-38, %v6730
    %v6732 = vsel %vm6729, %v6731, %v6727
    %v6733 = vmul.f32 1.0, %v6732
    %v6734 = vtanh.pop %v6676
    %v6735 = vmul.f32 %v6718, %v6520
    %v6736 = vmul.f32 %v6703, %v6734
    %v6737 = vadd.f32 %v6735, %v6736
    %v6738 = vtanh.pop %v6737
    %v6739 = vmul.f32 %v6733, %v6738
    %6740 = vst [vmem:[#allocation2 + $0x30] sm:$0xff] %v6739
    %6741 = vst [vmem:[#allocation3 + $0x8] sm:$0xff] %v6739
    %v6742 = vld [vmem:[#allocation4 + $0xe0] sm:$0xff]
    %v6743 = vld [vmem:[#allocation4 + $0xe8] sm:$0xff]
    %v6744 = vld [vmem:[#allocation4 + $0xf0] sm:$0xff]
    %v6745 = vld [vmem:[#allocation4 + $0xf8] sm:$0xff]
    %v6746 = vld [vmem:[%s5226] sm:$0xff]
    %v6747 = vld [vmem:[%s5226 + $0x8] sm:$0xff]
    %v6748 = vld [vmem:[%s5226 + $0x10] sm:$0xff]
    %v6749 = vld [vmem:[%s5226 + $0x18] sm:$0xff]
    %v6750 = vld [vmem:[%s5226 + $0x20] sm:$0xff]
    %v6751 = vld [vmem:[%s5226 + $0x28] sm:$0xff]
    %v6752 = vld [vmem:[%s5226 + $0x30] sm:$0xff]
    %v6753 = vld [vmem:[%s5226 + $0x38] sm:$0xff]
    %v6754 = vld [vmem:[%s5226 + $0x40] sm:$0xff]
    %v6755 = vld [vmem:[%s5226 + $0x48] sm:$0xff]
    %v6756 = vld [vmem:[%s5226 + $0x50] sm:$0xff]
    %v6757 = vld [vmem:[%s5226 + $0x58] sm:$0xff]
    %v6758 = vld [vmem:[%s5226 + $0x60] sm:$0xff]
    %v6759 = vld [vmem:[%s5226 + $0x68] sm:$0xff]
    %v6760 = vld [vmem:[%s5226 + $0x70] sm:$0xff]
    %v6761 = vld [vmem:[%s5226 + $0x78] sm:$0xff]
    %v6762 = vld [vmem:[%s5226 + $0x80] sm:$0xff]
    %v6763 = vld [vmem:[%s5226 + $0x88] sm:$0xff]
    %v6764 = vld [vmem:[%s5226 + $0x90] sm:$0xff]
    %v6765 = vld [vmem:[%s5226 + $0x98] sm:$0xff]
    %v6766 = vld [vmem:[%s5226 + $0xa0] sm:$0xff]
    %v6767 = vld [vmem:[%s5226 + $0xa8] sm:$0xff]
    %v6768 = vld [vmem:[%s5226 + $0xb0] sm:$0xff]
    %v6769 = vld [vmem:[%s5226 + $0xb8] sm:$0xff]
    %v6770 = vld [vmem:[%s5226 + $0xc0] sm:$0xff]
    %v6771 = vld [vmem:[%s5226 + $0xc8] sm:$0xff]
    %v6772 = vld [vmem:[%s5226 + $0xd0] sm:$0xff]
    %v6773 = vld [vmem:[%s5226 + $0xd8] sm:$0xff]
    %v6774 = vld [vmem:[%s5226 + $0xe0] sm:$0xff]
    %v6775 = vld [vmem:[%s5226 + $0xe8] sm:$0xff]
    %v6776 = vld [vmem:[%s5226 + $0xf0] sm:$0xff]
    %v6777 = vld [vmem:[%s5226 + $0xf8] sm:$0xff]
    %v6778 = vld [vmem:[%s5226 + $0x100] sm:$0xff]
    %v6779 = vld [vmem:[%s5226 + $0x108] sm:$0xff]
    %v6780 = vld [vmem:[%s5226 + $0x110] sm:$0xff]
    %v6781 = vld [vmem:[%s5226 + $0x118] sm:$0xff]
    %v6782 = vld [vmem:[%s5226 + $0x120] sm:$0xff]
    %v6783 = vld [vmem:[%s5226 + $0x128] sm:$0xff]
    %v6784 = vld [vmem:[%s5226 + $0x130] sm:$0xff]
    %v6785 = vld [vmem:[%s5226 + $0x138] sm:$0xff]
    %v6786 = vld [vmem:[%s5226 + $0x140] sm:$0xff]
    %v6787 = vld [vmem:[%s5226 + $0x148] sm:$0xff]
    %v6788 = vld [vmem:[%s5226 + $0x150] sm:$0xff]
    %v6789 = vld [vmem:[%s5226 + $0x158] sm:$0xff]
    %v6790 = vld [vmem:[%s5226 + $0x160] sm:$0xff]
    %v6791 = vld [vmem:[%s5226 + $0x168] sm:$0xff]
    %v6792 = vld [vmem:[%s5226 + $0x170] sm:$0xff]
    %v6793 = vld [vmem:[%s5226 + $0x178] sm:$0xff]
    %v6794 = vld [vmem:[%s5226 + $0x180] sm:$0xff]
    %v6795 = vld [vmem:[%s5226 + $0x188] sm:$0xff]
    %v6796 = vld [vmem:[%s5226 + $0x190] sm:$0xff]
    %v6797 = vld [vmem:[%s5226 + $0x198] sm:$0xff]
    %v6798 = vld [vmem:[%s5226 + $0x1a0] sm:$0xff]
    %v6799 = vld [vmem:[%s5226 + $0x1a8] sm:$0xff]
    %v6800 = vld [vmem:[%s5226 + $0x1b0] sm:$0xff]
    %v6801 = vld [vmem:[%s5226 + $0x1b8] sm:$0xff]
    %v6802 = vld [vmem:[%s5226 + $0x1c0] sm:$0xff]
    %v6803 = vld [vmem:[%s5226 + $0x1c8] sm:$0xff]
    %v6804 = vld [vmem:[%s5226 + $0x1d0] sm:$0xff]
    %v6805 = vld [vmem:[%s5226 + $0x1d8] sm:$0xff]
    %v6806 = vld [vmem:[%s5226 + $0x1e0] sm:$0xff]
    %v6807 = vld [vmem:[%s5226 + $0x1e8] sm:$0xff]
    %v6808 = vld [vmem:[%s5226 + $0x1f0] sm:$0xff]
    %v6809 = vld [vmem:[%s5226 + $0x1f8] sm:$0xff]
    %6810 = vmatpush.msra.mxu0 %v6806
    %6811 = vmatpush.msra.mxu0 %v6802
    %6812 = vmatpush.msra.mxu0 %v6798
    %6813 = vmatpush.msra.mxu0 %v6794
    %6814 = vmatpush.msra.mxu0 %v6790
    %6815 = vmatpush.msra.mxu0 %v6786
    %6816 = vmatpush.msra.mxu0 %v6782
    %6817 = vmatpush.msra.mxu0 %v6778
    %6818 = vmatpush.msra.mxu0 %v6774
    %6819 = vmatpush.msra.mxu0 %v6770
    %6820 = vmatpush.msra.mxu0 %v6766
    %6821 = vmatpush.msra.mxu0 %v6762
    %6822 = vmatpush.msra.mxu0 %v6758
    %6823 = vmatpush.msra.mxu0 %v6754
    %6824 = vmatpush.msra.mxu0 %v6750
    %6825 = vmatpush.msra.mxu0 %v6746
    %6826 = vmatmul.f32.gmra.mxu0 %v6739
    %v6827 = vpop.f32.mrf.mxu0
    %v6828 = vadd.f32 0.0, %v6827
    %6829 = vdwg.mxu0
    %6830 = vmatpush.msra.mxu0 %v6807
    %6831 = vmatpush.msra.mxu0 %v6803
    %6832 = vmatpush.msra.mxu0 %v6799
    %6833 = vmatpush.msra.mxu0 %v6795
    %6834 = vmatpush.msra.mxu0 %v6791
    %6835 = vmatpush.msra.mxu0 %v6787
    %6836 = vmatpush.msra.mxu0 %v6783
    %6837 = vmatpush.msra.mxu0 %v6779
    %6838 = vmatpush.msra.mxu0 %v6775
    %6839 = vmatpush.msra.mxu0 %v6771
    %6840 = vmatpush.msra.mxu0 %v6767
    %6841 = vmatpush.msra.mxu0 %v6763
    %6842 = vmatpush.msra.mxu0 %v6759
    %6843 = vmatpush.msra.mxu0 %v6755
    %6844 = vmatpush.msra.mxu0 %v6751
    %6845 = vmatpush.msra.mxu0 %v6747
    %6846 = vmatmul.f32.gmra.mxu0 %v6739
    %v6847 = vpop.f32.mrf.mxu0
    %v6848 = vadd.f32 0.0, %v6847
    %6849 = vdwg.mxu0
    %6850 = vmatpush.msra.mxu0 %v6808
    %6851 = vmatpush.msra.mxu0 %v6804
    %6852 = vmatpush.msra.mxu0 %v6800
    %6853 = vmatpush.msra.mxu0 %v6796
    %6854 = vmatpush.msra.mxu0 %v6792
    %6855 = vmatpush.msra.mxu0 %v6788
    %6856 = vmatpush.msra.mxu0 %v6784
    %6857 = vmatpush.msra.mxu0 %v6780
    %6858 = vmatpush.msra.mxu0 %v6776
    %6859 = vmatpush.msra.mxu0 %v6772
    %6860 = vmatpush.msra.mxu0 %v6768
    %6861 = vmatpush.msra.mxu0 %v6764
    %6862 = vmatpush.msra.mxu0 %v6760
    %6863 = vmatpush.msra.mxu0 %v6756
    %6864 = vmatpush.msra.mxu0 %v6752
    %6865 = vmatpush.msra.mxu0 %v6748
    %6866 = vmatmul.f32.gmra.mxu0 %v6739
    %v6867 = vpop.f32.mrf.mxu0
    %v6868 = vadd.f32 0.0, %v6867
    %6869 = vdwg.mxu0
    %6870 = vmatpush.msra.mxu0 %v6809
    %6871 = vmatpush.msra.mxu0 %v6805
    %6872 = vmatpush.msra.mxu0 %v6801
    %6873 = vmatpush.msra.mxu0 %v6797
    %6874 = vmatpush.msra.mxu0 %v6793
    %6875 = vmatpush.msra.mxu0 %v6789
    %6876 = vmatpush.msra.mxu0 %v6785
    %6877 = vmatpush.msra.mxu0 %v6781
    %6878 = vmatpush.msra.mxu0 %v6777
    %6879 = vmatpush.msra.mxu0 %v6773
    %6880 = vmatpush.msra.mxu0 %v6769
    %6881 = vmatpush.msra.mxu0 %v6765
    %6882 = vmatpush.msra.mxu0 %v6761
    %6883 = vmatpush.msra.mxu0 %v6757
    %6884 = vmatpush.msra.mxu0 %v6753
    %6885 = vmatpush.msra.mxu0 %v6749
    %6886 = vmatmul.f32.gmra.mxu0 %v6739
    %v6887 = vpop.f32.mrf.mxu0
    %v6888 = vadd.f32 0.0, %v6887
    %6889 = vdwg.mxu0
    %v6890 = vadd.f32 %v6742, %v6828
    %v6891 = vadd.f32 %v6743, %v6848
    %v6892 = vadd.f32 %v6744, %v6868
    %v6893 = vadd.f32 %v6745, %v6888
    %v6894 = vxor.u32 %v6890, 2147483648
    %v6895 = vxor.u32 %v6891, 2147483648
    %v6896 = vxor.u32 %v6892, 2147483648
    %v6897 = vmul.f32 %v6894, 1.442695
    %v6898 = vpow.pop %v6897
    %v6899 = vmul.f32 %v6895, 1.442695
    %v6900 = vpow.pop %v6899
    %v6901 = vmul.f32 %v6896, 1.442695
    %v6902 = vpow.pop %v6901
    %v6903 = vadd.f32 %v6898, 1.0
    %v6904 = vadd.f32 %v6900, 1.0
    %v6905 = vadd.f32 %v6902, 1.0
    %v6906 = vrcp.pop %v6903
    %v6907 = vmul.f32 %v6903, %v6906
    %v6908 = vsub.f32 1.0, %v6907
    %v6909 = vmul.f32 %v6906, %v6908
    %v6910 = vadd.f32 %v6906, %v6909
    %vm6911 = vweird.f32 %v6903
    %vm6912 = vweird.f32 %v6906
    %vm6913 = vmor %vm6911, %vm6912
    %v6914 = vsel %vm6913, %v6906, %v6910
    %v6915 = vand.u32 2147483647, %v6903
    %vm6916 = vcmp.eq.f32.partialorder %v6915, 8.507059e+37
    %v6917 = vand.u32 %v6903, 2147483648
    %v6918 = vor.u32 1.1754944e-38, %v6917
    %v6919 = vsel %vm6916, %v6918, %v6914
    %v6920 = vmul.f32 1.0, %v6919
    %v6921 = vrcp.pop %v6904
    %v6922 = vmul.f32 %v6904, %v6921
    %v6923 = vsub.f32 1.0, %v6922
    %v6924 = vmul.f32 %v6921, %v6923
    %v6925 = vadd.f32 %v6921, %v6924
    %vm6926 = vweird.f32 %v6904
    %vm6927 = vweird.f32 %v6921
    %vm6928 = vmor %vm6926, %vm6927
    %v6929 = vsel %vm6928, %v6921, %v6925
    %v6930 = vand.u32 2147483647, %v6904
    %vm6931 = vcmp.eq.f32.partialorder %v6930, 8.507059e+37
    %v6932 = vand.u32 %v6904, 2147483648
    %v6933 = vor.u32 1.1754944e-38, %v6932
    %v6934 = vsel %vm6931, %v6933, %v6929
    %v6935 = vmul.f32 1.0, %v6934
    %v6936 = vrcp.pop %v6905
    %v6937 = vmul.f32 %v6905, %v6936
    %v6938 = vsub.f32 1.0, %v6937
    %v6939 = vmul.f32 %v6936, %v6938
    %v6940 = vadd.f32 %v6936, %v6939
    %vm6941 = vweird.f32 %v6905
    %vm6942 = vweird.f32 %v6936
    %vm6943 = vmor %vm6941, %vm6942
    %v6944 = vsel %vm6943, %v6936, %v6940
    %v6945 = vand.u32 2147483647, %v6905
    %vm6946 = vcmp.eq.f32.partialorder %v6945, 8.507059e+37
    %v6947 = vand.u32 %v6905, 2147483648
    %v6948 = vor.u32 1.1754944e-38, %v6947
    %v6949 = vsel %vm6946, %v6948, %v6944
    %v6950 = vmul.f32 1.0, %v6949
    %v6951 = vtanh.pop %v6893
    %v6952 = vmul.f32 %v6935, %v6737
    %v6953 = vmul.f32 %v6920, %v6951
    %v6954 = vadd.f32 %v6952, %v6953
    %v6955 = vtanh.pop %v6954
    %v6956 = vmul.f32 %v6950, %v6955
    %6957 = vst [vmem:[#allocation2 + $0x38] sm:$0xff] %v6956
    %6958 = vst [vmem:[#allocation3] sm:$0xff] %v6956
    %v6959 = vld [vmem:[%s5] sm:$0xff]
    %v6960 = vld [vmem:[%s5 + $0x8] sm:$0xff]
    %v6961 = vld [vmem:[%s5 + $0x10] sm:$0xff]
    %v6962 = vld [vmem:[%s5 + $0x18] sm:$0xff]
    %v6963 = vld [vmem:[%s5 + $0x20] sm:$0xff]
    %v6964 = vld [vmem:[%s5 + $0x28] sm:$0xff]
    %v6965 = vld [vmem:[%s5 + $0x30] sm:$0xff]
    %v6966 = vld [vmem:[%s5 + $0x38] sm:$0xff]
    %v6967 = vld [vmem:[%s5 + $0x40] sm:$0xff]
    %v6968 = vld [vmem:[%s5 + $0x48] sm:$0xff]
    %v6969 = vld [vmem:[%s5 + $0x50] sm:$0xff]
    %v6970 = vld [vmem:[%s5 + $0x58] sm:$0xff]
    %v6971 = vld [vmem:[%s5 + $0x60] sm:$0xff]
    %v6972 = vld [vmem:[%s5 + $0x68] sm:$0xff]
    %v6973 = vld [vmem:[%s5 + $0x70] sm:$0xff]
    %v6974 = vld [vmem:[%s5 + $0x78] sm:$0xff]
    %s6975 = scalar_lea.vmem %s5, 128
    %v6976 = vld [vmem:[%s6975] sm:$0xff]
    %v6977 = vld [vmem:[%s6975 + $0x8] sm:$0xff]
    %v6978 = vld [vmem:[%s6975 + $0x10] sm:$0xff]
    %v6979 = vld [vmem:[%s6975 + $0x18] sm:$0xff]
    %v6980 = vld [vmem:[%s6975 + $0x20] sm:$0xff]
    %v6981 = vld [vmem:[%s6975 + $0x28] sm:$0xff]
    %v6982 = vld [vmem:[%s6975 + $0x30] sm:$0xff]
    %v6983 = vld [vmem:[%s6975 + $0x38] sm:$0xff]
    %v6984 = vld [vmem:[%s6975 + $0x40] sm:$0xff]
    %v6985 = vld [vmem:[%s6975 + $0x48] sm:$0xff]
    %v6986 = vld [vmem:[%s6975 + $0x50] sm:$0xff]
    %v6987 = vld [vmem:[%s6975 + $0x58] sm:$0xff]
    %v6988 = vld [vmem:[%s6975 + $0x60] sm:$0xff]
    %v6989 = vld [vmem:[%s6975 + $0x68] sm:$0xff]
    %v6990 = vld [vmem:[%s6975 + $0x70] sm:$0xff]
    %v6991 = vld [vmem:[%s6975 + $0x78] sm:$0xff]
    %6992 = vmatpush.msra.mxu0 %v6991
    %6993 = vmatpush.msra.mxu0 %v6990
    %6994 = vmatpush.msra.mxu0 %v6989
    %6995 = vmatpush.msra.mxu0 %v6988
    %6996 = vmatpush.msra.mxu0 %v6987
    %6997 = vmatpush.msra.mxu0 %v6986
    %6998 = vmatpush.msra.mxu0 %v6985
    %6999 = vmatpush.msra.mxu0 %v6984
    %7000 = vmatpush.msra.mxu0 %v6983
    %7001 = vmatpush.msra.mxu0 %v6982
    %7002 = vmatpush.msra.mxu0 %v6981
    %7003 = vmatpush.msra.mxu0 %v6980
    %7004 = vmatpush.msra.mxu0 %v6979
    %7005 = vmatpush.msra.mxu0 %v6978
    %7006 = vmatpush.msra.mxu0 %v6977
    %7007 = vmatpush.msra.mxu0 %v6976
    %7008 = vmatmul.f32.gmra.mxu0 %v5437
    %v7009 = vpop.f32.mrf.mxu0
    %v7010 = vadd.f32 0.0, %v7009
    %7011 = vdwg.mxu0
    %7012 = vmatpush.msra.mxu0 %v6974
    %7013 = vmatpush.msra.mxu0 %v6973
    %7014 = vmatpush.msra.mxu0 %v6972
    %7015 = vmatpush.msra.mxu0 %v6971
    %7016 = vmatpush.msra.mxu0 %v6970
    %7017 = vmatpush.msra.mxu0 %v6969
    %7018 = vmatpush.msra.mxu0 %v6968
    %7019 = vmatpush.msra.mxu0 %v6967
    %7020 = vmatpush.msra.mxu0 %v6966
    %7021 = vmatpush.msra.mxu0 %v6965
    %7022 = vmatpush.msra.mxu0 %v6964
    %7023 = vmatpush.msra.mxu0 %v6963
    %7024 = vmatpush.msra.mxu0 %v6962
    %7025 = vmatpush.msra.mxu0 %v6961
    %7026 = vmatpush.msra.mxu0 %v6960
    %7027 = vmatpush.msra.mxu0 %v6959
    %7028 = vmatmul.f32.gmra.mxu0 %v6956
    %v7029 = vpop.f32.mrf.mxu0
    %v7030 = vadd.f32 %v7010, %v7029
    %7031 = vdwg.mxu0
    %v7032 = vld [vmem:[%s6] sm:$0x1]
    %v7034 = vperm.slane %v7032, 0
    %v7036 = vadd.f32 %v7030, %v7034
    %vm7037 = vcmask 80896
    %7038 = vst.msk [vmem:[%s7] sm:$0xff] %vm7037, %v7036
    // Predicated region
    $region42: #{rnn_forward.1} parent=1 // pred_check
      _
    $region43: #{rnn_forward.1} parent=1 // pred_check_branch
      %7040 = sbr.rel (0) target = $region45
    $region44: #{rnn_forward.1} parent=1 // pred_region
      _
    $region45: #{rnn_forward.1} parent=1 // pred_fallthru
      _
    // Predicated region
    $region46: #{rnn_forward.1} parent=1 // pred_check
      _
    $region47: #{rnn_forward.1} parent=1 // pred_check_branch
      %7042 = sbr.rel (0) target = $region49
    $region48: #{rnn_forward.1} parent=1 // pred_region
      _
    $region49: #{rnn_forward.1} parent=1 // pred_fallthru
      _
    %7043 = vsyncpa [#allocation6], 1
    %7044 = vsyncpa [#allocation8], 1

</llo_original>
